<compile_context>
chip_gen: v7x
topology: tpu7x:2x2x1
jax: 0.10.0
libtpu: 0.0.40
codegen_flags: <defaults>
</compile_context>

<pallas_src>
import functools

import jax
import jax.numpy as jnp
from jax.experimental import pallas as pl
from jax.experimental.pallas import tpu as pltpu


def _round_up(x, m):
    return (x + m - 1) // m * m


# ----------------------- fused conv-matmul Pallas kernels -----------------------

def _make_mm_kernel(multi_k, has_residual):
    """Matmul + epilogue kernel factory.

    Epilogue (f32): y = acc * scale + bias [+ residual]; ReLU applied everywhere on the
    residual path, per-channel (relu-mask != 0) otherwise.
    """

    def _epilogue(y, s, c, e):
        if has_residual:
            return jnp.maximum(y * s + c + e, 0.0)
        y = y * s + c
        return jnp.where(e != 0.0, jnp.maximum(y, 0.0), y)

    if not multi_k:
        # Whole K in one block: no accumulator scratch, single dot per (i, j) tile.
        def kernel(a_ref, b_ref, s_ref, c_ref, e_ref, o_ref):
            y = jnp.dot(a_ref[...], b_ref[...], preferred_element_type=jnp.float32)
            o_ref[...] = _epilogue(y, s_ref[...], c_ref[...], e_ref[...])
    else:
        def kernel(a_ref, b_ref, s_ref, c_ref, e_ref, o_ref, acc_ref):
            @pl.when(pl.program_id(2) == 0)
            def _():
                acc_ref[...] = jnp.zeros_like(acc_ref)

            acc_ref[...] += jnp.dot(a_ref[...], b_ref[...],
                                    preferred_element_type=jnp.float32)

            @pl.when(pl.program_id(2) == pl.num_programs(2) - 1)
            def _():
                o_ref[...] = _epilogue(acc_ref[...], s_ref[...], c_ref[...], e_ref[...])

    return kernel


def matmul_affine_pallas(a, b, scale, bias, relu_mask=None, residual=None):
    """out = epilogue(a @ b) with bf16 MXU operands and f32 accumulate/epilogue.

    a: [M, K], b: [K, N] (cast to bf16); scale/bias: [N] f32 (folded BN / conv bias).
    residual is None : y = (a@b) * scale + bias, ReLU where relu_mask != 0 (default all).
    residual [M, N]  : y = relu((a@b) * scale + bias + residual).
    """
    M, K = a.shape
    K2, N = b.shape
    assert K == K2

    # --- tile selection -------------------------------------------------------
    Mp = _round_up(M, 16) if M <= 128 else _round_up(M, 128)
    tm = min(Mp, 128)
    Np = _round_up(N, 128)
    tn = 256 if (Np >= 256 and Np % 256 == 0) else 128
    if K <= 4096:                       # full-K single block (all layers of this net)
        Kp = _round_up(K, 16)
        tk = Kp
    else:                               # fallback: iterate K on the last grid axis
        tk = 512
        Kp = _round_up(K, tk)
    k_steps = Kp // tk
    multi_k = k_steps > 1

    # --- operand padding / packing -------------------------------------------
    def _pad2(x, rows, cols):
        if rows == x.shape[0] and cols == x.shape[1]:
            return x
        return jnp.pad(x, ((0, rows - x.shape[0]), (0, cols - x.shape[1])))

    a_p = _pad2(a, Mp, Kp).astype(jnp.bfloat16)
    b_p = _pad2(b, Kp, Np).astype(jnp.bfloat16)
    s_p = _pad2(scale.astype(jnp.float32).reshape(1, N), 1, Np)
    c_p = _pad2(bias.astype(jnp.float32).reshape(1, N), 1, Np)
    if residual is None:
        if relu_mask is None:
            relu_mask = jnp.ones((N,), jnp.float32)
        e_p = _pad2(relu_mask.astype(jnp.float32).reshape(1, N), 1, Np)
        e_block = (1, tn)
        e_idx = (lambda i, j: (0, j)) if not multi_k else (lambda i, j, k: (0, j))
    else:
        e_p = _pad2(residual.astype(jnp.float32), Mp, Np)
        e_block = (tm, tn)
        e_idx = (lambda i, j: (i, j)) if not multi_k else (lambda i, j, k: (i, j))

    kernel = _make_mm_kernel(multi_k, residual is not None)
    cost = pl.CostEstimate(
        flops=2 * M * K * N,
        transcendentals=0,
        bytes_accessed=int(a_p.size * 2 + b_p.size * 2 + Mp * Np * 4 + e_p.size * 4),
    )

    if not multi_k:
        grid_spec = pltpu.PrefetchScalarGridSpec(
            num_scalar_prefetch=0,
            grid=(Mp // tm, Np // tn),
            in_specs=[pl.BlockSpec((tm, tk), lambda i, j: (i, 0)),
                      pl.BlockSpec((tk, tn), lambda i, j: (0, j)),
                      pl.BlockSpec((1, tn), lambda i, j: (0, j)),
                      pl.BlockSpec((1, tn), lambda i, j: (0, j)),
                      pl.BlockSpec(e_block, e_idx)],
            out_specs=pl.BlockSpec((tm, tn), lambda i, j: (i, j)),
        )
        semantics = ("parallel", "parallel")
    else:
        grid_spec = pltpu.PrefetchScalarGridSpec(
            num_scalar_prefetch=0,
            grid=(Mp // tm, Np // tn, k_steps),
            in_specs=[pl.BlockSpec((tm, tk), lambda i, j, k: (i, k)),
                      pl.BlockSpec((tk, tn), lambda i, j, k: (k, j)),
                      pl.BlockSpec((1, tn), lambda i, j, k: (0, j)),
                      pl.BlockSpec((1, tn), lambda i, j, k: (0, j)),
                      pl.BlockSpec(e_block, e_idx)],
            out_specs=pl.BlockSpec((tm, tn), lambda i, j, k: (i, j)),
            scratch_shapes=[pltpu.VMEM((tm, tn), jnp.float32)],
        )
        semantics = ("parallel", "parallel", "arbitrary")

    out = pl.pallas_call(
        kernel,
        out_shape=jax.ShapeDtypeStruct((Mp, Np), jnp.float32),
        grid_spec=grid_spec,
        compiler_params=pltpu.CompilerParams(dimension_semantics=semantics),
        cost_estimate=cost,
    )(a_p, b_p, s_p, c_p, e_p)
    return out[:M, :N] if (Mp != M or Np != N) else out


# ----------------------------- conv glue (im2col) -----------------------------

def _im2col(x, kh, kw, stride, padding):
    # XLA glue (fuses into one producer of the bf16 patch blob the kernel streams).
    if padding:
        x = jnp.pad(x, ((0, 0), (padding, padding), (padding, padding), (0, 0)))
    B, Hp, Wp, C = x.shape
    Ho = (Hp - kh) // stride + 1
    Wo = (Wp - kw) // stride + 1
    cols = []
    for i in range(kh):
        for j in range(kw):
            cols.append(x[:, i:i + stride * (Ho - 1) + 1:stride,
                            j:j + stride * (Wo - 1) + 1:stride, :])
    p = jnp.concatenate(cols, axis=-1)          # [B, Ho, Wo, kh*kw*C]
    return p.reshape(B * Ho * Wo, kh * kw * C), Ho, Wo


def conv2d_fused(x_nhwc, w_hwio, scale, bias, relu_mask=None, residual=None,
                 stride=1, padding=0):
    """Conv2d + folded-BN/bias affine (+ residual) (+ ReLU) as one Pallas matmul."""
    kh, kw, cin, cout = w_hwio.shape
    patches, Ho, Wo = _im2col(x_nhwc.astype(jnp.bfloat16), kh, kw, stride, padding)
    res2 = None if residual is None else residual.reshape(-1, residual.shape[-1])
    y = matmul_affine_pallas(patches, w_hwio.reshape(kh * kw * cin, cout),
                             scale, bias, relu_mask=relu_mask, residual=res2)
    return y.reshape(x_nhwc.shape[0], Ho, Wo, cout)


def _bn_fold(p, eps=1e-5):
    scale = p["gamma"] / jnp.sqrt(p["var"] + eps)
    bias = p["beta"] - p["mean"] * scale
    return scale, bias


# ----------------------------- ResNet / BasicBlock -----------------------------

def basic_block(x, p, stride):
    cout = p["conv1"].shape[-1]
    s1, b1 = _bn_fold(p["bn1"])
    if "conv_sc" in p:
        # Pack conv1 (3x3, ReLU'd) with the 1x1 BN shortcut (no ReLU) along N: the 1x1
        # weights sit at the centre tap of a zero 3x3 kernel, which with padding=1
        # reproduces the padding=0 1x1 conv exactly for the same stride.
        ss, bs = _bn_fold(p["bn_sc"])
        w_sc = jnp.zeros((3, 3) + p["conv_sc"].shape[2:], jnp.float32)
        w_sc = w_sc.at[1, 1].set(p["conv_sc"][0, 0])
        w_pack = jnp.concatenate([p["conv1"], w_sc], axis=-1)
        scale = jnp.concatenate([s1, ss])
        bias = jnp.concatenate([b1, bs])
        mask = jnp.concatenate([jnp.ones((cout,), jnp.float32),
                                jnp.zeros((cout,), jnp.float32)])
        y = conv2d_fused(x, w_pack, scale, bias, relu_mask=mask,
                         stride=stride, padding=1)
        out, idn = y[..., :cout], y[..., cout:]
    else:
        out = conv2d_fused(x, p["conv1"], s1, b1, stride=stride, padding=1)
        idn = x
    s2, b2 = _bn_fold(p["bn2"])
    # relu(bn2(conv2(out)) + identity), fused into the conv2 matmul epilogue
    return conv2d_fused(out, p["conv2"], s2, b2, residual=idn, stride=1, padding=1)


def battlefield_feature(x_nchw, params):
    x = jnp.transpose(x_nchw, (0, 2, 3, 1)).astype(jnp.float32)   # NCHW -> NHWC
    # stem: relu(bn(conv3x3(x)))
    ss, sb = _bn_fold(params["stem_bn"])
    x = conv2d_fused(x, params["stem_conv"], ss, sb, stride=1, padding=1)
    # 4 stages of [1, 1, 1, 1] BasicBlocks
    for name, stride in (("layer1", 1), ("layer2", 2), ("layer3", 2), ("layer4", 2)):
        x = basic_block(x, params[name], stride)
    # downsample: relu(Conv2d(256, 32, 3, 1, padding=1) + bias)
    cout = params["down_w"].shape[-1]
    x = conv2d_fused(x, params["down_w"], jnp.ones((cout,), jnp.float32),
                     params["down_b"], stride=1, padding=1)
    # flatten in NCHW order to match torch.Tensor.view(x, (b, c*h*w))
    b = x.shape[0]
    return jnp.transpose(x, (0, 3, 1, 2)).reshape(b, -1)


# ----------------------------- deterministic param init -----------------------------

def _init_conv(key, kh, kw, cin, cout):
    fan_in = kh * kw * cin
    return jax.random.normal(key, (kh, kw, cin, cout), jnp.float32) * jnp.sqrt(2.0 / fan_in)


def _init_bn(key, c):
    k1, k2, k3, k4 = jax.random.split(key, 4)
    return dict(gamma=jax.random.uniform(k1, (c,), jnp.float32, 0.5, 1.5),
                beta=0.1 * jax.random.normal(k2, (c,), jnp.float32),
                mean=0.1 * jax.random.normal(k3, (c,), jnp.float32),
                var=jax.random.uniform(k4, (c,), jnp.float32, 0.5, 1.5))


def _init_block(key, cin, cout, stride):
    ks = jax.random.split(key, 6)
    p = dict(conv1=_init_conv(ks[0], 3, 3, cin, cout), bn1=_init_bn(ks[1], cout),
             conv2=_init_conv(ks[2], 3, 3, cout, cout), bn2=_init_bn(ks[3], cout))
    if stride != 1 or cin != cout:
        p["conv_sc"] = _init_conv(ks[4], 1, 1, cin, cout)
        p["bn_sc"] = _init_bn(ks[5], cout)
    return p


def init_params(key, in_ch):
    ks = jax.random.split(key, 8)
    w = (32, 64, 128, 256)
    return dict(
        stem_conv=_init_conv(ks[0], 3, 3, in_ch, w[0]),
        stem_bn=_init_bn(ks[1], w[0]),
        layer1=_init_block(ks[2], w[0], w[0], 1),
        layer2=_init_block(ks[3], w[0], w[1], 2),
        layer3=_init_block(ks[4], w[1], w[2], 2),
        layer4=_init_block(ks[5], w[2], w[3], 2),
        down_w=_init_conv(ks[6], 3, 3, w[3], 32),
        down_b=0.01 * jax.random.normal(ks[7], (32,), jnp.float32),
    )


if __name__ == "__main__":
    key = jax.random.PRNGKey(0)
    pkey, xkey = jax.random.split(key)
    B, C_in, H, W = 2, 4, 16, 16
    params = init_params(pkey, C_in)
    x = jax.random.normal(xkey, (B, C_in, H, W), jnp.float32)

    fwd = jax.jit(functools.partial(battlefield_feature, params=params))
    out = fwd(x)
    jax.block_until_ready(out)

    # backbone strides 1,2,2,2 -> spatial /8; downsample keeps spatial, 32 channels
    assert out.shape == (B, 32 * (H // 8) * (W // 8)), out.shape
    assert bool(jnp.all(jnp.isfinite(out))) and bool(jnp.all(out >= 0.0))
    print("KERNEL_OK")
</pallas_src>

<mosaic_0001>
module attributes {stable_mosaic.version = 11 : i64} {
  func.func @kernel(%arg0: i32, %arg1: i32, %arg2: memref<128x48xbf16, #tpu.memory_space<vmem>>, %arg3: memref<48x128xbf16, #tpu.memory_space<vmem>>, %arg4: memref<1x128xf32, #tpu.memory_space<vmem>>, %arg5: memref<1x128xf32, #tpu.memory_space<vmem>>, %arg6: memref<1x128xf32, #tpu.memory_space<vmem>>, %arg7: memref<128x128xf32, #tpu.memory_space<vmem>>) attributes {dimension_semantics = [#tpu.dimension_semantics<parallel>, #tpu.dimension_semantics<parallel>], iteration_bounds = array<i64: 4, 1>, scalar_prefetch = 0 : i64, scratch_operands = 0 : i64, tpu.core_type = #tpu.core_type<tc>, window_params = [{transform_indices = @transform_0, window_bounds = array<i64: 128, 48>}, {transform_indices = @transform_1, window_bounds = array<i64: 48, 128>}, {transform_indices = @transform_2, window_bounds = array<i64: 1, 128>}, {transform_indices = @transform_3, window_bounds = array<i64: 1, 128>}, {transform_indices = @transform_4, window_bounds = array<i64: 1, 128>}, {transform_indices = @transform_5, window_bounds = array<i64: 128, 128>}]} {
    %c0 = arith.constant 0 : index
    %c0_0 = arith.constant 0 : index
    %0 = vector.load %arg2[%c0, %c0_0] : memref<128x48xbf16, #tpu.memory_space<vmem>>, vector<128x48xbf16>
    %c0_1 = arith.constant 0 : index
    %c0_2 = arith.constant 0 : index
    %1 = vector.load %arg3[%c0_1, %c0_2] : memref<48x128xbf16, #tpu.memory_space<vmem>>, vector<48x128xbf16>
    %cst = arith.constant dense<0.000000e+00> : vector<128x128xf32>
    %2 = tpu.matmul %0, %1, %cst {dimension_numbers = #tpu.dot_dimension_numbers<[1], [0], [0], [1], [0, 0, 1, 1], [], []>} : vector<128x48xbf16>, vector<48x128xbf16>, vector<128x128xf32> -> vector<128x128xf32>
    %c0_3 = arith.constant 0 : index
    %c0_4 = arith.constant 0 : index
    %3 = vector.load %arg4[%c0_3, %c0_4] : memref<1x128xf32, #tpu.memory_space<vmem>>, vector<1x128xf32>
    %c0_5 = arith.constant 0 : index
    %c0_6 = arith.constant 0 : index
    %4 = vector.load %arg5[%c0_5, %c0_6] : memref<1x128xf32, #tpu.memory_space<vmem>>, vector<1x128xf32>
    %c0_7 = arith.constant 0 : index
    %c0_8 = arith.constant 0 : index
    %5 = vector.load %arg6[%c0_7, %c0_8] : memref<1x128xf32, #tpu.memory_space<vmem>>, vector<1x128xf32>
    %6 = vector.broadcast %3 : vector<1x128xf32> to vector<128x128xf32>
    %7 = arith.mulf %2, %6 : vector<128x128xf32>
    %8 = vector.broadcast %4 : vector<1x128xf32> to vector<128x128xf32>
    %9 = arith.addf %7, %8 : vector<128x128xf32>
    %cst_9 = arith.constant 0.000000e+00 : f32
    %10 = vector.broadcast %cst_9 : f32 to vector<1x128xf32>
    %11 = arith.cmpf one, %5, %10 : vector<1x128xf32>
    %cst_10 = arith.constant 0.000000e+00 : f32
    %12 = vector.broadcast %cst_10 : f32 to vector<128x128xf32>
    %13 = arith.maximumf %9, %12 : vector<128x128xf32>
    %14 = vector.shape_cast %11 : vector<1x128xi1> to vector<1x128xi1>
    %15 = vector.broadcast %14 : vector<1x128xi1> to vector<128x128xi1>
    %16 = arith.select %15, %13, %9 : vector<128x128xi1>, vector<128x128xf32>
    %c0_11 = arith.constant 0 : index
    %c0_12 = arith.constant 0 : index
    %17 = vector.load %arg7[%c0_11, %c0_12] : memref<128x128xf32, #tpu.memory_space<vmem>>, vector<128x128xf32>
    tpu.vector_store %arg7[%c0_11, %c0_12], %16 {strides = array<i32>} : memref<128x128xf32, #tpu.memory_space<vmem>>, vector<128x128xf32>,
    return
  }
  func.func @transform_0(%arg0: i32, %arg1: i32) -> (i32, i32) {
    %c0_i32 = arith.constant 0 : i32
    %c0_i32_0 = arith.constant 0 : i32
    return %arg0, %c0_i32 : i32, i32
  }
  func.func @transform_1(%arg0: i32, %arg1: i32) -> (i32, i32) {
    %c0_i32 = arith.constant 0 : i32
    %c0_i32_0 = arith.constant 0 : i32
    return %c0_i32, %arg1 : i32, i32
  }
  func.func @transform_2(%arg0: i32, %arg1: i32) -> (i32, i32) {
    %c0_i32 = arith.constant 0 : i32
    %c0_i32_0 = arith.constant 0 : i32
    return %c0_i32, %arg1 : i32, i32
  }
  func.func @transform_3(%arg0: i32, %arg1: i32) -> (i32, i32) {
    %c0_i32 = arith.constant 0 : i32
    %c0_i32_0 = arith.constant 0 : i32
    return %c0_i32, %arg1 : i32, i32
  }
  func.func @transform_4(%arg0: i32, %arg1: i32) -> (i32, i32) {
    %c0_i32 = arith.constant 0 : i32
    %c0_i32_0 = arith.constant 0 : i32
    return %c0_i32, %arg1 : i32, i32
  }
  func.func @transform_5(%arg0: i32, %arg1: i32) -> (i32, i32) {
    %c0_i32 = arith.constant 0 : i32
    return %arg0, %arg1 : i32, i32
  }
}

module attributes {stable_mosaic.version = 11 : i64} {
  func.func @kernel(%arg0: i32, %arg1: i32, %arg2: memref<128x288xbf16, #tpu.memory_space<vmem>>, %arg3: memref<288x128xbf16, #tpu.memory_space<vmem>>, %arg4: memref<1x128xf32, #tpu.memory_space<vmem>>, %arg5: memref<1x128xf32, #tpu.memory_space<vmem>>, %arg6: memref<1x128xf32, #tpu.memory_space<vmem>>, %arg7: memref<128x128xf32, #tpu.memory_space<vmem>>) attributes {dimension_semantics = [#tpu.dimension_semantics<parallel>, #tpu.dimension_semantics<parallel>], iteration_bounds = array<i64: 4, 1>, scalar_prefetch = 0 : i64, scratch_operands = 0 : i64, tpu.core_type = #tpu.core_type<tc>, window_params = [{transform_indices = @transform_0, window_bounds = array<i64: 128, 288>}, {transform_indices = @transform_1, window_bounds = array<i64: 288, 128>}, {transform_indices = @transform_2, window_bounds = array<i64: 1, 128>}, {transform_indices = @transform_3, window_bounds = array<i64: 1, 128>}, {transform_indices = @transform_4, window_bounds = array<i64: 1, 128>}, {transform_indices = @transform_5, window_bounds = array<i64: 128, 128>}]} {
    %c0 = arith.constant 0 : index
    %c0_0 = arith.constant 0 : index
    %0 = vector.load %arg2[%c0, %c0_0] : memref<128x288xbf16, #tpu.memory_space<vmem>>, vector<128x288xbf16>
    %c0_1 = arith.constant 0 : index
    %c0_2 = arith.constant 0 : index
    %1 = vector.load %arg3[%c0_1, %c0_2] : memref<288x128xbf16, #tpu.memory_space<vmem>>, vector<288x128xbf16>
    %cst = arith.constant dense<0.000000e+00> : vector<128x128xf32>
    %2 = tpu.matmul %0, %1, %cst {dimension_numbers = #tpu.dot_dimension_numbers<[1], [0], [0], [1], [0, 0, 1, 1], [], []>} : vector<128x288xbf16>, vector<288x128xbf16>, vector<128x128xf32> -> vector<128x128xf32>
    %c0_3 = arith.constant 0 : index
    %c0_4 = arith.constant 0 : index
    %3 = vector.load %arg4[%c0_3, %c0_4] : memref<1x128xf32, #tpu.memory_space<vmem>>, vector<1x128xf32>
    %c0_5 = arith.constant 0 : index
    %c0_6 = arith.constant 0 : index
    %4 = vector.load %arg5[%c0_5, %c0_6] : memref<1x128xf32, #tpu.memory_space<vmem>>, vector<1x128xf32>
    %c0_7 = arith.constant 0 : index
    %c0_8 = arith.constant 0 : index
    %5 = vector.load %arg6[%c0_7, %c0_8] : memref<1x128xf32, #tpu.memory_space<vmem>>, vector<1x128xf32>
    %6 = vector.broadcast %3 : vector<1x128xf32> to vector<128x128xf32>
    %7 = arith.mulf %2, %6 : vector<128x128xf32>
    %8 = vector.broadcast %4 : vector<1x128xf32> to vector<128x128xf32>
    %9 = arith.addf %7, %8 : vector<128x128xf32>
    %cst_9 = arith.constant 0.000000e+00 : f32
    %10 = vector.broadcast %cst_9 : f32 to vector<1x128xf32>
    %11 = arith.cmpf one, %5, %10 : vector<1x128xf32>
    %cst_10 = arith.constant 0.000000e+00 : f32
    %12 = vector.broadcast %cst_10 : f32 to vector<128x128xf32>
    %13 = arith.maximumf %9, %12 : vector<128x128xf32>
    %14 = vector.shape_cast %11 : vector<1x128xi1> to vector<1x128xi1>
    %15 = vector.broadcast %14 : vector<1x128xi1> to vector<128x128xi1>
    %16 = arith.select %15, %13, %9 : vector<128x128xi1>, vector<128x128xf32>
    %c0_11 = arith.constant 0 : index
    %c0_12 = arith.constant 0 : index
    %17 = vector.load %arg7[%c0_11, %c0_12] : memref<128x128xf32, #tpu.memory_space<vmem>>, vector<128x128xf32>
    tpu.vector_store %arg7[%c0_11, %c0_12], %16 {strides = array<i32>} : memref<128x128xf32, #tpu.memory_space<vmem>>, vector<128x128xf32>,
    return
  }
  func.func @transform_0(%arg0: i32, %arg1: i32) -> (i32, i32) {
    %c0_i32 = arith.constant 0 : i32
    %c0_i32_0 = arith.constant 0 : i32
    return %arg0, %c0_i32 : i32, i32
  }
  func.func @transform_1(%arg0: i32, %arg1: i32) -> (i32, i32) {
    %c0_i32 = arith.constant 0 : i32
    %c0_i32_0 = arith.constant 0 : i32
    return %c0_i32, %arg1 : i32, i32
  }
  func.func @transform_2(%arg0: i32, %arg1: i32) -> (i32, i32) {
    %c0_i32 = arith.constant 0 : i32
    %c0_i32_0 = arith.constant 0 : i32
    return %c0_i32, %arg1 : i32, i32
  }
  func.func @transform_3(%arg0: i32, %arg1: i32) -> (i32, i32) {
    %c0_i32 = arith.constant 0 : i32
    %c0_i32_0 = arith.constant 0 : i32
    return %c0_i32, %arg1 : i32, i32
  }
  func.func @transform_4(%arg0: i32, %arg1: i32) -> (i32, i32) {
    %c0_i32 = arith.constant 0 : i32
    %c0_i32_0 = arith.constant 0 : i32
    return %c0_i32, %arg1 : i32, i32
  }
  func.func @transform_5(%arg0: i32, %arg1: i32) -> (i32, i32) {
    %c0_i32 = arith.constant 0 : i32
    return %arg0, %arg1 : i32, i32
  }
}

module attributes {stable_mosaic.version = 11 : i64} {
  func.func @kernel(%arg0: i32, %arg1: i32, %arg2: memref<128x288xbf16, #tpu.memory_space<vmem>>, %arg3: memref<288x128xbf16, #tpu.memory_space<vmem>>, %arg4: memref<1x128xf32, #tpu.memory_space<vmem>>, %arg5: memref<1x128xf32, #tpu.memory_space<vmem>>, %arg6: memref<128x128xf32, #tpu.memory_space<vmem>>, %arg7: memref<128x128xf32, #tpu.memory_space<vmem>>) attributes {dimension_semantics = [#tpu.dimension_semantics<parallel>, #tpu.dimension_semantics<parallel>], iteration_bounds = array<i64: 4, 1>, scalar_prefetch = 0 : i64, scratch_operands = 0 : i64, tpu.core_type = #tpu.core_type<tc>, window_params = [{transform_indices = @transform_0, window_bounds = array<i64: 128, 288>}, {transform_indices = @transform_1, window_bounds = array<i64: 288, 128>}, {transform_indices = @transform_2, window_bounds = array<i64: 1, 128>}, {transform_indices = @transform_3, window_bounds = array<i64: 1, 128>}, {transform_indices = @transform_4, window_bounds = array<i64: 128, 128>}, {transform_indices = @transform_5, window_bounds = array<i64: 128, 128>}]} {
    %c0 = arith.constant 0 : index
    %c0_0 = arith.constant 0 : index
    %0 = vector.load %arg2[%c0, %c0_0] : memref<128x288xbf16, #tpu.memory_space<vmem>>, vector<128x288xbf16>
    %c0_1 = arith.constant 0 : index
    %c0_2 = arith.constant 0 : index
    %1 = vector.load %arg3[%c0_1, %c0_2] : memref<288x128xbf16, #tpu.memory_space<vmem>>, vector<288x128xbf16>
    %cst = arith.constant dense<0.000000e+00> : vector<128x128xf32>
    %2 = tpu.matmul %0, %1, %cst {dimension_numbers = #tpu.dot_dimension_numbers<[1], [0], [0], [1], [0, 0, 1, 1], [], []>} : vector<128x288xbf16>, vector<288x128xbf16>, vector<128x128xf32> -> vector<128x128xf32>
    %c0_3 = arith.constant 0 : index
    %c0_4 = arith.constant 0 : index
    %3 = vector.load %arg4[%c0_3, %c0_4] : memref<1x128xf32, #tpu.memory_space<vmem>>, vector<1x128xf32>
    %c0_5 = arith.constant 0 : index
    %c0_6 = arith.constant 0 : index
    %4 = vector.load %arg5[%c0_5, %c0_6] : memref<1x128xf32, #tpu.memory_space<vmem>>, vector<1x128xf32>
    %c0_7 = arith.constant 0 : index
    %c0_8 = arith.constant 0 : index
    %5 = vector.load %arg6[%c0_7, %c0_8] : memref<128x128xf32, #tpu.memory_space<vmem>>, vector<128x128xf32>
    %6 = vector.broadcast %3 : vector<1x128xf32> to vector<128x128xf32>
    %7 = arith.mulf %2, %6 : vector<128x128xf32>
    %8 = vector.broadcast %4 : vector<1x128xf32> to vector<128x128xf32>
    %9 = arith.addf %7, %8 : vector<128x128xf32>
    %10 = arith.addf %9, %5 : vector<128x128xf32>
    %cst_9 = arith.constant 0.000000e+00 : f32
    %11 = vector.broadcast %cst_9 : f32 to vector<128x128xf32>
    %12 = arith.maximumf %10, %11 : vector<128x128xf32>
    %c0_10 = arith.constant 0 : index
    %c0_11 = arith.constant 0 : index
    %13 = vector.load %arg7[%c0_10, %c0_11] : memref<128x128xf32, #tpu.memory_space<vmem>>, vector<128x128xf32>
    tpu.vector_store %arg7[%c0_10, %c0_11], %12 {strides = array<i32>} : memref<128x128xf32, #tpu.memory_space<vmem>>, vector<128x128xf32>,
    return
  }
  func.func @transform_0(%arg0: i32, %arg1: i32) -> (i32, i32) {
    %c0_i32 = arith.constant 0 : i32
    %c0_i32_0 = arith.constant 0 : i32
    return %arg0, %c0_i32 : i32, i32
  }
  func.func @transform_1(%arg0: i32, %arg1: i32) -> (i32, i32) {
    %c0_i32 = arith.constant 0 : i32
    %c0_i32_0 = arith.constant 0 : i32
    return %c0_i32, %arg1 : i32, i32
  }
  func.func @transform_2(%arg0: i32, %arg1: i32) -> (i32, i32) {
    %c0_i32 = arith.constant 0 : i32
    %c0_i32_0 = arith.constant 0 : i32
    return %c0_i32, %arg1 : i32, i32
  }
  func.func @transform_3(%arg0: i32, %arg1: i32) -> (i32, i32) {
    %c0_i32 = arith.constant 0 : i32
    %c0_i32_0 = arith.constant 0 : i32
    return %c0_i32, %arg1 : i32, i32
  }
  func.func @transform_4(%arg0: i32, %arg1: i32) -> (i32, i32) {
    %c0_i32 = arith.constant 0 : i32
    return %arg0, %arg1 : i32, i32
  }
  func.func @transform_5(%arg0: i32, %arg1: i32) -> (i32, i32) {
    %c0_i32 = arith.constant 0 : i32
    return %arg0, %arg1 : i32, i32
  }
}

module attributes {stable_mosaic.version = 11 : i64} {
  func.func @kernel(%arg0: i32, %arg1: i32, %arg2: memref<128x288xbf16, #tpu.memory_space<vmem>>, %arg3: memref<288x128xbf16, #tpu.memory_space<vmem>>, %arg4: memref<1x128xf32, #tpu.memory_space<vmem>>, %arg5: memref<1x128xf32, #tpu.memory_space<vmem>>, %arg6: memref<1x128xf32, #tpu.memory_space<vmem>>, %arg7: memref<128x128xf32, #tpu.memory_space<vmem>>) attributes {dimension_semantics = [#tpu.dimension_semantics<parallel>, #tpu.dimension_semantics<parallel>], iteration_bounds = array<i64: 1, 1>, scalar_prefetch = 0 : i64, scratch_operands = 0 : i64, tpu.core_type = #tpu.core_type<tc>, window_params = [{transform_indices = @transform_0, window_bounds = array<i64: 128, 288>}, {transform_indices = @transform_1, window_bounds = array<i64: 288, 128>}, {transform_indices = @transform_2, window_bounds = array<i64: 1, 128>}, {transform_indices = @transform_3, window_bounds = array<i64: 1, 128>}, {transform_indices = @transform_4, window_bounds = array<i64: 1, 128>}, {transform_indices = @transform_5, window_bounds = array<i64: 128, 128>}]} {
    %c0 = arith.constant 0 : index
    %c0_0 = arith.constant 0 : index
    %0 = vector.load %arg2[%c0, %c0_0] : memref<128x288xbf16, #tpu.memory_space<vmem>>, vector<128x288xbf16>
    %c0_1 = arith.constant 0 : index
    %c0_2 = arith.constant 0 : index
    %1 = vector.load %arg3[%c0_1, %c0_2] : memref<288x128xbf16, #tpu.memory_space<vmem>>, vector<288x128xbf16>
    %cst = arith.constant dense<0.000000e+00> : vector<128x128xf32>
    %2 = tpu.matmul %0, %1, %cst {dimension_numbers = #tpu.dot_dimension_numbers<[1], [0], [0], [1], [0, 0, 1, 1], [], []>} : vector<128x288xbf16>, vector<288x128xbf16>, vector<128x128xf32> -> vector<128x128xf32>
    %c0_3 = arith.constant 0 : index
    %c0_4 = arith.constant 0 : index
    %3 = vector.load %arg4[%c0_3, %c0_4] : memref<1x128xf32, #tpu.memory_space<vmem>>, vector<1x128xf32>
    %c0_5 = arith.constant 0 : index
    %c0_6 = arith.constant 0 : index
    %4 = vector.load %arg5[%c0_5, %c0_6] : memref<1x128xf32, #tpu.memory_space<vmem>>, vector<1x128xf32>
    %c0_7 = arith.constant 0 : index
    %c0_8 = arith.constant 0 : index
    %5 = vector.load %arg6[%c0_7, %c0_8] : memref<1x128xf32, #tpu.memory_space<vmem>>, vector<1x128xf32>
    %6 = vector.broadcast %3 : vector<1x128xf32> to vector<128x128xf32>
    %7 = arith.mulf %2, %6 : vector<128x128xf32>
    %8 = vector.broadcast %4 : vector<1x128xf32> to vector<128x128xf32>
    %9 = arith.addf %7, %8 : vector<128x128xf32>
    %cst_9 = arith.constant 0.000000e+00 : f32
    %10 = vector.broadcast %cst_9 : f32 to vector<1x128xf32>
    %11 = arith.cmpf one, %5, %10 : vector<1x128xf32>
    %cst_10 = arith.constant 0.000000e+00 : f32
    %12 = vector.broadcast %cst_10 : f32 to vector<128x128xf32>
    %13 = arith.maximumf %9, %12 : vector<128x128xf32>
    %14 = vector.shape_cast %11 : vector<1x128xi1> to vector<1x128xi1>
    %15 = vector.broadcast %14 : vector<1x128xi1> to vector<128x128xi1>
    %16 = arith.select %15, %13, %9 : vector<128x128xi1>, vector<128x128xf32>
    %c0_11 = arith.constant 0 : index
    %c0_12 = arith.constant 0 : index
    %17 = vector.load %arg7[%c0_11, %c0_12] : memref<128x128xf32, #tpu.memory_space<vmem>>, vector<128x128xf32>
    tpu.vector_store %arg7[%c0_11, %c0_12], %16 {strides = array<i32>} : memref<128x128xf32, #tpu.memory_space<vmem>>, vector<128x128xf32>,
    return
  }
  func.func @transform_0(%arg0: i32, %arg1: i32) -> (i32, i32) {
    %c0_i32 = arith.constant 0 : i32
    %c0_i32_0 = arith.constant 0 : i32
    return %arg0, %c0_i32 : i32, i32
  }
  func.func @transform_1(%arg0: i32, %arg1: i32) -> (i32, i32) {
    %c0_i32 = arith.constant 0 : i32
    %c0_i32_0 = arith.constant 0 : i32
    return %c0_i32, %arg1 : i32, i32
  }
  func.func @transform_2(%arg0: i32, %arg1: i32) -> (i32, i32) {
    %c0_i32 = arith.constant 0 : i32
    %c0_i32_0 = arith.constant 0 : i32
    return %c0_i32, %arg1 : i32, i32
  }
  func.func @transform_3(%arg0: i32, %arg1: i32) -> (i32, i32) {
    %c0_i32 = arith.constant 0 : i32
    %c0_i32_0 = arith.constant 0 : i32
    return %c0_i32, %arg1 : i32, i32
  }
  func.func @transform_4(%arg0: i32, %arg1: i32) -> (i32, i32) {
    %c0_i32 = arith.constant 0 : i32
    %c0_i32_0 = arith.constant 0 : i32
    return %c0_i32, %arg1 : i32, i32
  }
  func.func @transform_5(%arg0: i32, %arg1: i32) -> (i32, i32) {
    %c0_i32 = arith.constant 0 : i32
    return %arg0, %arg1 : i32, i32
  }
}

module attributes {stable_mosaic.version = 11 : i64} {
  func.func @kernel(%arg0: i32, %arg1: i32, %arg2: memref<128x576xbf16, #tpu.memory_space<vmem>>, %arg3: memref<576x128xbf16, #tpu.memory_space<vmem>>, %arg4: memref<1x128xf32, #tpu.memory_space<vmem>>, %arg5: memref<1x128xf32, #tpu.memory_space<vmem>>, %arg6: memref<128x128xf32, #tpu.memory_space<vmem>>, %arg7: memref<128x128xf32, #tpu.memory_space<vmem>>) attributes {dimension_semantics = [#tpu.dimension_semantics<parallel>, #tpu.dimension_semantics<parallel>], iteration_bounds = array<i64: 1, 1>, scalar_prefetch = 0 : i64, scratch_operands = 0 : i64, tpu.core_type = #tpu.core_type<tc>, window_params = [{transform_indices = @transform_0, window_bounds = array<i64: 128, 576>}, {transform_indices = @transform_1, window_bounds = array<i64: 576, 128>}, {transform_indices = @transform_2, window_bounds = array<i64: 1, 128>}, {transform_indices = @transform_3, window_bounds = array<i64: 1, 128>}, {transform_indices = @transform_4, window_bounds = array<i64: 128, 128>}, {transform_indices = @transform_5, window_bounds = array<i64: 128, 128>}]} {
    %c0 = arith.constant 0 : index
    %c0_0 = arith.constant 0 : index
    %0 = vector.load %arg2[%c0, %c0_0] : memref<128x576xbf16, #tpu.memory_space<vmem>>, vector<128x576xbf16>
    %c0_1 = arith.constant 0 : index
    %c0_2 = arith.constant 0 : index
    %1 = vector.load %arg3[%c0_1, %c0_2] : memref<576x128xbf16, #tpu.memory_space<vmem>>, vector<576x128xbf16>
    %cst = arith.constant dense<0.000000e+00> : vector<128x128xf32>
    %2 = tpu.matmul %0, %1, %cst {dimension_numbers = #tpu.dot_dimension_numbers<[1], [0], [0], [1], [0, 0, 1, 1], [], []>} : vector<128x576xbf16>, vector<576x128xbf16>, vector<128x128xf32> -> vector<128x128xf32>
    %c0_3 = arith.constant 0 : index
    %c0_4 = arith.constant 0 : index
    %3 = vector.load %arg4[%c0_3, %c0_4] : memref<1x128xf32, #tpu.memory_space<vmem>>, vector<1x128xf32>
    %c0_5 = arith.constant 0 : index
    %c0_6 = arith.constant 0 : index
    %4 = vector.load %arg5[%c0_5, %c0_6] : memref<1x128xf32, #tpu.memory_space<vmem>>, vector<1x128xf32>
    %c0_7 = arith.constant 0 : index
    %c0_8 = arith.constant 0 : index
    %5 = vector.load %arg6[%c0_7, %c0_8] : memref<128x128xf32, #tpu.memory_space<vmem>>, vector<128x128xf32>
    %6 = vector.broadcast %3 : vector<1x128xf32> to vector<128x128xf32>
    %7 = arith.mulf %2, %6 : vector<128x128xf32>
    %8 = vector.broadcast %4 : vector<1x128xf32> to vector<128x128xf32>
    %9 = arith.addf %7, %8 : vector<128x128xf32>
    %10 = arith.addf %9, %5 : vector<128x128xf32>
    %cst_9 = arith.constant 0.000000e+00 : f32
    %11 = vector.broadcast %cst_9 : f32 to vector<128x128xf32>
    %12 = arith.maximumf %10, %11 : vector<128x128xf32>
    %c0_10 = arith.constant 0 : index
    %c0_11 = arith.constant 0 : index
    %13 = vector.load %arg7[%c0_10, %c0_11] : memref<128x128xf32, #tpu.memory_space<vmem>>, vector<128x128xf32>
    tpu.vector_store %arg7[%c0_10, %c0_11], %12 {strides = array<i32>} : memref<128x128xf32, #tpu.memory_space<vmem>>, vector<128x128xf32>,
    return
  }
  func.func @transform_0(%arg0: i32, %arg1: i32) -> (i32, i32) {
    %c0_i32 = arith.constant 0 : i32
    %c0_i32_0 = arith.constant 0 : i32
    return %arg0, %c0_i32 : i32, i32
  }
  func.func @transform_1(%arg0: i32, %arg1: i32) -> (i32, i32) {
    %c0_i32 = arith.constant 0 : i32
    %c0_i32_0 = arith.constant 0 : i32
    return %c0_i32, %arg1 : i32, i32
  }
  func.func @transform_2(%arg0: i32, %arg1: i32) -> (i32, i32) {
    %c0_i32 = arith.constant 0 : i32
    %c0_i32_0 = arith.constant 0 : i32
    return %c0_i32, %arg1 : i32, i32
  }
  func.func @transform_3(%arg0: i32, %arg1: i32) -> (i32, i32) {
    %c0_i32 = arith.constant 0 : i32
    %c0_i32_0 = arith.constant 0 : i32
    return %c0_i32, %arg1 : i32, i32
  }
  func.func @transform_4(%arg0: i32, %arg1: i32) -> (i32, i32) {
    %c0_i32 = arith.constant 0 : i32
    return %arg0, %arg1 : i32, i32
  }
  func.func @transform_5(%arg0: i32, %arg1: i32) -> (i32, i32) {
    %c0_i32 = arith.constant 0 : i32
    return %arg0, %arg1 : i32, i32
  }
}

module attributes {stable_mosaic.version = 11 : i64} {
  func.func @kernel(%arg0: i32, %arg1: i32, %arg2: memref<32x576xbf16, #tpu.memory_space<vmem>>, %arg3: memref<576x256xbf16, #tpu.memory_space<vmem>>, %arg4: memref<1x256xf32, #tpu.memory_space<vmem>>, %arg5: memref<1x256xf32, #tpu.memory_space<vmem>>, %arg6: memref<1x256xf32, #tpu.memory_space<vmem>>, %arg7: memref<32x256xf32, #tpu.memory_space<vmem>>) attributes {dimension_semantics = [#tpu.dimension_semantics<parallel>, #tpu.dimension_semantics<parallel>], iteration_bounds = array<i64: 1, 1>, scalar_prefetch = 0 : i64, scratch_operands = 0 : i64, tpu.core_type = #tpu.core_type<tc>, window_params = [{transform_indices = @transform_0, window_bounds = array<i64: 32, 576>}, {transform_indices = @transform_1, window_bounds = array<i64: 576, 256>}, {transform_indices = @transform_2, window_bounds = array<i64: 1, 256>}, {transform_indices = @transform_3, window_bounds = array<i64: 1, 256>}, {transform_indices = @transform_4, window_bounds = array<i64: 1, 256>}, {transform_indices = @transform_5, window_bounds = array<i64: 32, 256>}]} {
    %c0 = arith.constant 0 : index
    %c0_0 = arith.constant 0 : index
    %0 = vector.load %arg2[%c0, %c0_0] : memref<32x576xbf16, #tpu.memory_space<vmem>>, vector<32x576xbf16>
    %c0_1 = arith.constant 0 : index
    %c0_2 = arith.constant 0 : index
    %1 = vector.load %arg3[%c0_1, %c0_2] : memref<576x256xbf16, #tpu.memory_space<vmem>>, vector<576x256xbf16>
    %cst = arith.constant dense<0.000000e+00> : vector<32x256xf32>
    %2 = tpu.matmul %0, %1, %cst {dimension_numbers = #tpu.dot_dimension_numbers<[1], [0], [0], [1], [0, 0, 1, 1], [], []>} : vector<32x576xbf16>, vector<576x256xbf16>, vector<32x256xf32> -> vector<32x256xf32>
    %c0_3 = arith.constant 0 : index
    %c0_4 = arith.constant 0 : index
    %3 = vector.load %arg4[%c0_3, %c0_4] : memref<1x256xf32, #tpu.memory_space<vmem>>, vector<1x256xf32>
    %c0_5 = arith.constant 0 : index
    %c0_6 = arith.constant 0 : index
    %4 = vector.load %arg5[%c0_5, %c0_6] : memref<1x256xf32, #tpu.memory_space<vmem>>, vector<1x256xf32>
    %c0_7 = arith.constant 0 : index
    %c0_8 = arith.constant 0 : index
    %5 = vector.load %arg6[%c0_7, %c0_8] : memref<1x256xf32, #tpu.memory_space<vmem>>, vector<1x256xf32>
    %6 = vector.broadcast %3 : vector<1x256xf32> to vector<32x256xf32>
    %7 = arith.mulf %2, %6 : vector<32x256xf32>
    %8 = vector.broadcast %4 : vector<1x256xf32> to vector<32x256xf32>
    %9 = arith.addf %7, %8 : vector<32x256xf32>
    %cst_9 = arith.constant 0.000000e+00 : f32
    %10 = vector.broadcast %cst_9 : f32 to vector<1x256xf32>
    %11 = arith.cmpf one, %5, %10 : vector<1x256xf32>
    %cst_10 = arith.constant 0.000000e+00 : f32
    %12 = vector.broadcast %cst_10 : f32 to vector<32x256xf32>
    %13 = arith.maximumf %9, %12 : vector<32x256xf32>
    %14 = vector.shape_cast %11 : vector<1x256xi1> to vector<1x256xi1>
    %15 = vector.broadcast %14 : vector<1x256xi1> to vector<32x256xi1>
    %16 = arith.select %15, %13, %9 : vector<32x256xi1>, vector<32x256xf32>
    %c0_11 = arith.constant 0 : index
    %c0_12 = arith.constant 0 : index
    %17 = vector.load %arg7[%c0_11, %c0_12] : memref<32x256xf32, #tpu.memory_space<vmem>>, vector<32x256xf32>
    tpu.vector_store %arg7[%c0_11, %c0_12], %16 {strides = array<i32>} : memref<32x256xf32, #tpu.memory_space<vmem>>, vector<32x256xf32>,
    return
  }
  func.func @transform_0(%arg0: i32, %arg1: i32) -> (i32, i32) {
    %c0_i32 = arith.constant 0 : i32
    %c0_i32_0 = arith.constant 0 : i32
    return %arg0, %c0_i32 : i32, i32
  }
  func.func @transform_1(%arg0: i32, %arg1: i32) -> (i32, i32) {
    %c0_i32 = arith.constant 0 : i32
    %c0_i32_0 = arith.constant 0 : i32
    return %c0_i32, %arg1 : i32, i32
  }
  func.func @transform_2(%arg0: i32, %arg1: i32) -> (i32, i32) {
    %c0_i32 = arith.constant 0 : i32
    %c0_i32_0 = arith.constant 0 : i32
    return %c0_i32, %arg1 : i32, i32
  }
  func.func @transform_3(%arg0: i32, %arg1: i32) -> (i32, i32) {
    %c0_i32 = arith.constant 0 : i32
    %c0_i32_0 = arith.constant 0 : i32
    return %c0_i32, %arg1 : i32, i32
  }
  func.func @transform_4(%arg0: i32, %arg1: i32) -> (i32, i32) {
    %c0_i32 = arith.constant 0 : i32
    %c0_i32_0 = arith.constant 0 : i32
    return %c0_i32, %arg1 : i32, i32
  }
  func.func @transform_5(%arg0: i32, %arg1: i32) -> (i32, i32) {
    %c0_i32 = arith.constant 0 : i32
    return %arg0, %arg1 : i32, i32
  }
}

module attributes {stable_mosaic.version = 11 : i64} {
  func.func @kernel(%arg0: i32, %arg1: i32, %arg2: memref<32x1152xbf16, #tpu.memory_space<vmem>>, %arg3: memref<1152x128xbf16, #tpu.memory_space<vmem>>, %arg4: memref<1x128xf32, #tpu.memory_space<vmem>>, %arg5: memref<1x128xf32, #tpu.memory_space<vmem>>, %arg6: memref<32x128xf32, #tpu.memory_space<vmem>>, %arg7: memref<32x128xf32, #tpu.memory_space<vmem>>) attributes {dimension_semantics = [#tpu.dimension_semantics<parallel>, #tpu.dimension_semantics<parallel>], iteration_bounds = array<i64: 1, 1>, scalar_prefetch = 0 : i64, scratch_operands = 0 : i64, tpu.core_type = #tpu.core_type<tc>, window_params = [{transform_indices = @transform_0, window_bounds = array<i64: 32, 1152>}, {transform_indices = @transform_1, window_bounds = array<i64: 1152, 128>}, {transform_indices = @transform_2, window_bounds = array<i64: 1, 128>}, {transform_indices = @transform_3, window_bounds = array<i64: 1, 128>}, {transform_indices = @transform_4, window_bounds = array<i64: 32, 128>}, {transform_indices = @transform_5, window_bounds = array<i64: 32, 128>}]} {
    %c0 = arith.constant 0 : index
    %c0_0 = arith.constant 0 : index
    %0 = vector.load %arg2[%c0, %c0_0] : memref<32x1152xbf16, #tpu.memory_space<vmem>>, vector<32x1152xbf16>
    %c0_1 = arith.constant 0 : index
    %c0_2 = arith.constant 0 : index
    %1 = vector.load %arg3[%c0_1, %c0_2] : memref<1152x128xbf16, #tpu.memory_space<vmem>>, vector<1152x128xbf16>
    %cst = arith.constant dense<0.000000e+00> : vector<32x128xf32>
    %2 = tpu.matmul %0, %1, %cst {dimension_numbers = #tpu.dot_dimension_numbers<[1], [0], [0], [1], [0, 0, 1, 1], [], []>} : vector<32x1152xbf16>, vector<1152x128xbf16>, vector<32x128xf32> -> vector<32x128xf32>
    %c0_3 = arith.constant 0 : index
    %c0_4 = arith.constant 0 : index
    %3 = vector.load %arg4[%c0_3, %c0_4] : memref<1x128xf32, #tpu.memory_space<vmem>>, vector<1x128xf32>
    %c0_5 = arith.constant 0 : index
    %c0_6 = arith.constant 0 : index
    %4 = vector.load %arg5[%c0_5, %c0_6] : memref<1x128xf32, #tpu.memory_space<vmem>>, vector<1x128xf32>
    %c0_7 = arith.constant 0 : index
    %c0_8 = arith.constant 0 : index
    %5 = vector.load %arg6[%c0_7, %c0_8] : memref<32x128xf32, #tpu.memory_space<vmem>>, vector<32x128xf32>
    %6 = vector.broadcast %3 : vector<1x128xf32> to vector<32x128xf32>
    %7 = arith.mulf %2, %6 : vector<32x128xf32>
    %8 = vector.broadcast %4 : vector<1x128xf32> to vector<32x128xf32>
    %9 = arith.addf %7, %8 : vector<32x128xf32>
    %10 = arith.addf %9, %5 : vector<32x128xf32>
    %cst_9 = arith.constant 0.000000e+00 : f32
    %11 = vector.broadcast %cst_9 : f32 to vector<32x128xf32>
    %12 = arith.maximumf %10, %11 : vector<32x128xf32>
    %c0_10 = arith.constant 0 : index
    %c0_11 = arith.constant 0 : index
    %13 = vector.load %arg7[%c0_10, %c0_11] : memref<32x128xf32, #tpu.memory_space<vmem>>, vector<32x128xf32>
    tpu.vector_store %arg7[%c0_10, %c0_11], %12 {strides = array<i32>} : memref<32x128xf32, #tpu.memory_space<vmem>>, vector<32x128xf32>,
    return
  }
  func.func @transform_0(%arg0: i32, %arg1: i32) -> (i32, i32) {
    %c0_i32 = arith.constant 0 : i32
    %c0_i32_0 = arith.constant 0 : i32
    return %arg0, %c0_i32 : i32, i32
  }
  func.func @transform_1(%arg0: i32, %arg1: i32) -> (i32, i32) {
    %c0_i32 = arith.constant 0 : i32
    %c0_i32_0 = arith.constant 0 : i32
    return %c0_i32, %arg1 : i32, i32
  }
  func.func @transform_2(%arg0: i32, %arg1: i32) -> (i32, i32) {
    %c0_i32 = arith.constant 0 : i32
    %c0_i32_0 = arith.constant 0 : i32
    return %c0_i32, %arg1 : i32, i32
  }
  func.func @transform_3(%arg0: i32, %arg1: i32) -> (i32, i32) {
    %c0_i32 = arith.constant 0 : i32
    %c0_i32_0 = arith.constant 0 : i32
    return %c0_i32, %arg1 : i32, i32
  }
  func.func @transform_4(%arg0: i32, %arg1: i32) -> (i32, i32) {
    %c0_i32 = arith.constant 0 : i32
    return %arg0, %arg1 : i32, i32
  }
  func.func @transform_5(%arg0: i32, %arg1: i32) -> (i32, i32) {
    %c0_i32 = arith.constant 0 : i32
    return %arg0, %arg1 : i32, i32
  }
}

module attributes {stable_mosaic.version = 11 : i64} {
  func.func @kernel(%arg0: i32, %arg1: i32, %arg2: memref<16x1152xbf16, #tpu.memory_space<vmem>>, %arg3: memref<1152x256xbf16, #tpu.memory_space<vmem>>, %arg4: memref<1x256xf32, #tpu.memory_space<vmem>>, %arg5: memref<1x256xf32, #tpu.memory_space<vmem>>, %arg6: memref<1x256xf32, #tpu.memory_space<vmem>>, %arg7: memref<16x256xf32, #tpu.memory_space<vmem>>) attributes {dimension_semantics = [#tpu.dimension_semantics<parallel>, #tpu.dimension_semantics<parallel>], iteration_bounds = array<i64: 1, 2>, scalar_prefetch = 0 : i64, scratch_operands = 0 : i64, tpu.core_type = #tpu.core_type<tc>, window_params = [{transform_indices = @transform_0, window_bounds = array<i64: 16, 1152>}, {transform_indices = @transform_1, window_bounds = array<i64: 1152, 256>}, {transform_indices = @transform_2, window_bounds = array<i64: 1, 256>}, {transform_indices = @transform_3, window_bounds = array<i64: 1, 256>}, {transform_indices = @transform_4, window_bounds = array<i64: 1, 256>}, {transform_indices = @transform_5, window_bounds = array<i64: 16, 256>}]} {
    %c0 = arith.constant 0 : index
    %c0_0 = arith.constant 0 : index
    %0 = vector.load %arg2[%c0, %c0_0] : memref<16x1152xbf16, #tpu.memory_space<vmem>>, vector<16x1152xbf16>
    %c0_1 = arith.constant 0 : index
    %c0_2 = arith.constant 0 : index
    %1 = vector.load %arg3[%c0_1, %c0_2] : memref<1152x256xbf16, #tpu.memory_space<vmem>>, vector<1152x256xbf16>
    %cst = arith.constant dense<0.000000e+00> : vector<16x256xf32>
    %2 = tpu.matmul %0, %1, %cst {dimension_numbers = #tpu.dot_dimension_numbers<[1], [0], [0], [1], [0, 0, 1, 1], [], []>} : vector<16x1152xbf16>, vector<1152x256xbf16>, vector<16x256xf32> -> vector<16x256xf32>
    %c0_3 = arith.constant 0 : index
    %c0_4 = arith.constant 0 : index
    %3 = vector.load %arg4[%c0_3, %c0_4] : memref<1x256xf32, #tpu.memory_space<vmem>>, vector<1x256xf32>
    %c0_5 = arith.constant 0 : index
    %c0_6 = arith.constant 0 : index
    %4 = vector.load %arg5[%c0_5, %c0_6] : memref<1x256xf32, #tpu.memory_space<vmem>>, vector<1x256xf32>
    %c0_7 = arith.constant 0 : index
    %c0_8 = arith.constant 0 : index
    %5 = vector.load %arg6[%c0_7, %c0_8] : memref<1x256xf32, #tpu.memory_space<vmem>>, vector<1x256xf32>
    %6 = vector.broadcast %3 : vector<1x256xf32> to vector<16x256xf32>
    %7 = arith.mulf %2, %6 : vector<16x256xf32>
    %8 = vector.broadcast %4 : vector<1x256xf32> to vector<16x256xf32>
    %9 = arith.addf %7, %8 : vector<16x256xf32>
    %cst_9 = arith.constant 0.000000e+00 : f32
    %10 = vector.broadcast %cst_9 : f32 to vector<1x256xf32>
    %11 = arith.cmpf one, %5, %10 : vector<1x256xf32>
    %cst_10 = arith.constant 0.000000e+00 : f32
    %12 = vector.broadcast %cst_10 : f32 to vector<16x256xf32>
    %13 = arith.maximumf %9, %12 : vector<16x256xf32>
    %14 = vector.shape_cast %11 : vector<1x256xi1> to vector<1x256xi1>
    %15 = vector.broadcast %14 : vector<1x256xi1> to vector<16x256xi1>
    %16 = arith.select %15, %13, %9 : vector<16x256xi1>, vector<16x256xf32>
    %c0_11 = arith.constant 0 : index
    %c0_12 = arith.constant 0 : index
    %17 = vector.load %arg7[%c0_11, %c0_12] : memref<16x256xf32, #tpu.memory_space<vmem>>, vector<16x256xf32>
    tpu.vector_store %arg7[%c0_11, %c0_12], %16 {strides = array<i32>} : memref<16x256xf32, #tpu.memory_space<vmem>>, vector<16x256xf32>,
    return
  }
  func.func @transform_0(%arg0: i32, %arg1: i32) -> (i32, i32) {
    %c0_i32 = arith.constant 0 : i32
    %c0_i32_0 = arith.constant 0 : i32
    return %arg0, %c0_i32 : i32, i32
  }
  func.func @transform_1(%arg0: i32, %arg1: i32) -> (i32, i32) {
    %c0_i32 = arith.constant 0 : i32
    %c0_i32_0 = arith.constant 0 : i32
    return %c0_i32, %arg1 : i32, i32
  }
  func.func @transform_2(%arg0: i32, %arg1: i32) -> (i32, i32) {
    %c0_i32 = arith.constant 0 : i32
    %c0_i32_0 = arith.constant 0 : i32
    return %c0_i32, %arg1 : i32, i32
  }
  func.func @transform_3(%arg0: i32, %arg1: i32) -> (i32, i32) {
    %c0_i32 = arith.constant 0 : i32
    %c0_i32_0 = arith.constant 0 : i32
    return %c0_i32, %arg1 : i32, i32
  }
  func.func @transform_4(%arg0: i32, %arg1: i32) -> (i32, i32) {
    %c0_i32 = arith.constant 0 : i32
    %c0_i32_0 = arith.constant 0 : i32
    return %c0_i32, %arg1 : i32, i32
  }
  func.func @transform_5(%arg0: i32, %arg1: i32) -> (i32, i32) {
    %c0_i32 = arith.constant 0 : i32
    return %arg0, %arg1 : i32, i32
  }
}

module attributes {stable_mosaic.version = 11 : i64} {
  func.func @kernel(%arg0: i32, %arg1: i32, %arg2: memref<16x2304xbf16, #tpu.memory_space<vmem>>, %arg3: memref<2304x256xbf16, #tpu.memory_space<vmem>>, %arg4: memref<1x256xf32, #tpu.memory_space<vmem>>, %arg5: memref<1x256xf32, #tpu.memory_space<vmem>>, %arg6: memref<16x256xf32, #tpu.memory_space<vmem>>, %arg7: memref<16x256xf32, #tpu.memory_space<vmem>>) attributes {dimension_semantics = [#tpu.dimension_semantics<parallel>, #tpu.dimension_semantics<parallel>], iteration_bounds = array<i64: 1, 1>, scalar_prefetch = 0 : i64, scratch_operands = 0 : i64, tpu.core_type = #tpu.core_type<tc>, window_params = [{transform_indices = @transform_0, window_bounds = array<i64: 16, 2304>}, {transform_indices = @transform_1, window_bounds = array<i64: 2304, 256>}, {transform_indices = @transform_2, window_bounds = array<i64: 1, 256>}, {transform_indices = @transform_3, window_bounds = array<i64: 1, 256>}, {transform_indices = @transform_4, window_bounds = array<i64: 16, 256>}, {transform_indices = @transform_5, window_bounds = array<i64: 16, 256>}]} {
    %c0 = arith.constant 0 : index
    %c0_0 = arith.constant 0 : index
    %0 = vector.load %arg2[%c0, %c0_0] : memref<16x2304xbf16, #tpu.memory_space<vmem>>, vector<16x2304xbf16>
    %c0_1 = arith.constant 0 : index
    %c0_2 = arith.constant 0 : index
    %1 = vector.load %arg3[%c0_1, %c0_2] : memref<2304x256xbf16, #tpu.memory_space<vmem>>, vector<2304x256xbf16>
    %cst = arith.constant dense<0.000000e+00> : vector<16x256xf32>
    %2 = tpu.matmul %0, %1, %cst {dimension_numbers = #tpu.dot_dimension_numbers<[1], [0], [0], [1], [0, 0, 1, 1], [], []>} : vector<16x2304xbf16>, vector<2304x256xbf16>, vector<16x256xf32> -> vector<16x256xf32>
    %c0_3 = arith.constant 0 : index
    %c0_4 = arith.constant 0 : index
    %3 = vector.load %arg4[%c0_3, %c0_4] : memref<1x256xf32, #tpu.memory_space<vmem>>, vector<1x256xf32>
    %c0_5 = arith.constant 0 : index
    %c0_6 = arith.constant 0 : index
    %4 = vector.load %arg5[%c0_5, %c0_6] : memref<1x256xf32, #tpu.memory_space<vmem>>, vector<1x256xf32>
    %c0_7 = arith.constant 0 : index
    %c0_8 = arith.constant 0 : index
    %5 = vector.load %arg6[%c0_7, %c0_8] : memref<16x256xf32, #tpu.memory_space<vmem>>, vector<16x256xf32>
    %6 = vector.broadcast %3 : vector<1x256xf32> to vector<16x256xf32>
    %7 = arith.mulf %2, %6 : vector<16x256xf32>
    %8 = vector.broadcast %4 : vector<1x256xf32> to vector<16x256xf32>
    %9 = arith.addf %7, %8 : vector<16x256xf32>
    %10 = arith.addf %9, %5 : vector<16x256xf32>
    %cst_9 = arith.constant 0.000000e+00 : f32
    %11 = vector.broadcast %cst_9 : f32 to vector<16x256xf32>
    %12 = arith.maximumf %10, %11 : vector<16x256xf32>
    %c0_10 = arith.constant 0 : index
    %c0_11 = arith.constant 0 : index
    %13 = vector.load %arg7[%c0_10, %c0_11] : memref<16x256xf32, #tpu.memory_space<vmem>>, vector<16x256xf32>
    tpu.vector_store %arg7[%c0_10, %c0_11], %12 {strides = array<i32>} : memref<16x256xf32, #tpu.memory_space<vmem>>, vector<16x256xf32>,
    return
  }
  func.func @transform_0(%arg0: i32, %arg1: i32) -> (i32, i32) {
    %c0_i32 = arith.constant 0 : i32
    %c0_i32_0 = arith.constant 0 : i32
    return %arg0, %c0_i32 : i32, i32
  }
  func.func @transform_1(%arg0: i32, %arg1: i32) -> (i32, i32) {
    %c0_i32 = arith.constant 0 : i32
    %c0_i32_0 = arith.constant 0 : i32
    return %c0_i32, %arg1 : i32, i32
  }
  func.func @transform_2(%arg0: i32, %arg1: i32) -> (i32, i32) {
    %c0_i32 = arith.constant 0 : i32
    %c0_i32_0 = arith.constant 0 : i32
    return %c0_i32, %arg1 : i32, i32
  }
  func.func @transform_3(%arg0: i32, %arg1: i32) -> (i32, i32) {
    %c0_i32 = arith.constant 0 : i32
    %c0_i32_0 = arith.constant 0 : i32
    return %c0_i32, %arg1 : i32, i32
  }
  func.func @transform_4(%arg0: i32, %arg1: i32) -> (i32, i32) {
    %c0_i32 = arith.constant 0 : i32
    return %arg0, %arg1 : i32, i32
  }
  func.func @transform_5(%arg0: i32, %arg1: i32) -> (i32, i32) {
    %c0_i32 = arith.constant 0 : i32
    return %arg0, %arg1 : i32, i32
  }
}

module attributes {stable_mosaic.version = 11 : i64} {
  func.func @kernel(%arg0: i32, %arg1: i32, %arg2: memref<16x2304xbf16, #tpu.memory_space<vmem>>, %arg3: memref<2304x128xbf16, #tpu.memory_space<vmem>>, %arg4: memref<1x128xf32, #tpu.memory_space<vmem>>, %arg5: memref<1x128xf32, #tpu.memory_space<vmem>>, %arg6: memref<1x128xf32, #tpu.memory_space<vmem>>, %arg7: memref<16x128xf32, #tpu.memory_space<vmem>>) attributes {dimension_semantics = [#tpu.dimension_semantics<parallel>, #tpu.dimension_semantics<parallel>], iteration_bounds = array<i64: 1, 1>, scalar_prefetch = 0 : i64, scratch_operands = 0 : i64, tpu.core_type = #tpu.core_type<tc>, window_params = [{transform_indices = @transform_0, window_bounds = array<i64: 16, 2304>}, {transform_indices = @transform_1, window_bounds = array<i64: 2304, 128>}, {transform_indices = @transform_2, window_bounds = array<i64: 1, 128>}, {transform_indices = @transform_3, window_bounds = array<i64: 1, 128>}, {transform_indices = @transform_4, window_bounds = array<i64: 1, 128>}, {transform_indices = @transform_5, window_bounds = array<i64: 16, 128>}]} {
    %c0 = arith.constant 0 : index
    %c0_0 = arith.constant 0 : index
    %0 = vector.load %arg2[%c0, %c0_0] : memref<16x2304xbf16, #tpu.memory_space<vmem>>, vector<16x2304xbf16>
    %c0_1 = arith.constant 0 : index
    %c0_2 = arith.constant 0 : index
    %1 = vector.load %arg3[%c0_1, %c0_2] : memref<2304x128xbf16, #tpu.memory_space<vmem>>, vector<2304x128xbf16>
    %cst = arith.constant dense<0.000000e+00> : vector<16x128xf32>
    %2 = tpu.matmul %0, %1, %cst {dimension_numbers = #tpu.dot_dimension_numbers<[1], [0], [0], [1], [0, 0, 1, 1], [], []>} : vector<16x2304xbf16>, vector<2304x128xbf16>, vector<16x128xf32> -> vector<16x128xf32>
    %c0_3 = arith.constant 0 : index
    %c0_4 = arith.constant 0 : index
    %3 = vector.load %arg4[%c0_3, %c0_4] : memref<1x128xf32, #tpu.memory_space<vmem>>, vector<1x128xf32>
    %c0_5 = arith.constant 0 : index
    %c0_6 = arith.constant 0 : index
    %4 = vector.load %arg5[%c0_5, %c0_6] : memref<1x128xf32, #tpu.memory_space<vmem>>, vector<1x128xf32>
    %c0_7 = arith.constant 0 : index
    %c0_8 = arith.constant 0 : index
    %5 = vector.load %arg6[%c0_7, %c0_8] : memref<1x128xf32, #tpu.memory_space<vmem>>, vector<1x128xf32>
    %6 = vector.broadcast %3 : vector<1x128xf32> to vector<16x128xf32>
    %7 = arith.mulf %2, %6 : vector<16x128xf32>
    %8 = vector.broadcast %4 : vector<1x128xf32> to vector<16x128xf32>
    %9 = arith.addf %7, %8 : vector<16x128xf32>
    %cst_9 = arith.constant 0.000000e+00 : f32
    %10 = vector.broadcast %cst_9 : f32 to vector<1x128xf32>
    %11 = arith.cmpf one, %5, %10 : vector<1x128xf32>
    %cst_10 = arith.constant 0.000000e+00 : f32
    %12 = vector.broadcast %cst_10 : f32 to vector<16x128xf32>
    %13 = arith.maximumf %9, %12 : vector<16x128xf32>
    %14 = vector.shape_cast %11 : vector<1x128xi1> to vector<1x128xi1>
    %15 = vector.broadcast %14 : vector<1x128xi1> to vector<16x128xi1>
    %16 = arith.select %15, %13, %9 : vector<16x128xi1>, vector<16x128xf32>
    %c0_11 = arith.constant 0 : index
    %c0_12 = arith.constant 0 : index
    %17 = vector.load %arg7[%c0_11, %c0_12] : memref<16x128xf32, #tpu.memory_space<vmem>>, vector<16x128xf32>
    tpu.vector_store %arg7[%c0_11, %c0_12], %16 {strides = array<i32>} : memref<16x128xf32, #tpu.memory_space<vmem>>, vector<16x128xf32>,
    return
  }
  func.func @transform_0(%arg0: i32, %arg1: i32) -> (i32, i32) {
    %c0_i32 = arith.constant 0 : i32
    %c0_i32_0 = arith.constant 0 : i32
    return %arg0, %c0_i32 : i32, i32
  }
  func.func @transform_1(%arg0: i32, %arg1: i32) -> (i32, i32) {
    %c0_i32 = arith.constant 0 : i32
    %c0_i32_0 = arith.constant 0 : i32
    return %c0_i32, %arg1 : i32, i32
  }
  func.func @transform_2(%arg0: i32, %arg1: i32) -> (i32, i32) {
    %c0_i32 = arith.constant 0 : i32
    %c0_i32_0 = arith.constant 0 : i32
    return %c0_i32, %arg1 : i32, i32
  }
  func.func @transform_3(%arg0: i32, %arg1: i32) -> (i32, i32) {
    %c0_i32 = arith.constant 0 : i32
    %c0_i32_0 = arith.constant 0 : i32
    return %c0_i32, %arg1 : i32, i32
  }
  func.func @transform_4(%arg0: i32, %arg1: i32) -> (i32, i32) {
    %c0_i32 = arith.constant 0 : i32
    %c0_i32_0 = arith.constant 0 : i32
    return %c0_i32, %arg1 : i32, i32
  }
  func.func @transform_5(%arg0: i32, %arg1: i32) -> (i32, i32) {
    %c0_i32 = arith.constant 0 : i32
    return %arg0, %arg1 : i32, i32
  }
}

</mosaic_0001>

<llo_original>
// kernel: battlefield_feature.10
$region0: #{battlefield_feature.10}
  #allocation0 [shape = 'u32[]', space=smem, size = 0x4, offset = 0x4, fixed_abs, tag = 'smem constant byte address 0x4 - core index']
  #allocation1 [shape = 'u32[144,128]{1,0:T(1,128)}', space=vmem, size = 0x12000, scoped, tag = 'internal scratch']
  %s0 = inlined_call_operand.vmem [shape: bf16[512,48], index: 0, kind: input, shape index: {}]
  %s1 = inlined_call_operand.vmem [shape: bf16[48,128], index: 1, kind: input, shape index: {}]
  %s2 = inlined_call_operand.vmem [shape: f32[1,128], index: 2, kind: input, shape index: {}]
  %s3 = inlined_call_operand.vmem [shape: f32[1,128], index: 3, kind: input, shape index: {}]
  %s4 = inlined_call_operand.vmem [shape: f32[1,128], index: 4, kind: input, shape index: {}]
  %s5 = inlined_call_operand.vmem [shape: f32[512,128], index: 5, kind: output, shape index: {}]
  %s6 = sld [smem:[#allocation0]]
  $region53: #{battlefield_feature.10} parent=0
    _
  %s8 = ssub.s32 1, %s6
  %s9 = scalar_select 0, %s8, %s6
  loop: start=0, step=1, limit=6
  $region2: #{battlefield_feature.10} parent=0 // loop_pre_header
    _
  $region3: #{battlefield_feature.10} parent=0 // loop_header
    %s11 = sphi 0, %s15
    %p12 = scmp.ge.s32.totalorder %s11, 6
    %s18 = sphi 0, %s30
    %s19 = sphi 0, %s26
    %s20 = sphi 0, %s18
    %s21 = sphi 0, %s19
    %s22 = sphi 0, %s20
    %s23 = sphi 0, %s21
    %s33 = sphi 0, %s35
    %s36 = sphi 0, %s33
    %s37 = sphi 0, %s36
    %s53 = sphi 0, %s37
    %s59 = sphi 0, %s61
    %s62 = sphi 0, %s59
    %s63 = sphi 0, %s62
    %s79 = sphi 0, %s63
    %s85 = sphi 0, %s87
    %s88 = sphi 0, %s85
    %s89 = sphi 0, %s88
    %s105 = sphi 0, %s89
    %s111 = sphi 0, %s113
    %s114 = sphi 0, %s111
    %s115 = sphi 0, %s114
    %s131 = sphi 0, %s115
    %s137 = sphi 0, %s139
    %s140 = sphi 0, %s137
    %s141 = sphi 0, %s140
    %s157 = sphi 0, %s141
    %s165 = sphi 0, %s167
    %s168 = sphi 0, %s165
    %s169 = sphi 0, %s168
    %s185 = sphi 0, %s169
  $region4: #{battlefield_feature.10} parent=0 // loop_header_branch
    %14 = sbr.rel (%p12) target = $region8
  $region5: #{battlefield_feature.10} parent=0 // loop_body
    %s16 = ssub.s32 %s11, 1
    %s17 = ssub.s32 %s11, 2
    %s24 = sadd.s32 1, %s19
    %p25 = scmp.ge.s32.totalorder %s24, 1
    %s26 = scalar_select %p25, 0, %s24
    %s27 = sadd.s32 1, %s18
    %s28 = scalar_select %p25, %s27, %s18
    %p29 = scmp.ge.s32.totalorder %s28, 4
    %s30 = scalar_select %p29, 0, %s28
    %s31 = ssub.s32 %s18, %s30
    %p32 = scmp.eq.s32.totalorder %s31, 0
    %s34 = sadd.s32 %s33, 1
    %s35 = scalar_select %p32, %s33, %s34
    %p38 = pneg %p32
    %p39 = scmp.eq.s32.totalorder %s11, 3
    %p40 = por %p38, %p39
    %p41 = scmp.ne.s32.totalorder %s33, %s36
    %p42 = scmp.eq.s32.totalorder %s11, 0
    %p43 = por %p41, %p42
    %p44 = scmp.ne.s32.totalorder %s33, %s36
    %p45 = scmp.eq.s32.totalorder %s16, 3
    %p46 = por %p44, %p45
    %p47 = scmp.ne.s32.totalorder %s36, %s37
    %p48 = scmp.eq.s32.totalorder %s16, 0
    %p49 = por %p47, %p48
    %p50 = scmp.ne.s32.totalorder %s36, %s37
    %p51 = scmp.eq.s32.totalorder %s17, 3
    %p52 = por %p50, %p51
    %p54 = scmp.ne.s32.totalorder %s37, %s53
    %p55 = scmp.eq.s32.totalorder %s17, 0
    %p56 = por %p54, %p55
    %s57 = ssub.s32 %s19, %s26
    %p58 = scmp.eq.s32.totalorder %s57, 0
    %s60 = sadd.s32 %s59, 1
    %s61 = scalar_select %p58, %s59, %s60
    %p64 = pneg %p58
    %p65 = scmp.eq.s32.totalorder %s11, 3
    %p66 = por %p64, %p65
    %p67 = scmp.ne.s32.totalorder %s59, %s62
    %p68 = scmp.eq.s32.totalorder %s11, 0
    %p69 = por %p67, %p68
    %p70 = scmp.ne.s32.totalorder %s59, %s62
    %p71 = scmp.eq.s32.totalorder %s16, 3
    %p72 = por %p70, %p71
    %p73 = scmp.ne.s32.totalorder %s62, %s63
    %p74 = scmp.eq.s32.totalorder %s16, 0
    %p75 = por %p73, %p74
    %p76 = scmp.ne.s32.totalorder %s62, %s63
    %p77 = scmp.eq.s32.totalorder %s17, 3
    %p78 = por %p76, %p77
    %p80 = scmp.ne.s32.totalorder %s63, %s79
    %p81 = scmp.eq.s32.totalorder %s17, 0
    %p82 = por %p80, %p81
    %s83 = ssub.s32 %s19, %s26
    %p84 = scmp.eq.s32.totalorder %s83, 0
    %s86 = sadd.s32 %s85, 1
    %s87 = scalar_select %p84, %s85, %s86
    %p90 = pneg %p84
    %p91 = scmp.eq.s32.totalorder %s11, 3
    %p92 = por %p90, %p91
    %p93 = scmp.ne.s32.totalorder %s85, %s88
    %p94 = scmp.eq.s32.totalorder %s11, 0
    %p95 = por %p93, %p94
    %p96 = scmp.ne.s32.totalorder %s85, %s88
    %p97 = scmp.eq.s32.totalorder %s16, 3
    %p98 = por %p96, %p97
    %p99 = scmp.ne.s32.totalorder %s88, %s89
    %p100 = scmp.eq.s32.totalorder %s16, 0
    %p101 = por %p99, %p100
    %p102 = scmp.ne.s32.totalorder %s88, %s89
    %p103 = scmp.eq.s32.totalorder %s17, 3
    %p104 = por %p102, %p103
    %p106 = scmp.ne.s32.totalorder %s89, %s105
    %p107 = scmp.eq.s32.totalorder %s17, 0
    %p108 = por %p106, %p107
    %s109 = ssub.s32 %s19, %s26
    %p110 = scmp.eq.s32.totalorder %s109, 0
    %s112 = sadd.s32 %s111, 1
    %s113 = scalar_select %p110, %s111, %s112
    %p116 = pneg %p110
    %p117 = scmp.eq.s32.totalorder %s11, 3
    %p118 = por %p116, %p117
    %p119 = scmp.ne.s32.totalorder %s111, %s114
    %p120 = scmp.eq.s32.totalorder %s11, 0
    %p121 = por %p119, %p120
    %p122 = scmp.ne.s32.totalorder %s111, %s114
    %p123 = scmp.eq.s32.totalorder %s16, 3
    %p124 = por %p122, %p123
    %p125 = scmp.ne.s32.totalorder %s114, %s115
    %p126 = scmp.eq.s32.totalorder %s16, 0
    %p127 = por %p125, %p126
    %p128 = scmp.ne.s32.totalorder %s114, %s115
    %p129 = scmp.eq.s32.totalorder %s17, 3
    %p130 = por %p128, %p129
    %p132 = scmp.ne.s32.totalorder %s115, %s131
    %p133 = scmp.eq.s32.totalorder %s17, 0
    %p134 = por %p132, %p133
    %s135 = ssub.s32 %s19, %s26
    %p136 = scmp.eq.s32.totalorder %s135, 0
    %s138 = sadd.s32 %s137, 1
    %s139 = scalar_select %p136, %s137, %s138
    %p142 = pneg %p136
    %p143 = scmp.eq.s32.totalorder %s11, 3
    %p144 = por %p142, %p143
    %p145 = scmp.ne.s32.totalorder %s137, %s140
    %p146 = scmp.eq.s32.totalorder %s11, 0
    %p147 = por %p145, %p146
    %p148 = scmp.ne.s32.totalorder %s137, %s140
    %p149 = scmp.eq.s32.totalorder %s16, 3
    %p150 = por %p148, %p149
    %p151 = scmp.ne.s32.totalorder %s140, %s141
    %p152 = scmp.eq.s32.totalorder %s16, 0
    %p153 = por %p151, %p152
    %p154 = scmp.ne.s32.totalorder %s140, %s141
    %p155 = scmp.eq.s32.totalorder %s17, 3
    %p156 = por %p154, %p155
    %p158 = scmp.ne.s32.totalorder %s141, %s157
    %p159 = scmp.eq.s32.totalorder %s17, 0
    %p160 = por %p158, %p159
    %s161 = ssub.s32 %s18, %s30
    %s162 = ssub.s32 %s19, %s26
    %s163 = sor.u32 %s161, %s162
    %p164 = scmp.eq.s32.totalorder %s163, 0
    %s166 = sadd.s32 %s165, 1
    %s167 = scalar_select %p164, %s165, %s166
    %p170 = pneg %p164
    %p171 = scmp.eq.s32.totalorder %s11, 3
    %p172 = por %p170, %p171
    %p173 = scmp.ne.s32.totalorder %s165, %s168
    %p174 = scmp.eq.s32.totalorder %s11, 0
    %p175 = por %p173, %p174
    %p176 = scmp.ne.s32.totalorder %s165, %s168
    %p177 = scmp.eq.s32.totalorder %s16, 3
    %p178 = por %p176, %p177
    %p179 = scmp.ne.s32.totalorder %s168, %s169
    %p180 = scmp.eq.s32.totalorder %s16, 0
    %p181 = por %p179, %p180
    %p182 = scmp.ne.s32.totalorder %s168, %s169
    %p183 = scmp.eq.s32.totalorder %s17, 3
    %p184 = por %p182, %p183
    %p186 = scmp.ne.s32.totalorder %s169, %s185
    %p187 = scmp.eq.s32.totalorder %s17, 0
    %p188 = por %p186, %p187
    %p189 = scmp.le.s32.totalorder 1, %s11
    %p190 = scmp.lt.s32.totalorder %s11, 5
    %p191 = pnand %p189, %p190
    %p192 = pneg %p191
    // Predicated region
    $region9: #{battlefield_feature.10} parent=5 // pred_check
      _
    $region10: #{battlefield_feature.10} parent=5 // pred_check_branch
      %194 = sbr.rel (%p191) target = $region12
    $region11: #{battlefield_feature.10} parent=5 // pred_region
      %s195 = ssub.s32 %s11, 1
      // Predicated region
      $region13: #{battlefield_feature.10} parent=11 // pred_check
        %p196 = pneg %p75
      $region14: #{battlefield_feature.10} parent=11 // pred_check_branch
        %198 = sbr.rel (%p196) target = $region16
      $region15: #{battlefield_feature.10} parent=11 // pred_region
        %p199 = scmp.lt.s32.totalorder %s21, 0
        %s200 = scalar_select %p199, %s21, 0
        %s201 = smul.addr %s200, 4
        %s202 = scalar_lea.vmem %s1, %s201
      $region16: #{battlefield_feature.10} parent=11 // pred_fallthru
        _
      // Predicated region
      $region17: #{battlefield_feature.10} parent=11 // pred_check
        %p203 = pneg %p101
      $region18: #{battlefield_feature.10} parent=11 // pred_check_branch
        %205 = sbr.rel (%p203) target = $region20
      $region19: #{battlefield_feature.10} parent=11 // pred_region
        %p206 = scmp.lt.s32.totalorder %s21, 0
        %s207 = scalar_select %p206, %s21, 0
        %s208 = scalar_lea.vmem %s2, %s207
      $region20: #{battlefield_feature.10} parent=11 // pred_fallthru
        _
      // Predicated region
      $region21: #{battlefield_feature.10} parent=11 // pred_check
        %p209 = pneg %p127
      $region22: #{battlefield_feature.10} parent=11 // pred_check_branch
        %211 = sbr.rel (%p209) target = $region24
      $region23: #{battlefield_feature.10} parent=11 // pred_region
        %p212 = scmp.lt.s32.totalorder %s21, 0
        %s213 = scalar_select %p212, %s21, 0
        %s214 = scalar_lea.vmem %s3, %s213
      $region24: #{battlefield_feature.10} parent=11 // pred_fallthru
        _
      // Predicated region
      $region25: #{battlefield_feature.10} parent=11 // pred_check
        %p215 = pneg %p153
      $region26: #{battlefield_feature.10} parent=11 // pred_check_branch
        %217 = sbr.rel (%p215) target = $region28
      $region27: #{battlefield_feature.10} parent=11 // pred_region
        %p218 = scmp.lt.s32.totalorder %s21, 0
        %s219 = scalar_select %p218, %s21, 0
        %s220 = scalar_lea.vmem %s4, %s219
      $region28: #{battlefield_feature.10} parent=11 // pred_fallthru
        _
    $region12: #{battlefield_feature.10} parent=5 // pred_fallthru
      _
    %p221 = scmp.lt.s32.totalorder %s11, 4
    // Predicated region
    $region29: #{battlefield_feature.10} parent=5 // pred_check
      %p222 = pneg %p221
    $region30: #{battlefield_feature.10} parent=5 // pred_check_branch
      %224 = sbr.rel (%p222) target = $region32
    $region31: #{battlefield_feature.10} parent=5 // pred_region
      // Predicated region
      $region33: #{battlefield_feature.10} parent=31 // pred_check
        %p225 = pneg %p43
      $region34: #{battlefield_feature.10} parent=31 // pred_check_branch
        %227 = sbr.rel (%p225) target = $region36
      $region35: #{battlefield_feature.10} parent=31 // pred_region
        %s228 = smul.u32 16, %s18
        %p229 = scmp.lt.s32.totalorder %s228, 63
        %s230 = scalar_select %p229, %s228, 63
        %s231 = smul.addr %s230, 4
        %s232 = scalar_lea.vmem %s0, %s231
        %s233 = smul.u32 16, %s18
      $region36: #{battlefield_feature.10} parent=31 // pred_fallthru
        _
    $region32: #{battlefield_feature.10} parent=5 // pred_fallthru
      _
    %p234 = scmp.le.s32.totalorder 1, %s11
    %p235 = scmp.lt.s32.totalorder %s11, 5
    %p236 = pnand %p234, %p235
    %p237 = pneg %p236
    // Predicated region
    $region37: #{battlefield_feature.10} parent=5 // pred_check
      _
    $region38: #{battlefield_feature.10} parent=5 // pred_check_branch
      %239 = sbr.rel (%p236) target = $region40
    $region39: #{battlefield_feature.10} parent=5 // pred_region
      %s240 = ssub.s32 %s11, 1
      %s241 = smul.u32 16, %s20
      %p242 = scmp.lt.s32.totalorder %s241, 63
      %s243 = scalar_select %p242, %s241, 63
      %s244 = smul.addr %s243, 4
      %s245 = scalar_lea.vmem %s0, %s244
      %p246 = pneg %p49
      %p247 = pneg %p46
      %p248 = scmp.lt.s32.totalorder %s21, 0
      %s249 = scalar_select %p248, %s21, 0
      %s250 = smul.addr %s249, 4
      %s251 = scalar_lea.vmem %s1, %s250
      %p252 = pneg %p75
      %p253 = pneg %p72
      %p254 = scmp.lt.s32.totalorder %s21, 0
      %s255 = scalar_select %p254, %s21, 0
      %s256 = scalar_lea.vmem %s2, %s255
      %p257 = pneg %p101
      %p258 = pneg %p98
      %p259 = scmp.lt.s32.totalorder %s21, 0
      %s260 = scalar_select %p259, %s21, 0
      %s261 = scalar_lea.vmem %s3, %s260
      %p262 = pneg %p127
      %p263 = pneg %p124
      %p264 = scmp.lt.s32.totalorder %s21, 0
      %s265 = scalar_select %p264, %s21, 0
      %s266 = scalar_lea.vmem %s4, %s265
      %p267 = pneg %p153
      %p268 = pneg %p150
      %p269 = pneg %p181
      %p270 = pneg %p178
      %s271 = smul.u32 16, %s20
      %p272 = scmp.lt.s32.totalorder %s271, 63
      %s273 = scalar_select %p272, %s271, 63
      %p274 = scmp.lt.s32.totalorder %s21, 0
      %s275 = scalar_select %p274, %s21, 0
      %s276 = sadd.s32 %s275, %s273
      %s277 = smul.addr %s276, 8
      %s278 = scalar_lea.vmem %s5, %s277
      %s279 = smul.u32 16, %s20
      %p280 = scmp.lt.s32.totalorder %s279, 63
      %s281 = scalar_select %p280, %s279, 63
      %s282 = smul.addr %s281, 4
      %s283 = scalar_lea.vmem %s0, %s282
      %s284 = smul.u32 16, %s20
      %p285 = scmp.lt.s32.totalorder %s21, 0
      %s286 = scalar_select %p285, %s21, 0
      %s287 = smul.addr %s286, 4
      %s288 = scalar_lea.vmem %s1, %s287
      %p289 = scmp.lt.s32.totalorder %s21, 0
      %s290 = scalar_select %p289, %s21, 0
      %s291 = scalar_lea.vmem %s2, %s290
      %p292 = scmp.lt.s32.totalorder %s21, 0
      %s293 = scalar_select %p292, %s21, 0
      %s294 = scalar_lea.vmem %s3, %s293
      %p295 = scmp.lt.s32.totalorder %s21, 0
      %s296 = scalar_select %p295, %s21, 0
      %s297 = scalar_lea.vmem %s4, %s296
      %s298 = smul.u32 16, %s20
      %p299 = scmp.lt.s32.totalorder %s298, 63
      %s300 = scalar_select %p299, %s298, 63
      %p301 = scmp.lt.s32.totalorder %s21, 0
      %s302 = scalar_select %p301, %s21, 0
      %s303 = sadd.s32 %s302, %s300
      %s304 = smul.addr %s303, 8
      %s305 = scalar_lea.vmem %s5, %s304
      %s306 = smul.u32 16, %s20
      %v308 = vld [vmem:[%s283] sm:$0xf]
      %v309 = vld [vmem:[%s283 + $0x4] sm:$0xf]
      %v310 = vld [vmem:[%s283 + $0x8] sm:$0xf]
      %v311 = vld [vmem:[%s283 + $0xc] sm:$0xf]
      %v312 = vld [vmem:[%s283 + $0x10] sm:$0xf]
      %v313 = vld [vmem:[%s283 + $0x14] sm:$0xf]
      %v314 = vld [vmem:[%s283 + $0x18] sm:$0xf]
      %v315 = vld [vmem:[%s283 + $0x1c] sm:$0xf]
      %v316 = vld [vmem:[%s283 + $0x20] sm:$0xf]
      %v317 = vld [vmem:[%s283 + $0x24] sm:$0xf]
      %v318 = vld [vmem:[%s283 + $0x28] sm:$0xf]
      %v319 = vld [vmem:[%s283 + $0x2c] sm:$0xf]
      %v320 = vld [vmem:[%s283 + $0x30] sm:$0xf]
      %v321 = vld [vmem:[%s283 + $0x34] sm:$0xf]
      %v322 = vld [vmem:[%s283 + $0x38] sm:$0xf]
      %v323 = vld [vmem:[%s283 + $0x3c] sm:$0xf]
      %v324 = vld [vmem:[%s288] sm:$0xf]
      %v325 = vld [vmem:[%s288 + $0x4] sm:$0xf]
      %v326 = vld [vmem:[%s288 + $0x8] sm:$0xf]
      %v327 = vld [vmem:[%s288 + $0xc] sm:$0xf]
      %v328 = vld [vmem:[%s288 + $0x10] sm:$0xf]
      %v329 = vld [vmem:[%s288 + $0x14] sm:$0xf]
      %v346 = vunpack.c.l.b16 %v308
      %v347 = vunpack.c.l.b16 %v309
      %v348 = vunpack.c.l.b16 %v310
      %v349 = vunpack.c.l.b16 %v311
      %v350 = vunpack.c.l.b16 %v312
      %v351 = vunpack.c.l.b16 %v313
      %v352 = vunpack.c.l.b16 %v314
      %v353 = vunpack.c.l.b16 %v315
      %v354 = vunpack.c.l.b16 %v316
      %v355 = vunpack.c.l.b16 %v317
      %v356 = vunpack.c.l.b16 %v318
      %v357 = vunpack.c.l.b16 %v319
      %v358 = vunpack.c.l.b16 %v320
      %v359 = vunpack.c.l.b16 %v321
      %v360 = vunpack.c.l.b16 %v322
      %v361 = vunpack.c.l.b16 %v323
      %v362 = vpack.c.b16 %v347, %v346
      %v363 = vpack.c.b16 %v349, %v348
      %v364 = vpack.c.b16 %v351, %v350
      %v365 = vpack.c.b16 %v353, %v352
      %v366 = vpack.c.b16 %v355, %v354
      %v367 = vpack.c.b16 %v357, %v356
      %v368 = vpack.c.b16 %v359, %v358
      %v369 = vpack.c.b16 %v361, %v360
      %v376 = vunpack.c.l.b16 %v324
      %v377 = vunpack.c.l.b16 %v325
      %v378 = vunpack.c.l.b16 %v326
      %v379 = vunpack.c.l.b16 %v327
      %v380 = vunpack.c.l.b16 %v328
      %v381 = vunpack.c.l.b16 %v329
      %v382 = vpack.c.b16 %v377, %v376
      %v383 = vpack.c.b16 %v379, %v378
      %v384 = vpack.c.b16 %v381, %v380
      %vm388 = vcmask 392192
      %v390 = vsel %vm388, %v362, 0
      %v393 = vsel %vm388, %v363, 0
      %v396 = vsel %vm388, %v364, 0
      %v399 = vsel %vm388, %v365, 0
      %v402 = vsel %vm388, %v366, 0
      %v405 = vsel %vm388, %v367, 0
      %v408 = vsel %vm388, %v368, 0
      %v411 = vsel %vm388, %v369, 0
      %413 = vmatprep.subr.bf16.mxu0 0
      %414 = vmatpush1.bf16.msra.mxu0 %v382
      %415 = vmatprep.subr.bf16.mxu0 0
      %416 = vmatpush1.bf16.msra.mxu0 %v383
      %417 = vmatprep.subr.bf16.mxu0 0
      %418 = vmatpush1.bf16.msra.mxu0 %v384
      %419 = vmatprep.subr.bf16.mxu0 0
      %420 = vmatpush1.bf16.msra.mxu0 0
      %421 = vmatprep.subr.bf16.mxu0 0
      %422 = vmatpush1.bf16.msra.mxu0 0
      %423 = vmatprep.subr.bf16.mxu0 0
      %424 = vmatpush1.bf16.msra.mxu0 0
      %425 = vmatprep.subr.bf16.mxu0 0
      %426 = vmatpush1.bf16.msra.mxu0 0
      %427 = vmatprep.subr.bf16.mxu0 0
      %428 = vmatpush1.bf16.msra.mxu0 0
      %429 = vmatprep.subr.bf16.mxu0 0
      %430 = vmatpush1.bf16.msra.mxu0 0
      %431 = vmatprep.subr.bf16.mxu0 0
      %432 = vmatpush1.bf16.msra.mxu0 0
      %433 = vmatprep.subr.bf16.mxu0 0
      %434 = vmatpush1.bf16.msra.mxu0 0
      %435 = vmatprep.subr.bf16.mxu0 0
      %436 = vmatpush1.bf16.msra.mxu0 0
      %437 = vmatprep.subr.bf16.mxu0 0
      %438 = vmatpush1.bf16.msra.mxu0 0
      %439 = vmatprep.subr.bf16.mxu0 0
      %440 = vmatpush1.bf16.msra.mxu0 0
      %441 = vmatprep.subr.bf16.mxu0 0
      %442 = vmatpush1.bf16.msra.mxu0 0
      %443 = vmatprep.subr.bf16.mxu0 0
      %444 = vmatpush1.bf16.msra.mxu0 0
      %445 = vmatprep.mubr.bf16.mxu0 0
      %446 = vmatmul.mubr.bf16.gmra.mrb[0].mxu0 %v390
      %v447 = vpop.f32.mrb[0].mxu0
      %v448 = vadd.f32 0.0, %v447
      %v449 = vpop.f32.mrb[0].mxu0
      %v450 = vpop.f32.mrb[0].mxu0
      %v451 = vadd.f32 0.0, %v450
      %v452 = vpop.f32.mrb[0].mxu0
      %453 = vmatprep.mubr.bf16.mxu0 0
      %454 = vmatmul.mubr.bf16.gmra.mrb[0].mxu0 %v393
      %v455 = vpop.f32.mrb[0].mxu0
      %v456 = vadd.f32 0.0, %v455
      %v457 = vpop.f32.mrb[0].mxu0
      %v458 = vpop.f32.mrb[0].mxu0
      %v459 = vadd.f32 0.0, %v458
      %v460 = vpop.f32.mrb[0].mxu0
      %461 = vmatprep.mubr.bf16.mxu0 0
      %462 = vmatmul.mubr.bf16.gmra.mrb[0].mxu0 %v396
      %v463 = vpop.f32.mrb[0].mxu0
      %v464 = vadd.f32 0.0, %v463
      %v465 = vpop.f32.mrb[0].mxu0
      %v466 = vpop.f32.mrb[0].mxu0
      %v467 = vadd.f32 0.0, %v466
      %v468 = vpop.f32.mrb[0].mxu0
      %469 = vmatprep.mubr.bf16.mxu0 0
      %470 = vmatmul.mubr.bf16.gmra.mrb[0].mxu0 %v399
      %v471 = vpop.f32.mrb[0].mxu0
      %v472 = vadd.f32 0.0, %v471
      %v473 = vpop.f32.mrb[0].mxu0
      %v474 = vpop.f32.mrb[0].mxu0
      %v475 = vadd.f32 0.0, %v474
      %v476 = vpop.f32.mrb[0].mxu0
      %477 = vmatprep.mubr.bf16.mxu0 0
      %478 = vmatmul.mubr.bf16.gmra.mrb[0].mxu0 %v402
      %v479 = vpop.f32.mrb[0].mxu0
      %v480 = vadd.f32 0.0, %v479
      %v481 = vpop.f32.mrb[0].mxu0
      %v482 = vpop.f32.mrb[0].mxu0
      %v483 = vadd.f32 0.0, %v482
      %v484 = vpop.f32.mrb[0].mxu0
      %485 = vmatprep.mubr.bf16.mxu0 0
      %486 = vmatmul.mubr.bf16.gmra.mrb[0].mxu0 %v405
      %v487 = vpop.f32.mrb[0].mxu0
      %v488 = vadd.f32 0.0, %v487
      %v489 = vpop.f32.mrb[0].mxu0
      %v490 = vpop.f32.mrb[0].mxu0
      %v491 = vadd.f32 0.0, %v490
      %v492 = vpop.f32.mrb[0].mxu0
      %493 = vmatprep.mubr.bf16.mxu0 0
      %494 = vmatmul.mubr.bf16.gmra.mrb[0].mxu0 %v408
      %v495 = vpop.f32.mrb[0].mxu0
      %v496 = vadd.f32 0.0, %v495
      %v497 = vpop.f32.mrb[0].mxu0
      %v498 = vpop.f32.mrb[0].mxu0
      %v499 = vadd.f32 0.0, %v498
      %v500 = vpop.f32.mrb[0].mxu0
      %501 = vmatprep.mubr.bf16.mxu0 0
      %502 = vmatmul.mubr.bf16.gmra.mrb[0].mxu0 %v411
      %v503 = vpop.f32.mrb[0].mxu0
      %v504 = vadd.f32 0.0, %v503
      %v505 = vpop.f32.mrb[0].mxu0
      %v506 = vpop.f32.mrb[0].mxu0
      %v507 = vadd.f32 0.0, %v506
      %v508 = vpop.f32.mrb[0].mxu0
      %509 = vdwg.mxu0
      %v510 = vld [vmem:[%s291] sm:$0x1]
      %v511 = vld [vmem:[%s294] sm:$0x1]
      %v512 = vld [vmem:[%s297] sm:$0x1]
      %v514 = vlaneseq
      %v515 = vshrl.u32 %v514, 7
      %v516 = vsub.s32 0, %v515
      %v517 = vrot.slane %v510, %v516
      %v519 = vmul.f32 %v448, %v517
      %v520 = vmul.f32 %v451, %v517
      %v521 = vmul.f32 %v456, %v517
      %v522 = vmul.f32 %v459, %v517
      %v523 = vmul.f32 %v464, %v517
      %v524 = vmul.f32 %v467, %v517
      %v525 = vmul.f32 %v472, %v517
      %v526 = vmul.f32 %v475, %v517
      %v527 = vmul.f32 %v480, %v517
      %v528 = vmul.f32 %v483, %v517
      %v529 = vmul.f32 %v488, %v517
      %v530 = vmul.f32 %v491, %v517
      %v531 = vmul.f32 %v496, %v517
      %v532 = vmul.f32 %v499, %v517
      %v533 = vmul.f32 %v504, %v517
      %v534 = vmul.f32 %v507, %v517
      %v536 = vlaneseq
      %v537 = vshrl.u32 %v536, 7
      %v538 = vsub.s32 0, %v537
      %v539 = vrot.slane %v511, %v538
      %v541 = vadd.f32 %v519, %v539
      %v542 = vadd.f32 %v520, %v539
      %v543 = vadd.f32 %v521, %v539
      %v544 = vadd.f32 %v522, %v539
      %v545 = vadd.f32 %v523, %v539
      %v546 = vadd.f32 %v524, %v539
      %v547 = vadd.f32 %v525, %v539
      %v548 = vadd.f32 %v526, %v539
      %v549 = vadd.f32 %v527, %v539
      %v550 = vadd.f32 %v528, %v539
      %v551 = vadd.f32 %v529, %v539
      %v552 = vadd.f32 %v530, %v539
      %v553 = vadd.f32 %v531, %v539
      %v554 = vadd.f32 %v532, %v539
      %v555 = vadd.f32 %v533, %v539
      %v556 = vadd.f32 %v534, %v539
      %vm557 = vcmp.ne.f32.partialorder %v512, 0.0
      %v558 = vmax.f32 %v541, 0.0
      %v559 = vmax.f32 %v542, 0.0
      %v560 = vmax.f32 %v543, 0.0
      %v561 = vmax.f32 %v544, 0.0
      %v562 = vmax.f32 %v545, 0.0
      %v563 = vmax.f32 %v546, 0.0
      %v564 = vmax.f32 %v547, 0.0
      %v565 = vmax.f32 %v548, 0.0
      %v566 = vmax.f32 %v549, 0.0
      %v567 = vmax.f32 %v550, 0.0
      %v568 = vmax.f32 %v551, 0.0
      %v569 = vmax.f32 %v552, 0.0
      %v570 = vmax.f32 %v553, 0.0
      %v571 = vmax.f32 %v554, 0.0
      %v572 = vmax.f32 %v555, 0.0
      %v573 = vmax.f32 %v556, 0.0
      %v574 = vsel %vm557, 1, 0
      %v575 = vlaneseq
      %v576 = vshrl.u32 %v575, 7
      %v577 = vsub.s32 0, %v576
      %v578 = vrot.slane %v574, %v577
      %vm579 = vcmp.eq.s32.totalorder %v578, 1
      %v580 = vsel %vm579, %v558, %v541
      %v581 = vsel %vm579, %v559, %v542
      %v582 = vsel %vm579, %v560, %v543
      %v583 = vsel %vm579, %v561, %v544
      %v584 = vsel %vm579, %v562, %v545
      %v585 = vsel %vm579, %v563, %v546
      %v586 = vsel %vm579, %v564, %v547
      %v587 = vsel %vm579, %v565, %v548
      %v588 = vsel %vm579, %v566, %v549
      %v589 = vsel %vm579, %v567, %v550
      %v590 = vsel %vm579, %v568, %v551
      %v591 = vsel %vm579, %v569, %v552
      %v592 = vsel %vm579, %v570, %v553
      %v593 = vsel %vm579, %v571, %v554
      %v594 = vsel %vm579, %v572, %v555
      %v595 = vsel %vm579, %v573, %v556
      %596 = vst [vmem:[%s305] sm:$0xff] %v580
      %597 = vst [vmem:[%s305 + $0x8] sm:$0xff] %v581
      %598 = vst [vmem:[%s305 + $0x10] sm:$0xff] %v582
      %599 = vst [vmem:[%s305 + $0x18] sm:$0xff] %v583
      %600 = vst [vmem:[%s305 + $0x20] sm:$0xff] %v584
      %601 = vst [vmem:[%s305 + $0x28] sm:$0xff] %v585
      %602 = vst [vmem:[%s305 + $0x30] sm:$0xff] %v586
      %603 = vst [vmem:[%s305 + $0x38] sm:$0xff] %v587
      %604 = vst [vmem:[%s305 + $0x40] sm:$0xff] %v588
      %605 = vst [vmem:[%s305 + $0x48] sm:$0xff] %v589
      %606 = vst [vmem:[%s305 + $0x50] sm:$0xff] %v590
      %607 = vst [vmem:[%s305 + $0x58] sm:$0xff] %v591
      %608 = vst [vmem:[%s305 + $0x60] sm:$0xff] %v592
      %609 = vst [vmem:[%s305 + $0x68] sm:$0xff] %v593
      %610 = vst [vmem:[%s305 + $0x70] sm:$0xff] %v594
      %611 = vst [vmem:[%s305 + $0x78] sm:$0xff] %v595
      %s612 = smul.u32 16, %s20
      %p613 = scmp.lt.s32.totalorder %s612, 63
      %s614 = scalar_select %p613, %s612, 63
      %p615 = scmp.lt.s32.totalorder %s21, 0
      %s616 = scalar_select %p615, %s21, 0
      %s617 = sadd.s32 %s616, %s614
      %s618 = smul.addr %s617, 8
      %s619 = scalar_lea.vmem %s5, %s618
      // Predicated region
      $region41: #{battlefield_feature.10} parent=39 // pred_check
        %p620 = pneg %p178
      $region42: #{battlefield_feature.10} parent=39 // pred_check_branch
        %622 = sbr.rel (%p620) target = $region44
      $region43: #{battlefield_feature.10} parent=39 // pred_region
        %s623 = smul.u32 16, %s20
      $region44: #{battlefield_feature.10} parent=39 // pred_fallthru
        _
    $region40: #{battlefield_feature.10} parent=5 // pred_fallthru
      _
    %p624 = scmp.le.s32.totalorder 2, %s11
    // Predicated region
    $region45: #{battlefield_feature.10} parent=5 // pred_check
      %p625 = pneg %p624
    $region46: #{battlefield_feature.10} parent=5 // pred_check_branch
      %627 = sbr.rel (%p625) target = $region48
    $region47: #{battlefield_feature.10} parent=5 // pred_region
      %s628 = ssub.s32 %s11, 2
      // Predicated region
      $region49: #{battlefield_feature.10} parent=47 // pred_check
        %p629 = pneg %p184
      $region50: #{battlefield_feature.10} parent=47 // pred_check_branch
        %631 = sbr.rel (%p629) target = $region52
      $region51: #{battlefield_feature.10} parent=47 // pred_region
        %s632 = smul.u32 16, %s22
        %p633 = scmp.lt.s32.totalorder %s632, 63
        %s634 = scalar_select %p633, %s632, 63
        %p635 = scmp.lt.s32.totalorder %s23, 0
        %s636 = scalar_select %p635, %s23, 0
        %s637 = sadd.s32 %s636, %s634
        %s638 = smul.addr %s637, 8
        %s639 = scalar_lea.vmem %s5, %s638
      $region52: #{battlefield_feature.10} parent=47 // pred_fallthru
        _
    $region48: #{battlefield_feature.10} parent=5 // pred_fallthru
      _
  $region6: #{battlefield_feature.10} parent=0 // loop_footer
    %s15 = sadd.s32 1, %s11
  $region7: #{battlefield_feature.10} parent=0 // loop_footer_branch
    %10 = sbr.rel target = $region3
  $region8: #{battlefield_feature.10} parent=0 // loop_exit
    _

// kernel: battlefield_feature.11
$region0: #{battlefield_feature.11}
  #allocation0 [shape = 'u32[]', space=smem, size = 0x4, offset = 0x4, fixed_abs, tag = 'smem constant byte address 0x4 - core index']
  #allocation1 [shape = 'u32[144,128]{1,0:T(1,128)}', space=vmem, size = 0x12000, scoped, tag = 'internal scratch']
  %s0 = inlined_call_operand.vmem [shape: bf16[512,288], index: 0, kind: input, shape index: {}]
  %s1 = inlined_call_operand.vmem [shape: bf16[288,128], index: 1, kind: input, shape index: {}]
  %s2 = inlined_call_operand.vmem [shape: f32[1,128], index: 2, kind: input, shape index: {}]
  %s3 = inlined_call_operand.vmem [shape: f32[1,128], index: 3, kind: input, shape index: {}]
  %s4 = inlined_call_operand.vmem [shape: f32[1,128], index: 4, kind: input, shape index: {}]
  %s5 = inlined_call_operand.vmem [shape: f32[512,128], index: 5, kind: output, shape index: {}]
  %s6 = sld [smem:[#allocation0]]
  $region53: #{battlefield_feature.11} parent=0
    _
  %s8 = ssub.s32 1, %s6
  %s9 = scalar_select 0, %s8, %s6
  loop: start=0, step=1, limit=6
  $region2: #{battlefield_feature.11} parent=0 // loop_pre_header
    _
  $region3: #{battlefield_feature.11} parent=0 // loop_header
    %s11 = sphi 0, %s15
    %p12 = scmp.ge.s32.totalorder %s11, 6
    %s18 = sphi 0, %s30
    %s19 = sphi 0, %s26
    %s20 = sphi 0, %s18
    %s21 = sphi 0, %s19
    %s22 = sphi 0, %s20
    %s23 = sphi 0, %s21
    %s33 = sphi 0, %s35
    %s36 = sphi 0, %s33
    %s37 = sphi 0, %s36
    %s53 = sphi 0, %s37
    %s59 = sphi 0, %s61
    %s62 = sphi 0, %s59
    %s63 = sphi 0, %s62
    %s79 = sphi 0, %s63
    %s85 = sphi 0, %s87
    %s88 = sphi 0, %s85
    %s89 = sphi 0, %s88
    %s105 = sphi 0, %s89
    %s111 = sphi 0, %s113
    %s114 = sphi 0, %s111
    %s115 = sphi 0, %s114
    %s131 = sphi 0, %s115
    %s137 = sphi 0, %s139
    %s140 = sphi 0, %s137
    %s141 = sphi 0, %s140
    %s157 = sphi 0, %s141
    %s165 = sphi 0, %s167
    %s168 = sphi 0, %s165
    %s169 = sphi 0, %s168
    %s185 = sphi 0, %s169
  $region4: #{battlefield_feature.11} parent=0 // loop_header_branch
    %14 = sbr.rel (%p12) target = $region8
  $region5: #{battlefield_feature.11} parent=0 // loop_body
    %s16 = ssub.s32 %s11, 1
    %s17 = ssub.s32 %s11, 2
    %s24 = sadd.s32 1, %s19
    %p25 = scmp.ge.s32.totalorder %s24, 1
    %s26 = scalar_select %p25, 0, %s24
    %s27 = sadd.s32 1, %s18
    %s28 = scalar_select %p25, %s27, %s18
    %p29 = scmp.ge.s32.totalorder %s28, 4
    %s30 = scalar_select %p29, 0, %s28
    %s31 = ssub.s32 %s18, %s30
    %p32 = scmp.eq.s32.totalorder %s31, 0
    %s34 = sadd.s32 %s33, 1
    %s35 = scalar_select %p32, %s33, %s34
    %p38 = pneg %p32
    %p39 = scmp.eq.s32.totalorder %s11, 3
    %p40 = por %p38, %p39
    %p41 = scmp.ne.s32.totalorder %s33, %s36
    %p42 = scmp.eq.s32.totalorder %s11, 0
    %p43 = por %p41, %p42
    %p44 = scmp.ne.s32.totalorder %s33, %s36
    %p45 = scmp.eq.s32.totalorder %s16, 3
    %p46 = por %p44, %p45
    %p47 = scmp.ne.s32.totalorder %s36, %s37
    %p48 = scmp.eq.s32.totalorder %s16, 0
    %p49 = por %p47, %p48
    %p50 = scmp.ne.s32.totalorder %s36, %s37
    %p51 = scmp.eq.s32.totalorder %s17, 3
    %p52 = por %p50, %p51
    %p54 = scmp.ne.s32.totalorder %s37, %s53
    %p55 = scmp.eq.s32.totalorder %s17, 0
    %p56 = por %p54, %p55
    %s57 = ssub.s32 %s19, %s26
    %p58 = scmp.eq.s32.totalorder %s57, 0
    %s60 = sadd.s32 %s59, 1
    %s61 = scalar_select %p58, %s59, %s60
    %p64 = pneg %p58
    %p65 = scmp.eq.s32.totalorder %s11, 3
    %p66 = por %p64, %p65
    %p67 = scmp.ne.s32.totalorder %s59, %s62
    %p68 = scmp.eq.s32.totalorder %s11, 0
    %p69 = por %p67, %p68
    %p70 = scmp.ne.s32.totalorder %s59, %s62
    %p71 = scmp.eq.s32.totalorder %s16, 3
    %p72 = por %p70, %p71
    %p73 = scmp.ne.s32.totalorder %s62, %s63
    %p74 = scmp.eq.s32.totalorder %s16, 0
    %p75 = por %p73, %p74
    %p76 = scmp.ne.s32.totalorder %s62, %s63
    %p77 = scmp.eq.s32.totalorder %s17, 3
    %p78 = por %p76, %p77
    %p80 = scmp.ne.s32.totalorder %s63, %s79
    %p81 = scmp.eq.s32.totalorder %s17, 0
    %p82 = por %p80, %p81
    %s83 = ssub.s32 %s19, %s26
    %p84 = scmp.eq.s32.totalorder %s83, 0
    %s86 = sadd.s32 %s85, 1
    %s87 = scalar_select %p84, %s85, %s86
    %p90 = pneg %p84
    %p91 = scmp.eq.s32.totalorder %s11, 3
    %p92 = por %p90, %p91
    %p93 = scmp.ne.s32.totalorder %s85, %s88
    %p94 = scmp.eq.s32.totalorder %s11, 0
    %p95 = por %p93, %p94
    %p96 = scmp.ne.s32.totalorder %s85, %s88
    %p97 = scmp.eq.s32.totalorder %s16, 3
    %p98 = por %p96, %p97
    %p99 = scmp.ne.s32.totalorder %s88, %s89
    %p100 = scmp.eq.s32.totalorder %s16, 0
    %p101 = por %p99, %p100
    %p102 = scmp.ne.s32.totalorder %s88, %s89
    %p103 = scmp.eq.s32.totalorder %s17, 3
    %p104 = por %p102, %p103
    %p106 = scmp.ne.s32.totalorder %s89, %s105
    %p107 = scmp.eq.s32.totalorder %s17, 0
    %p108 = por %p106, %p107
    %s109 = ssub.s32 %s19, %s26
    %p110 = scmp.eq.s32.totalorder %s109, 0
    %s112 = sadd.s32 %s111, 1
    %s113 = scalar_select %p110, %s111, %s112
    %p116 = pneg %p110
    %p117 = scmp.eq.s32.totalorder %s11, 3
    %p118 = por %p116, %p117
    %p119 = scmp.ne.s32.totalorder %s111, %s114
    %p120 = scmp.eq.s32.totalorder %s11, 0
    %p121 = por %p119, %p120
    %p122 = scmp.ne.s32.totalorder %s111, %s114
    %p123 = scmp.eq.s32.totalorder %s16, 3
    %p124 = por %p122, %p123
    %p125 = scmp.ne.s32.totalorder %s114, %s115
    %p126 = scmp.eq.s32.totalorder %s16, 0
    %p127 = por %p125, %p126
    %p128 = scmp.ne.s32.totalorder %s114, %s115
    %p129 = scmp.eq.s32.totalorder %s17, 3
    %p130 = por %p128, %p129
    %p132 = scmp.ne.s32.totalorder %s115, %s131
    %p133 = scmp.eq.s32.totalorder %s17, 0
    %p134 = por %p132, %p133
    %s135 = ssub.s32 %s19, %s26
    %p136 = scmp.eq.s32.totalorder %s135, 0
    %s138 = sadd.s32 %s137, 1
    %s139 = scalar_select %p136, %s137, %s138
    %p142 = pneg %p136
    %p143 = scmp.eq.s32.totalorder %s11, 3
    %p144 = por %p142, %p143
    %p145 = scmp.ne.s32.totalorder %s137, %s140
    %p146 = scmp.eq.s32.totalorder %s11, 0
    %p147 = por %p145, %p146
    %p148 = scmp.ne.s32.totalorder %s137, %s140
    %p149 = scmp.eq.s32.totalorder %s16, 3
    %p150 = por %p148, %p149
    %p151 = scmp.ne.s32.totalorder %s140, %s141
    %p152 = scmp.eq.s32.totalorder %s16, 0
    %p153 = por %p151, %p152
    %p154 = scmp.ne.s32.totalorder %s140, %s141
    %p155 = scmp.eq.s32.totalorder %s17, 3
    %p156 = por %p154, %p155
    %p158 = scmp.ne.s32.totalorder %s141, %s157
    %p159 = scmp.eq.s32.totalorder %s17, 0
    %p160 = por %p158, %p159
    %s161 = ssub.s32 %s18, %s30
    %s162 = ssub.s32 %s19, %s26
    %s163 = sor.u32 %s161, %s162
    %p164 = scmp.eq.s32.totalorder %s163, 0
    %s166 = sadd.s32 %s165, 1
    %s167 = scalar_select %p164, %s165, %s166
    %p170 = pneg %p164
    %p171 = scmp.eq.s32.totalorder %s11, 3
    %p172 = por %p170, %p171
    %p173 = scmp.ne.s32.totalorder %s165, %s168
    %p174 = scmp.eq.s32.totalorder %s11, 0
    %p175 = por %p173, %p174
    %p176 = scmp.ne.s32.totalorder %s165, %s168
    %p177 = scmp.eq.s32.totalorder %s16, 3
    %p178 = por %p176, %p177
    %p179 = scmp.ne.s32.totalorder %s168, %s169
    %p180 = scmp.eq.s32.totalorder %s16, 0
    %p181 = por %p179, %p180
    %p182 = scmp.ne.s32.totalorder %s168, %s169
    %p183 = scmp.eq.s32.totalorder %s17, 3
    %p184 = por %p182, %p183
    %p186 = scmp.ne.s32.totalorder %s169, %s185
    %p187 = scmp.eq.s32.totalorder %s17, 0
    %p188 = por %p186, %p187
    %p189 = scmp.le.s32.totalorder 1, %s11
    %p190 = scmp.lt.s32.totalorder %s11, 5
    %p191 = pnand %p189, %p190
    %p192 = pneg %p191
    // Predicated region
    $region9: #{battlefield_feature.11} parent=5 // pred_check
      _
    $region10: #{battlefield_feature.11} parent=5 // pred_check_branch
      %194 = sbr.rel (%p191) target = $region12
    $region11: #{battlefield_feature.11} parent=5 // pred_region
      %s195 = ssub.s32 %s11, 1
      // Predicated region
      $region13: #{battlefield_feature.11} parent=11 // pred_check
        %p196 = pneg %p75
      $region14: #{battlefield_feature.11} parent=11 // pred_check_branch
        %198 = sbr.rel (%p196) target = $region16
      $region15: #{battlefield_feature.11} parent=11 // pred_region
        %p199 = scmp.lt.s32.totalorder %s21, 0
        %s200 = scalar_select %p199, %s21, 0
        %s201 = smul.addr %s200, 4
        %s202 = scalar_lea.vmem %s1, %s201
      $region16: #{battlefield_feature.11} parent=11 // pred_fallthru
        _
      // Predicated region
      $region17: #{battlefield_feature.11} parent=11 // pred_check
        %p203 = pneg %p101
      $region18: #{battlefield_feature.11} parent=11 // pred_check_branch
        %205 = sbr.rel (%p203) target = $region20
      $region19: #{battlefield_feature.11} parent=11 // pred_region
        %p206 = scmp.lt.s32.totalorder %s21, 0
        %s207 = scalar_select %p206, %s21, 0
        %s208 = scalar_lea.vmem %s2, %s207
      $region20: #{battlefield_feature.11} parent=11 // pred_fallthru
        _
      // Predicated region
      $region21: #{battlefield_feature.11} parent=11 // pred_check
        %p209 = pneg %p127
      $region22: #{battlefield_feature.11} parent=11 // pred_check_branch
        %211 = sbr.rel (%p209) target = $region24
      $region23: #{battlefield_feature.11} parent=11 // pred_region
        %p212 = scmp.lt.s32.totalorder %s21, 0
        %s213 = scalar_select %p212, %s21, 0
        %s214 = scalar_lea.vmem %s3, %s213
      $region24: #{battlefield_feature.11} parent=11 // pred_fallthru
        _
      // Predicated region
      $region25: #{battlefield_feature.11} parent=11 // pred_check
        %p215 = pneg %p153
      $region26: #{battlefield_feature.11} parent=11 // pred_check_branch
        %217 = sbr.rel (%p215) target = $region28
      $region27: #{battlefield_feature.11} parent=11 // pred_region
        %p218 = scmp.lt.s32.totalorder %s21, 0
        %s219 = scalar_select %p218, %s21, 0
        %s220 = scalar_lea.vmem %s4, %s219
      $region28: #{battlefield_feature.11} parent=11 // pred_fallthru
        _
    $region12: #{battlefield_feature.11} parent=5 // pred_fallthru
      _
    %p221 = scmp.lt.s32.totalorder %s11, 4
    // Predicated region
    $region29: #{battlefield_feature.11} parent=5 // pred_check
      %p222 = pneg %p221
    $region30: #{battlefield_feature.11} parent=5 // pred_check_branch
      %224 = sbr.rel (%p222) target = $region32
    $region31: #{battlefield_feature.11} parent=5 // pred_region
      // Predicated region
      $region33: #{battlefield_feature.11} parent=31 // pred_check
        %p225 = pneg %p43
      $region34: #{battlefield_feature.11} parent=31 // pred_check_branch
        %227 = sbr.rel (%p225) target = $region36
      $region35: #{battlefield_feature.11} parent=31 // pred_region
        %s228 = smul.u32 16, %s18
        %p229 = scmp.lt.s32.totalorder %s228, 63
        %s230 = scalar_select %p229, %s228, 63
        %s231 = smul.addr %s230, 3
        %s232 = smul.addr %s231, 4
        %s233 = scalar_lea.vmem %s0, %s232
        %s234 = smul.u32 16, %s18
      $region36: #{battlefield_feature.11} parent=31 // pred_fallthru
        _
    $region32: #{battlefield_feature.11} parent=5 // pred_fallthru
      _
    %p235 = scmp.le.s32.totalorder 1, %s11
    %p236 = scmp.lt.s32.totalorder %s11, 5
    %p237 = pnand %p235, %p236
    %p238 = pneg %p237
    // Predicated region
    $region37: #{battlefield_feature.11} parent=5 // pred_check
      _
    $region38: #{battlefield_feature.11} parent=5 // pred_check_branch
      %240 = sbr.rel (%p237) target = $region40
    $region39: #{battlefield_feature.11} parent=5 // pred_region
      %s241 = ssub.s32 %s11, 1
      %s242 = smul.u32 16, %s20
      %p243 = scmp.lt.s32.totalorder %s242, 63
      %s244 = scalar_select %p243, %s242, 63
      %s245 = smul.addr %s244, 3
      %s246 = smul.addr %s245, 4
      %s247 = scalar_lea.vmem %s0, %s246
      %p248 = pneg %p49
      %p249 = pneg %p46
      %p250 = scmp.lt.s32.totalorder %s21, 0
      %s251 = scalar_select %p250, %s21, 0
      %s252 = smul.addr %s251, 4
      %s253 = scalar_lea.vmem %s1, %s252
      %p254 = pneg %p75
      %p255 = pneg %p72
      %p256 = scmp.lt.s32.totalorder %s21, 0
      %s257 = scalar_select %p256, %s21, 0
      %s258 = scalar_lea.vmem %s2, %s257
      %p259 = pneg %p101
      %p260 = pneg %p98
      %p261 = scmp.lt.s32.totalorder %s21, 0
      %s262 = scalar_select %p261, %s21, 0
      %s263 = scalar_lea.vmem %s3, %s262
      %p264 = pneg %p127
      %p265 = pneg %p124
      %p266 = scmp.lt.s32.totalorder %s21, 0
      %s267 = scalar_select %p266, %s21, 0
      %s268 = scalar_lea.vmem %s4, %s267
      %p269 = pneg %p153
      %p270 = pneg %p150
      %p271 = pneg %p181
      %p272 = pneg %p178
      %s273 = smul.u32 16, %s20
      %p274 = scmp.lt.s32.totalorder %s273, 63
      %s275 = scalar_select %p274, %s273, 63
      %p276 = scmp.lt.s32.totalorder %s21, 0
      %s277 = scalar_select %p276, %s21, 0
      %s278 = sadd.s32 %s277, %s275
      %s279 = smul.addr %s278, 8
      %s280 = scalar_lea.vmem %s5, %s279
      %s281 = smul.u32 16, %s20
      %p282 = scmp.lt.s32.totalorder %s281, 63
      %s283 = scalar_select %p282, %s281, 63
      %s284 = smul.addr %s283, 3
      %s285 = smul.addr %s284, 4
      %s286 = scalar_lea.vmem %s0, %s285
      %s287 = smul.u32 16, %s20
      %p288 = scmp.lt.s32.totalorder %s21, 0
      %s289 = scalar_select %p288, %s21, 0
      %s290 = smul.addr %s289, 4
      %s291 = scalar_lea.vmem %s1, %s290
      %p292 = scmp.lt.s32.totalorder %s21, 0
      %s293 = scalar_select %p292, %s21, 0
      %s294 = scalar_lea.vmem %s2, %s293
      %p295 = scmp.lt.s32.totalorder %s21, 0
      %s296 = scalar_select %p295, %s21, 0
      %s297 = scalar_lea.vmem %s3, %s296
      %p298 = scmp.lt.s32.totalorder %s21, 0
      %s299 = scalar_select %p298, %s21, 0
      %s300 = scalar_lea.vmem %s4, %s299
      %s301 = smul.u32 16, %s20
      %p302 = scmp.lt.s32.totalorder %s301, 63
      %s303 = scalar_select %p302, %s301, 63
      %p304 = scmp.lt.s32.totalorder %s21, 0
      %s305 = scalar_select %p304, %s21, 0
      %s306 = sadd.s32 %s305, %s303
      %s307 = smul.addr %s306, 8
      %s308 = scalar_lea.vmem %s5, %s307
      %s309 = smul.u32 16, %s20
      %v311 = vld [vmem:[%s286] sm:$0xff]
      %v312 = vld [vmem:[%s286 + $0x8] sm:$0xf]
      %v313 = vld [vmem:[%s286 + $0xc] sm:$0xff]
      %v314 = vld [vmem:[%s286 + $0x14] sm:$0xf]
      %v315 = vld [vmem:[%s286 + $0x18] sm:$0xff]
      %v316 = vld [vmem:[%s286 + $0x20] sm:$0xf]
      %v317 = vld [vmem:[%s286 + $0x24] sm:$0xff]
      %v318 = vld [vmem:[%s286 + $0x2c] sm:$0xf]
      %v319 = vld [vmem:[%s286 + $0x30] sm:$0xff]
      %v320 = vld [vmem:[%s286 + $0x38] sm:$0xf]
      %v321 = vld [vmem:[%s286 + $0x3c] sm:$0xff]
      %v322 = vld [vmem:[%s286 + $0x44] sm:$0xf]
      %v323 = vld [vmem:[%s286 + $0x48] sm:$0xff]
      %v324 = vld [vmem:[%s286 + $0x50] sm:$0xf]
      %v325 = vld [vmem:[%s286 + $0x54] sm:$0xff]
      %v326 = vld [vmem:[%s286 + $0x5c] sm:$0xf]
      %v327 = vld [vmem:[%s286 + $0x60] sm:$0xff]
      %v328 = vld [vmem:[%s286 + $0x68] sm:$0xf]
      %v329 = vld [vmem:[%s286 + $0x6c] sm:$0xff]
      %v330 = vld [vmem:[%s286 + $0x74] sm:$0xf]
      %v331 = vld [vmem:[%s286 + $0x78] sm:$0xff]
      %v332 = vld [vmem:[%s286 + $0x80] sm:$0xf]
      %v333 = vld [vmem:[%s286 + $0x84] sm:$0xff]
      %v334 = vld [vmem:[%s286 + $0x8c] sm:$0xf]
      %v335 = vld [vmem:[%s286 + $0x90] sm:$0xff]
      %v336 = vld [vmem:[%s286 + $0x98] sm:$0xf]
      %v337 = vld [vmem:[%s286 + $0x9c] sm:$0xff]
      %v338 = vld [vmem:[%s286 + $0xa4] sm:$0xf]
      %v339 = vld [vmem:[%s286 + $0xa8] sm:$0xff]
      %v340 = vld [vmem:[%s286 + $0xb0] sm:$0xf]
      %v341 = vld [vmem:[%s286 + $0xb4] sm:$0xff]
      %v342 = vld [vmem:[%s286 + $0xbc] sm:$0xf]
      %v343 = vld [vmem:[%s291] sm:$0xf]
      %v344 = vld [vmem:[%s291 + $0x4] sm:$0xf]
      %v345 = vld [vmem:[%s291 + $0x8] sm:$0xf]
      %v346 = vld [vmem:[%s291 + $0xc] sm:$0xf]
      %v347 = vld [vmem:[%s291 + $0x10] sm:$0xf]
      %v348 = vld [vmem:[%s291 + $0x14] sm:$0xf]
      %v349 = vld [vmem:[%s291 + $0x18] sm:$0xf]
      %v350 = vld [vmem:[%s291 + $0x1c] sm:$0xf]
      %v351 = vld [vmem:[%s291 + $0x20] sm:$0xf]
      %v352 = vld [vmem:[%s291 + $0x24] sm:$0xf]
      %v353 = vld [vmem:[%s291 + $0x28] sm:$0xf]
      %v354 = vld [vmem:[%s291 + $0x2c] sm:$0xf]
      %v355 = vld [vmem:[%s291 + $0x30] sm:$0xf]
      %v356 = vld [vmem:[%s291 + $0x34] sm:$0xf]
      %v357 = vld [vmem:[%s291 + $0x38] sm:$0xf]
      %v358 = vld [vmem:[%s291 + $0x3c] sm:$0xf]
      %v359 = vld [vmem:[%s291 + $0x40] sm:$0xf]
      %v360 = vld [vmem:[%s291 + $0x44] sm:$0xf]
      %v361 = vld [vmem:[%s291 + $0x48] sm:$0xf]
      %v362 = vld [vmem:[%s291 + $0x4c] sm:$0xf]
      %v363 = vld [vmem:[%s291 + $0x50] sm:$0xf]
      %v364 = vld [vmem:[%s291 + $0x54] sm:$0xf]
      %v365 = vld [vmem:[%s291 + $0x58] sm:$0xf]
      %v366 = vld [vmem:[%s291 + $0x5c] sm:$0xf]
      %v367 = vld [vmem:[%s291 + $0x60] sm:$0xf]
      %v368 = vld [vmem:[%s291 + $0x64] sm:$0xf]
      %v369 = vld [vmem:[%s291 + $0x68] sm:$0xf]
      %v370 = vld [vmem:[%s291 + $0x6c] sm:$0xf]
      %v371 = vld [vmem:[%s291 + $0x70] sm:$0xf]
      %v372 = vld [vmem:[%s291 + $0x74] sm:$0xf]
      %v373 = vld [vmem:[%s291 + $0x78] sm:$0xf]
      %v374 = vld [vmem:[%s291 + $0x7c] sm:$0xf]
      %v375 = vld [vmem:[%s291 + $0x80] sm:$0xf]
      %v376 = vld [vmem:[%s291 + $0x84] sm:$0xf]
      %v377 = vld [vmem:[%s291 + $0x88] sm:$0xf]
      %v378 = vld [vmem:[%s291 + $0x8c] sm:$0xf]
      %v411 = vunpack.c.l.b16 %v311
      %v412 = vunpack.c.h.b16 %v311
      %v413 = vunpack.c.l.b16 %v312
      %v414 = vunpack.c.l.b16 %v313
      %v415 = vunpack.c.h.b16 %v313
      %v416 = vunpack.c.l.b16 %v314
      %v417 = vunpack.c.l.b16 %v315
      %v418 = vunpack.c.h.b16 %v315
      %v419 = vunpack.c.l.b16 %v316
      %v420 = vunpack.c.l.b16 %v317
      %v421 = vunpack.c.h.b16 %v317
      %v422 = vunpack.c.l.b16 %v318
      %v423 = vunpack.c.l.b16 %v319
      %v424 = vunpack.c.h.b16 %v319
      %v425 = vunpack.c.l.b16 %v320
      %v426 = vunpack.c.l.b16 %v321
      %v427 = vunpack.c.h.b16 %v321
      %v428 = vunpack.c.l.b16 %v322
      %v429 = vunpack.c.l.b16 %v323
      %v430 = vunpack.c.h.b16 %v323
      %v431 = vunpack.c.l.b16 %v324
      %v432 = vunpack.c.l.b16 %v325
      %v433 = vunpack.c.h.b16 %v325
      %v434 = vunpack.c.l.b16 %v326
      %v435 = vunpack.c.l.b16 %v327
      %v436 = vunpack.c.h.b16 %v327
      %v437 = vunpack.c.l.b16 %v328
      %v438 = vunpack.c.l.b16 %v329
      %v439 = vunpack.c.h.b16 %v329
      %v440 = vunpack.c.l.b16 %v330
      %v441 = vunpack.c.l.b16 %v331
      %v442 = vunpack.c.h.b16 %v331
      %v443 = vunpack.c.l.b16 %v332
      %v444 = vunpack.c.l.b16 %v333
      %v445 = vunpack.c.h.b16 %v333
      %v446 = vunpack.c.l.b16 %v334
      %v447 = vunpack.c.l.b16 %v335
      %v448 = vunpack.c.h.b16 %v335
      %v449 = vunpack.c.l.b16 %v336
      %v450 = vunpack.c.l.b16 %v337
      %v451 = vunpack.c.h.b16 %v337
      %v452 = vunpack.c.l.b16 %v338
      %v453 = vunpack.c.l.b16 %v339
      %v454 = vunpack.c.h.b16 %v339
      %v455 = vunpack.c.l.b16 %v340
      %v456 = vunpack.c.l.b16 %v341
      %v457 = vunpack.c.h.b16 %v341
      %v458 = vunpack.c.l.b16 %v342
      %v459 = vpack.c.b16 %v414, %v411
      %v460 = vpack.c.b16 %v415, %v412
      %v461 = vpack.c.b16 %v416, %v413
      %v462 = vpack.c.b16 %v420, %v417
      %v463 = vpack.c.b16 %v421, %v418
      %v464 = vpack.c.b16 %v422, %v419
      %v465 = vpack.c.b16 %v426, %v423
      %v466 = vpack.c.b16 %v427, %v424
      %v467 = vpack.c.b16 %v428, %v425
      %v468 = vpack.c.b16 %v432, %v429
      %v469 = vpack.c.b16 %v433, %v430
      %v470 = vpack.c.b16 %v434, %v431
      %v471 = vpack.c.b16 %v438, %v435
      %v472 = vpack.c.b16 %v439, %v436
      %v473 = vpack.c.b16 %v440, %v437
      %v474 = vpack.c.b16 %v444, %v441
      %v475 = vpack.c.b16 %v445, %v442
      %v476 = vpack.c.b16 %v446, %v443
      %v477 = vpack.c.b16 %v450, %v447
      %v478 = vpack.c.b16 %v451, %v448
      %v479 = vpack.c.b16 %v452, %v449
      %v480 = vpack.c.b16 %v456, %v453
      %v481 = vpack.c.b16 %v457, %v454
      %v482 = vpack.c.b16 %v458, %v455
      %v535 = vunpack.c.l.b16 %v343
      %v536 = vunpack.c.l.b16 %v344
      %v537 = vunpack.c.l.b16 %v345
      %v538 = vunpack.c.l.b16 %v346
      %v539 = vunpack.c.l.b16 %v347
      %v540 = vunpack.c.l.b16 %v348
      %v541 = vunpack.c.l.b16 %v349
      %v542 = vunpack.c.l.b16 %v350
      %v543 = vunpack.c.l.b16 %v351
      %v544 = vunpack.c.l.b16 %v352
      %v545 = vunpack.c.l.b16 %v353
      %v546 = vunpack.c.l.b16 %v354
      %v547 = vunpack.c.l.b16 %v355
      %v548 = vunpack.c.l.b16 %v356
      %v549 = vunpack.c.l.b16 %v357
      %v550 = vunpack.c.l.b16 %v358
      %v551 = vunpack.c.l.b16 %v359
      %v552 = vunpack.c.l.b16 %v360
      %v553 = vunpack.c.l.b16 %v361
      %v554 = vunpack.c.l.b16 %v362
      %v555 = vunpack.c.l.b16 %v363
      %v556 = vunpack.c.l.b16 %v364
      %v557 = vunpack.c.l.b16 %v365
      %v558 = vunpack.c.l.b16 %v366
      %v559 = vunpack.c.l.b16 %v367
      %v560 = vunpack.c.l.b16 %v368
      %v561 = vunpack.c.l.b16 %v369
      %v562 = vunpack.c.l.b16 %v370
      %v563 = vunpack.c.l.b16 %v371
      %v564 = vunpack.c.l.b16 %v372
      %v565 = vunpack.c.l.b16 %v373
      %v566 = vunpack.c.l.b16 %v374
      %v567 = vunpack.c.l.b16 %v375
      %v568 = vunpack.c.l.b16 %v376
      %v569 = vunpack.c.l.b16 %v377
      %v570 = vunpack.c.l.b16 %v378
      %v571 = vpack.c.b16 %v536, %v535
      %v572 = vpack.c.b16 %v538, %v537
      %v573 = vpack.c.b16 %v540, %v539
      %v574 = vpack.c.b16 %v542, %v541
      %v575 = vpack.c.b16 %v544, %v543
      %v576 = vpack.c.b16 %v546, %v545
      %v577 = vpack.c.b16 %v548, %v547
      %v578 = vpack.c.b16 %v550, %v549
      %v579 = vpack.c.b16 %v552, %v551
      %v580 = vpack.c.b16 %v554, %v553
      %v581 = vpack.c.b16 %v556, %v555
      %v582 = vpack.c.b16 %v558, %v557
      %v583 = vpack.c.b16 %v560, %v559
      %v584 = vpack.c.b16 %v562, %v561
      %v585 = vpack.c.b16 %v564, %v563
      %v586 = vpack.c.b16 %v566, %v565
      %v587 = vpack.c.b16 %v568, %v567
      %v588 = vpack.c.b16 %v570, %v569
      %vm607 = vcmask 261120
      %v609 = vsel %vm607, %v461, 0
      %v612 = vsel %vm607, %v464, 0
      %v615 = vsel %vm607, %v467, 0
      %v618 = vsel %vm607, %v470, 0
      %v621 = vsel %vm607, %v473, 0
      %v624 = vsel %vm607, %v476, 0
      %v627 = vsel %vm607, %v479, 0
      %v630 = vsel %vm607, %v482, 0
      %632 = vmatprep.subr.bf16.mxu0 0
      %633 = vmatpush1.bf16.msra.mxu0 %v571
      %634 = vmatprep.subr.bf16.mxu0 0
      %635 = vmatpush1.bf16.msra.mxu0 %v572
      %636 = vmatprep.subr.bf16.mxu0 0
      %637 = vmatpush1.bf16.msra.mxu0 %v573
      %638 = vmatprep.subr.bf16.mxu0 0
      %639 = vmatpush1.bf16.msra.mxu0 %v574
      %640 = vmatprep.subr.bf16.mxu0 0
      %641 = vmatpush1.bf16.msra.mxu0 %v575
      %642 = vmatprep.subr.bf16.mxu0 0
      %643 = vmatpush1.bf16.msra.mxu0 %v576
      %644 = vmatprep.subr.bf16.mxu0 0
      %645 = vmatpush1.bf16.msra.mxu0 %v577
      %646 = vmatprep.subr.bf16.mxu0 0
      %647 = vmatpush1.bf16.msra.mxu0 %v578
      %648 = vmatprep.subr.bf16.mxu0 0
      %649 = vmatpush1.bf16.msra.mxu0 %v579
      %650 = vmatprep.subr.bf16.mxu0 0
      %651 = vmatpush1.bf16.msra.mxu0 %v580
      %652 = vmatprep.subr.bf16.mxu0 0
      %653 = vmatpush1.bf16.msra.mxu0 %v581
      %654 = vmatprep.subr.bf16.mxu0 0
      %655 = vmatpush1.bf16.msra.mxu0 %v582
      %656 = vmatprep.subr.bf16.mxu0 0
      %657 = vmatpush1.bf16.msra.mxu0 %v583
      %658 = vmatprep.subr.bf16.mxu0 0
      %659 = vmatpush1.bf16.msra.mxu0 %v584
      %660 = vmatprep.subr.bf16.mxu0 0
      %661 = vmatpush1.bf16.msra.mxu0 %v585
      %662 = vmatprep.subr.bf16.mxu0 0
      %663 = vmatpush1.bf16.msra.mxu0 %v586
      %664 = vmatprep.mubr.bf16.mxu0 %v460
      %665 = vmatmul.mubr.bf16.gmra.mrb[0].mxu0 %v459
      %v666 = vpop.f32.mrb[0].mxu0
      %v667 = vadd.f32 0.0, %v666
      %v668 = vpop.f32.mrb[0].mxu0
      %v669 = vpop.f32.mrb[0].mxu0
      %v670 = vadd.f32 0.0, %v669
      %v671 = vpop.f32.mrb[0].mxu0
      %672 = vmatprep.mubr.bf16.mxu0 %v463
      %673 = vmatmul.mubr.bf16.gmra.mrb[0].mxu0 %v462
      %v674 = vpop.f32.mrb[0].mxu0
      %v675 = vadd.f32 0.0, %v674
      %v676 = vpop.f32.mrb[0].mxu0
      %v677 = vpop.f32.mrb[0].mxu0
      %v678 = vadd.f32 0.0, %v677
      %v679 = vpop.f32.mrb[0].mxu0
      %680 = vmatprep.mubr.bf16.mxu0 %v466
      %681 = vmatmul.mubr.bf16.gmra.mrb[0].mxu0 %v465
      %v682 = vpop.f32.mrb[0].mxu0
      %v683 = vadd.f32 0.0, %v682
      %v684 = vpop.f32.mrb[0].mxu0
      %v685 = vpop.f32.mrb[0].mxu0
      %v686 = vadd.f32 0.0, %v685
      %v687 = vpop.f32.mrb[0].mxu0
      %688 = vmatprep.mubr.bf16.mxu0 %v469
      %689 = vmatmul.mubr.bf16.gmra.mrb[0].mxu0 %v468
      %v690 = vpop.f32.mrb[0].mxu0
      %v691 = vadd.f32 0.0, %v690
      %v692 = vpop.f32.mrb[0].mxu0
      %v693 = vpop.f32.mrb[0].mxu0
      %v694 = vadd.f32 0.0, %v693
      %v695 = vpop.f32.mrb[0].mxu0
      %696 = vmatprep.mubr.bf16.mxu0 %v472
      %697 = vmatmul.mubr.bf16.gmra.mrb[0].mxu0 %v471
      %v698 = vpop.f32.mrb[0].mxu0
      %v699 = vadd.f32 0.0, %v698
      %v700 = vpop.f32.mrb[0].mxu0
      %v701 = vpop.f32.mrb[0].mxu0
      %v702 = vadd.f32 0.0, %v701
      %v703 = vpop.f32.mrb[0].mxu0
      %704 = vmatprep.mubr.bf16.mxu0 %v475
      %705 = vmatmul.mubr.bf16.gmra.mrb[0].mxu0 %v474
      %v706 = vpop.f32.mrb[0].mxu0
      %v707 = vadd.f32 0.0, %v706
      %v708 = vpop.f32.mrb[0].mxu0
      %v709 = vpop.f32.mrb[0].mxu0
      %v710 = vadd.f32 0.0, %v709
      %v711 = vpop.f32.mrb[0].mxu0
      %712 = vmatprep.mubr.bf16.mxu0 %v478
      %713 = vmatmul.mubr.bf16.gmra.mrb[0].mxu0 %v477
      %v714 = vpop.f32.mrb[0].mxu0
      %v715 = vadd.f32 0.0, %v714
      %v716 = vpop.f32.mrb[0].mxu0
      %v717 = vpop.f32.mrb[0].mxu0
      %v718 = vadd.f32 0.0, %v717
      %v719 = vpop.f32.mrb[0].mxu0
      %720 = vmatprep.mubr.bf16.mxu0 %v481
      %721 = vmatmul.mubr.bf16.gmra.mrb[0].mxu0 %v480
      %v722 = vpop.f32.mrb[0].mxu0
      %v723 = vadd.f32 0.0, %v722
      %v724 = vpop.f32.mrb[0].mxu0
      %v725 = vpop.f32.mrb[0].mxu0
      %v726 = vadd.f32 0.0, %v725
      %v727 = vpop.f32.mrb[0].mxu0
      %728 = vdwg.mxu0
      %729 = vmatprep.subr.bf16.mxu0 0
      %730 = vmatpush1.bf16.msra.mxu0 %v587
      %731 = vmatprep.subr.bf16.mxu0 0
      %732 = vmatpush1.bf16.msra.mxu0 %v588
      %733 = vmatprep.subr.bf16.mxu0 0
      %734 = vmatpush1.bf16.msra.mxu0 0
      %735 = vmatprep.subr.bf16.mxu0 0
      %736 = vmatpush1.bf16.msra.mxu0 0
      %737 = vmatprep.subr.bf16.mxu0 0
      %738 = vmatpush1.bf16.msra.mxu0 0
      %739 = vmatprep.subr.bf16.mxu0 0
      %740 = vmatpush1.bf16.msra.mxu0 0
      %741 = vmatprep.subr.bf16.mxu0 0
      %742 = vmatpush1.bf16.msra.mxu0 0
      %743 = vmatprep.subr.bf16.mxu0 0
      %744 = vmatpush1.bf16.msra.mxu0 0
      %745 = vmatprep.subr.bf16.mxu0 0
      %746 = vmatpush1.bf16.msra.mxu0 0
      %747 = vmatprep.subr.bf16.mxu0 0
      %748 = vmatpush1.bf16.msra.mxu0 0
      %749 = vmatprep.subr.bf16.mxu0 0
      %750 = vmatpush1.bf16.msra.mxu0 0
      %751 = vmatprep.subr.bf16.mxu0 0
      %752 = vmatpush1.bf16.msra.mxu0 0
      %753 = vmatprep.subr.bf16.mxu0 0
      %754 = vmatpush1.bf16.msra.mxu0 0
      %755 = vmatprep.subr.bf16.mxu0 0
      %756 = vmatpush1.bf16.msra.mxu0 0
      %757 = vmatprep.subr.bf16.mxu0 0
      %758 = vmatpush1.bf16.msra.mxu0 0
      %759 = vmatprep.subr.bf16.mxu0 0
      %760 = vmatpush1.bf16.msra.mxu0 0
      %761 = vmatprep.mubr.bf16.mxu0 0
      %762 = vmatmul.mubr.bf16.gmra.mrb[0].mxu0 %v609
      %v763 = vpop.f32.mrb[0].mxu0
      %v764 = vadd.f32 %v667, %v763
      %v765 = vpop.f32.mrb[0].mxu0
      %v766 = vpop.f32.mrb[0].mxu0
      %v767 = vadd.f32 %v670, %v766
      %v768 = vpop.f32.mrb[0].mxu0
      %769 = vmatprep.mubr.bf16.mxu0 0
      %770 = vmatmul.mubr.bf16.gmra.mrb[0].mxu0 %v612
      %v771 = vpop.f32.mrb[0].mxu0
      %v772 = vadd.f32 %v675, %v771
      %v773 = vpop.f32.mrb[0].mxu0
      %v774 = vpop.f32.mrb[0].mxu0
      %v775 = vadd.f32 %v678, %v774
      %v776 = vpop.f32.mrb[0].mxu0
      %777 = vmatprep.mubr.bf16.mxu0 0
      %778 = vmatmul.mubr.bf16.gmra.mrb[0].mxu0 %v615
      %v779 = vpop.f32.mrb[0].mxu0
      %v780 = vadd.f32 %v683, %v779
      %v781 = vpop.f32.mrb[0].mxu0
      %v782 = vpop.f32.mrb[0].mxu0
      %v783 = vadd.f32 %v686, %v782
      %v784 = vpop.f32.mrb[0].mxu0
      %785 = vmatprep.mubr.bf16.mxu0 0
      %786 = vmatmul.mubr.bf16.gmra.mrb[0].mxu0 %v618
      %v787 = vpop.f32.mrb[0].mxu0
      %v788 = vadd.f32 %v691, %v787
      %v789 = vpop.f32.mrb[0].mxu0
      %v790 = vpop.f32.mrb[0].mxu0
      %v791 = vadd.f32 %v694, %v790
      %v792 = vpop.f32.mrb[0].mxu0
      %793 = vmatprep.mubr.bf16.mxu0 0
      %794 = vmatmul.mubr.bf16.gmra.mrb[0].mxu0 %v621
      %v795 = vpop.f32.mrb[0].mxu0
      %v796 = vadd.f32 %v699, %v795
      %v797 = vpop.f32.mrb[0].mxu0
      %v798 = vpop.f32.mrb[0].mxu0
      %v799 = vadd.f32 %v702, %v798
      %v800 = vpop.f32.mrb[0].mxu0
      %801 = vmatprep.mubr.bf16.mxu0 0
      %802 = vmatmul.mubr.bf16.gmra.mrb[0].mxu0 %v624
      %v803 = vpop.f32.mrb[0].mxu0
      %v804 = vadd.f32 %v707, %v803
      %v805 = vpop.f32.mrb[0].mxu0
      %v806 = vpop.f32.mrb[0].mxu0
      %v807 = vadd.f32 %v710, %v806
      %v808 = vpop.f32.mrb[0].mxu0
      %809 = vmatprep.mubr.bf16.mxu0 0
      %810 = vmatmul.mubr.bf16.gmra.mrb[0].mxu0 %v627
      %v811 = vpop.f32.mrb[0].mxu0
      %v812 = vadd.f32 %v715, %v811
      %v813 = vpop.f32.mrb[0].mxu0
      %v814 = vpop.f32.mrb[0].mxu0
      %v815 = vadd.f32 %v718, %v814
      %v816 = vpop.f32.mrb[0].mxu0
      %817 = vmatprep.mubr.bf16.mxu0 0
      %818 = vmatmul.mubr.bf16.gmra.mrb[0].mxu0 %v630
      %v819 = vpop.f32.mrb[0].mxu0
      %v820 = vadd.f32 %v723, %v819
      %v821 = vpop.f32.mrb[0].mxu0
      %v822 = vpop.f32.mrb[0].mxu0
      %v823 = vadd.f32 %v726, %v822
      %v824 = vpop.f32.mrb[0].mxu0
      %825 = vdwg.mxu0
      %v826 = vld [vmem:[%s294] sm:$0x1]
      %v827 = vld [vmem:[%s297] sm:$0x1]
      %v828 = vld [vmem:[%s300] sm:$0x1]
      %v830 = vlaneseq
      %v831 = vshrl.u32 %v830, 7
      %v832 = vsub.s32 0, %v831
      %v833 = vrot.slane %v826, %v832
      %v835 = vmul.f32 %v764, %v833
      %v836 = vmul.f32 %v767, %v833
      %v837 = vmul.f32 %v772, %v833
      %v838 = vmul.f32 %v775, %v833
      %v839 = vmul.f32 %v780, %v833
      %v840 = vmul.f32 %v783, %v833
      %v841 = vmul.f32 %v788, %v833
      %v842 = vmul.f32 %v791, %v833
      %v843 = vmul.f32 %v796, %v833
      %v844 = vmul.f32 %v799, %v833
      %v845 = vmul.f32 %v804, %v833
      %v846 = vmul.f32 %v807, %v833
      %v847 = vmul.f32 %v812, %v833
      %v848 = vmul.f32 %v815, %v833
      %v849 = vmul.f32 %v820, %v833
      %v850 = vmul.f32 %v823, %v833
      %v852 = vlaneseq
      %v853 = vshrl.u32 %v852, 7
      %v854 = vsub.s32 0, %v853
      %v855 = vrot.slane %v827, %v854
      %v857 = vadd.f32 %v835, %v855
      %v858 = vadd.f32 %v836, %v855
      %v859 = vadd.f32 %v837, %v855
      %v860 = vadd.f32 %v838, %v855
      %v861 = vadd.f32 %v839, %v855
      %v862 = vadd.f32 %v840, %v855
      %v863 = vadd.f32 %v841, %v855
      %v864 = vadd.f32 %v842, %v855
      %v865 = vadd.f32 %v843, %v855
      %v866 = vadd.f32 %v844, %v855
      %v867 = vadd.f32 %v845, %v855
      %v868 = vadd.f32 %v846, %v855
      %v869 = vadd.f32 %v847, %v855
      %v870 = vadd.f32 %v848, %v855
      %v871 = vadd.f32 %v849, %v855
      %v872 = vadd.f32 %v850, %v855
      %vm873 = vcmp.ne.f32.partialorder %v828, 0.0
      %v874 = vmax.f32 %v857, 0.0
      %v875 = vmax.f32 %v858, 0.0
      %v876 = vmax.f32 %v859, 0.0
      %v877 = vmax.f32 %v860, 0.0
      %v878 = vmax.f32 %v861, 0.0
      %v879 = vmax.f32 %v862, 0.0
      %v880 = vmax.f32 %v863, 0.0
      %v881 = vmax.f32 %v864, 0.0
      %v882 = vmax.f32 %v865, 0.0
      %v883 = vmax.f32 %v866, 0.0
      %v884 = vmax.f32 %v867, 0.0
      %v885 = vmax.f32 %v868, 0.0
      %v886 = vmax.f32 %v869, 0.0
      %v887 = vmax.f32 %v870, 0.0
      %v888 = vmax.f32 %v871, 0.0
      %v889 = vmax.f32 %v872, 0.0
      %v890 = vsel %vm873, 1, 0
      %v891 = vlaneseq
      %v892 = vshrl.u32 %v891, 7
      %v893 = vsub.s32 0, %v892
      %v894 = vrot.slane %v890, %v893
      %vm895 = vcmp.eq.s32.totalorder %v894, 1
      %v896 = vsel %vm895, %v874, %v857
      %v897 = vsel %vm895, %v875, %v858
      %v898 = vsel %vm895, %v876, %v859
      %v899 = vsel %vm895, %v877, %v860
      %v900 = vsel %vm895, %v878, %v861
      %v901 = vsel %vm895, %v879, %v862
      %v902 = vsel %vm895, %v880, %v863
      %v903 = vsel %vm895, %v881, %v864
      %v904 = vsel %vm895, %v882, %v865
      %v905 = vsel %vm895, %v883, %v866
      %v906 = vsel %vm895, %v884, %v867
      %v907 = vsel %vm895, %v885, %v868
      %v908 = vsel %vm895, %v886, %v869
      %v909 = vsel %vm895, %v887, %v870
      %v910 = vsel %vm895, %v888, %v871
      %v911 = vsel %vm895, %v889, %v872
      %912 = vst [vmem:[%s308] sm:$0xff] %v896
      %913 = vst [vmem:[%s308 + $0x8] sm:$0xff] %v897
      %914 = vst [vmem:[%s308 + $0x10] sm:$0xff] %v898
      %915 = vst [vmem:[%s308 + $0x18] sm:$0xff] %v899
      %916 = vst [vmem:[%s308 + $0x20] sm:$0xff] %v900
      %917 = vst [vmem:[%s308 + $0x28] sm:$0xff] %v901
      %918 = vst [vmem:[%s308 + $0x30] sm:$0xff] %v902
      %919 = vst [vmem:[%s308 + $0x38] sm:$0xff] %v903
      %920 = vst [vmem:[%s308 + $0x40] sm:$0xff] %v904
      %921 = vst [vmem:[%s308 + $0x48] sm:$0xff] %v905
      %922 = vst [vmem:[%s308 + $0x50] sm:$0xff] %v906
      %923 = vst [vmem:[%s308 + $0x58] sm:$0xff] %v907
      %924 = vst [vmem:[%s308 + $0x60] sm:$0xff] %v908
      %925 = vst [vmem:[%s308 + $0x68] sm:$0xff] %v909
      %926 = vst [vmem:[%s308 + $0x70] sm:$0xff] %v910
      %927 = vst [vmem:[%s308 + $0x78] sm:$0xff] %v911
      %s928 = smul.u32 16, %s20
      %p929 = scmp.lt.s32.totalorder %s928, 63
      %s930 = scalar_select %p929, %s928, 63
      %p931 = scmp.lt.s32.totalorder %s21, 0
      %s932 = scalar_select %p931, %s21, 0
      %s933 = sadd.s32 %s932, %s930
      %s934 = smul.addr %s933, 8
      %s935 = scalar_lea.vmem %s5, %s934
      // Predicated region
      $region41: #{battlefield_feature.11} parent=39 // pred_check
        %p936 = pneg %p178
      $region42: #{battlefield_feature.11} parent=39 // pred_check_branch
        %938 = sbr.rel (%p936) target = $region44
      $region43: #{battlefield_feature.11} parent=39 // pred_region
        %s939 = smul.u32 16, %s20
      $region44: #{battlefield_feature.11} parent=39 // pred_fallthru
        _
    $region40: #{battlefield_feature.11} parent=5 // pred_fallthru
      _
    %p940 = scmp.le.s32.totalorder 2, %s11
    // Predicated region
    $region45: #{battlefield_feature.11} parent=5 // pred_check
      %p941 = pneg %p940
    $region46: #{battlefield_feature.11} parent=5 // pred_check_branch
      %943 = sbr.rel (%p941) target = $region48
    $region47: #{battlefield_feature.11} parent=5 // pred_region
      %s944 = ssub.s32 %s11, 2
      // Predicated region
      $region49: #{battlefield_feature.11} parent=47 // pred_check
        %p945 = pneg %p184
      $region50: #{battlefield_feature.11} parent=47 // pred_check_branch
        %947 = sbr.rel (%p945) target = $region52
      $region51: #{battlefield_feature.11} parent=47 // pred_region
        %s948 = smul.u32 16, %s22
        %p949 = scmp.lt.s32.totalorder %s948, 63
        %s950 = scalar_select %p949, %s948, 63
        %p951 = scmp.lt.s32.totalorder %s23, 0
        %s952 = scalar_select %p951, %s23, 0
        %s953 = sadd.s32 %s952, %s950
        %s954 = smul.addr %s953, 8
        %s955 = scalar_lea.vmem %s5, %s954
      $region52: #{battlefield_feature.11} parent=47 // pred_fallthru
        _
    $region48: #{battlefield_feature.11} parent=5 // pred_fallthru
      _
  $region6: #{battlefield_feature.11} parent=0 // loop_footer
    %s15 = sadd.s32 1, %s11
  $region7: #{battlefield_feature.11} parent=0 // loop_footer_branch
    %10 = sbr.rel target = $region3
  $region8: #{battlefield_feature.11} parent=0 // loop_exit
    _

// kernel: battlefield_feature.12
$region0: #{battlefield_feature.12}
  #allocation0 [shape = 'u32[]', space=smem, size = 0x4, offset = 0x4, fixed_abs, tag = 'smem constant byte address 0x4 - core index']
  #allocation1 [shape = 'u32[144,128]{1,0:T(1,128)}', space=vmem, size = 0x12000, scoped, tag = 'internal scratch']
  %s0 = inlined_call_operand.vmem [shape: bf16[512,288], index: 0, kind: input, shape index: {}]
  %s1 = inlined_call_operand.vmem [shape: bf16[288,128], index: 1, kind: input, shape index: {}]
  %s2 = inlined_call_operand.vmem [shape: f32[1,128], index: 2, kind: input, shape index: {}]
  %s3 = inlined_call_operand.vmem [shape: f32[1,128], index: 3, kind: input, shape index: {}]
  %s4 = inlined_call_operand.vmem [shape: f32[512,128], index: 4, kind: input, shape index: {}]
  %s5 = inlined_call_operand.vmem [shape: f32[512,128], index: 5, kind: output, shape index: {}]
  %s6 = sld [smem:[#allocation0]]
  $region53: #{battlefield_feature.12} parent=0
    _
  %s8 = ssub.s32 1, %s6
  %s9 = scalar_select 0, %s8, %s6
  loop: start=0, step=1, limit=6
  $region2: #{battlefield_feature.12} parent=0 // loop_pre_header
    _
  $region3: #{battlefield_feature.12} parent=0 // loop_header
    %s11 = sphi 0, %s15
    %p12 = scmp.ge.s32.totalorder %s11, 6
    %s18 = sphi 0, %s30
    %s19 = sphi 0, %s26
    %s20 = sphi 0, %s18
    %s21 = sphi 0, %s19
    %s22 = sphi 0, %s20
    %s23 = sphi 0, %s21
    %s33 = sphi 0, %s35
    %s36 = sphi 0, %s33
    %s37 = sphi 0, %s36
    %s53 = sphi 0, %s37
    %s59 = sphi 0, %s61
    %s62 = sphi 0, %s59
    %s63 = sphi 0, %s62
    %s79 = sphi 0, %s63
    %s85 = sphi 0, %s87
    %s88 = sphi 0, %s85
    %s89 = sphi 0, %s88
    %s105 = sphi 0, %s89
    %s111 = sphi 0, %s113
    %s114 = sphi 0, %s111
    %s115 = sphi 0, %s114
    %s131 = sphi 0, %s115
    %s139 = sphi 0, %s141
    %s142 = sphi 0, %s139
    %s143 = sphi 0, %s142
    %s159 = sphi 0, %s143
    %s167 = sphi 0, %s169
    %s170 = sphi 0, %s167
    %s171 = sphi 0, %s170
    %s187 = sphi 0, %s171
  $region4: #{battlefield_feature.12} parent=0 // loop_header_branch
    %14 = sbr.rel (%p12) target = $region8
  $region5: #{battlefield_feature.12} parent=0 // loop_body
    %s16 = ssub.s32 %s11, 1
    %s17 = ssub.s32 %s11, 2
    %s24 = sadd.s32 1, %s19
    %p25 = scmp.ge.s32.totalorder %s24, 1
    %s26 = scalar_select %p25, 0, %s24
    %s27 = sadd.s32 1, %s18
    %s28 = scalar_select %p25, %s27, %s18
    %p29 = scmp.ge.s32.totalorder %s28, 4
    %s30 = scalar_select %p29, 0, %s28
    %s31 = ssub.s32 %s18, %s30
    %p32 = scmp.eq.s32.totalorder %s31, 0
    %s34 = sadd.s32 %s33, 1
    %s35 = scalar_select %p32, %s33, %s34
    %p38 = pneg %p32
    %p39 = scmp.eq.s32.totalorder %s11, 3
    %p40 = por %p38, %p39
    %p41 = scmp.ne.s32.totalorder %s33, %s36
    %p42 = scmp.eq.s32.totalorder %s11, 0
    %p43 = por %p41, %p42
    %p44 = scmp.ne.s32.totalorder %s33, %s36
    %p45 = scmp.eq.s32.totalorder %s16, 3
    %p46 = por %p44, %p45
    %p47 = scmp.ne.s32.totalorder %s36, %s37
    %p48 = scmp.eq.s32.totalorder %s16, 0
    %p49 = por %p47, %p48
    %p50 = scmp.ne.s32.totalorder %s36, %s37
    %p51 = scmp.eq.s32.totalorder %s17, 3
    %p52 = por %p50, %p51
    %p54 = scmp.ne.s32.totalorder %s37, %s53
    %p55 = scmp.eq.s32.totalorder %s17, 0
    %p56 = por %p54, %p55
    %s57 = ssub.s32 %s19, %s26
    %p58 = scmp.eq.s32.totalorder %s57, 0
    %s60 = sadd.s32 %s59, 1
    %s61 = scalar_select %p58, %s59, %s60
    %p64 = pneg %p58
    %p65 = scmp.eq.s32.totalorder %s11, 3
    %p66 = por %p64, %p65
    %p67 = scmp.ne.s32.totalorder %s59, %s62
    %p68 = scmp.eq.s32.totalorder %s11, 0
    %p69 = por %p67, %p68
    %p70 = scmp.ne.s32.totalorder %s59, %s62
    %p71 = scmp.eq.s32.totalorder %s16, 3
    %p72 = por %p70, %p71
    %p73 = scmp.ne.s32.totalorder %s62, %s63
    %p74 = scmp.eq.s32.totalorder %s16, 0
    %p75 = por %p73, %p74
    %p76 = scmp.ne.s32.totalorder %s62, %s63
    %p77 = scmp.eq.s32.totalorder %s17, 3
    %p78 = por %p76, %p77
    %p80 = scmp.ne.s32.totalorder %s63, %s79
    %p81 = scmp.eq.s32.totalorder %s17, 0
    %p82 = por %p80, %p81
    %s83 = ssub.s32 %s19, %s26
    %p84 = scmp.eq.s32.totalorder %s83, 0
    %s86 = sadd.s32 %s85, 1
    %s87 = scalar_select %p84, %s85, %s86
    %p90 = pneg %p84
    %p91 = scmp.eq.s32.totalorder %s11, 3
    %p92 = por %p90, %p91
    %p93 = scmp.ne.s32.totalorder %s85, %s88
    %p94 = scmp.eq.s32.totalorder %s11, 0
    %p95 = por %p93, %p94
    %p96 = scmp.ne.s32.totalorder %s85, %s88
    %p97 = scmp.eq.s32.totalorder %s16, 3
    %p98 = por %p96, %p97
    %p99 = scmp.ne.s32.totalorder %s88, %s89
    %p100 = scmp.eq.s32.totalorder %s16, 0
    %p101 = por %p99, %p100
    %p102 = scmp.ne.s32.totalorder %s88, %s89
    %p103 = scmp.eq.s32.totalorder %s17, 3
    %p104 = por %p102, %p103
    %p106 = scmp.ne.s32.totalorder %s89, %s105
    %p107 = scmp.eq.s32.totalorder %s17, 0
    %p108 = por %p106, %p107
    %s109 = ssub.s32 %s19, %s26
    %p110 = scmp.eq.s32.totalorder %s109, 0
    %s112 = sadd.s32 %s111, 1
    %s113 = scalar_select %p110, %s111, %s112
    %p116 = pneg %p110
    %p117 = scmp.eq.s32.totalorder %s11, 3
    %p118 = por %p116, %p117
    %p119 = scmp.ne.s32.totalorder %s111, %s114
    %p120 = scmp.eq.s32.totalorder %s11, 0
    %p121 = por %p119, %p120
    %p122 = scmp.ne.s32.totalorder %s111, %s114
    %p123 = scmp.eq.s32.totalorder %s16, 3
    %p124 = por %p122, %p123
    %p125 = scmp.ne.s32.totalorder %s114, %s115
    %p126 = scmp.eq.s32.totalorder %s16, 0
    %p127 = por %p125, %p126
    %p128 = scmp.ne.s32.totalorder %s114, %s115
    %p129 = scmp.eq.s32.totalorder %s17, 3
    %p130 = por %p128, %p129
    %p132 = scmp.ne.s32.totalorder %s115, %s131
    %p133 = scmp.eq.s32.totalorder %s17, 0
    %p134 = por %p132, %p133
    %s135 = ssub.s32 %s18, %s30
    %s136 = ssub.s32 %s19, %s26
    %s137 = sor.u32 %s135, %s136
    %p138 = scmp.eq.s32.totalorder %s137, 0
    %s140 = sadd.s32 %s139, 1
    %s141 = scalar_select %p138, %s139, %s140
    %p144 = pneg %p138
    %p145 = scmp.eq.s32.totalorder %s11, 3
    %p146 = por %p144, %p145
    %p147 = scmp.ne.s32.totalorder %s139, %s142
    %p148 = scmp.eq.s32.totalorder %s11, 0
    %p149 = por %p147, %p148
    %p150 = scmp.ne.s32.totalorder %s139, %s142
    %p151 = scmp.eq.s32.totalorder %s16, 3
    %p152 = por %p150, %p151
    %p153 = scmp.ne.s32.totalorder %s142, %s143
    %p154 = scmp.eq.s32.totalorder %s16, 0
    %p155 = por %p153, %p154
    %p156 = scmp.ne.s32.totalorder %s142, %s143
    %p157 = scmp.eq.s32.totalorder %s17, 3
    %p158 = por %p156, %p157
    %p160 = scmp.ne.s32.totalorder %s143, %s159
    %p161 = scmp.eq.s32.totalorder %s17, 0
    %p162 = por %p160, %p161
    %s163 = ssub.s32 %s18, %s30
    %s164 = ssub.s32 %s19, %s26
    %s165 = sor.u32 %s163, %s164
    %p166 = scmp.eq.s32.totalorder %s165, 0
    %s168 = sadd.s32 %s167, 1
    %s169 = scalar_select %p166, %s167, %s168
    %p172 = pneg %p166
    %p173 = scmp.eq.s32.totalorder %s11, 3
    %p174 = por %p172, %p173
    %p175 = scmp.ne.s32.totalorder %s167, %s170
    %p176 = scmp.eq.s32.totalorder %s11, 0
    %p177 = por %p175, %p176
    %p178 = scmp.ne.s32.totalorder %s167, %s170
    %p179 = scmp.eq.s32.totalorder %s16, 3
    %p180 = por %p178, %p179
    %p181 = scmp.ne.s32.totalorder %s170, %s171
    %p182 = scmp.eq.s32.totalorder %s16, 0
    %p183 = por %p181, %p182
    %p184 = scmp.ne.s32.totalorder %s170, %s171
    %p185 = scmp.eq.s32.totalorder %s17, 3
    %p186 = por %p184, %p185
    %p188 = scmp.ne.s32.totalorder %s171, %s187
    %p189 = scmp.eq.s32.totalorder %s17, 0
    %p190 = por %p188, %p189
    %p191 = scmp.le.s32.totalorder 1, %s11
    %p192 = scmp.lt.s32.totalorder %s11, 5
    %p193 = pnand %p191, %p192
    %p194 = pneg %p193
    // Predicated region
    $region9: #{battlefield_feature.12} parent=5 // pred_check
      _
    $region10: #{battlefield_feature.12} parent=5 // pred_check_branch
      %196 = sbr.rel (%p193) target = $region12
    $region11: #{battlefield_feature.12} parent=5 // pred_region
      %s197 = ssub.s32 %s11, 1
      // Predicated region
      $region13: #{battlefield_feature.12} parent=11 // pred_check
        %p198 = pneg %p75
      $region14: #{battlefield_feature.12} parent=11 // pred_check_branch
        %200 = sbr.rel (%p198) target = $region16
      $region15: #{battlefield_feature.12} parent=11 // pred_region
        %p201 = scmp.lt.s32.totalorder %s21, 0
        %s202 = scalar_select %p201, %s21, 0
        %s203 = smul.addr %s202, 4
        %s204 = scalar_lea.vmem %s1, %s203
      $region16: #{battlefield_feature.12} parent=11 // pred_fallthru
        _
      // Predicated region
      $region17: #{battlefield_feature.12} parent=11 // pred_check
        %p205 = pneg %p101
      $region18: #{battlefield_feature.12} parent=11 // pred_check_branch
        %207 = sbr.rel (%p205) target = $region20
      $region19: #{battlefield_feature.12} parent=11 // pred_region
        %p208 = scmp.lt.s32.totalorder %s21, 0
        %s209 = scalar_select %p208, %s21, 0
        %s210 = scalar_lea.vmem %s2, %s209
      $region20: #{battlefield_feature.12} parent=11 // pred_fallthru
        _
      // Predicated region
      $region21: #{battlefield_feature.12} parent=11 // pred_check
        %p211 = pneg %p127
      $region22: #{battlefield_feature.12} parent=11 // pred_check_branch
        %213 = sbr.rel (%p211) target = $region24
      $region23: #{battlefield_feature.12} parent=11 // pred_region
        %p214 = scmp.lt.s32.totalorder %s21, 0
        %s215 = scalar_select %p214, %s21, 0
        %s216 = scalar_lea.vmem %s3, %s215
      $region24: #{battlefield_feature.12} parent=11 // pred_fallthru
        _
    $region12: #{battlefield_feature.12} parent=5 // pred_fallthru
      _
    %p217 = scmp.lt.s32.totalorder %s11, 4
    // Predicated region
    $region25: #{battlefield_feature.12} parent=5 // pred_check
      %p218 = pneg %p217
    $region26: #{battlefield_feature.12} parent=5 // pred_check_branch
      %220 = sbr.rel (%p218) target = $region28
    $region27: #{battlefield_feature.12} parent=5 // pred_region
      // Predicated region
      $region29: #{battlefield_feature.12} parent=27 // pred_check
        %p221 = pneg %p43
      $region30: #{battlefield_feature.12} parent=27 // pred_check_branch
        %223 = sbr.rel (%p221) target = $region32
      $region31: #{battlefield_feature.12} parent=27 // pred_region
        %s224 = smul.u32 16, %s18
        %p225 = scmp.lt.s32.totalorder %s224, 63
        %s226 = scalar_select %p225, %s224, 63
        %s227 = smul.addr %s226, 3
        %s228 = smul.addr %s227, 4
        %s229 = scalar_lea.vmem %s0, %s228
        %s230 = smul.u32 16, %s18
      $region32: #{battlefield_feature.12} parent=27 // pred_fallthru
        _
      // Predicated region
      $region33: #{battlefield_feature.12} parent=27 // pred_check
        %p231 = pneg %p149
      $region34: #{battlefield_feature.12} parent=27 // pred_check_branch
        %233 = sbr.rel (%p231) target = $region36
      $region35: #{battlefield_feature.12} parent=27 // pred_region
        %s234 = smul.u32 16, %s18
        %p235 = scmp.lt.s32.totalorder %s234, 63
        %s236 = scalar_select %p235, %s234, 63
        %p237 = scmp.lt.s32.totalorder %s19, 0
        %s238 = scalar_select %p237, %s19, 0
        %s239 = sadd.s32 %s238, %s236
        %s240 = smul.addr %s239, 8
        %s241 = scalar_lea.vmem %s4, %s240
        %s242 = smul.u32 16, %s18
      $region36: #{battlefield_feature.12} parent=27 // pred_fallthru
        _
    $region28: #{battlefield_feature.12} parent=5 // pred_fallthru
      _
    %p243 = scmp.le.s32.totalorder 1, %s11
    %p244 = scmp.lt.s32.totalorder %s11, 5
    %p245 = pnand %p243, %p244
    %p246 = pneg %p245
    // Predicated region
    $region37: #{battlefield_feature.12} parent=5 // pred_check
      _
    $region38: #{battlefield_feature.12} parent=5 // pred_check_branch
      %248 = sbr.rel (%p245) target = $region40
    $region39: #{battlefield_feature.12} parent=5 // pred_region
      %s249 = ssub.s32 %s11, 1
      %s250 = smul.u32 16, %s20
      %p251 = scmp.lt.s32.totalorder %s250, 63
      %s252 = scalar_select %p251, %s250, 63
      %s253 = smul.addr %s252, 3
      %s254 = smul.addr %s253, 4
      %s255 = scalar_lea.vmem %s0, %s254
      %p256 = pneg %p49
      %p257 = pneg %p46
      %p258 = scmp.lt.s32.totalorder %s21, 0
      %s259 = scalar_select %p258, %s21, 0
      %s260 = smul.addr %s259, 4
      %s261 = scalar_lea.vmem %s1, %s260
      %p262 = pneg %p75
      %p263 = pneg %p72
      %p264 = scmp.lt.s32.totalorder %s21, 0
      %s265 = scalar_select %p264, %s21, 0
      %s266 = scalar_lea.vmem %s2, %s265
      %p267 = pneg %p101
      %p268 = pneg %p98
      %p269 = scmp.lt.s32.totalorder %s21, 0
      %s270 = scalar_select %p269, %s21, 0
      %s271 = scalar_lea.vmem %s3, %s270
      %p272 = pneg %p127
      %p273 = pneg %p124
      %s274 = smul.u32 16, %s20
      %p275 = scmp.lt.s32.totalorder %s274, 63
      %s276 = scalar_select %p275, %s274, 63
      %p277 = scmp.lt.s32.totalorder %s21, 0
      %s278 = scalar_select %p277, %s21, 0
      %s279 = sadd.s32 %s278, %s276
      %s280 = smul.addr %s279, 8
      %s281 = scalar_lea.vmem %s4, %s280
      %p282 = pneg %p155
      %p283 = pneg %p152
      %p284 = pneg %p183
      %p285 = pneg %p180
      %s286 = smul.u32 16, %s20
      %p287 = scmp.lt.s32.totalorder %s286, 63
      %s288 = scalar_select %p287, %s286, 63
      %p289 = scmp.lt.s32.totalorder %s21, 0
      %s290 = scalar_select %p289, %s21, 0
      %s291 = sadd.s32 %s290, %s288
      %s292 = smul.addr %s291, 8
      %s293 = scalar_lea.vmem %s5, %s292
      %s294 = smul.u32 16, %s20
      %p295 = scmp.lt.s32.totalorder %s294, 63
      %s296 = scalar_select %p295, %s294, 63
      %s297 = smul.addr %s296, 3
      %s298 = smul.addr %s297, 4
      %s299 = scalar_lea.vmem %s0, %s298
      %s300 = smul.u32 16, %s20
      %p301 = scmp.lt.s32.totalorder %s21, 0
      %s302 = scalar_select %p301, %s21, 0
      %s303 = smul.addr %s302, 4
      %s304 = scalar_lea.vmem %s1, %s303
      %p305 = scmp.lt.s32.totalorder %s21, 0
      %s306 = scalar_select %p305, %s21, 0
      %s307 = scalar_lea.vmem %s2, %s306
      %p308 = scmp.lt.s32.totalorder %s21, 0
      %s309 = scalar_select %p308, %s21, 0
      %s310 = scalar_lea.vmem %s3, %s309
      %s311 = smul.u32 16, %s20
      %p312 = scmp.lt.s32.totalorder %s311, 63
      %s313 = scalar_select %p312, %s311, 63
      %p314 = scmp.lt.s32.totalorder %s21, 0
      %s315 = scalar_select %p314, %s21, 0
      %s316 = sadd.s32 %s315, %s313
      %s317 = smul.addr %s316, 8
      %s318 = scalar_lea.vmem %s4, %s317
      %s319 = smul.u32 16, %s20
      %s320 = smul.u32 16, %s20
      %p321 = scmp.lt.s32.totalorder %s320, 63
      %s322 = scalar_select %p321, %s320, 63
      %p323 = scmp.lt.s32.totalorder %s21, 0
      %s324 = scalar_select %p323, %s21, 0
      %s325 = sadd.s32 %s324, %s322
      %s326 = smul.addr %s325, 8
      %s327 = scalar_lea.vmem %s5, %s326
      %s328 = smul.u32 16, %s20
      %v330 = vld [vmem:[%s299] sm:$0xff]
      %v331 = vld [vmem:[%s299 + $0x8] sm:$0xf]
      %v332 = vld [vmem:[%s299 + $0xc] sm:$0xff]
      %v333 = vld [vmem:[%s299 + $0x14] sm:$0xf]
      %v334 = vld [vmem:[%s299 + $0x18] sm:$0xff]
      %v335 = vld [vmem:[%s299 + $0x20] sm:$0xf]
      %v336 = vld [vmem:[%s299 + $0x24] sm:$0xff]
      %v337 = vld [vmem:[%s299 + $0x2c] sm:$0xf]
      %v338 = vld [vmem:[%s299 + $0x30] sm:$0xff]
      %v339 = vld [vmem:[%s299 + $0x38] sm:$0xf]
      %v340 = vld [vmem:[%s299 + $0x3c] sm:$0xff]
      %v341 = vld [vmem:[%s299 + $0x44] sm:$0xf]
      %v342 = vld [vmem:[%s299 + $0x48] sm:$0xff]
      %v343 = vld [vmem:[%s299 + $0x50] sm:$0xf]
      %v344 = vld [vmem:[%s299 + $0x54] sm:$0xff]
      %v345 = vld [vmem:[%s299 + $0x5c] sm:$0xf]
      %v346 = vld [vmem:[%s299 + $0x60] sm:$0xff]
      %v347 = vld [vmem:[%s299 + $0x68] sm:$0xf]
      %v348 = vld [vmem:[%s299 + $0x6c] sm:$0xff]
      %v349 = vld [vmem:[%s299 + $0x74] sm:$0xf]
      %v350 = vld [vmem:[%s299 + $0x78] sm:$0xff]
      %v351 = vld [vmem:[%s299 + $0x80] sm:$0xf]
      %v352 = vld [vmem:[%s299 + $0x84] sm:$0xff]
      %v353 = vld [vmem:[%s299 + $0x8c] sm:$0xf]
      %v354 = vld [vmem:[%s299 + $0x90] sm:$0xff]
      %v355 = vld [vmem:[%s299 + $0x98] sm:$0xf]
      %v356 = vld [vmem:[%s299 + $0x9c] sm:$0xff]
      %v357 = vld [vmem:[%s299 + $0xa4] sm:$0xf]
      %v358 = vld [vmem:[%s299 + $0xa8] sm:$0xff]
      %v359 = vld [vmem:[%s299 + $0xb0] sm:$0xf]
      %v360 = vld [vmem:[%s299 + $0xb4] sm:$0xff]
      %v361 = vld [vmem:[%s299 + $0xbc] sm:$0xf]
      %v362 = vld [vmem:[%s304] sm:$0xf]
      %v363 = vld [vmem:[%s304 + $0x4] sm:$0xf]
      %v364 = vld [vmem:[%s304 + $0x8] sm:$0xf]
      %v365 = vld [vmem:[%s304 + $0xc] sm:$0xf]
      %v366 = vld [vmem:[%s304 + $0x10] sm:$0xf]
      %v367 = vld [vmem:[%s304 + $0x14] sm:$0xf]
      %v368 = vld [vmem:[%s304 + $0x18] sm:$0xf]
      %v369 = vld [vmem:[%s304 + $0x1c] sm:$0xf]
      %v370 = vld [vmem:[%s304 + $0x20] sm:$0xf]
      %v371 = vld [vmem:[%s304 + $0x24] sm:$0xf]
      %v372 = vld [vmem:[%s304 + $0x28] sm:$0xf]
      %v373 = vld [vmem:[%s304 + $0x2c] sm:$0xf]
      %v374 = vld [vmem:[%s304 + $0x30] sm:$0xf]
      %v375 = vld [vmem:[%s304 + $0x34] sm:$0xf]
      %v376 = vld [vmem:[%s304 + $0x38] sm:$0xf]
      %v377 = vld [vmem:[%s304 + $0x3c] sm:$0xf]
      %v378 = vld [vmem:[%s304 + $0x40] sm:$0xf]
      %v379 = vld [vmem:[%s304 + $0x44] sm:$0xf]
      %v380 = vld [vmem:[%s304 + $0x48] sm:$0xf]
      %v381 = vld [vmem:[%s304 + $0x4c] sm:$0xf]
      %v382 = vld [vmem:[%s304 + $0x50] sm:$0xf]
      %v383 = vld [vmem:[%s304 + $0x54] sm:$0xf]
      %v384 = vld [vmem:[%s304 + $0x58] sm:$0xf]
      %v385 = vld [vmem:[%s304 + $0x5c] sm:$0xf]
      %v386 = vld [vmem:[%s304 + $0x60] sm:$0xf]
      %v387 = vld [vmem:[%s304 + $0x64] sm:$0xf]
      %v388 = vld [vmem:[%s304 + $0x68] sm:$0xf]
      %v389 = vld [vmem:[%s304 + $0x6c] sm:$0xf]
      %v390 = vld [vmem:[%s304 + $0x70] sm:$0xf]
      %v391 = vld [vmem:[%s304 + $0x74] sm:$0xf]
      %v392 = vld [vmem:[%s304 + $0x78] sm:$0xf]
      %v393 = vld [vmem:[%s304 + $0x7c] sm:$0xf]
      %v394 = vld [vmem:[%s304 + $0x80] sm:$0xf]
      %v395 = vld [vmem:[%s304 + $0x84] sm:$0xf]
      %v396 = vld [vmem:[%s304 + $0x88] sm:$0xf]
      %v397 = vld [vmem:[%s304 + $0x8c] sm:$0xf]
      %v430 = vunpack.c.l.b16 %v330
      %v431 = vunpack.c.h.b16 %v330
      %v432 = vunpack.c.l.b16 %v331
      %v433 = vunpack.c.l.b16 %v332
      %v434 = vunpack.c.h.b16 %v332
      %v435 = vunpack.c.l.b16 %v333
      %v436 = vunpack.c.l.b16 %v334
      %v437 = vunpack.c.h.b16 %v334
      %v438 = vunpack.c.l.b16 %v335
      %v439 = vunpack.c.l.b16 %v336
      %v440 = vunpack.c.h.b16 %v336
      %v441 = vunpack.c.l.b16 %v337
      %v442 = vunpack.c.l.b16 %v338
      %v443 = vunpack.c.h.b16 %v338
      %v444 = vunpack.c.l.b16 %v339
      %v445 = vunpack.c.l.b16 %v340
      %v446 = vunpack.c.h.b16 %v340
      %v447 = vunpack.c.l.b16 %v341
      %v448 = vunpack.c.l.b16 %v342
      %v449 = vunpack.c.h.b16 %v342
      %v450 = vunpack.c.l.b16 %v343
      %v451 = vunpack.c.l.b16 %v344
      %v452 = vunpack.c.h.b16 %v344
      %v453 = vunpack.c.l.b16 %v345
      %v454 = vunpack.c.l.b16 %v346
      %v455 = vunpack.c.h.b16 %v346
      %v456 = vunpack.c.l.b16 %v347
      %v457 = vunpack.c.l.b16 %v348
      %v458 = vunpack.c.h.b16 %v348
      %v459 = vunpack.c.l.b16 %v349
      %v460 = vunpack.c.l.b16 %v350
      %v461 = vunpack.c.h.b16 %v350
      %v462 = vunpack.c.l.b16 %v351
      %v463 = vunpack.c.l.b16 %v352
      %v464 = vunpack.c.h.b16 %v352
      %v465 = vunpack.c.l.b16 %v353
      %v466 = vunpack.c.l.b16 %v354
      %v467 = vunpack.c.h.b16 %v354
      %v468 = vunpack.c.l.b16 %v355
      %v469 = vunpack.c.l.b16 %v356
      %v470 = vunpack.c.h.b16 %v356
      %v471 = vunpack.c.l.b16 %v357
      %v472 = vunpack.c.l.b16 %v358
      %v473 = vunpack.c.h.b16 %v358
      %v474 = vunpack.c.l.b16 %v359
      %v475 = vunpack.c.l.b16 %v360
      %v476 = vunpack.c.h.b16 %v360
      %v477 = vunpack.c.l.b16 %v361
      %v478 = vpack.c.b16 %v433, %v430
      %v479 = vpack.c.b16 %v434, %v431
      %v480 = vpack.c.b16 %v435, %v432
      %v481 = vpack.c.b16 %v439, %v436
      %v482 = vpack.c.b16 %v440, %v437
      %v483 = vpack.c.b16 %v441, %v438
      %v484 = vpack.c.b16 %v445, %v442
      %v485 = vpack.c.b16 %v446, %v443
      %v486 = vpack.c.b16 %v447, %v444
      %v487 = vpack.c.b16 %v451, %v448
      %v488 = vpack.c.b16 %v452, %v449
      %v489 = vpack.c.b16 %v453, %v450
      %v490 = vpack.c.b16 %v457, %v454
      %v491 = vpack.c.b16 %v458, %v455
      %v492 = vpack.c.b16 %v459, %v456
      %v493 = vpack.c.b16 %v463, %v460
      %v494 = vpack.c.b16 %v464, %v461
      %v495 = vpack.c.b16 %v465, %v462
      %v496 = vpack.c.b16 %v469, %v466
      %v497 = vpack.c.b16 %v470, %v467
      %v498 = vpack.c.b16 %v471, %v468
      %v499 = vpack.c.b16 %v475, %v472
      %v500 = vpack.c.b16 %v476, %v473
      %v501 = vpack.c.b16 %v477, %v474
      %v554 = vunpack.c.l.b16 %v362
      %v555 = vunpack.c.l.b16 %v363
      %v556 = vunpack.c.l.b16 %v364
      %v557 = vunpack.c.l.b16 %v365
      %v558 = vunpack.c.l.b16 %v366
      %v559 = vunpack.c.l.b16 %v367
      %v560 = vunpack.c.l.b16 %v368
      %v561 = vunpack.c.l.b16 %v369
      %v562 = vunpack.c.l.b16 %v370
      %v563 = vunpack.c.l.b16 %v371
      %v564 = vunpack.c.l.b16 %v372
      %v565 = vunpack.c.l.b16 %v373
      %v566 = vunpack.c.l.b16 %v374
      %v567 = vunpack.c.l.b16 %v375
      %v568 = vunpack.c.l.b16 %v376
      %v569 = vunpack.c.l.b16 %v377
      %v570 = vunpack.c.l.b16 %v378
      %v571 = vunpack.c.l.b16 %v379
      %v572 = vunpack.c.l.b16 %v380
      %v573 = vunpack.c.l.b16 %v381
      %v574 = vunpack.c.l.b16 %v382
      %v575 = vunpack.c.l.b16 %v383
      %v576 = vunpack.c.l.b16 %v384
      %v577 = vunpack.c.l.b16 %v385
      %v578 = vunpack.c.l.b16 %v386
      %v579 = vunpack.c.l.b16 %v387
      %v580 = vunpack.c.l.b16 %v388
      %v581 = vunpack.c.l.b16 %v389
      %v582 = vunpack.c.l.b16 %v390
      %v583 = vunpack.c.l.b16 %v391
      %v584 = vunpack.c.l.b16 %v392
      %v585 = vunpack.c.l.b16 %v393
      %v586 = vunpack.c.l.b16 %v394
      %v587 = vunpack.c.l.b16 %v395
      %v588 = vunpack.c.l.b16 %v396
      %v589 = vunpack.c.l.b16 %v397
      %v590 = vpack.c.b16 %v555, %v554
      %v591 = vpack.c.b16 %v557, %v556
      %v592 = vpack.c.b16 %v559, %v558
      %v593 = vpack.c.b16 %v561, %v560
      %v594 = vpack.c.b16 %v563, %v562
      %v595 = vpack.c.b16 %v565, %v564
      %v596 = vpack.c.b16 %v567, %v566
      %v597 = vpack.c.b16 %v569, %v568
      %v598 = vpack.c.b16 %v571, %v570
      %v599 = vpack.c.b16 %v573, %v572
      %v600 = vpack.c.b16 %v575, %v574
      %v601 = vpack.c.b16 %v577, %v576
      %v602 = vpack.c.b16 %v579, %v578
      %v603 = vpack.c.b16 %v581, %v580
      %v604 = vpack.c.b16 %v583, %v582
      %v605 = vpack.c.b16 %v585, %v584
      %v606 = vpack.c.b16 %v587, %v586
      %v607 = vpack.c.b16 %v589, %v588
      %vm626 = vcmask 261120
      %v628 = vsel %vm626, %v480, 0
      %v631 = vsel %vm626, %v483, 0
      %v634 = vsel %vm626, %v486, 0
      %v637 = vsel %vm626, %v489, 0
      %v640 = vsel %vm626, %v492, 0
      %v643 = vsel %vm626, %v495, 0
      %v646 = vsel %vm626, %v498, 0
      %v649 = vsel %vm626, %v501, 0
      %651 = vmatprep.subr.bf16.mxu0 0
      %652 = vmatpush1.bf16.msra.mxu0 %v590
      %653 = vmatprep.subr.bf16.mxu0 0
      %654 = vmatpush1.bf16.msra.mxu0 %v591
      %655 = vmatprep.subr.bf16.mxu0 0
      %656 = vmatpush1.bf16.msra.mxu0 %v592
      %657 = vmatprep.subr.bf16.mxu0 0
      %658 = vmatpush1.bf16.msra.mxu0 %v593
      %659 = vmatprep.subr.bf16.mxu0 0
      %660 = vmatpush1.bf16.msra.mxu0 %v594
      %661 = vmatprep.subr.bf16.mxu0 0
      %662 = vmatpush1.bf16.msra.mxu0 %v595
      %663 = vmatprep.subr.bf16.mxu0 0
      %664 = vmatpush1.bf16.msra.mxu0 %v596
      %665 = vmatprep.subr.bf16.mxu0 0
      %666 = vmatpush1.bf16.msra.mxu0 %v597
      %667 = vmatprep.subr.bf16.mxu0 0
      %668 = vmatpush1.bf16.msra.mxu0 %v598
      %669 = vmatprep.subr.bf16.mxu0 0
      %670 = vmatpush1.bf16.msra.mxu0 %v599
      %671 = vmatprep.subr.bf16.mxu0 0
      %672 = vmatpush1.bf16.msra.mxu0 %v600
      %673 = vmatprep.subr.bf16.mxu0 0
      %674 = vmatpush1.bf16.msra.mxu0 %v601
      %675 = vmatprep.subr.bf16.mxu0 0
      %676 = vmatpush1.bf16.msra.mxu0 %v602
      %677 = vmatprep.subr.bf16.mxu0 0
      %678 = vmatpush1.bf16.msra.mxu0 %v603
      %679 = vmatprep.subr.bf16.mxu0 0
      %680 = vmatpush1.bf16.msra.mxu0 %v604
      %681 = vmatprep.subr.bf16.mxu0 0
      %682 = vmatpush1.bf16.msra.mxu0 %v605
      %683 = vmatprep.mubr.bf16.mxu0 %v479
      %684 = vmatmul.mubr.bf16.gmra.mrb[0].mxu0 %v478
      %v685 = vpop.f32.mrb[0].mxu0
      %v686 = vadd.f32 0.0, %v685
      %v687 = vpop.f32.mrb[0].mxu0
      %v688 = vpop.f32.mrb[0].mxu0
      %v689 = vadd.f32 0.0, %v688
      %v690 = vpop.f32.mrb[0].mxu0
      %691 = vmatprep.mubr.bf16.mxu0 %v482
      %692 = vmatmul.mubr.bf16.gmra.mrb[0].mxu0 %v481
      %v693 = vpop.f32.mrb[0].mxu0
      %v694 = vadd.f32 0.0, %v693
      %v695 = vpop.f32.mrb[0].mxu0
      %v696 = vpop.f32.mrb[0].mxu0
      %v697 = vadd.f32 0.0, %v696
      %v698 = vpop.f32.mrb[0].mxu0
      %699 = vmatprep.mubr.bf16.mxu0 %v485
      %700 = vmatmul.mubr.bf16.gmra.mrb[0].mxu0 %v484
      %v701 = vpop.f32.mrb[0].mxu0
      %v702 = vadd.f32 0.0, %v701
      %v703 = vpop.f32.mrb[0].mxu0
      %v704 = vpop.f32.mrb[0].mxu0
      %v705 = vadd.f32 0.0, %v704
      %v706 = vpop.f32.mrb[0].mxu0
      %707 = vmatprep.mubr.bf16.mxu0 %v488
      %708 = vmatmul.mubr.bf16.gmra.mrb[0].mxu0 %v487
      %v709 = vpop.f32.mrb[0].mxu0
      %v710 = vadd.f32 0.0, %v709
      %v711 = vpop.f32.mrb[0].mxu0
      %v712 = vpop.f32.mrb[0].mxu0
      %v713 = vadd.f32 0.0, %v712
      %v714 = vpop.f32.mrb[0].mxu0
      %715 = vmatprep.mubr.bf16.mxu0 %v491
      %716 = vmatmul.mubr.bf16.gmra.mrb[0].mxu0 %v490
      %v717 = vpop.f32.mrb[0].mxu0
      %v718 = vadd.f32 0.0, %v717
      %v719 = vpop.f32.mrb[0].mxu0
      %v720 = vpop.f32.mrb[0].mxu0
      %v721 = vadd.f32 0.0, %v720
      %v722 = vpop.f32.mrb[0].mxu0
      %723 = vmatprep.mubr.bf16.mxu0 %v494
      %724 = vmatmul.mubr.bf16.gmra.mrb[0].mxu0 %v493
      %v725 = vpop.f32.mrb[0].mxu0
      %v726 = vadd.f32 0.0, %v725
      %v727 = vpop.f32.mrb[0].mxu0
      %v728 = vpop.f32.mrb[0].mxu0
      %v729 = vadd.f32 0.0, %v728
      %v730 = vpop.f32.mrb[0].mxu0
      %731 = vmatprep.mubr.bf16.mxu0 %v497
      %732 = vmatmul.mubr.bf16.gmra.mrb[0].mxu0 %v496
      %v733 = vpop.f32.mrb[0].mxu0
      %v734 = vadd.f32 0.0, %v733
      %v735 = vpop.f32.mrb[0].mxu0
      %v736 = vpop.f32.mrb[0].mxu0
      %v737 = vadd.f32 0.0, %v736
      %v738 = vpop.f32.mrb[0].mxu0
      %739 = vmatprep.mubr.bf16.mxu0 %v500
      %740 = vmatmul.mubr.bf16.gmra.mrb[0].mxu0 %v499
      %v741 = vpop.f32.mrb[0].mxu0
      %v742 = vadd.f32 0.0, %v741
      %v743 = vpop.f32.mrb[0].mxu0
      %v744 = vpop.f32.mrb[0].mxu0
      %v745 = vadd.f32 0.0, %v744
      %v746 = vpop.f32.mrb[0].mxu0
      %747 = vdwg.mxu0
      %748 = vmatprep.subr.bf16.mxu0 0
      %749 = vmatpush1.bf16.msra.mxu0 %v606
      %750 = vmatprep.subr.bf16.mxu0 0
      %751 = vmatpush1.bf16.msra.mxu0 %v607
      %752 = vmatprep.subr.bf16.mxu0 0
      %753 = vmatpush1.bf16.msra.mxu0 0
      %754 = vmatprep.subr.bf16.mxu0 0
      %755 = vmatpush1.bf16.msra.mxu0 0
      %756 = vmatprep.subr.bf16.mxu0 0
      %757 = vmatpush1.bf16.msra.mxu0 0
      %758 = vmatprep.subr.bf16.mxu0 0
      %759 = vmatpush1.bf16.msra.mxu0 0
      %760 = vmatprep.subr.bf16.mxu0 0
      %761 = vmatpush1.bf16.msra.mxu0 0
      %762 = vmatprep.subr.bf16.mxu0 0
      %763 = vmatpush1.bf16.msra.mxu0 0
      %764 = vmatprep.subr.bf16.mxu0 0
      %765 = vmatpush1.bf16.msra.mxu0 0
      %766 = vmatprep.subr.bf16.mxu0 0
      %767 = vmatpush1.bf16.msra.mxu0 0
      %768 = vmatprep.subr.bf16.mxu0 0
      %769 = vmatpush1.bf16.msra.mxu0 0
      %770 = vmatprep.subr.bf16.mxu0 0
      %771 = vmatpush1.bf16.msra.mxu0 0
      %772 = vmatprep.subr.bf16.mxu0 0
      %773 = vmatpush1.bf16.msra.mxu0 0
      %774 = vmatprep.subr.bf16.mxu0 0
      %775 = vmatpush1.bf16.msra.mxu0 0
      %776 = vmatprep.subr.bf16.mxu0 0
      %777 = vmatpush1.bf16.msra.mxu0 0
      %778 = vmatprep.subr.bf16.mxu0 0
      %779 = vmatpush1.bf16.msra.mxu0 0
      %780 = vmatprep.mubr.bf16.mxu0 0
      %781 = vmatmul.mubr.bf16.gmra.mrb[0].mxu0 %v628
      %v782 = vpop.f32.mrb[0].mxu0
      %v783 = vadd.f32 %v686, %v782
      %v784 = vpop.f32.mrb[0].mxu0
      %v785 = vpop.f32.mrb[0].mxu0
      %v786 = vadd.f32 %v689, %v785
      %v787 = vpop.f32.mrb[0].mxu0
      %788 = vmatprep.mubr.bf16.mxu0 0
      %789 = vmatmul.mubr.bf16.gmra.mrb[0].mxu0 %v631
      %v790 = vpop.f32.mrb[0].mxu0
      %v791 = vadd.f32 %v694, %v790
      %v792 = vpop.f32.mrb[0].mxu0
      %v793 = vpop.f32.mrb[0].mxu0
      %v794 = vadd.f32 %v697, %v793
      %v795 = vpop.f32.mrb[0].mxu0
      %796 = vmatprep.mubr.bf16.mxu0 0
      %797 = vmatmul.mubr.bf16.gmra.mrb[0].mxu0 %v634
      %v798 = vpop.f32.mrb[0].mxu0
      %v799 = vadd.f32 %v702, %v798
      %v800 = vpop.f32.mrb[0].mxu0
      %v801 = vpop.f32.mrb[0].mxu0
      %v802 = vadd.f32 %v705, %v801
      %v803 = vpop.f32.mrb[0].mxu0
      %804 = vmatprep.mubr.bf16.mxu0 0
      %805 = vmatmul.mubr.bf16.gmra.mrb[0].mxu0 %v637
      %v806 = vpop.f32.mrb[0].mxu0
      %v807 = vadd.f32 %v710, %v806
      %v808 = vpop.f32.mrb[0].mxu0
      %v809 = vpop.f32.mrb[0].mxu0
      %v810 = vadd.f32 %v713, %v809
      %v811 = vpop.f32.mrb[0].mxu0
      %812 = vmatprep.mubr.bf16.mxu0 0
      %813 = vmatmul.mubr.bf16.gmra.mrb[0].mxu0 %v640
      %v814 = vpop.f32.mrb[0].mxu0
      %v815 = vadd.f32 %v718, %v814
      %v816 = vpop.f32.mrb[0].mxu0
      %v817 = vpop.f32.mrb[0].mxu0
      %v818 = vadd.f32 %v721, %v817
      %v819 = vpop.f32.mrb[0].mxu0
      %820 = vmatprep.mubr.bf16.mxu0 0
      %821 = vmatmul.mubr.bf16.gmra.mrb[0].mxu0 %v643
      %v822 = vpop.f32.mrb[0].mxu0
      %v823 = vadd.f32 %v726, %v822
      %v824 = vpop.f32.mrb[0].mxu0
      %v825 = vpop.f32.mrb[0].mxu0
      %v826 = vadd.f32 %v729, %v825
      %v827 = vpop.f32.mrb[0].mxu0
      %828 = vmatprep.mubr.bf16.mxu0 0
      %829 = vmatmul.mubr.bf16.gmra.mrb[0].mxu0 %v646
      %v830 = vpop.f32.mrb[0].mxu0
      %v831 = vadd.f32 %v734, %v830
      %v832 = vpop.f32.mrb[0].mxu0
      %v833 = vpop.f32.mrb[0].mxu0
      %v834 = vadd.f32 %v737, %v833
      %v835 = vpop.f32.mrb[0].mxu0
      %836 = vmatprep.mubr.bf16.mxu0 0
      %837 = vmatmul.mubr.bf16.gmra.mrb[0].mxu0 %v649
      %v838 = vpop.f32.mrb[0].mxu0
      %v839 = vadd.f32 %v742, %v838
      %v840 = vpop.f32.mrb[0].mxu0
      %v841 = vpop.f32.mrb[0].mxu0
      %v842 = vadd.f32 %v745, %v841
      %v843 = vpop.f32.mrb[0].mxu0
      %844 = vdwg.mxu0
      %v845 = vld [vmem:[%s307] sm:$0x1]
      %v846 = vld [vmem:[%s310] sm:$0x1]
      %v847 = vld [vmem:[%s318] sm:$0xff]
      %v848 = vld [vmem:[%s318 + $0x8] sm:$0xff]
      %v849 = vld [vmem:[%s318 + $0x10] sm:$0xff]
      %v850 = vld [vmem:[%s318 + $0x18] sm:$0xff]
      %v851 = vld [vmem:[%s318 + $0x20] sm:$0xff]
      %v852 = vld [vmem:[%s318 + $0x28] sm:$0xff]
      %v853 = vld [vmem:[%s318 + $0x30] sm:$0xff]
      %v854 = vld [vmem:[%s318 + $0x38] sm:$0xff]
      %v855 = vld [vmem:[%s318 + $0x40] sm:$0xff]
      %v856 = vld [vmem:[%s318 + $0x48] sm:$0xff]
      %v857 = vld [vmem:[%s318 + $0x50] sm:$0xff]
      %v858 = vld [vmem:[%s318 + $0x58] sm:$0xff]
      %v859 = vld [vmem:[%s318 + $0x60] sm:$0xff]
      %v860 = vld [vmem:[%s318 + $0x68] sm:$0xff]
      %v861 = vld [vmem:[%s318 + $0x70] sm:$0xff]
      %v862 = vld [vmem:[%s318 + $0x78] sm:$0xff]
      %v864 = vlaneseq
      %v865 = vshrl.u32 %v864, 7
      %v866 = vsub.s32 0, %v865
      %v867 = vrot.slane %v845, %v866
      %v869 = vmul.f32 %v783, %v867
      %v870 = vmul.f32 %v786, %v867
      %v871 = vmul.f32 %v791, %v867
      %v872 = vmul.f32 %v794, %v867
      %v873 = vmul.f32 %v799, %v867
      %v874 = vmul.f32 %v802, %v867
      %v875 = vmul.f32 %v807, %v867
      %v876 = vmul.f32 %v810, %v867
      %v877 = vmul.f32 %v815, %v867
      %v878 = vmul.f32 %v818, %v867
      %v879 = vmul.f32 %v823, %v867
      %v880 = vmul.f32 %v826, %v867
      %v881 = vmul.f32 %v831, %v867
      %v882 = vmul.f32 %v834, %v867
      %v883 = vmul.f32 %v839, %v867
      %v884 = vmul.f32 %v842, %v867
      %v886 = vlaneseq
      %v887 = vshrl.u32 %v886, 7
      %v888 = vsub.s32 0, %v887
      %v889 = vrot.slane %v846, %v888
      %v891 = vadd.f32 %v869, %v889
      %v892 = vadd.f32 %v870, %v889
      %v893 = vadd.f32 %v871, %v889
      %v894 = vadd.f32 %v872, %v889
      %v895 = vadd.f32 %v873, %v889
      %v896 = vadd.f32 %v874, %v889
      %v897 = vadd.f32 %v875, %v889
      %v898 = vadd.f32 %v876, %v889
      %v899 = vadd.f32 %v877, %v889
      %v900 = vadd.f32 %v878, %v889
      %v901 = vadd.f32 %v879, %v889
      %v902 = vadd.f32 %v880, %v889
      %v903 = vadd.f32 %v881, %v889
      %v904 = vadd.f32 %v882, %v889
      %v905 = vadd.f32 %v883, %v889
      %v906 = vadd.f32 %v884, %v889
      %v907 = vadd.f32 %v891, %v847
      %v908 = vadd.f32 %v892, %v848
      %v909 = vadd.f32 %v893, %v849
      %v910 = vadd.f32 %v894, %v850
      %v911 = vadd.f32 %v895, %v851
      %v912 = vadd.f32 %v896, %v852
      %v913 = vadd.f32 %v897, %v853
      %v914 = vadd.f32 %v898, %v854
      %v915 = vadd.f32 %v899, %v855
      %v916 = vadd.f32 %v900, %v856
      %v917 = vadd.f32 %v901, %v857
      %v918 = vadd.f32 %v902, %v858
      %v919 = vadd.f32 %v903, %v859
      %v920 = vadd.f32 %v904, %v860
      %v921 = vadd.f32 %v905, %v861
      %v922 = vadd.f32 %v906, %v862
      %v923 = vmax.f32 %v907, 0.0
      %v924 = vmax.f32 %v908, 0.0
      %v925 = vmax.f32 %v909, 0.0
      %v926 = vmax.f32 %v910, 0.0
      %v927 = vmax.f32 %v911, 0.0
      %v928 = vmax.f32 %v912, 0.0
      %v929 = vmax.f32 %v913, 0.0
      %v930 = vmax.f32 %v914, 0.0
      %v931 = vmax.f32 %v915, 0.0
      %v932 = vmax.f32 %v916, 0.0
      %v933 = vmax.f32 %v917, 0.0
      %v934 = vmax.f32 %v918, 0.0
      %v935 = vmax.f32 %v919, 0.0
      %v936 = vmax.f32 %v920, 0.0
      %v937 = vmax.f32 %v921, 0.0
      %v938 = vmax.f32 %v922, 0.0
      %939 = vst [vmem:[%s327] sm:$0xff] %v923
      %940 = vst [vmem:[%s327 + $0x8] sm:$0xff] %v924
      %941 = vst [vmem:[%s327 + $0x10] sm:$0xff] %v925
      %942 = vst [vmem:[%s327 + $0x18] sm:$0xff] %v926
      %943 = vst [vmem:[%s327 + $0x20] sm:$0xff] %v927
      %944 = vst [vmem:[%s327 + $0x28] sm:$0xff] %v928
      %945 = vst [vmem:[%s327 + $0x30] sm:$0xff] %v929
      %946 = vst [vmem:[%s327 + $0x38] sm:$0xff] %v930
      %947 = vst [vmem:[%s327 + $0x40] sm:$0xff] %v931
      %948 = vst [vmem:[%s327 + $0x48] sm:$0xff] %v932
      %949 = vst [vmem:[%s327 + $0x50] sm:$0xff] %v933
      %950 = vst [vmem:[%s327 + $0x58] sm:$0xff] %v934
      %951 = vst [vmem:[%s327 + $0x60] sm:$0xff] %v935
      %952 = vst [vmem:[%s327 + $0x68] sm:$0xff] %v936
      %953 = vst [vmem:[%s327 + $0x70] sm:$0xff] %v937
      %954 = vst [vmem:[%s327 + $0x78] sm:$0xff] %v938
      %s955 = smul.u32 16, %s20
      %p956 = scmp.lt.s32.totalorder %s955, 63
      %s957 = scalar_select %p956, %s955, 63
      %p958 = scmp.lt.s32.totalorder %s21, 0
      %s959 = scalar_select %p958, %s21, 0
      %s960 = sadd.s32 %s959, %s957
      %s961 = smul.addr %s960, 8
      %s962 = scalar_lea.vmem %s5, %s961
      // Predicated region
      $region41: #{battlefield_feature.12} parent=39 // pred_check
        %p963 = pneg %p180
      $region42: #{battlefield_feature.12} parent=39 // pred_check_branch
        %965 = sbr.rel (%p963) target = $region44
      $region43: #{battlefield_feature.12} parent=39 // pred_region
        %s966 = smul.u32 16, %s20
      $region44: #{battlefield_feature.12} parent=39 // pred_fallthru
        _
    $region40: #{battlefield_feature.12} parent=5 // pred_fallthru
      _
    %p967 = scmp.le.s32.totalorder 2, %s11
    // Predicated region
    $region45: #{battlefield_feature.12} parent=5 // pred_check
      %p968 = pneg %p967
    $region46: #{battlefield_feature.12} parent=5 // pred_check_branch
      %970 = sbr.rel (%p968) target = $region48
    $region47: #{battlefield_feature.12} parent=5 // pred_region
      %s971 = ssub.s32 %s11, 2
      // Predicated region
      $region49: #{battlefield_feature.12} parent=47 // pred_check
        %p972 = pneg %p186
      $region50: #{battlefield_feature.12} parent=47 // pred_check_branch
        %974 = sbr.rel (%p972) target = $region52
      $region51: #{battlefield_feature.12} parent=47 // pred_region
        %s975 = smul.u32 16, %s22
        %p976 = scmp.lt.s32.totalorder %s975, 63
        %s977 = scalar_select %p976, %s975, 63
        %p978 = scmp.lt.s32.totalorder %s23, 0
        %s979 = scalar_select %p978, %s23, 0
        %s980 = sadd.s32 %s979, %s977
        %s981 = smul.addr %s980, 8
        %s982 = scalar_lea.vmem %s5, %s981
      $region52: #{battlefield_feature.12} parent=47 // pred_fallthru
        _
    $region48: #{battlefield_feature.12} parent=5 // pred_fallthru
      _
  $region6: #{battlefield_feature.12} parent=0 // loop_footer
    %s15 = sadd.s32 1, %s11
  $region7: #{battlefield_feature.12} parent=0 // loop_footer_branch
    %10 = sbr.rel target = $region3
  $region8: #{battlefield_feature.12} parent=0 // loop_exit
    _

// kernel: battlefield_feature.13
$region0: #{battlefield_feature.13}
  #allocation0 [shape = 'u32[]', space=smem, size = 0x4, offset = 0x4, fixed_abs, tag = 'smem constant byte address 0x4 - core index']
  #allocation1 [shape = 'u32[144,128]{1,0:T(1,128)}', space=vmem, size = 0x12000, scoped, tag = 'internal scratch']
  %s0 = inlined_call_operand.vmem [shape: bf16[128,288], index: 0, kind: input, shape index: {}]
  %s1 = inlined_call_operand.vmem [shape: bf16[288,128], index: 1, kind: input, shape index: {}]
  %s2 = inlined_call_operand.vmem [shape: f32[1,128], index: 2, kind: input, shape index: {}]
  %s3 = inlined_call_operand.vmem [shape: f32[1,128], index: 3, kind: input, shape index: {}]
  %s4 = inlined_call_operand.vmem [shape: f32[1,128], index: 4, kind: input, shape index: {}]
  %s5 = inlined_call_operand.vmem [shape: f32[128,128], index: 5, kind: output, shape index: {}]
  %s6 = sld [smem:[#allocation0]]
  $region30: #{battlefield_feature.13} parent=0
    _
  %s8 = ssub.s32 1, %s6
  %s9 = scalar_select 0, %s8, %s6
  // Predicated region
  $region2: #{battlefield_feature.13} parent=0 // pred_check
    _
  $region3: #{battlefield_feature.13} parent=0 // pred_check_branch
    %11 = sbr.rel (0) target = $region5
  $region4: #{battlefield_feature.13} parent=0 // pred_region
    _
  $region5: #{battlefield_feature.13} parent=0 // pred_fallthru
    _
  // Predicated region
  $region6: #{battlefield_feature.13} parent=0 // pred_check
    _
  $region7: #{battlefield_feature.13} parent=0 // pred_check_branch
    %13 = sbr.rel (0) target = $region9
  $region8: #{battlefield_feature.13} parent=0 // pred_region
    _
  $region9: #{battlefield_feature.13} parent=0 // pred_fallthru
    _
  // Predicated region
  $region10: #{battlefield_feature.13} parent=0 // pred_check
    _
  $region11: #{battlefield_feature.13} parent=0 // pred_check_branch
    %15 = sbr.rel (0) target = $region13
  $region12: #{battlefield_feature.13} parent=0 // pred_region
    _
  $region13: #{battlefield_feature.13} parent=0 // pred_fallthru
    _
  // Predicated region
  $region14: #{battlefield_feature.13} parent=0 // pred_check
    _
  $region15: #{battlefield_feature.13} parent=0 // pred_check_branch
    %17 = sbr.rel (0) target = $region17
  $region16: #{battlefield_feature.13} parent=0 // pred_region
    _
  $region17: #{battlefield_feature.13} parent=0 // pred_fallthru
    _
  // Predicated region
  $region18: #{battlefield_feature.13} parent=0 // pred_check
    _
  $region19: #{battlefield_feature.13} parent=0 // pred_check_branch
    %19 = sbr.rel (0) target = $region21
  $region20: #{battlefield_feature.13} parent=0 // pred_region
    _
  $region21: #{battlefield_feature.13} parent=0 // pred_fallthru
    _
  %v21 = vld [vmem:[%s0] sm:$0xff]
  %v22 = vld [vmem:[%s0 + $0x8] sm:$0xf]
  %v23 = vld [vmem:[%s0 + $0xc] sm:$0xff]
  %v24 = vld [vmem:[%s0 + $0x14] sm:$0xf]
  %v25 = vld [vmem:[%s0 + $0x18] sm:$0xff]
  %v26 = vld [vmem:[%s0 + $0x20] sm:$0xf]
  %v27 = vld [vmem:[%s0 + $0x24] sm:$0xff]
  %v28 = vld [vmem:[%s0 + $0x2c] sm:$0xf]
  %v29 = vld [vmem:[%s0 + $0x30] sm:$0xff]
  %v30 = vld [vmem:[%s0 + $0x38] sm:$0xf]
  %v31 = vld [vmem:[%s0 + $0x3c] sm:$0xff]
  %v32 = vld [vmem:[%s0 + $0x44] sm:$0xf]
  %v33 = vld [vmem:[%s0 + $0x48] sm:$0xff]
  %v34 = vld [vmem:[%s0 + $0x50] sm:$0xf]
  %v35 = vld [vmem:[%s0 + $0x54] sm:$0xff]
  %v36 = vld [vmem:[%s0 + $0x5c] sm:$0xf]
  %v37 = vld [vmem:[%s0 + $0x60] sm:$0xff]
  %v38 = vld [vmem:[%s0 + $0x68] sm:$0xf]
  %v39 = vld [vmem:[%s0 + $0x6c] sm:$0xff]
  %v40 = vld [vmem:[%s0 + $0x74] sm:$0xf]
  %v41 = vld [vmem:[%s0 + $0x78] sm:$0xff]
  %v42 = vld [vmem:[%s0 + $0x80] sm:$0xf]
  %v43 = vld [vmem:[%s0 + $0x84] sm:$0xff]
  %v44 = vld [vmem:[%s0 + $0x8c] sm:$0xf]
  %v45 = vld [vmem:[%s0 + $0x90] sm:$0xff]
  %v46 = vld [vmem:[%s0 + $0x98] sm:$0xf]
  %v47 = vld [vmem:[%s0 + $0x9c] sm:$0xff]
  %v48 = vld [vmem:[%s0 + $0xa4] sm:$0xf]
  %v49 = vld [vmem:[%s0 + $0xa8] sm:$0xff]
  %v50 = vld [vmem:[%s0 + $0xb0] sm:$0xf]
  %v51 = vld [vmem:[%s0 + $0xb4] sm:$0xff]
  %v52 = vld [vmem:[%s0 + $0xbc] sm:$0xf]
  %v53 = vld [vmem:[%s1] sm:$0xf]
  %v54 = vld [vmem:[%s1 + $0x4] sm:$0xf]
  %v55 = vld [vmem:[%s1 + $0x8] sm:$0xf]
  %v56 = vld [vmem:[%s1 + $0xc] sm:$0xf]
  %v57 = vld [vmem:[%s1 + $0x10] sm:$0xf]
  %v58 = vld [vmem:[%s1 + $0x14] sm:$0xf]
  %v59 = vld [vmem:[%s1 + $0x18] sm:$0xf]
  %v60 = vld [vmem:[%s1 + $0x1c] sm:$0xf]
  %v61 = vld [vmem:[%s1 + $0x20] sm:$0xf]
  %v62 = vld [vmem:[%s1 + $0x24] sm:$0xf]
  %v63 = vld [vmem:[%s1 + $0x28] sm:$0xf]
  %v64 = vld [vmem:[%s1 + $0x2c] sm:$0xf]
  %v65 = vld [vmem:[%s1 + $0x30] sm:$0xf]
  %v66 = vld [vmem:[%s1 + $0x34] sm:$0xf]
  %v67 = vld [vmem:[%s1 + $0x38] sm:$0xf]
  %v68 = vld [vmem:[%s1 + $0x3c] sm:$0xf]
  %v69 = vld [vmem:[%s1 + $0x40] sm:$0xf]
  %v70 = vld [vmem:[%s1 + $0x44] sm:$0xf]
  %v71 = vld [vmem:[%s1 + $0x48] sm:$0xf]
  %v72 = vld [vmem:[%s1 + $0x4c] sm:$0xf]
  %v73 = vld [vmem:[%s1 + $0x50] sm:$0xf]
  %v74 = vld [vmem:[%s1 + $0x54] sm:$0xf]
  %v75 = vld [vmem:[%s1 + $0x58] sm:$0xf]
  %v76 = vld [vmem:[%s1 + $0x5c] sm:$0xf]
  %v77 = vld [vmem:[%s1 + $0x60] sm:$0xf]
  %v78 = vld [vmem:[%s1 + $0x64] sm:$0xf]
  %v79 = vld [vmem:[%s1 + $0x68] sm:$0xf]
  %v80 = vld [vmem:[%s1 + $0x6c] sm:$0xf]
  %v81 = vld [vmem:[%s1 + $0x70] sm:$0xf]
  %v82 = vld [vmem:[%s1 + $0x74] sm:$0xf]
  %v83 = vld [vmem:[%s1 + $0x78] sm:$0xf]
  %v84 = vld [vmem:[%s1 + $0x7c] sm:$0xf]
  %v85 = vld [vmem:[%s1 + $0x80] sm:$0xf]
  %v86 = vld [vmem:[%s1 + $0x84] sm:$0xf]
  %v87 = vld [vmem:[%s1 + $0x88] sm:$0xf]
  %v88 = vld [vmem:[%s1 + $0x8c] sm:$0xf]
  %v121 = vunpack.c.l.b16 %v21
  %v122 = vunpack.c.h.b16 %v21
  %v123 = vunpack.c.l.b16 %v22
  %v124 = vunpack.c.l.b16 %v23
  %v125 = vunpack.c.h.b16 %v23
  %v126 = vunpack.c.l.b16 %v24
  %v127 = vunpack.c.l.b16 %v25
  %v128 = vunpack.c.h.b16 %v25
  %v129 = vunpack.c.l.b16 %v26
  %v130 = vunpack.c.l.b16 %v27
  %v131 = vunpack.c.h.b16 %v27
  %v132 = vunpack.c.l.b16 %v28
  %v133 = vunpack.c.l.b16 %v29
  %v134 = vunpack.c.h.b16 %v29
  %v135 = vunpack.c.l.b16 %v30
  %v136 = vunpack.c.l.b16 %v31
  %v137 = vunpack.c.h.b16 %v31
  %v138 = vunpack.c.l.b16 %v32
  %v139 = vunpack.c.l.b16 %v33
  %v140 = vunpack.c.h.b16 %v33
  %v141 = vunpack.c.l.b16 %v34
  %v142 = vunpack.c.l.b16 %v35
  %v143 = vunpack.c.h.b16 %v35
  %v144 = vunpack.c.l.b16 %v36
  %v145 = vunpack.c.l.b16 %v37
  %v146 = vunpack.c.h.b16 %v37
  %v147 = vunpack.c.l.b16 %v38
  %v148 = vunpack.c.l.b16 %v39
  %v149 = vunpack.c.h.b16 %v39
  %v150 = vunpack.c.l.b16 %v40
  %v151 = vunpack.c.l.b16 %v41
  %v152 = vunpack.c.h.b16 %v41
  %v153 = vunpack.c.l.b16 %v42
  %v154 = vunpack.c.l.b16 %v43
  %v155 = vunpack.c.h.b16 %v43
  %v156 = vunpack.c.l.b16 %v44
  %v157 = vunpack.c.l.b16 %v45
  %v158 = vunpack.c.h.b16 %v45
  %v159 = vunpack.c.l.b16 %v46
  %v160 = vunpack.c.l.b16 %v47
  %v161 = vunpack.c.h.b16 %v47
  %v162 = vunpack.c.l.b16 %v48
  %v163 = vunpack.c.l.b16 %v49
  %v164 = vunpack.c.h.b16 %v49
  %v165 = vunpack.c.l.b16 %v50
  %v166 = vunpack.c.l.b16 %v51
  %v167 = vunpack.c.h.b16 %v51
  %v168 = vunpack.c.l.b16 %v52
  %v169 = vpack.c.b16 %v124, %v121
  %v170 = vpack.c.b16 %v125, %v122
  %v171 = vpack.c.b16 %v126, %v123
  %v172 = vpack.c.b16 %v130, %v127
  %v173 = vpack.c.b16 %v131, %v128
  %v174 = vpack.c.b16 %v132, %v129
  %v175 = vpack.c.b16 %v136, %v133
  %v176 = vpack.c.b16 %v137, %v134
  %v177 = vpack.c.b16 %v138, %v135
  %v178 = vpack.c.b16 %v142, %v139
  %v179 = vpack.c.b16 %v143, %v140
  %v180 = vpack.c.b16 %v144, %v141
  %v181 = vpack.c.b16 %v148, %v145
  %v182 = vpack.c.b16 %v149, %v146
  %v183 = vpack.c.b16 %v150, %v147
  %v184 = vpack.c.b16 %v154, %v151
  %v185 = vpack.c.b16 %v155, %v152
  %v186 = vpack.c.b16 %v156, %v153
  %v187 = vpack.c.b16 %v160, %v157
  %v188 = vpack.c.b16 %v161, %v158
  %v189 = vpack.c.b16 %v162, %v159
  %v190 = vpack.c.b16 %v166, %v163
  %v191 = vpack.c.b16 %v167, %v164
  %v192 = vpack.c.b16 %v168, %v165
  %v245 = vunpack.c.l.b16 %v53
  %v246 = vunpack.c.l.b16 %v54
  %v247 = vunpack.c.l.b16 %v55
  %v248 = vunpack.c.l.b16 %v56
  %v249 = vunpack.c.l.b16 %v57
  %v250 = vunpack.c.l.b16 %v58
  %v251 = vunpack.c.l.b16 %v59
  %v252 = vunpack.c.l.b16 %v60
  %v253 = vunpack.c.l.b16 %v61
  %v254 = vunpack.c.l.b16 %v62
  %v255 = vunpack.c.l.b16 %v63
  %v256 = vunpack.c.l.b16 %v64
  %v257 = vunpack.c.l.b16 %v65
  %v258 = vunpack.c.l.b16 %v66
  %v259 = vunpack.c.l.b16 %v67
  %v260 = vunpack.c.l.b16 %v68
  %v261 = vunpack.c.l.b16 %v69
  %v262 = vunpack.c.l.b16 %v70
  %v263 = vunpack.c.l.b16 %v71
  %v264 = vunpack.c.l.b16 %v72
  %v265 = vunpack.c.l.b16 %v73
  %v266 = vunpack.c.l.b16 %v74
  %v267 = vunpack.c.l.b16 %v75
  %v268 = vunpack.c.l.b16 %v76
  %v269 = vunpack.c.l.b16 %v77
  %v270 = vunpack.c.l.b16 %v78
  %v271 = vunpack.c.l.b16 %v79
  %v272 = vunpack.c.l.b16 %v80
  %v273 = vunpack.c.l.b16 %v81
  %v274 = vunpack.c.l.b16 %v82
  %v275 = vunpack.c.l.b16 %v83
  %v276 = vunpack.c.l.b16 %v84
  %v277 = vunpack.c.l.b16 %v85
  %v278 = vunpack.c.l.b16 %v86
  %v279 = vunpack.c.l.b16 %v87
  %v280 = vunpack.c.l.b16 %v88
  %v281 = vpack.c.b16 %v246, %v245
  %v282 = vpack.c.b16 %v248, %v247
  %v283 = vpack.c.b16 %v250, %v249
  %v284 = vpack.c.b16 %v252, %v251
  %v285 = vpack.c.b16 %v254, %v253
  %v286 = vpack.c.b16 %v256, %v255
  %v287 = vpack.c.b16 %v258, %v257
  %v288 = vpack.c.b16 %v260, %v259
  %v289 = vpack.c.b16 %v262, %v261
  %v290 = vpack.c.b16 %v264, %v263
  %v291 = vpack.c.b16 %v266, %v265
  %v292 = vpack.c.b16 %v268, %v267
  %v293 = vpack.c.b16 %v270, %v269
  %v294 = vpack.c.b16 %v272, %v271
  %v295 = vpack.c.b16 %v274, %v273
  %v296 = vpack.c.b16 %v276, %v275
  %v297 = vpack.c.b16 %v278, %v277
  %v298 = vpack.c.b16 %v280, %v279
  %vm317 = vcmask 261120
  %v319 = vsel %vm317, %v171, 0
  %v322 = vsel %vm317, %v174, 0
  %v325 = vsel %vm317, %v177, 0
  %v328 = vsel %vm317, %v180, 0
  %v331 = vsel %vm317, %v183, 0
  %v334 = vsel %vm317, %v186, 0
  %v337 = vsel %vm317, %v189, 0
  %v340 = vsel %vm317, %v192, 0
  %342 = vmatprep.subr.bf16.mxu0 0
  %343 = vmatpush1.bf16.msra.mxu0 %v281
  %344 = vmatprep.subr.bf16.mxu0 0
  %345 = vmatpush1.bf16.msra.mxu0 %v282
  %346 = vmatprep.subr.bf16.mxu0 0
  %347 = vmatpush1.bf16.msra.mxu0 %v283
  %348 = vmatprep.subr.bf16.mxu0 0
  %349 = vmatpush1.bf16.msra.mxu0 %v284
  %350 = vmatprep.subr.bf16.mxu0 0
  %351 = vmatpush1.bf16.msra.mxu0 %v285
  %352 = vmatprep.subr.bf16.mxu0 0
  %353 = vmatpush1.bf16.msra.mxu0 %v286
  %354 = vmatprep.subr.bf16.mxu0 0
  %355 = vmatpush1.bf16.msra.mxu0 %v287
  %356 = vmatprep.subr.bf16.mxu0 0
  %357 = vmatpush1.bf16.msra.mxu0 %v288
  %358 = vmatprep.subr.bf16.mxu0 0
  %359 = vmatpush1.bf16.msra.mxu0 %v289
  %360 = vmatprep.subr.bf16.mxu0 0
  %361 = vmatpush1.bf16.msra.mxu0 %v290
  %362 = vmatprep.subr.bf16.mxu0 0
  %363 = vmatpush1.bf16.msra.mxu0 %v291
  %364 = vmatprep.subr.bf16.mxu0 0
  %365 = vmatpush1.bf16.msra.mxu0 %v292
  %366 = vmatprep.subr.bf16.mxu0 0
  %367 = vmatpush1.bf16.msra.mxu0 %v293
  %368 = vmatprep.subr.bf16.mxu0 0
  %369 = vmatpush1.bf16.msra.mxu0 %v294
  %370 = vmatprep.subr.bf16.mxu0 0
  %371 = vmatpush1.bf16.msra.mxu0 %v295
  %372 = vmatprep.subr.bf16.mxu0 0
  %373 = vmatpush1.bf16.msra.mxu0 %v296
  %374 = vmatprep.mubr.bf16.mxu0 %v170
  %375 = vmatmul.mubr.bf16.gmra.mrb[0].mxu0 %v169
  %v376 = vpop.f32.mrb[0].mxu0
  %v377 = vadd.f32 0.0, %v376
  %v378 = vpop.f32.mrb[0].mxu0
  %v379 = vpop.f32.mrb[0].mxu0
  %v380 = vadd.f32 0.0, %v379
  %v381 = vpop.f32.mrb[0].mxu0
  %382 = vmatprep.mubr.bf16.mxu0 %v173
  %383 = vmatmul.mubr.bf16.gmra.mrb[0].mxu0 %v172
  %v384 = vpop.f32.mrb[0].mxu0
  %v385 = vadd.f32 0.0, %v384
  %v386 = vpop.f32.mrb[0].mxu0
  %v387 = vpop.f32.mrb[0].mxu0
  %v388 = vadd.f32 0.0, %v387
  %v389 = vpop.f32.mrb[0].mxu0
  %390 = vmatprep.mubr.bf16.mxu0 %v176
  %391 = vmatmul.mubr.bf16.gmra.mrb[0].mxu0 %v175
  %v392 = vpop.f32.mrb[0].mxu0
  %v393 = vadd.f32 0.0, %v392
  %v394 = vpop.f32.mrb[0].mxu0
  %v395 = vpop.f32.mrb[0].mxu0
  %v396 = vadd.f32 0.0, %v395
  %v397 = vpop.f32.mrb[0].mxu0
  %398 = vmatprep.mubr.bf16.mxu0 %v179
  %399 = vmatmul.mubr.bf16.gmra.mrb[0].mxu0 %v178
  %v400 = vpop.f32.mrb[0].mxu0
  %v401 = vadd.f32 0.0, %v400
  %v402 = vpop.f32.mrb[0].mxu0
  %v403 = vpop.f32.mrb[0].mxu0
  %v404 = vadd.f32 0.0, %v403
  %v405 = vpop.f32.mrb[0].mxu0
  %406 = vmatprep.mubr.bf16.mxu0 %v182
  %407 = vmatmul.mubr.bf16.gmra.mrb[0].mxu0 %v181
  %v408 = vpop.f32.mrb[0].mxu0
  %v409 = vadd.f32 0.0, %v408
  %v410 = vpop.f32.mrb[0].mxu0
  %v411 = vpop.f32.mrb[0].mxu0
  %v412 = vadd.f32 0.0, %v411
  %v413 = vpop.f32.mrb[0].mxu0
  %414 = vmatprep.mubr.bf16.mxu0 %v185
  %415 = vmatmul.mubr.bf16.gmra.mrb[0].mxu0 %v184
  %v416 = vpop.f32.mrb[0].mxu0
  %v417 = vadd.f32 0.0, %v416
  %v418 = vpop.f32.mrb[0].mxu0
  %v419 = vpop.f32.mrb[0].mxu0
  %v420 = vadd.f32 0.0, %v419
  %v421 = vpop.f32.mrb[0].mxu0
  %422 = vmatprep.mubr.bf16.mxu0 %v188
  %423 = vmatmul.mubr.bf16.gmra.mrb[0].mxu0 %v187
  %v424 = vpop.f32.mrb[0].mxu0
  %v425 = vadd.f32 0.0, %v424
  %v426 = vpop.f32.mrb[0].mxu0
  %v427 = vpop.f32.mrb[0].mxu0
  %v428 = vadd.f32 0.0, %v427
  %v429 = vpop.f32.mrb[0].mxu0
  %430 = vmatprep.mubr.bf16.mxu0 %v191
  %431 = vmatmul.mubr.bf16.gmra.mrb[0].mxu0 %v190
  %v432 = vpop.f32.mrb[0].mxu0
  %v433 = vadd.f32 0.0, %v432
  %v434 = vpop.f32.mrb[0].mxu0
  %v435 = vpop.f32.mrb[0].mxu0
  %v436 = vadd.f32 0.0, %v435
  %v437 = vpop.f32.mrb[0].mxu0
  %438 = vdwg.mxu0
  %439 = vmatprep.subr.bf16.mxu0 0
  %440 = vmatpush1.bf16.msra.mxu0 %v297
  %441 = vmatprep.subr.bf16.mxu0 0
  %442 = vmatpush1.bf16.msra.mxu0 %v298
  %443 = vmatprep.subr.bf16.mxu0 0
  %444 = vmatpush1.bf16.msra.mxu0 0
  %445 = vmatprep.subr.bf16.mxu0 0
  %446 = vmatpush1.bf16.msra.mxu0 0
  %447 = vmatprep.subr.bf16.mxu0 0
  %448 = vmatpush1.bf16.msra.mxu0 0
  %449 = vmatprep.subr.bf16.mxu0 0
  %450 = vmatpush1.bf16.msra.mxu0 0
  %451 = vmatprep.subr.bf16.mxu0 0
  %452 = vmatpush1.bf16.msra.mxu0 0
  %453 = vmatprep.subr.bf16.mxu0 0
  %454 = vmatpush1.bf16.msra.mxu0 0
  %455 = vmatprep.subr.bf16.mxu0 0
  %456 = vmatpush1.bf16.msra.mxu0 0
  %457 = vmatprep.subr.bf16.mxu0 0
  %458 = vmatpush1.bf16.msra.mxu0 0
  %459 = vmatprep.subr.bf16.mxu0 0
  %460 = vmatpush1.bf16.msra.mxu0 0
  %461 = vmatprep.subr.bf16.mxu0 0
  %462 = vmatpush1.bf16.msra.mxu0 0
  %463 = vmatprep.subr.bf16.mxu0 0
  %464 = vmatpush1.bf16.msra.mxu0 0
  %465 = vmatprep.subr.bf16.mxu0 0
  %466 = vmatpush1.bf16.msra.mxu0 0
  %467 = vmatprep.subr.bf16.mxu0 0
  %468 = vmatpush1.bf16.msra.mxu0 0
  %469 = vmatprep.subr.bf16.mxu0 0
  %470 = vmatpush1.bf16.msra.mxu0 0
  %471 = vmatprep.mubr.bf16.mxu0 0
  %472 = vmatmul.mubr.bf16.gmra.mrb[0].mxu0 %v319
  %v473 = vpop.f32.mrb[0].mxu0
  %v474 = vadd.f32 %v377, %v473
  %v475 = vpop.f32.mrb[0].mxu0
  %v476 = vpop.f32.mrb[0].mxu0
  %v477 = vadd.f32 %v380, %v476
  %v478 = vpop.f32.mrb[0].mxu0
  %479 = vmatprep.mubr.bf16.mxu0 0
  %480 = vmatmul.mubr.bf16.gmra.mrb[0].mxu0 %v322
  %v481 = vpop.f32.mrb[0].mxu0
  %v482 = vadd.f32 %v385, %v481
  %v483 = vpop.f32.mrb[0].mxu0
  %v484 = vpop.f32.mrb[0].mxu0
  %v485 = vadd.f32 %v388, %v484
  %v486 = vpop.f32.mrb[0].mxu0
  %487 = vmatprep.mubr.bf16.mxu0 0
  %488 = vmatmul.mubr.bf16.gmra.mrb[0].mxu0 %v325
  %v489 = vpop.f32.mrb[0].mxu0
  %v490 = vadd.f32 %v393, %v489
  %v491 = vpop.f32.mrb[0].mxu0
  %v492 = vpop.f32.mrb[0].mxu0
  %v493 = vadd.f32 %v396, %v492
  %v494 = vpop.f32.mrb[0].mxu0
  %495 = vmatprep.mubr.bf16.mxu0 0
  %496 = vmatmul.mubr.bf16.gmra.mrb[0].mxu0 %v328
  %v497 = vpop.f32.mrb[0].mxu0
  %v498 = vadd.f32 %v401, %v497
  %v499 = vpop.f32.mrb[0].mxu0
  %v500 = vpop.f32.mrb[0].mxu0
  %v501 = vadd.f32 %v404, %v500
  %v502 = vpop.f32.mrb[0].mxu0
  %503 = vmatprep.mubr.bf16.mxu0 0
  %504 = vmatmul.mubr.bf16.gmra.mrb[0].mxu0 %v331
  %v505 = vpop.f32.mrb[0].mxu0
  %v506 = vadd.f32 %v409, %v505
  %v507 = vpop.f32.mrb[0].mxu0
  %v508 = vpop.f32.mrb[0].mxu0
  %v509 = vadd.f32 %v412, %v508
  %v510 = vpop.f32.mrb[0].mxu0
  %511 = vmatprep.mubr.bf16.mxu0 0
  %512 = vmatmul.mubr.bf16.gmra.mrb[0].mxu0 %v334
  %v513 = vpop.f32.mrb[0].mxu0
  %v514 = vadd.f32 %v417, %v513
  %v515 = vpop.f32.mrb[0].mxu0
  %v516 = vpop.f32.mrb[0].mxu0
  %v517 = vadd.f32 %v420, %v516
  %v518 = vpop.f32.mrb[0].mxu0
  %519 = vmatprep.mubr.bf16.mxu0 0
  %520 = vmatmul.mubr.bf16.gmra.mrb[0].mxu0 %v337
  %v521 = vpop.f32.mrb[0].mxu0
  %v522 = vadd.f32 %v425, %v521
  %v523 = vpop.f32.mrb[0].mxu0
  %v524 = vpop.f32.mrb[0].mxu0
  %v525 = vadd.f32 %v428, %v524
  %v526 = vpop.f32.mrb[0].mxu0
  %527 = vmatprep.mubr.bf16.mxu0 0
  %528 = vmatmul.mubr.bf16.gmra.mrb[0].mxu0 %v340
  %v529 = vpop.f32.mrb[0].mxu0
  %v530 = vadd.f32 %v433, %v529
  %v531 = vpop.f32.mrb[0].mxu0
  %v532 = vpop.f32.mrb[0].mxu0
  %v533 = vadd.f32 %v436, %v532
  %v534 = vpop.f32.mrb[0].mxu0
  %535 = vdwg.mxu0
  %v536 = vld [vmem:[%s2] sm:$0x1]
  %v537 = vld [vmem:[%s3] sm:$0x1]
  %v538 = vld [vmem:[%s4] sm:$0x1]
  %v540 = vlaneseq
  %v541 = vshrl.u32 %v540, 7
  %v542 = vsub.s32 0, %v541
  %v543 = vrot.slane %v536, %v542
  %v545 = vmul.f32 %v474, %v543
  %v546 = vmul.f32 %v477, %v543
  %v547 = vmul.f32 %v482, %v543
  %v548 = vmul.f32 %v485, %v543
  %v549 = vmul.f32 %v490, %v543
  %v550 = vmul.f32 %v493, %v543
  %v551 = vmul.f32 %v498, %v543
  %v552 = vmul.f32 %v501, %v543
  %v553 = vmul.f32 %v506, %v543
  %v554 = vmul.f32 %v509, %v543
  %v555 = vmul.f32 %v514, %v543
  %v556 = vmul.f32 %v517, %v543
  %v557 = vmul.f32 %v522, %v543
  %v558 = vmul.f32 %v525, %v543
  %v559 = vmul.f32 %v530, %v543
  %v560 = vmul.f32 %v533, %v543
  %v562 = vlaneseq
  %v563 = vshrl.u32 %v562, 7
  %v564 = vsub.s32 0, %v563
  %v565 = vrot.slane %v537, %v564
  %v567 = vadd.f32 %v545, %v565
  %v568 = vadd.f32 %v546, %v565
  %v569 = vadd.f32 %v547, %v565
  %v570 = vadd.f32 %v548, %v565
  %v571 = vadd.f32 %v549, %v565
  %v572 = vadd.f32 %v550, %v565
  %v573 = vadd.f32 %v551, %v565
  %v574 = vadd.f32 %v552, %v565
  %v575 = vadd.f32 %v553, %v565
  %v576 = vadd.f32 %v554, %v565
  %v577 = vadd.f32 %v555, %v565
  %v578 = vadd.f32 %v556, %v565
  %v579 = vadd.f32 %v557, %v565
  %v580 = vadd.f32 %v558, %v565
  %v581 = vadd.f32 %v559, %v565
  %v582 = vadd.f32 %v560, %v565
  %vm583 = vcmp.ne.f32.partialorder %v538, 0.0
  %v584 = vmax.f32 %v567, 0.0
  %v585 = vmax.f32 %v568, 0.0
  %v586 = vmax.f32 %v569, 0.0
  %v587 = vmax.f32 %v570, 0.0
  %v588 = vmax.f32 %v571, 0.0
  %v589 = vmax.f32 %v572, 0.0
  %v590 = vmax.f32 %v573, 0.0
  %v591 = vmax.f32 %v574, 0.0
  %v592 = vmax.f32 %v575, 0.0
  %v593 = vmax.f32 %v576, 0.0
  %v594 = vmax.f32 %v577, 0.0
  %v595 = vmax.f32 %v578, 0.0
  %v596 = vmax.f32 %v579, 0.0
  %v597 = vmax.f32 %v580, 0.0
  %v598 = vmax.f32 %v581, 0.0
  %v599 = vmax.f32 %v582, 0.0
  %v600 = vsel %vm583, 1, 0
  %v601 = vlaneseq
  %v602 = vshrl.u32 %v601, 7
  %v603 = vsub.s32 0, %v602
  %v604 = vrot.slane %v600, %v603
  %vm605 = vcmp.eq.s32.totalorder %v604, 1
  %v606 = vsel %vm605, %v584, %v567
  %v607 = vsel %vm605, %v585, %v568
  %v608 = vsel %vm605, %v586, %v569
  %v609 = vsel %vm605, %v587, %v570
  %v610 = vsel %vm605, %v588, %v571
  %v611 = vsel %vm605, %v589, %v572
  %v612 = vsel %vm605, %v590, %v573
  %v613 = vsel %vm605, %v591, %v574
  %v614 = vsel %vm605, %v592, %v575
  %v615 = vsel %vm605, %v593, %v576
  %v616 = vsel %vm605, %v594, %v577
  %v617 = vsel %vm605, %v595, %v578
  %v618 = vsel %vm605, %v596, %v579
  %v619 = vsel %vm605, %v597, %v580
  %v620 = vsel %vm605, %v598, %v581
  %v621 = vsel %vm605, %v599, %v582
  %622 = vst [vmem:[%s5] sm:$0xff] %v606
  %623 = vst [vmem:[%s5 + $0x8] sm:$0xff] %v607
  %624 = vst [vmem:[%s5 + $0x10] sm:$0xff] %v608
  %625 = vst [vmem:[%s5 + $0x18] sm:$0xff] %v609
  %626 = vst [vmem:[%s5 + $0x20] sm:$0xff] %v610
  %627 = vst [vmem:[%s5 + $0x28] sm:$0xff] %v611
  %628 = vst [vmem:[%s5 + $0x30] sm:$0xff] %v612
  %629 = vst [vmem:[%s5 + $0x38] sm:$0xff] %v613
  %630 = vst [vmem:[%s5 + $0x40] sm:$0xff] %v614
  %631 = vst [vmem:[%s5 + $0x48] sm:$0xff] %v615
  %632 = vst [vmem:[%s5 + $0x50] sm:$0xff] %v616
  %633 = vst [vmem:[%s5 + $0x58] sm:$0xff] %v617
  %634 = vst [vmem:[%s5 + $0x60] sm:$0xff] %v618
  %635 = vst [vmem:[%s5 + $0x68] sm:$0xff] %v619
  %636 = vst [vmem:[%s5 + $0x70] sm:$0xff] %v620
  %637 = vst [vmem:[%s5 + $0x78] sm:$0xff] %v621
  // Predicated region
  $region22: #{battlefield_feature.13} parent=0 // pred_check
    _
  $region23: #{battlefield_feature.13} parent=0 // pred_check_branch
    %639 = sbr.rel (0) target = $region25
  $region24: #{battlefield_feature.13} parent=0 // pred_region
    _
  $region25: #{battlefield_feature.13} parent=0 // pred_fallthru
    _
  // Predicated region
  $region26: #{battlefield_feature.13} parent=0 // pred_check
    _
  $region27: #{battlefield_feature.13} parent=0 // pred_check_branch
    %641 = sbr.rel (0) target = $region29
  $region28: #{battlefield_feature.13} parent=0 // pred_region
    _
  $region29: #{battlefield_feature.13} parent=0 // pred_fallthru
    _

// kernel: battlefield_feature.14
$region0: #{battlefield_feature.14}
  #allocation0 [shape = 'u32[]', space=smem, size = 0x4, offset = 0x4, fixed_abs, tag = 'smem constant byte address 0x4 - core index']
  #allocation1 [shape = 'u32[144,128]{1,0:T(1,128)}', space=vmem, size = 0x12000, scoped, tag = 'internal scratch']
  %s0 = inlined_call_operand.vmem [shape: bf16[128,576], index: 0, kind: input, shape index: {}]
  %s1 = inlined_call_operand.vmem [shape: bf16[576,128], index: 1, kind: input, shape index: {}]
  %s2 = inlined_call_operand.vmem [shape: f32[1,128], index: 2, kind: input, shape index: {}]
  %s3 = inlined_call_operand.vmem [shape: f32[1,128], index: 3, kind: input, shape index: {}]
  %s4 = inlined_call_operand.vmem [shape: f32[128,128], index: 4, kind: input, shape index: {}]
  %s5 = inlined_call_operand.vmem [shape: f32[128,128], index: 5, kind: output, shape index: {}]
  %s6 = sld [smem:[#allocation0]]
  $region30: #{battlefield_feature.14} parent=0
    _
  %s8 = ssub.s32 1, %s6
  %s9 = scalar_select 0, %s8, %s6
  // Predicated region
  $region2: #{battlefield_feature.14} parent=0 // pred_check
    _
  $region3: #{battlefield_feature.14} parent=0 // pred_check_branch
    %11 = sbr.rel (0) target = $region5
  $region4: #{battlefield_feature.14} parent=0 // pred_region
    _
  $region5: #{battlefield_feature.14} parent=0 // pred_fallthru
    _
  // Predicated region
  $region6: #{battlefield_feature.14} parent=0 // pred_check
    _
  $region7: #{battlefield_feature.14} parent=0 // pred_check_branch
    %13 = sbr.rel (0) target = $region9
  $region8: #{battlefield_feature.14} parent=0 // pred_region
    _
  $region9: #{battlefield_feature.14} parent=0 // pred_fallthru
    _
  // Predicated region
  $region10: #{battlefield_feature.14} parent=0 // pred_check
    _
  $region11: #{battlefield_feature.14} parent=0 // pred_check_branch
    %15 = sbr.rel (0) target = $region13
  $region12: #{battlefield_feature.14} parent=0 // pred_region
    _
  $region13: #{battlefield_feature.14} parent=0 // pred_fallthru
    _
  // Predicated region
  $region14: #{battlefield_feature.14} parent=0 // pred_check
    _
  $region15: #{battlefield_feature.14} parent=0 // pred_check_branch
    %17 = sbr.rel (0) target = $region17
  $region16: #{battlefield_feature.14} parent=0 // pred_region
    _
  $region17: #{battlefield_feature.14} parent=0 // pred_fallthru
    _
  // Predicated region
  $region18: #{battlefield_feature.14} parent=0 // pred_check
    _
  $region19: #{battlefield_feature.14} parent=0 // pred_check_branch
    %19 = sbr.rel (0) target = $region21
  $region20: #{battlefield_feature.14} parent=0 // pred_region
    _
  $region21: #{battlefield_feature.14} parent=0 // pred_fallthru
    _
  %v21 = vld [vmem:[%s0] sm:$0xff]
  %v22 = vld [vmem:[%s0 + $0x8] sm:$0xff]
  %v23 = vld [vmem:[%s0 + $0x10] sm:$0xf]
  %v24 = vld [vmem:[%s0 + $0x14] sm:$0xff]
  %v25 = vld [vmem:[%s0 + $0x1c] sm:$0xff]
  %v26 = vld [vmem:[%s0 + $0x24] sm:$0xf]
  %v27 = vld [vmem:[%s0 + $0x28] sm:$0xff]
  %v28 = vld [vmem:[%s0 + $0x30] sm:$0xff]
  %v29 = vld [vmem:[%s0 + $0x38] sm:$0xf]
  %v30 = vld [vmem:[%s0 + $0x3c] sm:$0xff]
  %v31 = vld [vmem:[%s0 + $0x44] sm:$0xff]
  %v32 = vld [vmem:[%s0 + $0x4c] sm:$0xf]
  %v33 = vld [vmem:[%s0 + $0x50] sm:$0xff]
  %v34 = vld [vmem:[%s0 + $0x58] sm:$0xff]
  %v35 = vld [vmem:[%s0 + $0x60] sm:$0xf]
  %v36 = vld [vmem:[%s0 + $0x64] sm:$0xff]
  %v37 = vld [vmem:[%s0 + $0x6c] sm:$0xff]
  %v38 = vld [vmem:[%s0 + $0x74] sm:$0xf]
  %v39 = vld [vmem:[%s0 + $0x78] sm:$0xff]
  %v40 = vld [vmem:[%s0 + $0x80] sm:$0xff]
  %v41 = vld [vmem:[%s0 + $0x88] sm:$0xf]
  %v42 = vld [vmem:[%s0 + $0x8c] sm:$0xff]
  %v43 = vld [vmem:[%s0 + $0x94] sm:$0xff]
  %v44 = vld [vmem:[%s0 + $0x9c] sm:$0xf]
  %v45 = vld [vmem:[%s0 + $0xa0] sm:$0xff]
  %v46 = vld [vmem:[%s0 + $0xa8] sm:$0xff]
  %v47 = vld [vmem:[%s0 + $0xb0] sm:$0xf]
  %v48 = vld [vmem:[%s0 + $0xb4] sm:$0xff]
  %v49 = vld [vmem:[%s0 + $0xbc] sm:$0xff]
  %v50 = vld [vmem:[%s0 + $0xc4] sm:$0xf]
  %v51 = vld [vmem:[%s0 + $0xc8] sm:$0xff]
  %v52 = vld [vmem:[%s0 + $0xd0] sm:$0xff]
  %v53 = vld [vmem:[%s0 + $0xd8] sm:$0xf]
  %v54 = vld [vmem:[%s0 + $0xdc] sm:$0xff]
  %v55 = vld [vmem:[%s0 + $0xe4] sm:$0xff]
  %v56 = vld [vmem:[%s0 + $0xec] sm:$0xf]
  %v57 = vld [vmem:[%s0 + $0xf0] sm:$0xff]
  %v58 = vld [vmem:[%s0 + $0xf8] sm:$0xff]
  %v59 = vld [vmem:[%s0 + $0x100] sm:$0xf]
  %v60 = vld [vmem:[%s0 + $0x104] sm:$0xff]
  %v61 = vld [vmem:[%s0 + $0x10c] sm:$0xff]
  %v62 = vld [vmem:[%s0 + $0x114] sm:$0xf]
  %v63 = vld [vmem:[%s0 + $0x118] sm:$0xff]
  %v64 = vld [vmem:[%s0 + $0x120] sm:$0xff]
  %v65 = vld [vmem:[%s0 + $0x128] sm:$0xf]
  %v66 = vld [vmem:[%s0 + $0x12c] sm:$0xff]
  %v67 = vld [vmem:[%s0 + $0x134] sm:$0xff]
  %v68 = vld [vmem:[%s0 + $0x13c] sm:$0xf]
  %v69 = vld [vmem:[%s1] sm:$0xf]
  %v70 = vld [vmem:[%s1 + $0x4] sm:$0xf]
  %v71 = vld [vmem:[%s1 + $0x8] sm:$0xf]
  %v72 = vld [vmem:[%s1 + $0xc] sm:$0xf]
  %v73 = vld [vmem:[%s1 + $0x10] sm:$0xf]
  %v74 = vld [vmem:[%s1 + $0x14] sm:$0xf]
  %v75 = vld [vmem:[%s1 + $0x18] sm:$0xf]
  %v76 = vld [vmem:[%s1 + $0x1c] sm:$0xf]
  %v77 = vld [vmem:[%s1 + $0x20] sm:$0xf]
  %v78 = vld [vmem:[%s1 + $0x24] sm:$0xf]
  %v79 = vld [vmem:[%s1 + $0x28] sm:$0xf]
  %v80 = vld [vmem:[%s1 + $0x2c] sm:$0xf]
  %v81 = vld [vmem:[%s1 + $0x30] sm:$0xf]
  %v82 = vld [vmem:[%s1 + $0x34] sm:$0xf]
  %v83 = vld [vmem:[%s1 + $0x38] sm:$0xf]
  %v84 = vld [vmem:[%s1 + $0x3c] sm:$0xf]
  %v85 = vld [vmem:[%s1 + $0x40] sm:$0xf]
  %v86 = vld [vmem:[%s1 + $0x44] sm:$0xf]
  %v87 = vld [vmem:[%s1 + $0x48] sm:$0xf]
  %v88 = vld [vmem:[%s1 + $0x4c] sm:$0xf]
  %v89 = vld [vmem:[%s1 + $0x50] sm:$0xf]
  %v90 = vld [vmem:[%s1 + $0x54] sm:$0xf]
  %v91 = vld [vmem:[%s1 + $0x58] sm:$0xf]
  %v92 = vld [vmem:[%s1 + $0x5c] sm:$0xf]
  %v93 = vld [vmem:[%s1 + $0x60] sm:$0xf]
  %v94 = vld [vmem:[%s1 + $0x64] sm:$0xf]
  %v95 = vld [vmem:[%s1 + $0x68] sm:$0xf]
  %v96 = vld [vmem:[%s1 + $0x6c] sm:$0xf]
  %v97 = vld [vmem:[%s1 + $0x70] sm:$0xf]
  %v98 = vld [vmem:[%s1 + $0x74] sm:$0xf]
  %v99 = vld [vmem:[%s1 + $0x78] sm:$0xf]
  %v100 = vld [vmem:[%s1 + $0x7c] sm:$0xf]
  %v101 = vld [vmem:[%s1 + $0x80] sm:$0xf]
  %v102 = vld [vmem:[%s1 + $0x84] sm:$0xf]
  %v103 = vld [vmem:[%s1 + $0x88] sm:$0xf]
  %v104 = vld [vmem:[%s1 + $0x8c] sm:$0xf]
  %v105 = vld [vmem:[%s1 + $0x90] sm:$0xf]
  %v106 = vld [vmem:[%s1 + $0x94] sm:$0xf]
  %v107 = vld [vmem:[%s1 + $0x98] sm:$0xf]
  %v108 = vld [vmem:[%s1 + $0x9c] sm:$0xf]
  %v109 = vld [vmem:[%s1 + $0xa0] sm:$0xf]
  %v110 = vld [vmem:[%s1 + $0xa4] sm:$0xf]
  %v111 = vld [vmem:[%s1 + $0xa8] sm:$0xf]
  %v112 = vld [vmem:[%s1 + $0xac] sm:$0xf]
  %v113 = vld [vmem:[%s1 + $0xb0] sm:$0xf]
  %v114 = vld [vmem:[%s1 + $0xb4] sm:$0xf]
  %v115 = vld [vmem:[%s1 + $0xb8] sm:$0xf]
  %v116 = vld [vmem:[%s1 + $0xbc] sm:$0xf]
  %v117 = vld [vmem:[%s1 + $0xc0] sm:$0xf]
  %v118 = vld [vmem:[%s1 + $0xc4] sm:$0xf]
  %v119 = vld [vmem:[%s1 + $0xc8] sm:$0xf]
  %v120 = vld [vmem:[%s1 + $0xcc] sm:$0xf]
  %v121 = vld [vmem:[%s1 + $0xd0] sm:$0xf]
  %v122 = vld [vmem:[%s1 + $0xd4] sm:$0xf]
  %v123 = vld [vmem:[%s1 + $0xd8] sm:$0xf]
  %v124 = vld [vmem:[%s1 + $0xdc] sm:$0xf]
  %v125 = vld [vmem:[%s1 + $0xe0] sm:$0xf]
  %v126 = vld [vmem:[%s1 + $0xe4] sm:$0xf]
  %v127 = vld [vmem:[%s1 + $0xe8] sm:$0xf]
  %v128 = vld [vmem:[%s1 + $0xec] sm:$0xf]
  %v129 = vld [vmem:[%s1 + $0xf0] sm:$0xf]
  %v130 = vld [vmem:[%s1 + $0xf4] sm:$0xf]
  %v131 = vld [vmem:[%s1 + $0xf8] sm:$0xf]
  %v132 = vld [vmem:[%s1 + $0xfc] sm:$0xf]
  %v133 = vld [vmem:[%s1 + $0x100] sm:$0xf]
  %v134 = vld [vmem:[%s1 + $0x104] sm:$0xf]
  %v135 = vld [vmem:[%s1 + $0x108] sm:$0xf]
  %v136 = vld [vmem:[%s1 + $0x10c] sm:$0xf]
  %v137 = vld [vmem:[%s1 + $0x110] sm:$0xf]
  %v138 = vld [vmem:[%s1 + $0x114] sm:$0xf]
  %v139 = vld [vmem:[%s1 + $0x118] sm:$0xf]
  %v140 = vld [vmem:[%s1 + $0x11c] sm:$0xf]
  %v189 = vunpack.c.l.b16 %v21
  %v190 = vunpack.c.h.b16 %v21
  %v191 = vunpack.c.l.b16 %v22
  %v192 = vunpack.c.h.b16 %v22
  %v193 = vunpack.c.l.b16 %v23
  %v194 = vunpack.c.l.b16 %v24
  %v195 = vunpack.c.h.b16 %v24
  %v196 = vunpack.c.l.b16 %v25
  %v197 = vunpack.c.h.b16 %v25
  %v198 = vunpack.c.l.b16 %v26
  %v199 = vunpack.c.l.b16 %v27
  %v200 = vunpack.c.h.b16 %v27
  %v201 = vunpack.c.l.b16 %v28
  %v202 = vunpack.c.h.b16 %v28
  %v203 = vunpack.c.l.b16 %v29
  %v204 = vunpack.c.l.b16 %v30
  %v205 = vunpack.c.h.b16 %v30
  %v206 = vunpack.c.l.b16 %v31
  %v207 = vunpack.c.h.b16 %v31
  %v208 = vunpack.c.l.b16 %v32
  %v209 = vunpack.c.l.b16 %v33
  %v210 = vunpack.c.h.b16 %v33
  %v211 = vunpack.c.l.b16 %v34
  %v212 = vunpack.c.h.b16 %v34
  %v213 = vunpack.c.l.b16 %v35
  %v214 = vunpack.c.l.b16 %v36
  %v215 = vunpack.c.h.b16 %v36
  %v216 = vunpack.c.l.b16 %v37
  %v217 = vunpack.c.h.b16 %v37
  %v218 = vunpack.c.l.b16 %v38
  %v219 = vunpack.c.l.b16 %v39
  %v220 = vunpack.c.h.b16 %v39
  %v221 = vunpack.c.l.b16 %v40
  %v222 = vunpack.c.h.b16 %v40
  %v223 = vunpack.c.l.b16 %v41
  %v224 = vunpack.c.l.b16 %v42
  %v225 = vunpack.c.h.b16 %v42
  %v226 = vunpack.c.l.b16 %v43
  %v227 = vunpack.c.h.b16 %v43
  %v228 = vunpack.c.l.b16 %v44
  %v229 = vunpack.c.l.b16 %v45
  %v230 = vunpack.c.h.b16 %v45
  %v231 = vunpack.c.l.b16 %v46
  %v232 = vunpack.c.h.b16 %v46
  %v233 = vunpack.c.l.b16 %v47
  %v234 = vunpack.c.l.b16 %v48
  %v235 = vunpack.c.h.b16 %v48
  %v236 = vunpack.c.l.b16 %v49
  %v237 = vunpack.c.h.b16 %v49
  %v238 = vunpack.c.l.b16 %v50
  %v239 = vunpack.c.l.b16 %v51
  %v240 = vunpack.c.h.b16 %v51
  %v241 = vunpack.c.l.b16 %v52
  %v242 = vunpack.c.h.b16 %v52
  %v243 = vunpack.c.l.b16 %v53
  %v244 = vunpack.c.l.b16 %v54
  %v245 = vunpack.c.h.b16 %v54
  %v246 = vunpack.c.l.b16 %v55
  %v247 = vunpack.c.h.b16 %v55
  %v248 = vunpack.c.l.b16 %v56
  %v249 = vunpack.c.l.b16 %v57
  %v250 = vunpack.c.h.b16 %v57
  %v251 = vunpack.c.l.b16 %v58
  %v252 = vunpack.c.h.b16 %v58
  %v253 = vunpack.c.l.b16 %v59
  %v254 = vunpack.c.l.b16 %v60
  %v255 = vunpack.c.h.b16 %v60
  %v256 = vunpack.c.l.b16 %v61
  %v257 = vunpack.c.h.b16 %v61
  %v258 = vunpack.c.l.b16 %v62
  %v259 = vunpack.c.l.b16 %v63
  %v260 = vunpack.c.h.b16 %v63
  %v261 = vunpack.c.l.b16 %v64
  %v262 = vunpack.c.h.b16 %v64
  %v263 = vunpack.c.l.b16 %v65
  %v264 = vunpack.c.l.b16 %v66
  %v265 = vunpack.c.h.b16 %v66
  %v266 = vunpack.c.l.b16 %v67
  %v267 = vunpack.c.h.b16 %v67
  %v268 = vunpack.c.l.b16 %v68
  %v269 = vpack.c.b16 %v194, %v189
  %v270 = vpack.c.b16 %v195, %v190
  %v271 = vpack.c.b16 %v196, %v191
  %v272 = vpack.c.b16 %v197, %v192
  %v273 = vpack.c.b16 %v198, %v193
  %v274 = vpack.c.b16 %v204, %v199
  %v275 = vpack.c.b16 %v205, %v200
  %v276 = vpack.c.b16 %v206, %v201
  %v277 = vpack.c.b16 %v207, %v202
  %v278 = vpack.c.b16 %v208, %v203
  %v279 = vpack.c.b16 %v214, %v209
  %v280 = vpack.c.b16 %v215, %v210
  %v281 = vpack.c.b16 %v216, %v211
  %v282 = vpack.c.b16 %v217, %v212
  %v283 = vpack.c.b16 %v218, %v213
  %v284 = vpack.c.b16 %v224, %v219
  %v285 = vpack.c.b16 %v225, %v220
  %v286 = vpack.c.b16 %v226, %v221
  %v287 = vpack.c.b16 %v227, %v222
  %v288 = vpack.c.b16 %v228, %v223
  %v289 = vpack.c.b16 %v234, %v229
  %v290 = vpack.c.b16 %v235, %v230
  %v291 = vpack.c.b16 %v236, %v231
  %v292 = vpack.c.b16 %v237, %v232
  %v293 = vpack.c.b16 %v238, %v233
  %v294 = vpack.c.b16 %v244, %v239
  %v295 = vpack.c.b16 %v245, %v240
  %v296 = vpack.c.b16 %v246, %v241
  %v297 = vpack.c.b16 %v247, %v242
  %v298 = vpack.c.b16 %v248, %v243
  %v299 = vpack.c.b16 %v254, %v249
  %v300 = vpack.c.b16 %v255, %v250
  %v301 = vpack.c.b16 %v256, %v251
  %v302 = vpack.c.b16 %v257, %v252
  %v303 = vpack.c.b16 %v258, %v253
  %v304 = vpack.c.b16 %v264, %v259
  %v305 = vpack.c.b16 %v265, %v260
  %v306 = vpack.c.b16 %v266, %v261
  %v307 = vpack.c.b16 %v267, %v262
  %v308 = vpack.c.b16 %v268, %v263
  %v413 = vunpack.c.l.b16 %v69
  %v414 = vunpack.c.l.b16 %v70
  %v415 = vunpack.c.l.b16 %v71
  %v416 = vunpack.c.l.b16 %v72
  %v417 = vunpack.c.l.b16 %v73
  %v418 = vunpack.c.l.b16 %v74
  %v419 = vunpack.c.l.b16 %v75
  %v420 = vunpack.c.l.b16 %v76
  %v421 = vunpack.c.l.b16 %v77
  %v422 = vunpack.c.l.b16 %v78
  %v423 = vunpack.c.l.b16 %v79
  %v424 = vunpack.c.l.b16 %v80
  %v425 = vunpack.c.l.b16 %v81
  %v426 = vunpack.c.l.b16 %v82
  %v427 = vunpack.c.l.b16 %v83
  %v428 = vunpack.c.l.b16 %v84
  %v429 = vunpack.c.l.b16 %v85
  %v430 = vunpack.c.l.b16 %v86
  %v431 = vunpack.c.l.b16 %v87
  %v432 = vunpack.c.l.b16 %v88
  %v433 = vunpack.c.l.b16 %v89
  %v434 = vunpack.c.l.b16 %v90
  %v435 = vunpack.c.l.b16 %v91
  %v436 = vunpack.c.l.b16 %v92
  %v437 = vunpack.c.l.b16 %v93
  %v438 = vunpack.c.l.b16 %v94
  %v439 = vunpack.c.l.b16 %v95
  %v440 = vunpack.c.l.b16 %v96
  %v441 = vunpack.c.l.b16 %v97
  %v442 = vunpack.c.l.b16 %v98
  %v443 = vunpack.c.l.b16 %v99
  %v444 = vunpack.c.l.b16 %v100
  %v445 = vunpack.c.l.b16 %v101
  %v446 = vunpack.c.l.b16 %v102
  %v447 = vunpack.c.l.b16 %v103
  %v448 = vunpack.c.l.b16 %v104
  %v449 = vunpack.c.l.b16 %v105
  %v450 = vunpack.c.l.b16 %v106
  %v451 = vunpack.c.l.b16 %v107
  %v452 = vunpack.c.l.b16 %v108
  %v453 = vunpack.c.l.b16 %v109
  %v454 = vunpack.c.l.b16 %v110
  %v455 = vunpack.c.l.b16 %v111
  %v456 = vunpack.c.l.b16 %v112
  %v457 = vunpack.c.l.b16 %v113
  %v458 = vunpack.c.l.b16 %v114
  %v459 = vunpack.c.l.b16 %v115
  %v460 = vunpack.c.l.b16 %v116
  %v461 = vunpack.c.l.b16 %v117
  %v462 = vunpack.c.l.b16 %v118
  %v463 = vunpack.c.l.b16 %v119
  %v464 = vunpack.c.l.b16 %v120
  %v465 = vunpack.c.l.b16 %v121
  %v466 = vunpack.c.l.b16 %v122
  %v467 = vunpack.c.l.b16 %v123
  %v468 = vunpack.c.l.b16 %v124
  %v469 = vunpack.c.l.b16 %v125
  %v470 = vunpack.c.l.b16 %v126
  %v471 = vunpack.c.l.b16 %v127
  %v472 = vunpack.c.l.b16 %v128
  %v473 = vunpack.c.l.b16 %v129
  %v474 = vunpack.c.l.b16 %v130
  %v475 = vunpack.c.l.b16 %v131
  %v476 = vunpack.c.l.b16 %v132
  %v477 = vunpack.c.l.b16 %v133
  %v478 = vunpack.c.l.b16 %v134
  %v479 = vunpack.c.l.b16 %v135
  %v480 = vunpack.c.l.b16 %v136
  %v481 = vunpack.c.l.b16 %v137
  %v482 = vunpack.c.l.b16 %v138
  %v483 = vunpack.c.l.b16 %v139
  %v484 = vunpack.c.l.b16 %v140
  %v485 = vpack.c.b16 %v414, %v413
  %v486 = vpack.c.b16 %v416, %v415
  %v487 = vpack.c.b16 %v418, %v417
  %v488 = vpack.c.b16 %v420, %v419
  %v489 = vpack.c.b16 %v422, %v421
  %v490 = vpack.c.b16 %v424, %v423
  %v491 = vpack.c.b16 %v426, %v425
  %v492 = vpack.c.b16 %v428, %v427
  %v493 = vpack.c.b16 %v430, %v429
  %v494 = vpack.c.b16 %v432, %v431
  %v495 = vpack.c.b16 %v434, %v433
  %v496 = vpack.c.b16 %v436, %v435
  %v497 = vpack.c.b16 %v438, %v437
  %v498 = vpack.c.b16 %v440, %v439
  %v499 = vpack.c.b16 %v442, %v441
  %v500 = vpack.c.b16 %v444, %v443
  %v501 = vpack.c.b16 %v446, %v445
  %v502 = vpack.c.b16 %v448, %v447
  %v503 = vpack.c.b16 %v450, %v449
  %v504 = vpack.c.b16 %v452, %v451
  %v505 = vpack.c.b16 %v454, %v453
  %v506 = vpack.c.b16 %v456, %v455
  %v507 = vpack.c.b16 %v458, %v457
  %v508 = vpack.c.b16 %v460, %v459
  %v509 = vpack.c.b16 %v462, %v461
  %v510 = vpack.c.b16 %v464, %v463
  %v511 = vpack.c.b16 %v466, %v465
  %v512 = vpack.c.b16 %v468, %v467
  %v513 = vpack.c.b16 %v470, %v469
  %v514 = vpack.c.b16 %v472, %v471
  %v515 = vpack.c.b16 %v474, %v473
  %v516 = vpack.c.b16 %v476, %v475
  %v517 = vpack.c.b16 %v478, %v477
  %v518 = vpack.c.b16 %v480, %v479
  %v519 = vpack.c.b16 %v482, %v481
  %v520 = vpack.c.b16 %v484, %v483
  %vm557 = vcmask 523264
  %v559 = vsel %vm557, %v273, 0
  %v562 = vsel %vm557, %v278, 0
  %v565 = vsel %vm557, %v283, 0
  %v568 = vsel %vm557, %v288, 0
  %v571 = vsel %vm557, %v293, 0
  %v574 = vsel %vm557, %v298, 0
  %v577 = vsel %vm557, %v303, 0
  %v580 = vsel %vm557, %v308, 0
  %582 = vmatprep.subr.bf16.mxu0 0
  %583 = vmatpush1.bf16.msra.mxu0 %v485
  %584 = vmatprep.subr.bf16.mxu0 0
  %585 = vmatpush1.bf16.msra.mxu0 %v486
  %586 = vmatprep.subr.bf16.mxu0 0
  %587 = vmatpush1.bf16.msra.mxu0 %v487
  %588 = vmatprep.subr.bf16.mxu0 0
  %589 = vmatpush1.bf16.msra.mxu0 %v488
  %590 = vmatprep.subr.bf16.mxu0 0
  %591 = vmatpush1.bf16.msra.mxu0 %v489
  %592 = vmatprep.subr.bf16.mxu0 0
  %593 = vmatpush1.bf16.msra.mxu0 %v490
  %594 = vmatprep.subr.bf16.mxu0 0
  %595 = vmatpush1.bf16.msra.mxu0 %v491
  %596 = vmatprep.subr.bf16.mxu0 0
  %597 = vmatpush1.bf16.msra.mxu0 %v492
  %598 = vmatprep.subr.bf16.mxu0 0
  %599 = vmatpush1.bf16.msra.mxu0 %v493
  %600 = vmatprep.subr.bf16.mxu0 0
  %601 = vmatpush1.bf16.msra.mxu0 %v494
  %602 = vmatprep.subr.bf16.mxu0 0
  %603 = vmatpush1.bf16.msra.mxu0 %v495
  %604 = vmatprep.subr.bf16.mxu0 0
  %605 = vmatpush1.bf16.msra.mxu0 %v496
  %606 = vmatprep.subr.bf16.mxu0 0
  %607 = vmatpush1.bf16.msra.mxu0 %v497
  %608 = vmatprep.subr.bf16.mxu0 0
  %609 = vmatpush1.bf16.msra.mxu0 %v498
  %610 = vmatprep.subr.bf16.mxu0 0
  %611 = vmatpush1.bf16.msra.mxu0 %v499
  %612 = vmatprep.subr.bf16.mxu0 0
  %613 = vmatpush1.bf16.msra.mxu0 %v500
  %614 = vmatprep.mubr.bf16.mxu0 %v270
  %615 = vmatmul.mubr.bf16.gmra.mrb[0].mxu0 %v269
  %v616 = vpop.f32.mrb[0].mxu0
  %v617 = vadd.f32 0.0, %v616
  %v618 = vpop.f32.mrb[0].mxu0
  %v619 = vpop.f32.mrb[0].mxu0
  %v620 = vadd.f32 0.0, %v619
  %v621 = vpop.f32.mrb[0].mxu0
  %622 = vmatprep.mubr.bf16.mxu0 %v275
  %623 = vmatmul.mubr.bf16.gmra.mrb[0].mxu0 %v274
  %v624 = vpop.f32.mrb[0].mxu0
  %v625 = vadd.f32 0.0, %v624
  %v626 = vpop.f32.mrb[0].mxu0
  %v627 = vpop.f32.mrb[0].mxu0
  %v628 = vadd.f32 0.0, %v627
  %v629 = vpop.f32.mrb[0].mxu0
  %630 = vmatprep.mubr.bf16.mxu0 %v280
  %631 = vmatmul.mubr.bf16.gmra.mrb[0].mxu0 %v279
  %v632 = vpop.f32.mrb[0].mxu0
  %v633 = vadd.f32 0.0, %v632
  %v634 = vpop.f32.mrb[0].mxu0
  %v635 = vpop.f32.mrb[0].mxu0
  %v636 = vadd.f32 0.0, %v635
  %v637 = vpop.f32.mrb[0].mxu0
  %638 = vmatprep.mubr.bf16.mxu0 %v285
  %639 = vmatmul.mubr.bf16.gmra.mrb[0].mxu0 %v284
  %v640 = vpop.f32.mrb[0].mxu0
  %v641 = vadd.f32 0.0, %v640
  %v642 = vpop.f32.mrb[0].mxu0
  %v643 = vpop.f32.mrb[0].mxu0
  %v644 = vadd.f32 0.0, %v643
  %v645 = vpop.f32.mrb[0].mxu0
  %646 = vmatprep.mubr.bf16.mxu0 %v290
  %647 = vmatmul.mubr.bf16.gmra.mrb[0].mxu0 %v289
  %v648 = vpop.f32.mrb[0].mxu0
  %v649 = vadd.f32 0.0, %v648
  %v650 = vpop.f32.mrb[0].mxu0
  %v651 = vpop.f32.mrb[0].mxu0
  %v652 = vadd.f32 0.0, %v651
  %v653 = vpop.f32.mrb[0].mxu0
  %654 = vmatprep.mubr.bf16.mxu0 %v295
  %655 = vmatmul.mubr.bf16.gmra.mrb[0].mxu0 %v294
  %v656 = vpop.f32.mrb[0].mxu0
  %v657 = vadd.f32 0.0, %v656
  %v658 = vpop.f32.mrb[0].mxu0
  %v659 = vpop.f32.mrb[0].mxu0
  %v660 = vadd.f32 0.0, %v659
  %v661 = vpop.f32.mrb[0].mxu0
  %662 = vmatprep.mubr.bf16.mxu0 %v300
  %663 = vmatmul.mubr.bf16.gmra.mrb[0].mxu0 %v299
  %v664 = vpop.f32.mrb[0].mxu0
  %v665 = vadd.f32 0.0, %v664
  %v666 = vpop.f32.mrb[0].mxu0
  %v667 = vpop.f32.mrb[0].mxu0
  %v668 = vadd.f32 0.0, %v667
  %v669 = vpop.f32.mrb[0].mxu0
  %670 = vmatprep.mubr.bf16.mxu0 %v305
  %671 = vmatmul.mubr.bf16.gmra.mrb[0].mxu0 %v304
  %v672 = vpop.f32.mrb[0].mxu0
  %v673 = vadd.f32 0.0, %v672
  %v674 = vpop.f32.mrb[0].mxu0
  %v675 = vpop.f32.mrb[0].mxu0
  %v676 = vadd.f32 0.0, %v675
  %v677 = vpop.f32.mrb[0].mxu0
  %678 = vdwg.mxu0
  %679 = vmatprep.subr.bf16.mxu0 0
  %680 = vmatpush1.bf16.msra.mxu0 %v501
  %681 = vmatprep.subr.bf16.mxu0 0
  %682 = vmatpush1.bf16.msra.mxu0 %v502
  %683 = vmatprep.subr.bf16.mxu0 0
  %684 = vmatpush1.bf16.msra.mxu0 %v503
  %685 = vmatprep.subr.bf16.mxu0 0
  %686 = vmatpush1.bf16.msra.mxu0 %v504
  %687 = vmatprep.subr.bf16.mxu0 0
  %688 = vmatpush1.bf16.msra.mxu0 %v505
  %689 = vmatprep.subr.bf16.mxu0 0
  %690 = vmatpush1.bf16.msra.mxu0 %v506
  %691 = vmatprep.subr.bf16.mxu0 0
  %692 = vmatpush1.bf16.msra.mxu0 %v507
  %693 = vmatprep.subr.bf16.mxu0 0
  %694 = vmatpush1.bf16.msra.mxu0 %v508
  %695 = vmatprep.subr.bf16.mxu0 0
  %696 = vmatpush1.bf16.msra.mxu0 %v509
  %697 = vmatprep.subr.bf16.mxu0 0
  %698 = vmatpush1.bf16.msra.mxu0 %v510
  %699 = vmatprep.subr.bf16.mxu0 0
  %700 = vmatpush1.bf16.msra.mxu0 %v511
  %701 = vmatprep.subr.bf16.mxu0 0
  %702 = vmatpush1.bf16.msra.mxu0 %v512
  %703 = vmatprep.subr.bf16.mxu0 0
  %704 = vmatpush1.bf16.msra.mxu0 %v513
  %705 = vmatprep.subr.bf16.mxu0 0
  %706 = vmatpush1.bf16.msra.mxu0 %v514
  %707 = vmatprep.subr.bf16.mxu0 0
  %708 = vmatpush1.bf16.msra.mxu0 %v515
  %709 = vmatprep.subr.bf16.mxu0 0
  %710 = vmatpush1.bf16.msra.mxu0 %v516
  %711 = vmatprep.mubr.bf16.mxu0 %v272
  %712 = vmatmul.mubr.bf16.gmra.mrb[0].mxu0 %v271
  %v713 = vpop.f32.mrb[0].mxu0
  %v714 = vadd.f32 %v617, %v713
  %v715 = vpop.f32.mrb[0].mxu0
  %v716 = vpop.f32.mrb[0].mxu0
  %v717 = vadd.f32 %v620, %v716
  %v718 = vpop.f32.mrb[0].mxu0
  %719 = vmatprep.mubr.bf16.mxu0 %v277
  %720 = vmatmul.mubr.bf16.gmra.mrb[0].mxu0 %v276
  %v721 = vpop.f32.mrb[0].mxu0
  %v722 = vadd.f32 %v625, %v721
  %v723 = vpop.f32.mrb[0].mxu0
  %v724 = vpop.f32.mrb[0].mxu0
  %v725 = vadd.f32 %v628, %v724
  %v726 = vpop.f32.mrb[0].mxu0
  %727 = vmatprep.mubr.bf16.mxu0 %v282
  %728 = vmatmul.mubr.bf16.gmra.mrb[0].mxu0 %v281
  %v729 = vpop.f32.mrb[0].mxu0
  %v730 = vadd.f32 %v633, %v729
  %v731 = vpop.f32.mrb[0].mxu0
  %v732 = vpop.f32.mrb[0].mxu0
  %v733 = vadd.f32 %v636, %v732
  %v734 = vpop.f32.mrb[0].mxu0
  %735 = vmatprep.mubr.bf16.mxu0 %v287
  %736 = vmatmul.mubr.bf16.gmra.mrb[0].mxu0 %v286
  %v737 = vpop.f32.mrb[0].mxu0
  %v738 = vadd.f32 %v641, %v737
  %v739 = vpop.f32.mrb[0].mxu0
  %v740 = vpop.f32.mrb[0].mxu0
  %v741 = vadd.f32 %v644, %v740
  %v742 = vpop.f32.mrb[0].mxu0
  %743 = vmatprep.mubr.bf16.mxu0 %v292
  %744 = vmatmul.mubr.bf16.gmra.mrb[0].mxu0 %v291
  %v745 = vpop.f32.mrb[0].mxu0
  %v746 = vadd.f32 %v649, %v745
  %v747 = vpop.f32.mrb[0].mxu0
  %v748 = vpop.f32.mrb[0].mxu0
  %v749 = vadd.f32 %v652, %v748
  %v750 = vpop.f32.mrb[0].mxu0
  %751 = vmatprep.mubr.bf16.mxu0 %v297
  %752 = vmatmul.mubr.bf16.gmra.mrb[0].mxu0 %v296
  %v753 = vpop.f32.mrb[0].mxu0
  %v754 = vadd.f32 %v657, %v753
  %v755 = vpop.f32.mrb[0].mxu0
  %v756 = vpop.f32.mrb[0].mxu0
  %v757 = vadd.f32 %v660, %v756
  %v758 = vpop.f32.mrb[0].mxu0
  %759 = vmatprep.mubr.bf16.mxu0 %v302
  %760 = vmatmul.mubr.bf16.gmra.mrb[0].mxu0 %v301
  %v761 = vpop.f32.mrb[0].mxu0
  %v762 = vadd.f32 %v665, %v761
  %v763 = vpop.f32.mrb[0].mxu0
  %v764 = vpop.f32.mrb[0].mxu0
  %v765 = vadd.f32 %v668, %v764
  %v766 = vpop.f32.mrb[0].mxu0
  %767 = vmatprep.mubr.bf16.mxu0 %v307
  %768 = vmatmul.mubr.bf16.gmra.mrb[0].mxu0 %v306
  %v769 = vpop.f32.mrb[0].mxu0
  %v770 = vadd.f32 %v673, %v769
  %v771 = vpop.f32.mrb[0].mxu0
  %v772 = vpop.f32.mrb[0].mxu0
  %v773 = vadd.f32 %v676, %v772
  %v774 = vpop.f32.mrb[0].mxu0
  %775 = vdwg.mxu0
  %776 = vmatprep.subr.bf16.mxu0 0
  %777 = vmatpush1.bf16.msra.mxu0 %v517
  %778 = vmatprep.subr.bf16.mxu0 0
  %779 = vmatpush1.bf16.msra.mxu0 %v518
  %780 = vmatprep.subr.bf16.mxu0 0
  %781 = vmatpush1.bf16.msra.mxu0 %v519
  %782 = vmatprep.subr.bf16.mxu0 0
  %783 = vmatpush1.bf16.msra.mxu0 %v520
  %784 = vmatprep.subr.bf16.mxu0 0
  %785 = vmatpush1.bf16.msra.mxu0 0
  %786 = vmatprep.subr.bf16.mxu0 0
  %787 = vmatpush1.bf16.msra.mxu0 0
  %788 = vmatprep.subr.bf16.mxu0 0
  %789 = vmatpush1.bf16.msra.mxu0 0
  %790 = vmatprep.subr.bf16.mxu0 0
  %791 = vmatpush1.bf16.msra.mxu0 0
  %792 = vmatprep.subr.bf16.mxu0 0
  %793 = vmatpush1.bf16.msra.mxu0 0
  %794 = vmatprep.subr.bf16.mxu0 0
  %795 = vmatpush1.bf16.msra.mxu0 0
  %796 = vmatprep.subr.bf16.mxu0 0
  %797 = vmatpush1.bf16.msra.mxu0 0
  %798 = vmatprep.subr.bf16.mxu0 0
  %799 = vmatpush1.bf16.msra.mxu0 0
  %800 = vmatprep.subr.bf16.mxu0 0
  %801 = vmatpush1.bf16.msra.mxu0 0
  %802 = vmatprep.subr.bf16.mxu0 0
  %803 = vmatpush1.bf16.msra.mxu0 0
  %804 = vmatprep.subr.bf16.mxu0 0
  %805 = vmatpush1.bf16.msra.mxu0 0
  %806 = vmatprep.subr.bf16.mxu0 0
  %807 = vmatpush1.bf16.msra.mxu0 0
  %808 = vmatprep.mubr.bf16.mxu0 0
  %809 = vmatmul.mubr.bf16.gmra.mrb[0].mxu0 %v559
  %v810 = vpop.f32.mrb[0].mxu0
  %v811 = vadd.f32 %v714, %v810
  %v812 = vpop.f32.mrb[0].mxu0
  %v813 = vpop.f32.mrb[0].mxu0
  %v814 = vadd.f32 %v717, %v813
  %v815 = vpop.f32.mrb[0].mxu0
  %816 = vmatprep.mubr.bf16.mxu0 0
  %817 = vmatmul.mubr.bf16.gmra.mrb[0].mxu0 %v562
  %v818 = vpop.f32.mrb[0].mxu0
  %v819 = vadd.f32 %v722, %v818
  %v820 = vpop.f32.mrb[0].mxu0
  %v821 = vpop.f32.mrb[0].mxu0
  %v822 = vadd.f32 %v725, %v821
  %v823 = vpop.f32.mrb[0].mxu0
  %824 = vmatprep.mubr.bf16.mxu0 0
  %825 = vmatmul.mubr.bf16.gmra.mrb[0].mxu0 %v565
  %v826 = vpop.f32.mrb[0].mxu0
  %v827 = vadd.f32 %v730, %v826
  %v828 = vpop.f32.mrb[0].mxu0
  %v829 = vpop.f32.mrb[0].mxu0
  %v830 = vadd.f32 %v733, %v829
  %v831 = vpop.f32.mrb[0].mxu0
  %832 = vmatprep.mubr.bf16.mxu0 0
  %833 = vmatmul.mubr.bf16.gmra.mrb[0].mxu0 %v568
  %v834 = vpop.f32.mrb[0].mxu0
  %v835 = vadd.f32 %v738, %v834
  %v836 = vpop.f32.mrb[0].mxu0
  %v837 = vpop.f32.mrb[0].mxu0
  %v838 = vadd.f32 %v741, %v837
  %v839 = vpop.f32.mrb[0].mxu0
  %840 = vmatprep.mubr.bf16.mxu0 0
  %841 = vmatmul.mubr.bf16.gmra.mrb[0].mxu0 %v571
  %v842 = vpop.f32.mrb[0].mxu0
  %v843 = vadd.f32 %v746, %v842
  %v844 = vpop.f32.mrb[0].mxu0
  %v845 = vpop.f32.mrb[0].mxu0
  %v846 = vadd.f32 %v749, %v845
  %v847 = vpop.f32.mrb[0].mxu0
  %848 = vmatprep.mubr.bf16.mxu0 0
  %849 = vmatmul.mubr.bf16.gmra.mrb[0].mxu0 %v574
  %v850 = vpop.f32.mrb[0].mxu0
  %v851 = vadd.f32 %v754, %v850
  %v852 = vpop.f32.mrb[0].mxu0
  %v853 = vpop.f32.mrb[0].mxu0
  %v854 = vadd.f32 %v757, %v853
  %v855 = vpop.f32.mrb[0].mxu0
  %856 = vmatprep.mubr.bf16.mxu0 0
  %857 = vmatmul.mubr.bf16.gmra.mrb[0].mxu0 %v577
  %v858 = vpop.f32.mrb[0].mxu0
  %v859 = vadd.f32 %v762, %v858
  %v860 = vpop.f32.mrb[0].mxu0
  %v861 = vpop.f32.mrb[0].mxu0
  %v862 = vadd.f32 %v765, %v861
  %v863 = vpop.f32.mrb[0].mxu0
  %864 = vmatprep.mubr.bf16.mxu0 0
  %865 = vmatmul.mubr.bf16.gmra.mrb[0].mxu0 %v580
  %v866 = vpop.f32.mrb[0].mxu0
  %v867 = vadd.f32 %v770, %v866
  %v868 = vpop.f32.mrb[0].mxu0
  %v869 = vpop.f32.mrb[0].mxu0
  %v870 = vadd.f32 %v773, %v869
  %v871 = vpop.f32.mrb[0].mxu0
  %872 = vdwg.mxu0
  %v873 = vld [vmem:[%s2] sm:$0x1]
  %v874 = vld [vmem:[%s3] sm:$0x1]
  %v875 = vld [vmem:[%s4] sm:$0xff]
  %v876 = vld [vmem:[%s4 + $0x8] sm:$0xff]
  %v877 = vld [vmem:[%s4 + $0x10] sm:$0xff]
  %v878 = vld [vmem:[%s4 + $0x18] sm:$0xff]
  %v879 = vld [vmem:[%s4 + $0x20] sm:$0xff]
  %v880 = vld [vmem:[%s4 + $0x28] sm:$0xff]
  %v881 = vld [vmem:[%s4 + $0x30] sm:$0xff]
  %v882 = vld [vmem:[%s4 + $0x38] sm:$0xff]
  %v883 = vld [vmem:[%s4 + $0x40] sm:$0xff]
  %v884 = vld [vmem:[%s4 + $0x48] sm:$0xff]
  %v885 = vld [vmem:[%s4 + $0x50] sm:$0xff]
  %v886 = vld [vmem:[%s4 + $0x58] sm:$0xff]
  %v887 = vld [vmem:[%s4 + $0x60] sm:$0xff]
  %v888 = vld [vmem:[%s4 + $0x68] sm:$0xff]
  %v889 = vld [vmem:[%s4 + $0x70] sm:$0xff]
  %v890 = vld [vmem:[%s4 + $0x78] sm:$0xff]
  %v892 = vlaneseq
  %v893 = vshrl.u32 %v892, 7
  %v894 = vsub.s32 0, %v893
  %v895 = vrot.slane %v873, %v894
  %v897 = vmul.f32 %v811, %v895
  %v898 = vmul.f32 %v814, %v895
  %v899 = vmul.f32 %v819, %v895
  %v900 = vmul.f32 %v822, %v895
  %v901 = vmul.f32 %v827, %v895
  %v902 = vmul.f32 %v830, %v895
  %v903 = vmul.f32 %v835, %v895
  %v904 = vmul.f32 %v838, %v895
  %v905 = vmul.f32 %v843, %v895
  %v906 = vmul.f32 %v846, %v895
  %v907 = vmul.f32 %v851, %v895
  %v908 = vmul.f32 %v854, %v895
  %v909 = vmul.f32 %v859, %v895
  %v910 = vmul.f32 %v862, %v895
  %v911 = vmul.f32 %v867, %v895
  %v912 = vmul.f32 %v870, %v895
  %v914 = vlaneseq
  %v915 = vshrl.u32 %v914, 7
  %v916 = vsub.s32 0, %v915
  %v917 = vrot.slane %v874, %v916
  %v919 = vadd.f32 %v897, %v917
  %v920 = vadd.f32 %v898, %v917
  %v921 = vadd.f32 %v899, %v917
  %v922 = vadd.f32 %v900, %v917
  %v923 = vadd.f32 %v901, %v917
  %v924 = vadd.f32 %v902, %v917
  %v925 = vadd.f32 %v903, %v917
  %v926 = vadd.f32 %v904, %v917
  %v927 = vadd.f32 %v905, %v917
  %v928 = vadd.f32 %v906, %v917
  %v929 = vadd.f32 %v907, %v917
  %v930 = vadd.f32 %v908, %v917
  %v931 = vadd.f32 %v909, %v917
  %v932 = vadd.f32 %v910, %v917
  %v933 = vadd.f32 %v911, %v917
  %v934 = vadd.f32 %v912, %v917
  %v935 = vadd.f32 %v919, %v875
  %v936 = vadd.f32 %v920, %v876
  %v937 = vadd.f32 %v921, %v877
  %v938 = vadd.f32 %v922, %v878
  %v939 = vadd.f32 %v923, %v879
  %v940 = vadd.f32 %v924, %v880
  %v941 = vadd.f32 %v925, %v881
  %v942 = vadd.f32 %v926, %v882
  %v943 = vadd.f32 %v927, %v883
  %v944 = vadd.f32 %v928, %v884
  %v945 = vadd.f32 %v929, %v885
  %v946 = vadd.f32 %v930, %v886
  %v947 = vadd.f32 %v931, %v887
  %v948 = vadd.f32 %v932, %v888
  %v949 = vadd.f32 %v933, %v889
  %v950 = vadd.f32 %v934, %v890
  %v951 = vmax.f32 %v935, 0.0
  %v952 = vmax.f32 %v936, 0.0
  %v953 = vmax.f32 %v937, 0.0
  %v954 = vmax.f32 %v938, 0.0
  %v955 = vmax.f32 %v939, 0.0
  %v956 = vmax.f32 %v940, 0.0
  %v957 = vmax.f32 %v941, 0.0
  %v958 = vmax.f32 %v942, 0.0
  %v959 = vmax.f32 %v943, 0.0
  %v960 = vmax.f32 %v944, 0.0
  %v961 = vmax.f32 %v945, 0.0
  %v962 = vmax.f32 %v946, 0.0
  %v963 = vmax.f32 %v947, 0.0
  %v964 = vmax.f32 %v948, 0.0
  %v965 = vmax.f32 %v949, 0.0
  %v966 = vmax.f32 %v950, 0.0
  %967 = vst [vmem:[%s5] sm:$0xff] %v951
  %968 = vst [vmem:[%s5 + $0x8] sm:$0xff] %v952
  %969 = vst [vmem:[%s5 + $0x10] sm:$0xff] %v953
  %970 = vst [vmem:[%s5 + $0x18] sm:$0xff] %v954
  %971 = vst [vmem:[%s5 + $0x20] sm:$0xff] %v955
  %972 = vst [vmem:[%s5 + $0x28] sm:$0xff] %v956
  %973 = vst [vmem:[%s5 + $0x30] sm:$0xff] %v957
  %974 = vst [vmem:[%s5 + $0x38] sm:$0xff] %v958
  %975 = vst [vmem:[%s5 + $0x40] sm:$0xff] %v959
  %976 = vst [vmem:[%s5 + $0x48] sm:$0xff] %v960
  %977 = vst [vmem:[%s5 + $0x50] sm:$0xff] %v961
  %978 = vst [vmem:[%s5 + $0x58] sm:$0xff] %v962
  %979 = vst [vmem:[%s5 + $0x60] sm:$0xff] %v963
  %980 = vst [vmem:[%s5 + $0x68] sm:$0xff] %v964
  %981 = vst [vmem:[%s5 + $0x70] sm:$0xff] %v965
  %982 = vst [vmem:[%s5 + $0x78] sm:$0xff] %v966
  // Predicated region
  $region22: #{battlefield_feature.14} parent=0 // pred_check
    _
  $region23: #{battlefield_feature.14} parent=0 // pred_check_branch
    %984 = sbr.rel (0) target = $region25
  $region24: #{battlefield_feature.14} parent=0 // pred_region
    _
  $region25: #{battlefield_feature.14} parent=0 // pred_fallthru
    _
  // Predicated region
  $region26: #{battlefield_feature.14} parent=0 // pred_check
    _
  $region27: #{battlefield_feature.14} parent=0 // pred_check_branch
    %986 = sbr.rel (0) target = $region29
  $region28: #{battlefield_feature.14} parent=0 // pred_region
    _
  $region29: #{battlefield_feature.14} parent=0 // pred_fallthru
    _

// kernel: battlefield_feature.15
$region0: #{battlefield_feature.15}
  #allocation0 [shape = 'u32[]', space=smem, size = 0x4, offset = 0x4, fixed_abs, tag = 'smem constant byte address 0x4 - core index']
  #allocation1 [shape = 'u32[144,128]{1,0:T(1,128)}', space=vmem, size = 0x12000, scoped, tag = 'internal scratch']
  %s0 = inlined_call_operand.vmem [shape: bf16[32,576], index: 0, kind: input, shape index: {}]
  %s1 = inlined_call_operand.vmem [shape: bf16[576,256], index: 1, kind: input, shape index: {}]
  %s2 = inlined_call_operand.vmem [shape: f32[1,256], index: 2, kind: input, shape index: {}]
  %s3 = inlined_call_operand.vmem [shape: f32[1,256], index: 3, kind: input, shape index: {}]
  %s4 = inlined_call_operand.vmem [shape: f32[1,256], index: 4, kind: input, shape index: {}]
  %s5 = inlined_call_operand.vmem [shape: f32[32,256], index: 5, kind: output, shape index: {}]
  %s6 = sld [smem:[#allocation0]]
  $region30: #{battlefield_feature.15} parent=0
    _
  %s8 = ssub.s32 1, %s6
  %s9 = scalar_select 0, %s8, %s6
  // Predicated region
  $region2: #{battlefield_feature.15} parent=0 // pred_check
    _
  $region3: #{battlefield_feature.15} parent=0 // pred_check_branch
    %11 = sbr.rel (0) target = $region5
  $region4: #{battlefield_feature.15} parent=0 // pred_region
    _
  $region5: #{battlefield_feature.15} parent=0 // pred_fallthru
    _
  // Predicated region
  $region6: #{battlefield_feature.15} parent=0 // pred_check
    _
  $region7: #{battlefield_feature.15} parent=0 // pred_check_branch
    %13 = sbr.rel (0) target = $region9
  $region8: #{battlefield_feature.15} parent=0 // pred_region
    _
  $region9: #{battlefield_feature.15} parent=0 // pred_fallthru
    _
  // Predicated region
  $region10: #{battlefield_feature.15} parent=0 // pred_check
    _
  $region11: #{battlefield_feature.15} parent=0 // pred_check_branch
    %15 = sbr.rel (0) target = $region13
  $region12: #{battlefield_feature.15} parent=0 // pred_region
    _
  $region13: #{battlefield_feature.15} parent=0 // pred_fallthru
    _
  // Predicated region
  $region14: #{battlefield_feature.15} parent=0 // pred_check
    _
  $region15: #{battlefield_feature.15} parent=0 // pred_check_branch
    %17 = sbr.rel (0) target = $region17
  $region16: #{battlefield_feature.15} parent=0 // pred_region
    _
  $region17: #{battlefield_feature.15} parent=0 // pred_fallthru
    _
  // Predicated region
  $region18: #{battlefield_feature.15} parent=0 // pred_check
    _
  $region19: #{battlefield_feature.15} parent=0 // pred_check_branch
    %19 = sbr.rel (0) target = $region21
  $region20: #{battlefield_feature.15} parent=0 // pred_region
    _
  $region21: #{battlefield_feature.15} parent=0 // pred_fallthru
    _
  %v21 = vld [vmem:[%s0] sm:$0xff]
  %v22 = vld [vmem:[%s0 + $0x8] sm:$0xff]
  %v23 = vld [vmem:[%s0 + $0x10] sm:$0xf]
  %v24 = vld [vmem:[%s0 + $0x14] sm:$0xff]
  %v25 = vld [vmem:[%s0 + $0x1c] sm:$0xff]
  %v26 = vld [vmem:[%s0 + $0x24] sm:$0xf]
  %v27 = vld [vmem:[%s0 + $0x28] sm:$0xff]
  %v28 = vld [vmem:[%s0 + $0x30] sm:$0xff]
  %v29 = vld [vmem:[%s0 + $0x38] sm:$0xf]
  %v30 = vld [vmem:[%s0 + $0x3c] sm:$0xff]
  %v31 = vld [vmem:[%s0 + $0x44] sm:$0xff]
  %v32 = vld [vmem:[%s0 + $0x4c] sm:$0xf]
  %v33 = vld [vmem:[%s1] sm:$0xff]
  %v34 = vld [vmem:[%s1 + $0x8] sm:$0xff]
  %v35 = vld [vmem:[%s1 + $0x10] sm:$0xff]
  %v36 = vld [vmem:[%s1 + $0x18] sm:$0xff]
  %v37 = vld [vmem:[%s1 + $0x20] sm:$0xff]
  %v38 = vld [vmem:[%s1 + $0x28] sm:$0xff]
  %v39 = vld [vmem:[%s1 + $0x30] sm:$0xff]
  %v40 = vld [vmem:[%s1 + $0x38] sm:$0xff]
  %v41 = vld [vmem:[%s1 + $0x40] sm:$0xff]
  %v42 = vld [vmem:[%s1 + $0x48] sm:$0xff]
  %v43 = vld [vmem:[%s1 + $0x50] sm:$0xff]
  %v44 = vld [vmem:[%s1 + $0x58] sm:$0xff]
  %v45 = vld [vmem:[%s1 + $0x60] sm:$0xff]
  %v46 = vld [vmem:[%s1 + $0x68] sm:$0xff]
  %v47 = vld [vmem:[%s1 + $0x70] sm:$0xff]
  %v48 = vld [vmem:[%s1 + $0x78] sm:$0xff]
  %v49 = vld [vmem:[%s1 + $0x80] sm:$0xff]
  %v50 = vld [vmem:[%s1 + $0x88] sm:$0xff]
  %v51 = vld [vmem:[%s1 + $0x90] sm:$0xff]
  %v52 = vld [vmem:[%s1 + $0x98] sm:$0xff]
  %v53 = vld [vmem:[%s1 + $0xa0] sm:$0xff]
  %v54 = vld [vmem:[%s1 + $0xa8] sm:$0xff]
  %v55 = vld [vmem:[%s1 + $0xb0] sm:$0xff]
  %v56 = vld [vmem:[%s1 + $0xb8] sm:$0xff]
  %v57 = vld [vmem:[%s1 + $0xc0] sm:$0xff]
  %v58 = vld [vmem:[%s1 + $0xc8] sm:$0xff]
  %v59 = vld [vmem:[%s1 + $0xd0] sm:$0xff]
  %v60 = vld [vmem:[%s1 + $0xd8] sm:$0xff]
  %v61 = vld [vmem:[%s1 + $0xe0] sm:$0xff]
  %v62 = vld [vmem:[%s1 + $0xe8] sm:$0xff]
  %v63 = vld [vmem:[%s1 + $0xf0] sm:$0xff]
  %v64 = vld [vmem:[%s1 + $0xf8] sm:$0xff]
  %v65 = vld [vmem:[%s1 + $0x100] sm:$0xff]
  %v66 = vld [vmem:[%s1 + $0x108] sm:$0xff]
  %v67 = vld [vmem:[%s1 + $0x110] sm:$0xff]
  %v68 = vld [vmem:[%s1 + $0x118] sm:$0xff]
  %v69 = vld [vmem:[%s1 + $0x120] sm:$0xff]
  %v70 = vld [vmem:[%s1 + $0x128] sm:$0xff]
  %v71 = vld [vmem:[%s1 + $0x130] sm:$0xff]
  %v72 = vld [vmem:[%s1 + $0x138] sm:$0xff]
  %v73 = vld [vmem:[%s1 + $0x140] sm:$0xff]
  %v74 = vld [vmem:[%s1 + $0x148] sm:$0xff]
  %v75 = vld [vmem:[%s1 + $0x150] sm:$0xff]
  %v76 = vld [vmem:[%s1 + $0x158] sm:$0xff]
  %v77 = vld [vmem:[%s1 + $0x160] sm:$0xff]
  %v78 = vld [vmem:[%s1 + $0x168] sm:$0xff]
  %v79 = vld [vmem:[%s1 + $0x170] sm:$0xff]
  %v80 = vld [vmem:[%s1 + $0x178] sm:$0xff]
  %v81 = vld [vmem:[%s1 + $0x180] sm:$0xff]
  %v82 = vld [vmem:[%s1 + $0x188] sm:$0xff]
  %v83 = vld [vmem:[%s1 + $0x190] sm:$0xff]
  %v84 = vld [vmem:[%s1 + $0x198] sm:$0xff]
  %v85 = vld [vmem:[%s1 + $0x1a0] sm:$0xff]
  %v86 = vld [vmem:[%s1 + $0x1a8] sm:$0xff]
  %v87 = vld [vmem:[%s1 + $0x1b0] sm:$0xff]
  %v88 = vld [vmem:[%s1 + $0x1b8] sm:$0xff]
  %v89 = vld [vmem:[%s1 + $0x1c0] sm:$0xff]
  %v90 = vld [vmem:[%s1 + $0x1c8] sm:$0xff]
  %v91 = vld [vmem:[%s1 + $0x1d0] sm:$0xff]
  %v92 = vld [vmem:[%s1 + $0x1d8] sm:$0xff]
  %v93 = vld [vmem:[%s1 + $0x1e0] sm:$0xff]
  %v94 = vld [vmem:[%s1 + $0x1e8] sm:$0xff]
  %v95 = vld [vmem:[%s1 + $0x1f0] sm:$0xff]
  %v96 = vld [vmem:[%s1 + $0x1f8] sm:$0xff]
  %v97 = vld [vmem:[%s1 + $0x200] sm:$0xff]
  %v98 = vld [vmem:[%s1 + $0x208] sm:$0xff]
  %v99 = vld [vmem:[%s1 + $0x210] sm:$0xff]
  %v100 = vld [vmem:[%s1 + $0x218] sm:$0xff]
  %v101 = vld [vmem:[%s1 + $0x220] sm:$0xff]
  %v102 = vld [vmem:[%s1 + $0x228] sm:$0xff]
  %v103 = vld [vmem:[%s1 + $0x230] sm:$0xff]
  %v104 = vld [vmem:[%s1 + $0x238] sm:$0xff]
  %v117 = vunpack.c.l.b16 %v21
  %v118 = vunpack.c.h.b16 %v21
  %v119 = vunpack.c.l.b16 %v22
  %v120 = vunpack.c.h.b16 %v22
  %v121 = vunpack.c.l.b16 %v23
  %v122 = vunpack.c.l.b16 %v24
  %v123 = vunpack.c.h.b16 %v24
  %v124 = vunpack.c.l.b16 %v25
  %v125 = vunpack.c.h.b16 %v25
  %v126 = vunpack.c.l.b16 %v26
  %v127 = vunpack.c.l.b16 %v27
  %v128 = vunpack.c.h.b16 %v27
  %v129 = vunpack.c.l.b16 %v28
  %v130 = vunpack.c.h.b16 %v28
  %v131 = vunpack.c.l.b16 %v29
  %v132 = vunpack.c.l.b16 %v30
  %v133 = vunpack.c.h.b16 %v30
  %v134 = vunpack.c.l.b16 %v31
  %v135 = vunpack.c.h.b16 %v31
  %v136 = vunpack.c.l.b16 %v32
  %v137 = vpack.c.b16 %v122, %v117
  %v138 = vpack.c.b16 %v123, %v118
  %v139 = vpack.c.b16 %v124, %v119
  %v140 = vpack.c.b16 %v125, %v120
  %v141 = vpack.c.b16 %v126, %v121
  %v142 = vpack.c.b16 %v132, %v127
  %v143 = vpack.c.b16 %v133, %v128
  %v144 = vpack.c.b16 %v134, %v129
  %v145 = vpack.c.b16 %v135, %v130
  %v146 = vpack.c.b16 %v136, %v131
  %v227 = vunpack.c.l.b16 %v33
  %v228 = vunpack.c.h.b16 %v33
  %v229 = vunpack.c.l.b16 %v34
  %v230 = vunpack.c.h.b16 %v34
  %v231 = vunpack.c.l.b16 %v35
  %v232 = vunpack.c.h.b16 %v35
  %v233 = vunpack.c.l.b16 %v36
  %v234 = vunpack.c.h.b16 %v36
  %v235 = vunpack.c.l.b16 %v37
  %v236 = vunpack.c.h.b16 %v37
  %v237 = vunpack.c.l.b16 %v38
  %v238 = vunpack.c.h.b16 %v38
  %v239 = vunpack.c.l.b16 %v39
  %v240 = vunpack.c.h.b16 %v39
  %v241 = vunpack.c.l.b16 %v40
  %v242 = vunpack.c.h.b16 %v40
  %v243 = vunpack.c.l.b16 %v41
  %v244 = vunpack.c.h.b16 %v41
  %v245 = vunpack.c.l.b16 %v42
  %v246 = vunpack.c.h.b16 %v42
  %v247 = vunpack.c.l.b16 %v43
  %v248 = vunpack.c.h.b16 %v43
  %v249 = vunpack.c.l.b16 %v44
  %v250 = vunpack.c.h.b16 %v44
  %v251 = vunpack.c.l.b16 %v45
  %v252 = vunpack.c.h.b16 %v45
  %v253 = vunpack.c.l.b16 %v46
  %v254 = vunpack.c.h.b16 %v46
  %v255 = vunpack.c.l.b16 %v47
  %v256 = vunpack.c.h.b16 %v47
  %v257 = vunpack.c.l.b16 %v48
  %v258 = vunpack.c.h.b16 %v48
  %v259 = vunpack.c.l.b16 %v49
  %v260 = vunpack.c.h.b16 %v49
  %v261 = vunpack.c.l.b16 %v50
  %v262 = vunpack.c.h.b16 %v50
  %v263 = vunpack.c.l.b16 %v51
  %v264 = vunpack.c.h.b16 %v51
  %v265 = vunpack.c.l.b16 %v52
  %v266 = vunpack.c.h.b16 %v52
  %v267 = vunpack.c.l.b16 %v53
  %v268 = vunpack.c.h.b16 %v53
  %v269 = vunpack.c.l.b16 %v54
  %v270 = vunpack.c.h.b16 %v54
  %v271 = vunpack.c.l.b16 %v55
  %v272 = vunpack.c.h.b16 %v55
  %v273 = vunpack.c.l.b16 %v56
  %v274 = vunpack.c.h.b16 %v56
  %v275 = vunpack.c.l.b16 %v57
  %v276 = vunpack.c.h.b16 %v57
  %v277 = vunpack.c.l.b16 %v58
  %v278 = vunpack.c.h.b16 %v58
  %v279 = vunpack.c.l.b16 %v59
  %v280 = vunpack.c.h.b16 %v59
  %v281 = vunpack.c.l.b16 %v60
  %v282 = vunpack.c.h.b16 %v60
  %v283 = vunpack.c.l.b16 %v61
  %v284 = vunpack.c.h.b16 %v61
  %v285 = vunpack.c.l.b16 %v62
  %v286 = vunpack.c.h.b16 %v62
  %v287 = vunpack.c.l.b16 %v63
  %v288 = vunpack.c.h.b16 %v63
  %v289 = vunpack.c.l.b16 %v64
  %v290 = vunpack.c.h.b16 %v64
  %v291 = vunpack.c.l.b16 %v65
  %v292 = vunpack.c.h.b16 %v65
  %v293 = vunpack.c.l.b16 %v66
  %v294 = vunpack.c.h.b16 %v66
  %v295 = vunpack.c.l.b16 %v67
  %v296 = vunpack.c.h.b16 %v67
  %v297 = vunpack.c.l.b16 %v68
  %v298 = vunpack.c.h.b16 %v68
  %v299 = vunpack.c.l.b16 %v69
  %v300 = vunpack.c.h.b16 %v69
  %v301 = vunpack.c.l.b16 %v70
  %v302 = vunpack.c.h.b16 %v70
  %v303 = vunpack.c.l.b16 %v71
  %v304 = vunpack.c.h.b16 %v71
  %v305 = vunpack.c.l.b16 %v72
  %v306 = vunpack.c.h.b16 %v72
  %v307 = vunpack.c.l.b16 %v73
  %v308 = vunpack.c.h.b16 %v73
  %v309 = vunpack.c.l.b16 %v74
  %v310 = vunpack.c.h.b16 %v74
  %v311 = vunpack.c.l.b16 %v75
  %v312 = vunpack.c.h.b16 %v75
  %v313 = vunpack.c.l.b16 %v76
  %v314 = vunpack.c.h.b16 %v76
  %v315 = vunpack.c.l.b16 %v77
  %v316 = vunpack.c.h.b16 %v77
  %v317 = vunpack.c.l.b16 %v78
  %v318 = vunpack.c.h.b16 %v78
  %v319 = vunpack.c.l.b16 %v79
  %v320 = vunpack.c.h.b16 %v79
  %v321 = vunpack.c.l.b16 %v80
  %v322 = vunpack.c.h.b16 %v80
  %v323 = vunpack.c.l.b16 %v81
  %v324 = vunpack.c.h.b16 %v81
  %v325 = vunpack.c.l.b16 %v82
  %v326 = vunpack.c.h.b16 %v82
  %v327 = vunpack.c.l.b16 %v83
  %v328 = vunpack.c.h.b16 %v83
  %v329 = vunpack.c.l.b16 %v84
  %v330 = vunpack.c.h.b16 %v84
  %v331 = vunpack.c.l.b16 %v85
  %v332 = vunpack.c.h.b16 %v85
  %v333 = vunpack.c.l.b16 %v86
  %v334 = vunpack.c.h.b16 %v86
  %v335 = vunpack.c.l.b16 %v87
  %v336 = vunpack.c.h.b16 %v87
  %v337 = vunpack.c.l.b16 %v88
  %v338 = vunpack.c.h.b16 %v88
  %v339 = vunpack.c.l.b16 %v89
  %v340 = vunpack.c.h.b16 %v89
  %v341 = vunpack.c.l.b16 %v90
  %v342 = vunpack.c.h.b16 %v90
  %v343 = vunpack.c.l.b16 %v91
  %v344 = vunpack.c.h.b16 %v91
  %v345 = vunpack.c.l.b16 %v92
  %v346 = vunpack.c.h.b16 %v92
  %v347 = vunpack.c.l.b16 %v93
  %v348 = vunpack.c.h.b16 %v93
  %v349 = vunpack.c.l.b16 %v94
  %v350 = vunpack.c.h.b16 %v94
  %v351 = vunpack.c.l.b16 %v95
  %v352 = vunpack.c.h.b16 %v95
  %v353 = vunpack.c.l.b16 %v96
  %v354 = vunpack.c.h.b16 %v96
  %v355 = vunpack.c.l.b16 %v97
  %v356 = vunpack.c.h.b16 %v97
  %v357 = vunpack.c.l.b16 %v98
  %v358 = vunpack.c.h.b16 %v98
  %v359 = vunpack.c.l.b16 %v99
  %v360 = vunpack.c.h.b16 %v99
  %v361 = vunpack.c.l.b16 %v100
  %v362 = vunpack.c.h.b16 %v100
  %v363 = vunpack.c.l.b16 %v101
  %v364 = vunpack.c.h.b16 %v101
  %v365 = vunpack.c.l.b16 %v102
  %v366 = vunpack.c.h.b16 %v102
  %v367 = vunpack.c.l.b16 %v103
  %v368 = vunpack.c.h.b16 %v103
  %v369 = vunpack.c.l.b16 %v104
  %v370 = vunpack.c.h.b16 %v104
  %v371 = vpack.c.b16 %v229, %v227
  %v372 = vpack.c.b16 %v230, %v228
  %v373 = vpack.c.b16 %v233, %v231
  %v374 = vpack.c.b16 %v234, %v232
  %v375 = vpack.c.b16 %v237, %v235
  %v376 = vpack.c.b16 %v238, %v236
  %v377 = vpack.c.b16 %v241, %v239
  %v378 = vpack.c.b16 %v242, %v240
  %v379 = vpack.c.b16 %v245, %v243
  %v380 = vpack.c.b16 %v246, %v244
  %v381 = vpack.c.b16 %v249, %v247
  %v382 = vpack.c.b16 %v250, %v248
  %v383 = vpack.c.b16 %v253, %v251
  %v384 = vpack.c.b16 %v254, %v252
  %v385 = vpack.c.b16 %v257, %v255
  %v386 = vpack.c.b16 %v258, %v256
  %v387 = vpack.c.b16 %v261, %v259
  %v388 = vpack.c.b16 %v262, %v260
  %v389 = vpack.c.b16 %v265, %v263
  %v390 = vpack.c.b16 %v266, %v264
  %v391 = vpack.c.b16 %v269, %v267
  %v392 = vpack.c.b16 %v270, %v268
  %v393 = vpack.c.b16 %v273, %v271
  %v394 = vpack.c.b16 %v274, %v272
  %v395 = vpack.c.b16 %v277, %v275
  %v396 = vpack.c.b16 %v278, %v276
  %v397 = vpack.c.b16 %v281, %v279
  %v398 = vpack.c.b16 %v282, %v280
  %v399 = vpack.c.b16 %v285, %v283
  %v400 = vpack.c.b16 %v286, %v284
  %v401 = vpack.c.b16 %v289, %v287
  %v402 = vpack.c.b16 %v290, %v288
  %v403 = vpack.c.b16 %v293, %v291
  %v404 = vpack.c.b16 %v294, %v292
  %v405 = vpack.c.b16 %v297, %v295
  %v406 = vpack.c.b16 %v298, %v296
  %v407 = vpack.c.b16 %v301, %v299
  %v408 = vpack.c.b16 %v302, %v300
  %v409 = vpack.c.b16 %v305, %v303
  %v410 = vpack.c.b16 %v306, %v304
  %v411 = vpack.c.b16 %v309, %v307
  %v412 = vpack.c.b16 %v310, %v308
  %v413 = vpack.c.b16 %v313, %v311
  %v414 = vpack.c.b16 %v314, %v312
  %v415 = vpack.c.b16 %v317, %v315
  %v416 = vpack.c.b16 %v318, %v316
  %v417 = vpack.c.b16 %v321, %v319
  %v418 = vpack.c.b16 %v322, %v320
  %v419 = vpack.c.b16 %v325, %v323
  %v420 = vpack.c.b16 %v326, %v324
  %v421 = vpack.c.b16 %v329, %v327
  %v422 = vpack.c.b16 %v330, %v328
  %v423 = vpack.c.b16 %v333, %v331
  %v424 = vpack.c.b16 %v334, %v332
  %v425 = vpack.c.b16 %v337, %v335
  %v426 = vpack.c.b16 %v338, %v336
  %v427 = vpack.c.b16 %v341, %v339
  %v428 = vpack.c.b16 %v342, %v340
  %v429 = vpack.c.b16 %v345, %v343
  %v430 = vpack.c.b16 %v346, %v344
  %v431 = vpack.c.b16 %v349, %v347
  %v432 = vpack.c.b16 %v350, %v348
  %v433 = vpack.c.b16 %v353, %v351
  %v434 = vpack.c.b16 %v354, %v352
  %v435 = vpack.c.b16 %v357, %v355
  %v436 = vpack.c.b16 %v358, %v356
  %v437 = vpack.c.b16 %v361, %v359
  %v438 = vpack.c.b16 %v362, %v360
  %v439 = vpack.c.b16 %v365, %v363
  %v440 = vpack.c.b16 %v366, %v364
  %v441 = vpack.c.b16 %v369, %v367
  %v442 = vpack.c.b16 %v370, %v368
  %vm515 = vcmask 523264
  %v517 = vsel %vm515, %v141, 0
  %v520 = vsel %vm515, %v146, 0
  %522 = vmatprep.subr.bf16.mxu0 %v372
  %523 = vmatpush1.bf16.msra.mxu0 %v371
  %524 = vmatprep.subr.bf16.mxu0 %v374
  %525 = vmatpush1.bf16.msra.mxu0 %v373
  %526 = vmatprep.subr.bf16.mxu0 %v376
  %527 = vmatpush1.bf16.msra.mxu0 %v375
  %528 = vmatprep.subr.bf16.mxu0 %v378
  %529 = vmatpush1.bf16.msra.mxu0 %v377
  %530 = vmatprep.subr.bf16.mxu0 %v380
  %531 = vmatpush1.bf16.msra.mxu0 %v379
  %532 = vmatprep.subr.bf16.mxu0 %v382
  %533 = vmatpush1.bf16.msra.mxu0 %v381
  %534 = vmatprep.subr.bf16.mxu0 %v384
  %535 = vmatpush1.bf16.msra.mxu0 %v383
  %536 = vmatprep.subr.bf16.mxu0 %v386
  %537 = vmatpush1.bf16.msra.mxu0 %v385
  %538 = vmatprep.subr.bf16.mxu0 %v388
  %539 = vmatpush1.bf16.msra.mxu0 %v387
  %540 = vmatprep.subr.bf16.mxu0 %v390
  %541 = vmatpush1.bf16.msra.mxu0 %v389
  %542 = vmatprep.subr.bf16.mxu0 %v392
  %543 = vmatpush1.bf16.msra.mxu0 %v391
  %544 = vmatprep.subr.bf16.mxu0 %v394
  %545 = vmatpush1.bf16.msra.mxu0 %v393
  %546 = vmatprep.subr.bf16.mxu0 %v396
  %547 = vmatpush1.bf16.msra.mxu0 %v395
  %548 = vmatprep.subr.bf16.mxu0 %v398
  %549 = vmatpush1.bf16.msra.mxu0 %v397
  %550 = vmatprep.subr.bf16.mxu0 %v400
  %551 = vmatpush1.bf16.msra.mxu0 %v399
  %552 = vmatprep.subr.bf16.mxu0 %v402
  %553 = vmatpush1.bf16.msra.mxu0 %v401
  %554 = vmatprep.mubr.bf16.mxu0 %v138
  %555 = vmatmul.mubr.bf16.gmra.mrb[0].mxu0 %v137
  %v556 = vpop.f32.mrb[0].mxu0
  %v557 = vadd.f32 0.0, %v556
  %v558 = vpop.f32.mrb[0].mxu0
  %v559 = vadd.f32 0.0, %v558
  %v560 = vpop.f32.mrb[0].mxu0
  %v561 = vadd.f32 0.0, %v560
  %v562 = vpop.f32.mrb[0].mxu0
  %v563 = vadd.f32 0.0, %v562
  %564 = vmatprep.mubr.bf16.mxu0 %v143
  %565 = vmatmul.mubr.bf16.gmra.mrb[0].mxu0 %v142
  %v566 = vpop.f32.mrb[0].mxu0
  %v567 = vadd.f32 0.0, %v566
  %v568 = vpop.f32.mrb[0].mxu0
  %v569 = vadd.f32 0.0, %v568
  %v570 = vpop.f32.mrb[0].mxu0
  %v571 = vadd.f32 0.0, %v570
  %v572 = vpop.f32.mrb[0].mxu0
  %v573 = vadd.f32 0.0, %v572
  %574 = vdwg.mxu0
  %575 = vmatprep.subr.bf16.mxu0 %v404
  %576 = vmatpush1.bf16.msra.mxu0 %v403
  %577 = vmatprep.subr.bf16.mxu0 %v406
  %578 = vmatpush1.bf16.msra.mxu0 %v405
  %579 = vmatprep.subr.bf16.mxu0 %v408
  %580 = vmatpush1.bf16.msra.mxu0 %v407
  %581 = vmatprep.subr.bf16.mxu0 %v410
  %582 = vmatpush1.bf16.msra.mxu0 %v409
  %583 = vmatprep.subr.bf16.mxu0 %v412
  %584 = vmatpush1.bf16.msra.mxu0 %v411
  %585 = vmatprep.subr.bf16.mxu0 %v414
  %586 = vmatpush1.bf16.msra.mxu0 %v413
  %587 = vmatprep.subr.bf16.mxu0 %v416
  %588 = vmatpush1.bf16.msra.mxu0 %v415
  %589 = vmatprep.subr.bf16.mxu0 %v418
  %590 = vmatpush1.bf16.msra.mxu0 %v417
  %591 = vmatprep.subr.bf16.mxu0 %v420
  %592 = vmatpush1.bf16.msra.mxu0 %v419
  %593 = vmatprep.subr.bf16.mxu0 %v422
  %594 = vmatpush1.bf16.msra.mxu0 %v421
  %595 = vmatprep.subr.bf16.mxu0 %v424
  %596 = vmatpush1.bf16.msra.mxu0 %v423
  %597 = vmatprep.subr.bf16.mxu0 %v426
  %598 = vmatpush1.bf16.msra.mxu0 %v425
  %599 = vmatprep.subr.bf16.mxu0 %v428
  %600 = vmatpush1.bf16.msra.mxu0 %v427
  %601 = vmatprep.subr.bf16.mxu0 %v430
  %602 = vmatpush1.bf16.msra.mxu0 %v429
  %603 = vmatprep.subr.bf16.mxu0 %v432
  %604 = vmatpush1.bf16.msra.mxu0 %v431
  %605 = vmatprep.subr.bf16.mxu0 %v434
  %606 = vmatpush1.bf16.msra.mxu0 %v433
  %607 = vmatprep.mubr.bf16.mxu0 %v140
  %608 = vmatmul.mubr.bf16.gmra.mrb[0].mxu0 %v139
  %v609 = vpop.f32.mrb[0].mxu0
  %v610 = vadd.f32 %v557, %v609
  %v611 = vpop.f32.mrb[0].mxu0
  %v612 = vadd.f32 %v559, %v611
  %v613 = vpop.f32.mrb[0].mxu0
  %v614 = vadd.f32 %v561, %v613
  %v615 = vpop.f32.mrb[0].mxu0
  %v616 = vadd.f32 %v563, %v615
  %617 = vmatprep.mubr.bf16.mxu0 %v145
  %618 = vmatmul.mubr.bf16.gmra.mrb[0].mxu0 %v144
  %v619 = vpop.f32.mrb[0].mxu0
  %v620 = vadd.f32 %v567, %v619
  %v621 = vpop.f32.mrb[0].mxu0
  %v622 = vadd.f32 %v569, %v621
  %v623 = vpop.f32.mrb[0].mxu0
  %v624 = vadd.f32 %v571, %v623
  %v625 = vpop.f32.mrb[0].mxu0
  %v626 = vadd.f32 %v573, %v625
  %627 = vdwg.mxu0
  %628 = vmatprep.subr.bf16.mxu0 %v436
  %629 = vmatpush1.bf16.msra.mxu0 %v435
  %630 = vmatprep.subr.bf16.mxu0 %v438
  %631 = vmatpush1.bf16.msra.mxu0 %v437
  %632 = vmatprep.subr.bf16.mxu0 %v440
  %633 = vmatpush1.bf16.msra.mxu0 %v439
  %634 = vmatprep.subr.bf16.mxu0 %v442
  %635 = vmatpush1.bf16.msra.mxu0 %v441
  %636 = vmatprep.subr.bf16.mxu0 0
  %637 = vmatpush1.bf16.msra.mxu0 0
  %638 = vmatprep.subr.bf16.mxu0 0
  %639 = vmatpush1.bf16.msra.mxu0 0
  %640 = vmatprep.subr.bf16.mxu0 0
  %641 = vmatpush1.bf16.msra.mxu0 0
  %642 = vmatprep.subr.bf16.mxu0 0
  %643 = vmatpush1.bf16.msra.mxu0 0
  %644 = vmatprep.subr.bf16.mxu0 0
  %645 = vmatpush1.bf16.msra.mxu0 0
  %646 = vmatprep.subr.bf16.mxu0 0
  %647 = vmatpush1.bf16.msra.mxu0 0
  %648 = vmatprep.subr.bf16.mxu0 0
  %649 = vmatpush1.bf16.msra.mxu0 0
  %650 = vmatprep.subr.bf16.mxu0 0
  %651 = vmatpush1.bf16.msra.mxu0 0
  %652 = vmatprep.subr.bf16.mxu0 0
  %653 = vmatpush1.bf16.msra.mxu0 0
  %654 = vmatprep.subr.bf16.mxu0 0
  %655 = vmatpush1.bf16.msra.mxu0 0
  %656 = vmatprep.subr.bf16.mxu0 0
  %657 = vmatpush1.bf16.msra.mxu0 0
  %658 = vmatprep.subr.bf16.mxu0 0
  %659 = vmatpush1.bf16.msra.mxu0 0
  %660 = vmatprep.mubr.bf16.mxu0 0
  %661 = vmatmul.mubr.bf16.gmra.mrb[0].mxu0 %v517
  %v662 = vpop.f32.mrb[0].mxu0
  %v663 = vadd.f32 %v610, %v662
  %v664 = vpop.f32.mrb[0].mxu0
  %v665 = vadd.f32 %v612, %v664
  %v666 = vpop.f32.mrb[0].mxu0
  %v667 = vadd.f32 %v614, %v666
  %v668 = vpop.f32.mrb[0].mxu0
  %v669 = vadd.f32 %v616, %v668
  %670 = vmatprep.mubr.bf16.mxu0 0
  %671 = vmatmul.mubr.bf16.gmra.mrb[0].mxu0 %v520
  %v672 = vpop.f32.mrb[0].mxu0
  %v673 = vadd.f32 %v620, %v672
  %v674 = vpop.f32.mrb[0].mxu0
  %v675 = vadd.f32 %v622, %v674
  %v676 = vpop.f32.mrb[0].mxu0
  %v677 = vadd.f32 %v624, %v676
  %v678 = vpop.f32.mrb[0].mxu0
  %v679 = vadd.f32 %v626, %v678
  %680 = vdwg.mxu0
  %v681 = vld [vmem:[%s2] sm:$0x3]
  %v682 = vld [vmem:[%s3] sm:$0x3]
  %v683 = vld [vmem:[%s4] sm:$0x3]
  %v685 = vlaneseq
  %v686 = vshrl.u32 %v685, 7
  %v687 = vsub.s32 0, %v686
  %v688 = vrot.slane %v681, %v687
  %v689 = vlaneseq
  %v690 = vshrl.u32 %v689, 7
  %v691 = vsub.s32 1, %v690
  %v692 = vrot.slane %v681, %v691
  %v695 = vmul.f32 %v663, %v688
  %v696 = vmul.f32 %v665, %v692
  %v697 = vmul.f32 %v667, %v688
  %v698 = vmul.f32 %v669, %v692
  %v699 = vmul.f32 %v673, %v688
  %v700 = vmul.f32 %v675, %v692
  %v701 = vmul.f32 %v677, %v688
  %v702 = vmul.f32 %v679, %v692
  %v704 = vlaneseq
  %v705 = vshrl.u32 %v704, 7
  %v706 = vsub.s32 0, %v705
  %v707 = vrot.slane %v682, %v706
  %v708 = vlaneseq
  %v709 = vshrl.u32 %v708, 7
  %v710 = vsub.s32 1, %v709
  %v711 = vrot.slane %v682, %v710
  %v714 = vadd.f32 %v695, %v707
  %v715 = vadd.f32 %v696, %v711
  %v716 = vadd.f32 %v697, %v707
  %v717 = vadd.f32 %v698, %v711
  %v718 = vadd.f32 %v699, %v707
  %v719 = vadd.f32 %v700, %v711
  %v720 = vadd.f32 %v701, %v707
  %v721 = vadd.f32 %v702, %v711
  %vm722 = vcmp.ne.f32.partialorder %v683, 0.0
  %v723 = vmax.f32 %v714, 0.0
  %v724 = vmax.f32 %v715, 0.0
  %v725 = vmax.f32 %v716, 0.0
  %v726 = vmax.f32 %v717, 0.0
  %v727 = vmax.f32 %v718, 0.0
  %v728 = vmax.f32 %v719, 0.0
  %v729 = vmax.f32 %v720, 0.0
  %v730 = vmax.f32 %v721, 0.0
  %v731 = vsel %vm722, 1, 0
  %v732 = vlaneseq
  %v733 = vshrl.u32 %v732, 7
  %v734 = vsub.s32 0, %v733
  %v735 = vrot.slane %v731, %v734
  %v736 = vlaneseq
  %v737 = vshrl.u32 %v736, 7
  %v738 = vsub.s32 1, %v737
  %v739 = vrot.slane %v731, %v738
  %vm740 = vcmp.eq.s32.totalorder %v735, 1
  %vm741 = vcmp.eq.s32.totalorder %v739, 1
  %v742 = vsel %vm740, %v723, %v714
  %v743 = vsel %vm741, %v724, %v715
  %v744 = vsel %vm740, %v725, %v716
  %v745 = vsel %vm741, %v726, %v717
  %v746 = vsel %vm740, %v727, %v718
  %v747 = vsel %vm741, %v728, %v719
  %v748 = vsel %vm740, %v729, %v720
  %v749 = vsel %vm741, %v730, %v721
  %750 = vst [vmem:[%s5] sm:$0xff] %v742
  %751 = vst [vmem:[%s5 + $0x8] sm:$0xff] %v743
  %752 = vst [vmem:[%s5 + $0x10] sm:$0xff] %v744
  %753 = vst [vmem:[%s5 + $0x18] sm:$0xff] %v745
  %754 = vst [vmem:[%s5 + $0x20] sm:$0xff] %v746
  %755 = vst [vmem:[%s5 + $0x28] sm:$0xff] %v747
  %756 = vst [vmem:[%s5 + $0x30] sm:$0xff] %v748
  %757 = vst [vmem:[%s5 + $0x38] sm:$0xff] %v749
  // Predicated region
  $region22: #{battlefield_feature.15} parent=0 // pred_check
    _
  $region23: #{battlefield_feature.15} parent=0 // pred_check_branch
    %759 = sbr.rel (0) target = $region25
  $region24: #{battlefield_feature.15} parent=0 // pred_region
    _
  $region25: #{battlefield_feature.15} parent=0 // pred_fallthru
    _
  // Predicated region
  $region26: #{battlefield_feature.15} parent=0 // pred_check
    _
  $region27: #{battlefield_feature.15} parent=0 // pred_check_branch
    %761 = sbr.rel (0) target = $region29
  $region28: #{battlefield_feature.15} parent=0 // pred_region
    _
  $region29: #{battlefield_feature.15} parent=0 // pred_fallthru
    _

// kernel: battlefield_feature.16
$region0: #{battlefield_feature.16}
  #allocation0 [shape = 'u32[]', space=smem, size = 0x4, offset = 0x4, fixed_abs, tag = 'smem constant byte address 0x4 - core index']
  #allocation1 [shape = 'u32[144,128]{1,0:T(1,128)}', space=vmem, size = 0x12000, scoped, tag = 'internal scratch']
  %s0 = inlined_call_operand.vmem [shape: bf16[32,1152], index: 0, kind: input, shape index: {}]
  %s1 = inlined_call_operand.vmem [shape: bf16[1152,128], index: 1, kind: input, shape index: {}]
  %s2 = inlined_call_operand.vmem [shape: f32[1,128], index: 2, kind: input, shape index: {}]
  %s3 = inlined_call_operand.vmem [shape: f32[1,128], index: 3, kind: input, shape index: {}]
  %s4 = inlined_call_operand.vmem [shape: f32[32,128], index: 4, kind: input, shape index: {}]
  %s5 = inlined_call_operand.vmem [shape: f32[32,128], index: 5, kind: output, shape index: {}]
  %s6 = sld [smem:[#allocation0]]
  $region30: #{battlefield_feature.16} parent=0
    _
  %s8 = ssub.s32 1, %s6
  %s9 = scalar_select 0, %s8, %s6
  // Predicated region
  $region2: #{battlefield_feature.16} parent=0 // pred_check
    _
  $region3: #{battlefield_feature.16} parent=0 // pred_check_branch
    %11 = sbr.rel (0) target = $region5
  $region4: #{battlefield_feature.16} parent=0 // pred_region
    _
  $region5: #{battlefield_feature.16} parent=0 // pred_fallthru
    _
  // Predicated region
  $region6: #{battlefield_feature.16} parent=0 // pred_check
    _
  $region7: #{battlefield_feature.16} parent=0 // pred_check_branch
    %13 = sbr.rel (0) target = $region9
  $region8: #{battlefield_feature.16} parent=0 // pred_region
    _
  $region9: #{battlefield_feature.16} parent=0 // pred_fallthru
    _
  // Predicated region
  $region10: #{battlefield_feature.16} parent=0 // pred_check
    _
  $region11: #{battlefield_feature.16} parent=0 // pred_check_branch
    %15 = sbr.rel (0) target = $region13
  $region12: #{battlefield_feature.16} parent=0 // pred_region
    _
  $region13: #{battlefield_feature.16} parent=0 // pred_fallthru
    _
  // Predicated region
  $region14: #{battlefield_feature.16} parent=0 // pred_check
    _
  $region15: #{battlefield_feature.16} parent=0 // pred_check_branch
    %17 = sbr.rel (0) target = $region17
  $region16: #{battlefield_feature.16} parent=0 // pred_region
    _
  $region17: #{battlefield_feature.16} parent=0 // pred_fallthru
    _
  // Predicated region
  $region18: #{battlefield_feature.16} parent=0 // pred_check
    _
  $region19: #{battlefield_feature.16} parent=0 // pred_check_branch
    %19 = sbr.rel (0) target = $region21
  $region20: #{battlefield_feature.16} parent=0 // pred_region
    _
  $region21: #{battlefield_feature.16} parent=0 // pred_fallthru
    _
  %v21 = vld [vmem:[%s0] sm:$0xff]
  %v22 = vld [vmem:[%s0 + $0x8] sm:$0xff]
  %v23 = vld [vmem:[%s0 + $0x10] sm:$0xff]
  %v24 = vld [vmem:[%s0 + $0x18] sm:$0xff]
  %v25 = vld [vmem:[%s0 + $0x20] sm:$0xf]
  %v26 = vld [vmem:[%s0 + $0x24] sm:$0xff]
  %v27 = vld [vmem:[%s0 + $0x2c] sm:$0xff]
  %v28 = vld [vmem:[%s0 + $0x34] sm:$0xff]
  %v29 = vld [vmem:[%s0 + $0x3c] sm:$0xff]
  %v30 = vld [vmem:[%s0 + $0x44] sm:$0xf]
  %v31 = vld [vmem:[%s0 + $0x48] sm:$0xff]
  %v32 = vld [vmem:[%s0 + $0x50] sm:$0xff]
  %v33 = vld [vmem:[%s0 + $0x58] sm:$0xff]
  %v34 = vld [vmem:[%s0 + $0x60] sm:$0xff]
  %v35 = vld [vmem:[%s0 + $0x68] sm:$0xf]
  %v36 = vld [vmem:[%s0 + $0x6c] sm:$0xff]
  %v37 = vld [vmem:[%s0 + $0x74] sm:$0xff]
  %v38 = vld [vmem:[%s0 + $0x7c] sm:$0xff]
  %v39 = vld [vmem:[%s0 + $0x84] sm:$0xff]
  %v40 = vld [vmem:[%s0 + $0x8c] sm:$0xf]
  %v41 = vld [vmem:[%s1] sm:$0xf]
  %v42 = vld [vmem:[%s1 + $0x4] sm:$0xf]
  %v43 = vld [vmem:[%s1 + $0x8] sm:$0xf]
  %v44 = vld [vmem:[%s1 + $0xc] sm:$0xf]
  %v45 = vld [vmem:[%s1 + $0x10] sm:$0xf]
  %v46 = vld [vmem:[%s1 + $0x14] sm:$0xf]
  %v47 = vld [vmem:[%s1 + $0x18] sm:$0xf]
  %v48 = vld [vmem:[%s1 + $0x1c] sm:$0xf]
  %v49 = vld [vmem:[%s1 + $0x20] sm:$0xf]
  %v50 = vld [vmem:[%s1 + $0x24] sm:$0xf]
  %v51 = vld [vmem:[%s1 + $0x28] sm:$0xf]
  %v52 = vld [vmem:[%s1 + $0x2c] sm:$0xf]
  %v53 = vld [vmem:[%s1 + $0x30] sm:$0xf]
  %v54 = vld [vmem:[%s1 + $0x34] sm:$0xf]
  %v55 = vld [vmem:[%s1 + $0x38] sm:$0xf]
  %v56 = vld [vmem:[%s1 + $0x3c] sm:$0xf]
  %v57 = vld [vmem:[%s1 + $0x40] sm:$0xf]
  %v58 = vld [vmem:[%s1 + $0x44] sm:$0xf]
  %v59 = vld [vmem:[%s1 + $0x48] sm:$0xf]
  %v60 = vld [vmem:[%s1 + $0x4c] sm:$0xf]
  %v61 = vld [vmem:[%s1 + $0x50] sm:$0xf]
  %v62 = vld [vmem:[%s1 + $0x54] sm:$0xf]
  %v63 = vld [vmem:[%s1 + $0x58] sm:$0xf]
  %v64 = vld [vmem:[%s1 + $0x5c] sm:$0xf]
  %v65 = vld [vmem:[%s1 + $0x60] sm:$0xf]
  %v66 = vld [vmem:[%s1 + $0x64] sm:$0xf]
  %v67 = vld [vmem:[%s1 + $0x68] sm:$0xf]
  %v68 = vld [vmem:[%s1 + $0x6c] sm:$0xf]
  %v69 = vld [vmem:[%s1 + $0x70] sm:$0xf]
  %v70 = vld [vmem:[%s1 + $0x74] sm:$0xf]
  %v71 = vld [vmem:[%s1 + $0x78] sm:$0xf]
  %v72 = vld [vmem:[%s1 + $0x7c] sm:$0xf]
  %v73 = vld [vmem:[%s1 + $0x80] sm:$0xf]
  %v74 = vld [vmem:[%s1 + $0x84] sm:$0xf]
  %v75 = vld [vmem:[%s1 + $0x88] sm:$0xf]
  %v76 = vld [vmem:[%s1 + $0x8c] sm:$0xf]
  %v77 = vld [vmem:[%s1 + $0x90] sm:$0xf]
  %v78 = vld [vmem:[%s1 + $0x94] sm:$0xf]
  %v79 = vld [vmem:[%s1 + $0x98] sm:$0xf]
  %v80 = vld [vmem:[%s1 + $0x9c] sm:$0xf]
  %v81 = vld [vmem:[%s1 + $0xa0] sm:$0xf]
  %v82 = vld [vmem:[%s1 + $0xa4] sm:$0xf]
  %v83 = vld [vmem:[%s1 + $0xa8] sm:$0xf]
  %v84 = vld [vmem:[%s1 + $0xac] sm:$0xf]
  %v85 = vld [vmem:[%s1 + $0xb0] sm:$0xf]
  %v86 = vld [vmem:[%s1 + $0xb4] sm:$0xf]
  %v87 = vld [vmem:[%s1 + $0xb8] sm:$0xf]
  %v88 = vld [vmem:[%s1 + $0xbc] sm:$0xf]
  %v89 = vld [vmem:[%s1 + $0xc0] sm:$0xf]
  %v90 = vld [vmem:[%s1 + $0xc4] sm:$0xf]
  %v91 = vld [vmem:[%s1 + $0xc8] sm:$0xf]
  %v92 = vld [vmem:[%s1 + $0xcc] sm:$0xf]
  %v93 = vld [vmem:[%s1 + $0xd0] sm:$0xf]
  %v94 = vld [vmem:[%s1 + $0xd4] sm:$0xf]
  %v95 = vld [vmem:[%s1 + $0xd8] sm:$0xf]
  %v96 = vld [vmem:[%s1 + $0xdc] sm:$0xf]
  %v97 = vld [vmem:[%s1 + $0xe0] sm:$0xf]
  %v98 = vld [vmem:[%s1 + $0xe4] sm:$0xf]
  %v99 = vld [vmem:[%s1 + $0xe8] sm:$0xf]
  %v100 = vld [vmem:[%s1 + $0xec] sm:$0xf]
  %v101 = vld [vmem:[%s1 + $0xf0] sm:$0xf]
  %v102 = vld [vmem:[%s1 + $0xf4] sm:$0xf]
  %v103 = vld [vmem:[%s1 + $0xf8] sm:$0xf]
  %v104 = vld [vmem:[%s1 + $0xfc] sm:$0xf]
  %v105 = vld [vmem:[%s1 + $0x100] sm:$0xf]
  %v106 = vld [vmem:[%s1 + $0x104] sm:$0xf]
  %v107 = vld [vmem:[%s1 + $0x108] sm:$0xf]
  %v108 = vld [vmem:[%s1 + $0x10c] sm:$0xf]
  %v109 = vld [vmem:[%s1 + $0x110] sm:$0xf]
  %v110 = vld [vmem:[%s1 + $0x114] sm:$0xf]
  %v111 = vld [vmem:[%s1 + $0x118] sm:$0xf]
  %v112 = vld [vmem:[%s1 + $0x11c] sm:$0xf]
  %v113 = vld [vmem:[%s1 + $0x120] sm:$0xf]
  %v114 = vld [vmem:[%s1 + $0x124] sm:$0xf]
  %v115 = vld [vmem:[%s1 + $0x128] sm:$0xf]
  %v116 = vld [vmem:[%s1 + $0x12c] sm:$0xf]
  %v117 = vld [vmem:[%s1 + $0x130] sm:$0xf]
  %v118 = vld [vmem:[%s1 + $0x134] sm:$0xf]
  %v119 = vld [vmem:[%s1 + $0x138] sm:$0xf]
  %v120 = vld [vmem:[%s1 + $0x13c] sm:$0xf]
  %v121 = vld [vmem:[%s1 + $0x140] sm:$0xf]
  %v122 = vld [vmem:[%s1 + $0x144] sm:$0xf]
  %v123 = vld [vmem:[%s1 + $0x148] sm:$0xf]
  %v124 = vld [vmem:[%s1 + $0x14c] sm:$0xf]
  %v125 = vld [vmem:[%s1 + $0x150] sm:$0xf]
  %v126 = vld [vmem:[%s1 + $0x154] sm:$0xf]
  %v127 = vld [vmem:[%s1 + $0x158] sm:$0xf]
  %v128 = vld [vmem:[%s1 + $0x15c] sm:$0xf]
  %v129 = vld [vmem:[%s1 + $0x160] sm:$0xf]
  %v130 = vld [vmem:[%s1 + $0x164] sm:$0xf]
  %v131 = vld [vmem:[%s1 + $0x168] sm:$0xf]
  %v132 = vld [vmem:[%s1 + $0x16c] sm:$0xf]
  %v133 = vld [vmem:[%s1 + $0x170] sm:$0xf]
  %v134 = vld [vmem:[%s1 + $0x174] sm:$0xf]
  %v135 = vld [vmem:[%s1 + $0x178] sm:$0xf]
  %v136 = vld [vmem:[%s1 + $0x17c] sm:$0xf]
  %v137 = vld [vmem:[%s1 + $0x180] sm:$0xf]
  %v138 = vld [vmem:[%s1 + $0x184] sm:$0xf]
  %v139 = vld [vmem:[%s1 + $0x188] sm:$0xf]
  %v140 = vld [vmem:[%s1 + $0x18c] sm:$0xf]
  %v141 = vld [vmem:[%s1 + $0x190] sm:$0xf]
  %v142 = vld [vmem:[%s1 + $0x194] sm:$0xf]
  %v143 = vld [vmem:[%s1 + $0x198] sm:$0xf]
  %v144 = vld [vmem:[%s1 + $0x19c] sm:$0xf]
  %v145 = vld [vmem:[%s1 + $0x1a0] sm:$0xf]
  %v146 = vld [vmem:[%s1 + $0x1a4] sm:$0xf]
  %v147 = vld [vmem:[%s1 + $0x1a8] sm:$0xf]
  %v148 = vld [vmem:[%s1 + $0x1ac] sm:$0xf]
  %v149 = vld [vmem:[%s1 + $0x1b0] sm:$0xf]
  %v150 = vld [vmem:[%s1 + $0x1b4] sm:$0xf]
  %v151 = vld [vmem:[%s1 + $0x1b8] sm:$0xf]
  %v152 = vld [vmem:[%s1 + $0x1bc] sm:$0xf]
  %v153 = vld [vmem:[%s1 + $0x1c0] sm:$0xf]
  %v154 = vld [vmem:[%s1 + $0x1c4] sm:$0xf]
  %v155 = vld [vmem:[%s1 + $0x1c8] sm:$0xf]
  %v156 = vld [vmem:[%s1 + $0x1cc] sm:$0xf]
  %v157 = vld [vmem:[%s1 + $0x1d0] sm:$0xf]
  %v158 = vld [vmem:[%s1 + $0x1d4] sm:$0xf]
  %v159 = vld [vmem:[%s1 + $0x1d8] sm:$0xf]
  %v160 = vld [vmem:[%s1 + $0x1dc] sm:$0xf]
  %v161 = vld [vmem:[%s1 + $0x1e0] sm:$0xf]
  %v162 = vld [vmem:[%s1 + $0x1e4] sm:$0xf]
  %v163 = vld [vmem:[%s1 + $0x1e8] sm:$0xf]
  %v164 = vld [vmem:[%s1 + $0x1ec] sm:$0xf]
  %v165 = vld [vmem:[%s1 + $0x1f0] sm:$0xf]
  %v166 = vld [vmem:[%s1 + $0x1f4] sm:$0xf]
  %v167 = vld [vmem:[%s1 + $0x1f8] sm:$0xf]
  %v168 = vld [vmem:[%s1 + $0x1fc] sm:$0xf]
  %v169 = vld [vmem:[%s1 + $0x200] sm:$0xf]
  %v170 = vld [vmem:[%s1 + $0x204] sm:$0xf]
  %v171 = vld [vmem:[%s1 + $0x208] sm:$0xf]
  %v172 = vld [vmem:[%s1 + $0x20c] sm:$0xf]
  %v173 = vld [vmem:[%s1 + $0x210] sm:$0xf]
  %v174 = vld [vmem:[%s1 + $0x214] sm:$0xf]
  %v175 = vld [vmem:[%s1 + $0x218] sm:$0xf]
  %v176 = vld [vmem:[%s1 + $0x21c] sm:$0xf]
  %v177 = vld [vmem:[%s1 + $0x220] sm:$0xf]
  %v178 = vld [vmem:[%s1 + $0x224] sm:$0xf]
  %v179 = vld [vmem:[%s1 + $0x228] sm:$0xf]
  %v180 = vld [vmem:[%s1 + $0x22c] sm:$0xf]
  %v181 = vld [vmem:[%s1 + $0x230] sm:$0xf]
  %v182 = vld [vmem:[%s1 + $0x234] sm:$0xf]
  %v183 = vld [vmem:[%s1 + $0x238] sm:$0xf]
  %v184 = vld [vmem:[%s1 + $0x23c] sm:$0xf]
  %v205 = vunpack.c.l.b16 %v21
  %v206 = vunpack.c.h.b16 %v21
  %v207 = vunpack.c.l.b16 %v22
  %v208 = vunpack.c.h.b16 %v22
  %v209 = vunpack.c.l.b16 %v23
  %v210 = vunpack.c.h.b16 %v23
  %v211 = vunpack.c.l.b16 %v24
  %v212 = vunpack.c.h.b16 %v24
  %v213 = vunpack.c.l.b16 %v25
  %v214 = vunpack.c.l.b16 %v26
  %v215 = vunpack.c.h.b16 %v26
  %v216 = vunpack.c.l.b16 %v27
  %v217 = vunpack.c.h.b16 %v27
  %v218 = vunpack.c.l.b16 %v28
  %v219 = vunpack.c.h.b16 %v28
  %v220 = vunpack.c.l.b16 %v29
  %v221 = vunpack.c.h.b16 %v29
  %v222 = vunpack.c.l.b16 %v30
  %v223 = vunpack.c.l.b16 %v31
  %v224 = vunpack.c.h.b16 %v31
  %v225 = vunpack.c.l.b16 %v32
  %v226 = vunpack.c.h.b16 %v32
  %v227 = vunpack.c.l.b16 %v33
  %v228 = vunpack.c.h.b16 %v33
  %v229 = vunpack.c.l.b16 %v34
  %v230 = vunpack.c.h.b16 %v34
  %v231 = vunpack.c.l.b16 %v35
  %v232 = vunpack.c.l.b16 %v36
  %v233 = vunpack.c.h.b16 %v36
  %v234 = vunpack.c.l.b16 %v37
  %v235 = vunpack.c.h.b16 %v37
  %v236 = vunpack.c.l.b16 %v38
  %v237 = vunpack.c.h.b16 %v38
  %v238 = vunpack.c.l.b16 %v39
  %v239 = vunpack.c.h.b16 %v39
  %v240 = vunpack.c.l.b16 %v40
  %v241 = vpack.c.b16 %v214, %v205
  %v242 = vpack.c.b16 %v215, %v206
  %v243 = vpack.c.b16 %v216, %v207
  %v244 = vpack.c.b16 %v217, %v208
  %v245 = vpack.c.b16 %v218, %v209
  %v246 = vpack.c.b16 %v219, %v210
  %v247 = vpack.c.b16 %v220, %v211
  %v248 = vpack.c.b16 %v221, %v212
  %v249 = vpack.c.b16 %v222, %v213
  %v250 = vpack.c.b16 %v232, %v223
  %v251 = vpack.c.b16 %v233, %v224
  %v252 = vpack.c.b16 %v234, %v225
  %v253 = vpack.c.b16 %v235, %v226
  %v254 = vpack.c.b16 %v236, %v227
  %v255 = vpack.c.b16 %v237, %v228
  %v256 = vpack.c.b16 %v238, %v229
  %v257 = vpack.c.b16 %v239, %v230
  %v258 = vpack.c.b16 %v240, %v231
  %v421 = vunpack.c.l.b16 %v41
  %v422 = vunpack.c.l.b16 %v42
  %v423 = vunpack.c.l.b16 %v43
  %v424 = vunpack.c.l.b16 %v44
  %v425 = vunpack.c.l.b16 %v45
  %v426 = vunpack.c.l.b16 %v46
  %v427 = vunpack.c.l.b16 %v47
  %v428 = vunpack.c.l.b16 %v48
  %v429 = vunpack.c.l.b16 %v49
  %v430 = vunpack.c.l.b16 %v50
  %v431 = vunpack.c.l.b16 %v51
  %v432 = vunpack.c.l.b16 %v52
  %v433 = vunpack.c.l.b16 %v53
  %v434 = vunpack.c.l.b16 %v54
  %v435 = vunpack.c.l.b16 %v55
  %v436 = vunpack.c.l.b16 %v56
  %v437 = vunpack.c.l.b16 %v57
  %v438 = vunpack.c.l.b16 %v58
  %v439 = vunpack.c.l.b16 %v59
  %v440 = vunpack.c.l.b16 %v60
  %v441 = vunpack.c.l.b16 %v61
  %v442 = vunpack.c.l.b16 %v62
  %v443 = vunpack.c.l.b16 %v63
  %v444 = vunpack.c.l.b16 %v64
  %v445 = vunpack.c.l.b16 %v65
  %v446 = vunpack.c.l.b16 %v66
  %v447 = vunpack.c.l.b16 %v67
  %v448 = vunpack.c.l.b16 %v68
  %v449 = vunpack.c.l.b16 %v69
  %v450 = vunpack.c.l.b16 %v70
  %v451 = vunpack.c.l.b16 %v71
  %v452 = vunpack.c.l.b16 %v72
  %v453 = vunpack.c.l.b16 %v73
  %v454 = vunpack.c.l.b16 %v74
  %v455 = vunpack.c.l.b16 %v75
  %v456 = vunpack.c.l.b16 %v76
  %v457 = vunpack.c.l.b16 %v77
  %v458 = vunpack.c.l.b16 %v78
  %v459 = vunpack.c.l.b16 %v79
  %v460 = vunpack.c.l.b16 %v80
  %v461 = vunpack.c.l.b16 %v81
  %v462 = vunpack.c.l.b16 %v82
  %v463 = vunpack.c.l.b16 %v83
  %v464 = vunpack.c.l.b16 %v84
  %v465 = vunpack.c.l.b16 %v85
  %v466 = vunpack.c.l.b16 %v86
  %v467 = vunpack.c.l.b16 %v87
  %v468 = vunpack.c.l.b16 %v88
  %v469 = vunpack.c.l.b16 %v89
  %v470 = vunpack.c.l.b16 %v90
  %v471 = vunpack.c.l.b16 %v91
  %v472 = vunpack.c.l.b16 %v92
  %v473 = vunpack.c.l.b16 %v93
  %v474 = vunpack.c.l.b16 %v94
  %v475 = vunpack.c.l.b16 %v95
  %v476 = vunpack.c.l.b16 %v96
  %v477 = vunpack.c.l.b16 %v97
  %v478 = vunpack.c.l.b16 %v98
  %v479 = vunpack.c.l.b16 %v99
  %v480 = vunpack.c.l.b16 %v100
  %v481 = vunpack.c.l.b16 %v101
  %v482 = vunpack.c.l.b16 %v102
  %v483 = vunpack.c.l.b16 %v103
  %v484 = vunpack.c.l.b16 %v104
  %v485 = vunpack.c.l.b16 %v105
  %v486 = vunpack.c.l.b16 %v106
  %v487 = vunpack.c.l.b16 %v107
  %v488 = vunpack.c.l.b16 %v108
  %v489 = vunpack.c.l.b16 %v109
  %v490 = vunpack.c.l.b16 %v110
  %v491 = vunpack.c.l.b16 %v111
  %v492 = vunpack.c.l.b16 %v112
  %v493 = vunpack.c.l.b16 %v113
  %v494 = vunpack.c.l.b16 %v114
  %v495 = vunpack.c.l.b16 %v115
  %v496 = vunpack.c.l.b16 %v116
  %v497 = vunpack.c.l.b16 %v117
  %v498 = vunpack.c.l.b16 %v118
  %v499 = vunpack.c.l.b16 %v119
  %v500 = vunpack.c.l.b16 %v120
  %v501 = vunpack.c.l.b16 %v121
  %v502 = vunpack.c.l.b16 %v122
  %v503 = vunpack.c.l.b16 %v123
  %v504 = vunpack.c.l.b16 %v124
  %v505 = vunpack.c.l.b16 %v125
  %v506 = vunpack.c.l.b16 %v126
  %v507 = vunpack.c.l.b16 %v127
  %v508 = vunpack.c.l.b16 %v128
  %v509 = vunpack.c.l.b16 %v129
  %v510 = vunpack.c.l.b16 %v130
  %v511 = vunpack.c.l.b16 %v131
  %v512 = vunpack.c.l.b16 %v132
  %v513 = vunpack.c.l.b16 %v133
  %v514 = vunpack.c.l.b16 %v134
  %v515 = vunpack.c.l.b16 %v135
  %v516 = vunpack.c.l.b16 %v136
  %v517 = vunpack.c.l.b16 %v137
  %v518 = vunpack.c.l.b16 %v138
  %v519 = vunpack.c.l.b16 %v139
  %v520 = vunpack.c.l.b16 %v140
  %v521 = vunpack.c.l.b16 %v141
  %v522 = vunpack.c.l.b16 %v142
  %v523 = vunpack.c.l.b16 %v143
  %v524 = vunpack.c.l.b16 %v144
  %v525 = vunpack.c.l.b16 %v145
  %v526 = vunpack.c.l.b16 %v146
  %v527 = vunpack.c.l.b16 %v147
  %v528 = vunpack.c.l.b16 %v148
  %v529 = vunpack.c.l.b16 %v149
  %v530 = vunpack.c.l.b16 %v150
  %v531 = vunpack.c.l.b16 %v151
  %v532 = vunpack.c.l.b16 %v152
  %v533 = vunpack.c.l.b16 %v153
  %v534 = vunpack.c.l.b16 %v154
  %v535 = vunpack.c.l.b16 %v155
  %v536 = vunpack.c.l.b16 %v156
  %v537 = vunpack.c.l.b16 %v157
  %v538 = vunpack.c.l.b16 %v158
  %v539 = vunpack.c.l.b16 %v159
  %v540 = vunpack.c.l.b16 %v160
  %v541 = vunpack.c.l.b16 %v161
  %v542 = vunpack.c.l.b16 %v162
  %v543 = vunpack.c.l.b16 %v163
  %v544 = vunpack.c.l.b16 %v164
  %v545 = vunpack.c.l.b16 %v165
  %v546 = vunpack.c.l.b16 %v166
  %v547 = vunpack.c.l.b16 %v167
  %v548 = vunpack.c.l.b16 %v168
  %v549 = vunpack.c.l.b16 %v169
  %v550 = vunpack.c.l.b16 %v170
  %v551 = vunpack.c.l.b16 %v171
  %v552 = vunpack.c.l.b16 %v172
  %v553 = vunpack.c.l.b16 %v173
  %v554 = vunpack.c.l.b16 %v174
  %v555 = vunpack.c.l.b16 %v175
  %v556 = vunpack.c.l.b16 %v176
  %v557 = vunpack.c.l.b16 %v177
  %v558 = vunpack.c.l.b16 %v178
  %v559 = vunpack.c.l.b16 %v179
  %v560 = vunpack.c.l.b16 %v180
  %v561 = vunpack.c.l.b16 %v181
  %v562 = vunpack.c.l.b16 %v182
  %v563 = vunpack.c.l.b16 %v183
  %v564 = vunpack.c.l.b16 %v184
  %v565 = vpack.c.b16 %v422, %v421
  %v566 = vpack.c.b16 %v424, %v423
  %v567 = vpack.c.b16 %v426, %v425
  %v568 = vpack.c.b16 %v428, %v427
  %v569 = vpack.c.b16 %v430, %v429
  %v570 = vpack.c.b16 %v432, %v431
  %v571 = vpack.c.b16 %v434, %v433
  %v572 = vpack.c.b16 %v436, %v435
  %v573 = vpack.c.b16 %v438, %v437
  %v574 = vpack.c.b16 %v440, %v439
  %v575 = vpack.c.b16 %v442, %v441
  %v576 = vpack.c.b16 %v444, %v443
  %v577 = vpack.c.b16 %v446, %v445
  %v578 = vpack.c.b16 %v448, %v447
  %v579 = vpack.c.b16 %v450, %v449
  %v580 = vpack.c.b16 %v452, %v451
  %v581 = vpack.c.b16 %v454, %v453
  %v582 = vpack.c.b16 %v456, %v455
  %v583 = vpack.c.b16 %v458, %v457
  %v584 = vpack.c.b16 %v460, %v459
  %v585 = vpack.c.b16 %v462, %v461
  %v586 = vpack.c.b16 %v464, %v463
  %v587 = vpack.c.b16 %v466, %v465
  %v588 = vpack.c.b16 %v468, %v467
  %v589 = vpack.c.b16 %v470, %v469
  %v590 = vpack.c.b16 %v472, %v471
  %v591 = vpack.c.b16 %v474, %v473
  %v592 = vpack.c.b16 %v476, %v475
  %v593 = vpack.c.b16 %v478, %v477
  %v594 = vpack.c.b16 %v480, %v479
  %v595 = vpack.c.b16 %v482, %v481
  %v596 = vpack.c.b16 %v484, %v483
  %v597 = vpack.c.b16 %v486, %v485
  %v598 = vpack.c.b16 %v488, %v487
  %v599 = vpack.c.b16 %v490, %v489
  %v600 = vpack.c.b16 %v492, %v491
  %v601 = vpack.c.b16 %v494, %v493
  %v602 = vpack.c.b16 %v496, %v495
  %v603 = vpack.c.b16 %v498, %v497
  %v604 = vpack.c.b16 %v500, %v499
  %v605 = vpack.c.b16 %v502, %v501
  %v606 = vpack.c.b16 %v504, %v503
  %v607 = vpack.c.b16 %v506, %v505
  %v608 = vpack.c.b16 %v508, %v507
  %v609 = vpack.c.b16 %v510, %v509
  %v610 = vpack.c.b16 %v512, %v511
  %v611 = vpack.c.b16 %v514, %v513
  %v612 = vpack.c.b16 %v516, %v515
  %v613 = vpack.c.b16 %v518, %v517
  %v614 = vpack.c.b16 %v520, %v519
  %v615 = vpack.c.b16 %v522, %v521
  %v616 = vpack.c.b16 %v524, %v523
  %v617 = vpack.c.b16 %v526, %v525
  %v618 = vpack.c.b16 %v528, %v527
  %v619 = vpack.c.b16 %v530, %v529
  %v620 = vpack.c.b16 %v532, %v531
  %v621 = vpack.c.b16 %v534, %v533
  %v622 = vpack.c.b16 %v536, %v535
  %v623 = vpack.c.b16 %v538, %v537
  %v624 = vpack.c.b16 %v540, %v539
  %v625 = vpack.c.b16 %v542, %v541
  %v626 = vpack.c.b16 %v544, %v543
  %v627 = vpack.c.b16 %v546, %v545
  %v628 = vpack.c.b16 %v548, %v547
  %v629 = vpack.c.b16 %v550, %v549
  %v630 = vpack.c.b16 %v552, %v551
  %v631 = vpack.c.b16 %v554, %v553
  %v632 = vpack.c.b16 %v556, %v555
  %v633 = vpack.c.b16 %v558, %v557
  %v634 = vpack.c.b16 %v560, %v559
  %v635 = vpack.c.b16 %v562, %v561
  %v636 = vpack.c.b16 %v564, %v563
  %709 = vmatprep.subr.bf16.mxu0 0
  %710 = vmatpush1.bf16.msra.mxu0 %v565
  %711 = vmatprep.subr.bf16.mxu0 0
  %712 = vmatpush1.bf16.msra.mxu0 %v566
  %713 = vmatprep.subr.bf16.mxu0 0
  %714 = vmatpush1.bf16.msra.mxu0 %v567
  %715 = vmatprep.subr.bf16.mxu0 0
  %716 = vmatpush1.bf16.msra.mxu0 %v568
  %717 = vmatprep.subr.bf16.mxu0 0
  %718 = vmatpush1.bf16.msra.mxu0 %v569
  %719 = vmatprep.subr.bf16.mxu0 0
  %720 = vmatpush1.bf16.msra.mxu0 %v570
  %721 = vmatprep.subr.bf16.mxu0 0
  %722 = vmatpush1.bf16.msra.mxu0 %v571
  %723 = vmatprep.subr.bf16.mxu0 0
  %724 = vmatpush1.bf16.msra.mxu0 %v572
  %725 = vmatprep.subr.bf16.mxu0 0
  %726 = vmatpush1.bf16.msra.mxu0 %v573
  %727 = vmatprep.subr.bf16.mxu0 0
  %728 = vmatpush1.bf16.msra.mxu0 %v574
  %729 = vmatprep.subr.bf16.mxu0 0
  %730 = vmatpush1.bf16.msra.mxu0 %v575
  %731 = vmatprep.subr.bf16.mxu0 0
  %732 = vmatpush1.bf16.msra.mxu0 %v576
  %733 = vmatprep.subr.bf16.mxu0 0
  %734 = vmatpush1.bf16.msra.mxu0 %v577
  %735 = vmatprep.subr.bf16.mxu0 0
  %736 = vmatpush1.bf16.msra.mxu0 %v578
  %737 = vmatprep.subr.bf16.mxu0 0
  %738 = vmatpush1.bf16.msra.mxu0 %v579
  %739 = vmatprep.subr.bf16.mxu0 0
  %740 = vmatpush1.bf16.msra.mxu0 %v580
  %741 = vmatprep.mubr.bf16.mxu0 %v242
  %742 = vmatmul.mubr.bf16.gmra.mrb[0].mxu0 %v241
  %v743 = vpop.f32.mrb[0].mxu0
  %v744 = vadd.f32 0.0, %v743
  %v745 = vpop.f32.mrb[0].mxu0
  %v746 = vpop.f32.mrb[0].mxu0
  %v747 = vadd.f32 0.0, %v746
  %v748 = vpop.f32.mrb[0].mxu0
  %749 = vmatprep.mubr.bf16.mxu0 %v251
  %750 = vmatmul.mubr.bf16.gmra.mrb[0].mxu0 %v250
  %v751 = vpop.f32.mrb[0].mxu0
  %v752 = vadd.f32 0.0, %v751
  %v753 = vpop.f32.mrb[0].mxu0
  %v754 = vpop.f32.mrb[0].mxu0
  %v755 = vadd.f32 0.0, %v754
  %v756 = vpop.f32.mrb[0].mxu0
  %757 = vdwg.mxu0
  %758 = vmatprep.subr.bf16.mxu0 0
  %759 = vmatpush1.bf16.msra.mxu0 %v581
  %760 = vmatprep.subr.bf16.mxu0 0
  %761 = vmatpush1.bf16.msra.mxu0 %v582
  %762 = vmatprep.subr.bf16.mxu0 0
  %763 = vmatpush1.bf16.msra.mxu0 %v583
  %764 = vmatprep.subr.bf16.mxu0 0
  %765 = vmatpush1.bf16.msra.mxu0 %v584
  %766 = vmatprep.subr.bf16.mxu0 0
  %767 = vmatpush1.bf16.msra.mxu0 %v585
  %768 = vmatprep.subr.bf16.mxu0 0
  %769 = vmatpush1.bf16.msra.mxu0 %v586
  %770 = vmatprep.subr.bf16.mxu0 0
  %771 = vmatpush1.bf16.msra.mxu0 %v587
  %772 = vmatprep.subr.bf16.mxu0 0
  %773 = vmatpush1.bf16.msra.mxu0 %v588
  %774 = vmatprep.subr.bf16.mxu0 0
  %775 = vmatpush1.bf16.msra.mxu0 %v589
  %776 = vmatprep.subr.bf16.mxu0 0
  %777 = vmatpush1.bf16.msra.mxu0 %v590
  %778 = vmatprep.subr.bf16.mxu0 0
  %779 = vmatpush1.bf16.msra.mxu0 %v591
  %780 = vmatprep.subr.bf16.mxu0 0
  %781 = vmatpush1.bf16.msra.mxu0 %v592
  %782 = vmatprep.subr.bf16.mxu0 0
  %783 = vmatpush1.bf16.msra.mxu0 %v593
  %784 = vmatprep.subr.bf16.mxu0 0
  %785 = vmatpush1.bf16.msra.mxu0 %v594
  %786 = vmatprep.subr.bf16.mxu0 0
  %787 = vmatpush1.bf16.msra.mxu0 %v595
  %788 = vmatprep.subr.bf16.mxu0 0
  %789 = vmatpush1.bf16.msra.mxu0 %v596
  %790 = vmatprep.mubr.bf16.mxu0 %v244
  %791 = vmatmul.mubr.bf16.gmra.mrb[0].mxu0 %v243
  %v792 = vpop.f32.mrb[0].mxu0
  %v793 = vadd.f32 %v744, %v792
  %v794 = vpop.f32.mrb[0].mxu0
  %v795 = vpop.f32.mrb[0].mxu0
  %v796 = vadd.f32 %v747, %v795
  %v797 = vpop.f32.mrb[0].mxu0
  %798 = vmatprep.mubr.bf16.mxu0 %v253
  %799 = vmatmul.mubr.bf16.gmra.mrb[0].mxu0 %v252
  %v800 = vpop.f32.mrb[0].mxu0
  %v801 = vadd.f32 %v752, %v800
  %v802 = vpop.f32.mrb[0].mxu0
  %v803 = vpop.f32.mrb[0].mxu0
  %v804 = vadd.f32 %v755, %v803
  %v805 = vpop.f32.mrb[0].mxu0
  %806 = vdwg.mxu0
  %807 = vmatprep.subr.bf16.mxu0 0
  %808 = vmatpush1.bf16.msra.mxu0 %v597
  %809 = vmatprep.subr.bf16.mxu0 0
  %810 = vmatpush1.bf16.msra.mxu0 %v598
  %811 = vmatprep.subr.bf16.mxu0 0
  %812 = vmatpush1.bf16.msra.mxu0 %v599
  %813 = vmatprep.subr.bf16.mxu0 0
  %814 = vmatpush1.bf16.msra.mxu0 %v600
  %815 = vmatprep.subr.bf16.mxu0 0
  %816 = vmatpush1.bf16.msra.mxu0 %v601
  %817 = vmatprep.subr.bf16.mxu0 0
  %818 = vmatpush1.bf16.msra.mxu0 %v602
  %819 = vmatprep.subr.bf16.mxu0 0
  %820 = vmatpush1.bf16.msra.mxu0 %v603
  %821 = vmatprep.subr.bf16.mxu0 0
  %822 = vmatpush1.bf16.msra.mxu0 %v604
  %823 = vmatprep.subr.bf16.mxu0 0
  %824 = vmatpush1.bf16.msra.mxu0 %v605
  %825 = vmatprep.subr.bf16.mxu0 0
  %826 = vmatpush1.bf16.msra.mxu0 %v606
  %827 = vmatprep.subr.bf16.mxu0 0
  %828 = vmatpush1.bf16.msra.mxu0 %v607
  %829 = vmatprep.subr.bf16.mxu0 0
  %830 = vmatpush1.bf16.msra.mxu0 %v608
  %831 = vmatprep.subr.bf16.mxu0 0
  %832 = vmatpush1.bf16.msra.mxu0 %v609
  %833 = vmatprep.subr.bf16.mxu0 0
  %834 = vmatpush1.bf16.msra.mxu0 %v610
  %835 = vmatprep.subr.bf16.mxu0 0
  %836 = vmatpush1.bf16.msra.mxu0 %v611
  %837 = vmatprep.subr.bf16.mxu0 0
  %838 = vmatpush1.bf16.msra.mxu0 %v612
  %839 = vmatprep.mubr.bf16.mxu0 %v246
  %840 = vmatmul.mubr.bf16.gmra.mrb[0].mxu0 %v245
  %v841 = vpop.f32.mrb[0].mxu0
  %v842 = vadd.f32 %v793, %v841
  %v843 = vpop.f32.mrb[0].mxu0
  %v844 = vpop.f32.mrb[0].mxu0
  %v845 = vadd.f32 %v796, %v844
  %v846 = vpop.f32.mrb[0].mxu0
  %847 = vmatprep.mubr.bf16.mxu0 %v255
  %848 = vmatmul.mubr.bf16.gmra.mrb[0].mxu0 %v254
  %v849 = vpop.f32.mrb[0].mxu0
  %v850 = vadd.f32 %v801, %v849
  %v851 = vpop.f32.mrb[0].mxu0
  %v852 = vpop.f32.mrb[0].mxu0
  %v853 = vadd.f32 %v804, %v852
  %v854 = vpop.f32.mrb[0].mxu0
  %855 = vdwg.mxu0
  %856 = vmatprep.subr.bf16.mxu0 0
  %857 = vmatpush1.bf16.msra.mxu0 %v613
  %858 = vmatprep.subr.bf16.mxu0 0
  %859 = vmatpush1.bf16.msra.mxu0 %v614
  %860 = vmatprep.subr.bf16.mxu0 0
  %861 = vmatpush1.bf16.msra.mxu0 %v615
  %862 = vmatprep.subr.bf16.mxu0 0
  %863 = vmatpush1.bf16.msra.mxu0 %v616
  %864 = vmatprep.subr.bf16.mxu0 0
  %865 = vmatpush1.bf16.msra.mxu0 %v617
  %866 = vmatprep.subr.bf16.mxu0 0
  %867 = vmatpush1.bf16.msra.mxu0 %v618
  %868 = vmatprep.subr.bf16.mxu0 0
  %869 = vmatpush1.bf16.msra.mxu0 %v619
  %870 = vmatprep.subr.bf16.mxu0 0
  %871 = vmatpush1.bf16.msra.mxu0 %v620
  %872 = vmatprep.subr.bf16.mxu0 0
  %873 = vmatpush1.bf16.msra.mxu0 %v621
  %874 = vmatprep.subr.bf16.mxu0 0
  %875 = vmatpush1.bf16.msra.mxu0 %v622
  %876 = vmatprep.subr.bf16.mxu0 0
  %877 = vmatpush1.bf16.msra.mxu0 %v623
  %878 = vmatprep.subr.bf16.mxu0 0
  %879 = vmatpush1.bf16.msra.mxu0 %v624
  %880 = vmatprep.subr.bf16.mxu0 0
  %881 = vmatpush1.bf16.msra.mxu0 %v625
  %882 = vmatprep.subr.bf16.mxu0 0
  %883 = vmatpush1.bf16.msra.mxu0 %v626
  %884 = vmatprep.subr.bf16.mxu0 0
  %885 = vmatpush1.bf16.msra.mxu0 %v627
  %886 = vmatprep.subr.bf16.mxu0 0
  %887 = vmatpush1.bf16.msra.mxu0 %v628
  %888 = vmatprep.mubr.bf16.mxu0 %v248
  %889 = vmatmul.mubr.bf16.gmra.mrb[0].mxu0 %v247
  %v890 = vpop.f32.mrb[0].mxu0
  %v891 = vadd.f32 %v842, %v890
  %v892 = vpop.f32.mrb[0].mxu0
  %v893 = vpop.f32.mrb[0].mxu0
  %v894 = vadd.f32 %v845, %v893
  %v895 = vpop.f32.mrb[0].mxu0
  %896 = vmatprep.mubr.bf16.mxu0 %v257
  %897 = vmatmul.mubr.bf16.gmra.mrb[0].mxu0 %v256
  %v898 = vpop.f32.mrb[0].mxu0
  %v899 = vadd.f32 %v850, %v898
  %v900 = vpop.f32.mrb[0].mxu0
  %v901 = vpop.f32.mrb[0].mxu0
  %v902 = vadd.f32 %v853, %v901
  %v903 = vpop.f32.mrb[0].mxu0
  %904 = vdwg.mxu0
  %905 = vmatprep.subr.bf16.mxu0 0
  %906 = vmatpush1.bf16.msra.mxu0 %v629
  %907 = vmatprep.subr.bf16.mxu0 0
  %908 = vmatpush1.bf16.msra.mxu0 %v630
  %909 = vmatprep.subr.bf16.mxu0 0
  %910 = vmatpush1.bf16.msra.mxu0 %v631
  %911 = vmatprep.subr.bf16.mxu0 0
  %912 = vmatpush1.bf16.msra.mxu0 %v632
  %913 = vmatprep.subr.bf16.mxu0 0
  %914 = vmatpush1.bf16.msra.mxu0 %v633
  %915 = vmatprep.subr.bf16.mxu0 0
  %916 = vmatpush1.bf16.msra.mxu0 %v634
  %917 = vmatprep.subr.bf16.mxu0 0
  %918 = vmatpush1.bf16.msra.mxu0 %v635
  %919 = vmatprep.subr.bf16.mxu0 0
  %920 = vmatpush1.bf16.msra.mxu0 %v636
  %921 = vmatprep.subr.bf16.mxu0 0
  %922 = vmatpush1.bf16.msra.mxu0 0
  %923 = vmatprep.subr.bf16.mxu0 0
  %924 = vmatpush1.bf16.msra.mxu0 0
  %925 = vmatprep.subr.bf16.mxu0 0
  %926 = vmatpush1.bf16.msra.mxu0 0
  %927 = vmatprep.subr.bf16.mxu0 0
  %928 = vmatpush1.bf16.msra.mxu0 0
  %929 = vmatprep.subr.bf16.mxu0 0
  %930 = vmatpush1.bf16.msra.mxu0 0
  %931 = vmatprep.subr.bf16.mxu0 0
  %932 = vmatpush1.bf16.msra.mxu0 0
  %933 = vmatprep.subr.bf16.mxu0 0
  %934 = vmatpush1.bf16.msra.mxu0 0
  %935 = vmatprep.subr.bf16.mxu0 0
  %936 = vmatpush1.bf16.msra.mxu0 0
  %937 = vmatprep.mubr.bf16.mxu0 0
  %938 = vmatmul.mubr.bf16.gmra.mrb[0].mxu0 %v249
  %v939 = vpop.f32.mrb[0].mxu0
  %v940 = vadd.f32 %v891, %v939
  %v941 = vpop.f32.mrb[0].mxu0
  %v942 = vpop.f32.mrb[0].mxu0
  %v943 = vadd.f32 %v894, %v942
  %v944 = vpop.f32.mrb[0].mxu0
  %945 = vmatprep.mubr.bf16.mxu0 0
  %946 = vmatmul.mubr.bf16.gmra.mrb[0].mxu0 %v258
  %v947 = vpop.f32.mrb[0].mxu0
  %v948 = vadd.f32 %v899, %v947
  %v949 = vpop.f32.mrb[0].mxu0
  %v950 = vpop.f32.mrb[0].mxu0
  %v951 = vadd.f32 %v902, %v950
  %v952 = vpop.f32.mrb[0].mxu0
  %953 = vdwg.mxu0
  %v954 = vld [vmem:[%s2] sm:$0x1]
  %v955 = vld [vmem:[%s3] sm:$0x1]
  %v956 = vld [vmem:[%s4] sm:$0xff]
  %v957 = vld [vmem:[%s4 + $0x8] sm:$0xff]
  %v958 = vld [vmem:[%s4 + $0x10] sm:$0xff]
  %v959 = vld [vmem:[%s4 + $0x18] sm:$0xff]
  %v961 = vlaneseq
  %v962 = vshrl.u32 %v961, 7
  %v963 = vsub.s32 0, %v962
  %v964 = vrot.slane %v954, %v963
  %v966 = vmul.f32 %v940, %v964
  %v967 = vmul.f32 %v943, %v964
  %v968 = vmul.f32 %v948, %v964
  %v969 = vmul.f32 %v951, %v964
  %v971 = vlaneseq
  %v972 = vshrl.u32 %v971, 7
  %v973 = vsub.s32 0, %v972
  %v974 = vrot.slane %v955, %v973
  %v976 = vadd.f32 %v966, %v974
  %v977 = vadd.f32 %v967, %v974
  %v978 = vadd.f32 %v968, %v974
  %v979 = vadd.f32 %v969, %v974
  %v980 = vadd.f32 %v976, %v956
  %v981 = vadd.f32 %v977, %v957
  %v982 = vadd.f32 %v978, %v958
  %v983 = vadd.f32 %v979, %v959
  %v984 = vmax.f32 %v980, 0.0
  %v985 = vmax.f32 %v981, 0.0
  %v986 = vmax.f32 %v982, 0.0
  %v987 = vmax.f32 %v983, 0.0
  %988 = vst [vmem:[%s5] sm:$0xff] %v984
  %989 = vst [vmem:[%s5 + $0x8] sm:$0xff] %v985
  %990 = vst [vmem:[%s5 + $0x10] sm:$0xff] %v986
  %991 = vst [vmem:[%s5 + $0x18] sm:$0xff] %v987
  // Predicated region
  $region22: #{battlefield_feature.16} parent=0 // pred_check
    _
  $region23: #{battlefield_feature.16} parent=0 // pred_check_branch
    %993 = sbr.rel (0) target = $region25
  $region24: #{battlefield_feature.16} parent=0 // pred_region
    _
  $region25: #{battlefield_feature.16} parent=0 // pred_fallthru
    _
  // Predicated region
  $region26: #{battlefield_feature.16} parent=0 // pred_check
    _
  $region27: #{battlefield_feature.16} parent=0 // pred_check_branch
    %995 = sbr.rel (0) target = $region29
  $region28: #{battlefield_feature.16} parent=0 // pred_region
    _
  $region29: #{battlefield_feature.16} parent=0 // pred_fallthru
    _

// kernel: battlefield_feature.17
$region0: #{battlefield_feature.17}
  #allocation0 [shape = 'u32[]', space=smem, size = 0x4, offset = 0x4, fixed_abs, tag = 'smem constant byte address 0x4 - core index']
  #allocation1 [shape = 'u32[144,128]{1,0:T(1,128)}', space=vmem, size = 0x12000, scoped, tag = 'internal scratch']
  %s0 = inlined_call_operand.vmem [shape: bf16[16,1152], index: 0, kind: input, shape index: {}]
  %s1 = inlined_call_operand.vmem [shape: bf16[1152,512], index: 1, kind: input, shape index: {}]
  %s2 = inlined_call_operand.vmem [shape: f32[1,512], index: 2, kind: input, shape index: {}]
  %s3 = inlined_call_operand.vmem [shape: f32[1,512], index: 3, kind: input, shape index: {}]
  %s4 = inlined_call_operand.vmem [shape: f32[1,512], index: 4, kind: input, shape index: {}]
  %s5 = inlined_call_operand.vmem [shape: f32[16,512], index: 5, kind: output, shape index: {}]
  %s6 = sld [smem:[#allocation0]]
  $region110: #{battlefield_feature.17} parent=0
    _
  %s8 = ssub.s32 1, %s6
  %s9 = scalar_select 0, %s8, %s6
  $region1: #{battlefield_feature.17} parent=0
    #allocation2 [shape = 'u8[1179648]{0}', space=vmem, size = 0x120000, scoped, tag = 'input window, operand 1']
    #allocation3 [shape = 'u8[32768]{0}', space=vmem, size = 0x8000, scoped, tag = 'output window, operand 0']
    loop: start=0, step=1, limit=4
    $region2: #{battlefield_feature.17} parent=1 // loop_pre_header
      _
    $region3: #{battlefield_feature.17} parent=1 // loop_header
      %s11 = sphi 0, %s15
      %p12 = scmp.ge.s32.totalorder %s11, 4
      %s18 = sphi 0, %s30
      %s19 = sphi 0, %s26
      %s20 = sphi 0, %s18
      %s21 = sphi 0, %s19
      %s22 = sphi 0, %s20
      %s23 = sphi 0, %s21
      %s33 = sphi 0, %s35
      %s36 = sphi 0, %s33
      %s37 = sphi 0, %s36
      %s53 = sphi 0, %s37
      %s59 = sphi 0, %s61
      %s62 = sphi 0, %s59
      %s63 = sphi 0, %s62
      %s79 = sphi 0, %s63
      %s85 = sphi 0, %s87
      %s88 = sphi 0, %s85
      %s89 = sphi 0, %s88
      %s105 = sphi 0, %s89
      %s111 = sphi 0, %s113
      %s114 = sphi 0, %s111
      %s115 = sphi 0, %s114
      %s131 = sphi 0, %s115
      %s137 = sphi 0, %s139
      %s140 = sphi 0, %s137
      %s141 = sphi 0, %s140
      %s157 = sphi 0, %s141
      %s165 = sphi 0, %s167
      %s168 = sphi 0, %s165
      %s169 = sphi 0, %s168
      %s185 = sphi 0, %s169
    $region4: #{battlefield_feature.17} parent=1 // loop_header_branch
      %14 = sbr.rel (%p12) target = $region8
    $region5: #{battlefield_feature.17} parent=1 // loop_body
      %s16 = ssub.s32 %s11, 1
      %s17 = ssub.s32 %s11, 2
      %s24 = sadd.s32 1, %s19
      %p25 = scmp.ge.s32.totalorder %s24, 2
      %s26 = scalar_select %p25, 0, %s24
      %s27 = sadd.s32 1, %s18
      %s28 = scalar_select %p25, %s27, %s18
      %p29 = scmp.ge.s32.totalorder %s28, 1
      %s30 = scalar_select %p29, 0, %s28
      %s31 = ssub.s32 %s18, %s30
      %p32 = scmp.eq.s32.totalorder %s31, 0
      %s34 = sadd.s32 %s33, 1
      %s35 = scalar_select %p32, %s33, %s34
      %p38 = pneg %p32
      %p39 = scmp.eq.s32.totalorder %s11, 1
      %p40 = por %p38, %p39
      %p41 = scmp.ne.s32.totalorder %s33, %s36
      %p42 = scmp.eq.s32.totalorder %s11, 0
      %p43 = por %p41, %p42
      %p44 = scmp.ne.s32.totalorder %s33, %s36
      %p45 = scmp.eq.s32.totalorder %s16, 1
      %p46 = por %p44, %p45
      %p47 = scmp.ne.s32.totalorder %s36, %s37
      %p48 = scmp.eq.s32.totalorder %s16, 0
      %p49 = por %p47, %p48
      %p50 = scmp.ne.s32.totalorder %s36, %s37
      %p51 = scmp.eq.s32.totalorder %s17, 1
      %p52 = por %p50, %p51
      %p54 = scmp.ne.s32.totalorder %s37, %s53
      %p55 = scmp.eq.s32.totalorder %s17, 0
      %p56 = por %p54, %p55
      %s57 = ssub.s32 %s19, %s26
      %p58 = scmp.eq.s32.totalorder %s57, 0
      %s60 = sadd.s32 %s59, 1
      %s61 = scalar_select %p58, %s59, %s60
      %p64 = pneg %p58
      %p65 = scmp.eq.s32.totalorder %s11, 1
      %p66 = por %p64, %p65
      %p67 = scmp.ne.s32.totalorder %s59, %s62
      %p68 = scmp.eq.s32.totalorder %s11, 0
      %p69 = por %p67, %p68
      %p70 = scmp.ne.s32.totalorder %s59, %s62
      %p71 = scmp.eq.s32.totalorder %s16, 1
      %p72 = por %p70, %p71
      %p73 = scmp.ne.s32.totalorder %s62, %s63
      %p74 = scmp.eq.s32.totalorder %s16, 0
      %p75 = por %p73, %p74
      %p76 = scmp.ne.s32.totalorder %s62, %s63
      %p77 = scmp.eq.s32.totalorder %s17, 1
      %p78 = por %p76, %p77
      %p80 = scmp.ne.s32.totalorder %s63, %s79
      %p81 = scmp.eq.s32.totalorder %s17, 0
      %p82 = por %p80, %p81
      %s83 = ssub.s32 %s19, %s26
      %p84 = scmp.eq.s32.totalorder %s83, 0
      %s86 = sadd.s32 %s85, 1
      %s87 = scalar_select %p84, %s85, %s86
      %p90 = pneg %p84
      %p91 = scmp.eq.s32.totalorder %s11, 1
      %p92 = por %p90, %p91
      %p93 = scmp.ne.s32.totalorder %s85, %s88
      %p94 = scmp.eq.s32.totalorder %s11, 0
      %p95 = por %p93, %p94
      %p96 = scmp.ne.s32.totalorder %s85, %s88
      %p97 = scmp.eq.s32.totalorder %s16, 1
      %p98 = por %p96, %p97
      %p99 = scmp.ne.s32.totalorder %s88, %s89
      %p100 = scmp.eq.s32.totalorder %s16, 0
      %p101 = por %p99, %p100
      %p102 = scmp.ne.s32.totalorder %s88, %s89
      %p103 = scmp.eq.s32.totalorder %s17, 1
      %p104 = por %p102, %p103
      %p106 = scmp.ne.s32.totalorder %s89, %s105
      %p107 = scmp.eq.s32.totalorder %s17, 0
      %p108 = por %p106, %p107
      %s109 = ssub.s32 %s19, %s26
      %p110 = scmp.eq.s32.totalorder %s109, 0
      %s112 = sadd.s32 %s111, 1
      %s113 = scalar_select %p110, %s111, %s112
      %p116 = pneg %p110
      %p117 = scmp.eq.s32.totalorder %s11, 1
      %p118 = por %p116, %p117
      %p119 = scmp.ne.s32.totalorder %s111, %s114
      %p120 = scmp.eq.s32.totalorder %s11, 0
      %p121 = por %p119, %p120
      %p122 = scmp.ne.s32.totalorder %s111, %s114
      %p123 = scmp.eq.s32.totalorder %s16, 1
      %p124 = por %p122, %p123
      %p125 = scmp.ne.s32.totalorder %s114, %s115
      %p126 = scmp.eq.s32.totalorder %s16, 0
      %p127 = por %p125, %p126
      %p128 = scmp.ne.s32.totalorder %s114, %s115
      %p129 = scmp.eq.s32.totalorder %s17, 1
      %p130 = por %p128, %p129
      %p132 = scmp.ne.s32.totalorder %s115, %s131
      %p133 = scmp.eq.s32.totalorder %s17, 0
      %p134 = por %p132, %p133
      %s135 = ssub.s32 %s19, %s26
      %p136 = scmp.eq.s32.totalorder %s135, 0
      %s138 = sadd.s32 %s137, 1
      %s139 = scalar_select %p136, %s137, %s138
      %p142 = pneg %p136
      %p143 = scmp.eq.s32.totalorder %s11, 1
      %p144 = por %p142, %p143
      %p145 = scmp.ne.s32.totalorder %s137, %s140
      %p146 = scmp.eq.s32.totalorder %s11, 0
      %p147 = por %p145, %p146
      %p148 = scmp.ne.s32.totalorder %s137, %s140
      %p149 = scmp.eq.s32.totalorder %s16, 1
      %p150 = por %p148, %p149
      %p151 = scmp.ne.s32.totalorder %s140, %s141
      %p152 = scmp.eq.s32.totalorder %s16, 0
      %p153 = por %p151, %p152
      %p154 = scmp.ne.s32.totalorder %s140, %s141
      %p155 = scmp.eq.s32.totalorder %s17, 1
      %p156 = por %p154, %p155
      %p158 = scmp.ne.s32.totalorder %s141, %s157
      %p159 = scmp.eq.s32.totalorder %s17, 0
      %p160 = por %p158, %p159
      %s161 = ssub.s32 %s18, %s30
      %s162 = ssub.s32 %s19, %s26
      %s163 = sor.u32 %s161, %s162
      %p164 = scmp.eq.s32.totalorder %s163, 0
      %s166 = sadd.s32 %s165, 1
      %s167 = scalar_select %p164, %s165, %s166
      %p170 = pneg %p164
      %p171 = scmp.eq.s32.totalorder %s11, 1
      %p172 = por %p170, %p171
      %p173 = scmp.ne.s32.totalorder %s165, %s168
      %p174 = scmp.eq.s32.totalorder %s11, 0
      %p175 = por %p173, %p174
      %p176 = scmp.ne.s32.totalorder %s165, %s168
      %p177 = scmp.eq.s32.totalorder %s16, 1
      %p178 = por %p176, %p177
      %p179 = scmp.ne.s32.totalorder %s168, %s169
      %p180 = scmp.eq.s32.totalorder %s16, 0
      %p181 = por %p179, %p180
      %p182 = scmp.ne.s32.totalorder %s168, %s169
      %p183 = scmp.eq.s32.totalorder %s17, 1
      %p184 = por %p182, %p183
      %p186 = scmp.ne.s32.totalorder %s169, %s185
      %p187 = scmp.eq.s32.totalorder %s17, 0
      %p188 = por %p186, %p187
      %p189 = scmp.le.s32.totalorder 1, %s11
      %p190 = scmp.lt.s32.totalorder %s11, 3
      %p191 = pnand %p189, %p190
      %p192 = pneg %p191
      // Predicated region
      $region9: #{battlefield_feature.17} parent=5 // pred_check
        _
      $region10: #{battlefield_feature.17} parent=5 // pred_check_branch
        %194 = sbr.rel (%p191) target = $region12
      $region11: #{battlefield_feature.17} parent=5 // pred_region
        %s195 = ssub.s32 %s11, 1
        // Predicated region
        $region13: #{battlefield_feature.17} parent=11 // pred_check
          %p196 = pneg %p49
        $region14: #{battlefield_feature.17} parent=11 // pred_check_branch
          %198 = sbr.rel (%p196) target = $region16
        $region15: #{battlefield_feature.17} parent=11 // pred_region
          %s199 = smul.u32 2, %s20
          %p200 = scmp.lt.s32.totalorder %s199, 1
          %s201 = scalar_select %p200, %s199, 1
          %s202 = smul.addr %s201, 9
          %s203 = smul.addr %s202, 4
          %s204 = scalar_lea.vmem %s0, %s203
          %s205 = smul.u32 2, %s20
        $region16: #{battlefield_feature.17} parent=11 // pred_fallthru
          _
      $region12: #{battlefield_feature.17} parent=5 // pred_fallthru
        _
      %p206 = scmp.lt.s32.totalorder %s11, 2
      // Predicated region
      $region17: #{battlefield_feature.17} parent=5 // pred_check
        %p207 = pneg %p206
      $region18: #{battlefield_feature.17} parent=5 // pred_check_branch
        %209 = sbr.rel (%p207) target = $region20
      $region19: #{battlefield_feature.17} parent=5 // pred_region
        // Predicated region
        $region21: #{battlefield_feature.17} parent=19 // pred_check
          %p210 = pneg %p69
        $region22: #{battlefield_feature.17} parent=19 // pred_check_branch
          %212 = sbr.rel (%p210) target = $region24
        $region23: #{battlefield_feature.17} parent=19 // pred_region
          %s213 = sand.u32 %s59, 1
          %s214 = sand.u32 %s59, 1
          %s215 = smul.addr %s214, 1152
          %s216 = scalar_lea.vmem [#allocation2], %s215
          %s217 = smul.u32 2, %s19
          %s218 = smul.addr %s217, 4
          %s219 = scalar_lea.vmem %s1, %s218
          // Predicated region
          $region25: #{battlefield_feature.17} parent=23 // pred_check
            _
          $region26: #{battlefield_feature.17} parent=23 // pred_check_branch
            %221 = sbr.rel (0) target = $region28
          $region27: #{battlefield_feature.17} parent=23 // pred_region
            // Predicated region
            $region29: #{battlefield_feature.17} parent=27 // pred_check
              _
            $region30: #{battlefield_feature.17} parent=27 // pred_check_branch
              %223 = sbr.rel (0) target = $region32
            $region31: #{battlefield_feature.17} parent=27 // pred_region
              // Predicated region
              $region44: #{battlefield_feature.17} parent=31 // pred_check
                _
              $region45: #{battlefield_feature.17} parent=31 // pred_check_branch
                %524 = sbr.rel (0) target = $region47
              $region46: #{battlefield_feature.17} parent=31 // pred_region
                loop: start=0, step=1, limit=1
                $region48: #{battlefield_feature.17} parent=46 // loop_pre_header
                  _
                $region49: #{battlefield_feature.17} parent=46 // loop_header
                  %s526 = sphi 0, %s530
                  %p527 = scmp.ge.s32.totalorder %s526, 1
                  %s531 = sphi %s219, %s219
                  %s532 = sphi %s216, %s216
                $region50: #{battlefield_feature.17} parent=46 // loop_header_branch
                  %529 = sbr.rel (%p527) target = $region54
                $region51: #{battlefield_feature.17} parent=46 // loop_body
                  %v533 = vld [vmem:[%s531] sm:$0xff]
                  %534 = vst [vmem:[%s532] sm:$0xff] %v533
                  %v535 = vld [vmem:[%s531 + $0x10] sm:$0xff]
                  %536 = vst [vmem:[%s532 + $0x8] sm:$0xff] %v535
                  %v537 = vld [vmem:[%s531 + $0x20] sm:$0xff]
                  %538 = vst [vmem:[%s532 + $0x10] sm:$0xff] %v537
                  %v539 = vld [vmem:[%s531 + $0x30] sm:$0xff]
                  %540 = vst [vmem:[%s532 + $0x18] sm:$0xff] %v539
                  %v541 = vld [vmem:[%s531 + $0x40] sm:$0xff]
                  %542 = vst [vmem:[%s532 + $0x20] sm:$0xff] %v541
                  %v543 = vld [vmem:[%s531 + $0x50] sm:$0xff]
                  %544 = vst [vmem:[%s532 + $0x28] sm:$0xff] %v543
                  %v545 = vld [vmem:[%s531 + $0x60] sm:$0xff]
                  %546 = vst [vmem:[%s532 + $0x30] sm:$0xff] %v545
                  %v547 = vld [vmem:[%s531 + $0x70] sm:$0xff]
                  %548 = vst [vmem:[%s532 + $0x38] sm:$0xff] %v547
                  %v549 = vld [vmem:[%s531 + $0x80] sm:$0xff]
                  %550 = vst [vmem:[%s532 + $0x40] sm:$0xff] %v549
                  %v551 = vld [vmem:[%s531 + $0x90] sm:$0xff]
                  %552 = vst [vmem:[%s532 + $0x48] sm:$0xff] %v551
                  %v553 = vld [vmem:[%s531 + $0xa0] sm:$0xff]
                  %554 = vst [vmem:[%s532 + $0x50] sm:$0xff] %v553
                  %v555 = vld [vmem:[%s531 + $0xb0] sm:$0xff]
                  %556 = vst [vmem:[%s532 + $0x58] sm:$0xff] %v555
                  %v557 = vld [vmem:[%s531 + $0xc0] sm:$0xff]
                  %558 = vst [vmem:[%s532 + $0x60] sm:$0xff] %v557
                  %v559 = vld [vmem:[%s531 + $0xd0] sm:$0xff]
                  %560 = vst [vmem:[%s532 + $0x68] sm:$0xff] %v559
                  %v561 = vld [vmem:[%s531 + $0xe0] sm:$0xff]
                  %562 = vst [vmem:[%s532 + $0x70] sm:$0xff] %v561
                  %v563 = vld [vmem:[%s531 + $0xf0] sm:$0xff]
                  %564 = vst [vmem:[%s532 + $0x78] sm:$0xff] %v563
                  %v565 = vld [vmem:[%s531 + $0x100] sm:$0xff]
                  %566 = vst [vmem:[%s532 + $0x80] sm:$0xff] %v565
                  %v567 = vld [vmem:[%s531 + $0x110] sm:$0xff]
                  %568 = vst [vmem:[%s532 + $0x88] sm:$0xff] %v567
                  %v569 = vld [vmem:[%s531 + $0x120] sm:$0xff]
                  %570 = vst [vmem:[%s532 + $0x90] sm:$0xff] %v569
                  %v571 = vld [vmem:[%s531 + $0x130] sm:$0xff]
                  %572 = vst [vmem:[%s532 + $0x98] sm:$0xff] %v571
                  %v573 = vld [vmem:[%s531 + $0x140] sm:$0xff]
                  %574 = vst [vmem:[%s532 + $0xa0] sm:$0xff] %v573
                  %v575 = vld [vmem:[%s531 + $0x150] sm:$0xff]
                  %576 = vst [vmem:[%s532 + $0xa8] sm:$0xff] %v575
                  %v577 = vld [vmem:[%s531 + $0x160] sm:$0xff]
                  %578 = vst [vmem:[%s532 + $0xb0] sm:$0xff] %v577
                  %v579 = vld [vmem:[%s531 + $0x170] sm:$0xff]
                  %580 = vst [vmem:[%s532 + $0xb8] sm:$0xff] %v579
                  %v581 = vld [vmem:[%s531 + $0x180] sm:$0xff]
                  %582 = vst [vmem:[%s532 + $0xc0] sm:$0xff] %v581
                  %v583 = vld [vmem:[%s531 + $0x190] sm:$0xff]
                  %584 = vst [vmem:[%s532 + $0xc8] sm:$0xff] %v583
                  %v585 = vld [vmem:[%s531 + $0x1a0] sm:$0xff]
                  %586 = vst [vmem:[%s532 + $0xd0] sm:$0xff] %v585
                  %v587 = vld [vmem:[%s531 + $0x1b0] sm:$0xff]
                  %588 = vst [vmem:[%s532 + $0xd8] sm:$0xff] %v587
                  %v589 = vld [vmem:[%s531 + $0x1c0] sm:$0xff]
                  %590 = vst [vmem:[%s532 + $0xe0] sm:$0xff] %v589
                  %v591 = vld [vmem:[%s531 + $0x1d0] sm:$0xff]
                  %592 = vst [vmem:[%s532 + $0xe8] sm:$0xff] %v591
                  %v593 = vld [vmem:[%s531 + $0x1e0] sm:$0xff]
                  %594 = vst [vmem:[%s532 + $0xf0] sm:$0xff] %v593
                  %v595 = vld [vmem:[%s531 + $0x1f0] sm:$0xff]
                  %596 = vst [vmem:[%s532 + $0xf8] sm:$0xff] %v595
                  %v597 = vld [vmem:[%s531 + $0x200] sm:$0xff]
                  %598 = vst [vmem:[%s532 + $0x100] sm:$0xff] %v597
                  %v599 = vld [vmem:[%s531 + $0x210] sm:$0xff]
                  %600 = vst [vmem:[%s532 + $0x108] sm:$0xff] %v599
                  %v601 = vld [vmem:[%s531 + $0x220] sm:$0xff]
                  %602 = vst [vmem:[%s532 + $0x110] sm:$0xff] %v601
                  %v603 = vld [vmem:[%s531 + $0x230] sm:$0xff]
                  %604 = vst [vmem:[%s532 + $0x118] sm:$0xff] %v603
                  %v605 = vld [vmem:[%s531 + $0x240] sm:$0xff]
                  %606 = vst [vmem:[%s532 + $0x120] sm:$0xff] %v605
                  %v607 = vld [vmem:[%s531 + $0x250] sm:$0xff]
                  %608 = vst [vmem:[%s532 + $0x128] sm:$0xff] %v607
                  %v609 = vld [vmem:[%s531 + $0x260] sm:$0xff]
                  %610 = vst [vmem:[%s532 + $0x130] sm:$0xff] %v609
                  %v611 = vld [vmem:[%s531 + $0x270] sm:$0xff]
                  %612 = vst [vmem:[%s532 + $0x138] sm:$0xff] %v611
                  %v613 = vld [vmem:[%s531 + $0x280] sm:$0xff]
                  %614 = vst [vmem:[%s532 + $0x140] sm:$0xff] %v613
                  %v615 = vld [vmem:[%s531 + $0x290] sm:$0xff]
                  %616 = vst [vmem:[%s532 + $0x148] sm:$0xff] %v615
                  %v617 = vld [vmem:[%s531 + $0x2a0] sm:$0xff]
                  %618 = vst [vmem:[%s532 + $0x150] sm:$0xff] %v617
                  %v619 = vld [vmem:[%s531 + $0x2b0] sm:$0xff]
                  %620 = vst [vmem:[%s532 + $0x158] sm:$0xff] %v619
                  %v621 = vld [vmem:[%s531 + $0x2c0] sm:$0xff]
                  %622 = vst [vmem:[%s532 + $0x160] sm:$0xff] %v621
                  %v623 = vld [vmem:[%s531 + $0x2d0] sm:$0xff]
                  %624 = vst [vmem:[%s532 + $0x168] sm:$0xff] %v623
                  %v625 = vld [vmem:[%s531 + $0x2e0] sm:$0xff]
                  %626 = vst [vmem:[%s532 + $0x170] sm:$0xff] %v625
                  %v627 = vld [vmem:[%s531 + $0x2f0] sm:$0xff]
                  %628 = vst [vmem:[%s532 + $0x178] sm:$0xff] %v627
                  %v629 = vld [vmem:[%s531 + $0x300] sm:$0xff]
                  %630 = vst [vmem:[%s532 + $0x180] sm:$0xff] %v629
                  %v631 = vld [vmem:[%s531 + $0x310] sm:$0xff]
                  %632 = vst [vmem:[%s532 + $0x188] sm:$0xff] %v631
                  %v633 = vld [vmem:[%s531 + $0x320] sm:$0xff]
                  %634 = vst [vmem:[%s532 + $0x190] sm:$0xff] %v633
                  %v635 = vld [vmem:[%s531 + $0x330] sm:$0xff]
                  %636 = vst [vmem:[%s532 + $0x198] sm:$0xff] %v635
                  %v637 = vld [vmem:[%s531 + $0x340] sm:$0xff]
                  %638 = vst [vmem:[%s532 + $0x1a0] sm:$0xff] %v637
                  %v639 = vld [vmem:[%s531 + $0x350] sm:$0xff]
                  %640 = vst [vmem:[%s532 + $0x1a8] sm:$0xff] %v639
                  %v641 = vld [vmem:[%s531 + $0x360] sm:$0xff]
                  %642 = vst [vmem:[%s532 + $0x1b0] sm:$0xff] %v641
                  %v643 = vld [vmem:[%s531 + $0x370] sm:$0xff]
                  %644 = vst [vmem:[%s532 + $0x1b8] sm:$0xff] %v643
                  %v645 = vld [vmem:[%s531 + $0x380] sm:$0xff]
                  %646 = vst [vmem:[%s532 + $0x1c0] sm:$0xff] %v645
                  %v647 = vld [vmem:[%s531 + $0x390] sm:$0xff]
                  %648 = vst [vmem:[%s532 + $0x1c8] sm:$0xff] %v647
                  %v649 = vld [vmem:[%s531 + $0x3a0] sm:$0xff]
                  %650 = vst [vmem:[%s532 + $0x1d0] sm:$0xff] %v649
                  %v651 = vld [vmem:[%s531 + $0x3b0] sm:$0xff]
                  %652 = vst [vmem:[%s532 + $0x1d8] sm:$0xff] %v651
                  %v653 = vld [vmem:[%s531 + $0x3c0] sm:$0xff]
                  %654 = vst [vmem:[%s532 + $0x1e0] sm:$0xff] %v653
                  %v655 = vld [vmem:[%s531 + $0x3d0] sm:$0xff]
                  %656 = vst [vmem:[%s532 + $0x1e8] sm:$0xff] %v655
                  %v657 = vld [vmem:[%s531 + $0x3e0] sm:$0xff]
                  %658 = vst [vmem:[%s532 + $0x1f0] sm:$0xff] %v657
                  %v659 = vld [vmem:[%s531 + $0x3f0] sm:$0xff]
                  %660 = vst [vmem:[%s532 + $0x1f8] sm:$0xff] %v659
                  %v661 = vld [vmem:[%s531 + $0x400] sm:$0xff]
                  %662 = vst [vmem:[%s532 + $0x200] sm:$0xff] %v661
                  %v663 = vld [vmem:[%s531 + $0x410] sm:$0xff]
                  %664 = vst [vmem:[%s532 + $0x208] sm:$0xff] %v663
                  %v665 = vld [vmem:[%s531 + $0x420] sm:$0xff]
                  %666 = vst [vmem:[%s532 + $0x210] sm:$0xff] %v665
                  %v667 = vld [vmem:[%s531 + $0x430] sm:$0xff]
                  %668 = vst [vmem:[%s532 + $0x218] sm:$0xff] %v667
                  %v669 = vld [vmem:[%s531 + $0x440] sm:$0xff]
                  %670 = vst [vmem:[%s532 + $0x220] sm:$0xff] %v669
                  %v671 = vld [vmem:[%s531 + $0x450] sm:$0xff]
                  %672 = vst [vmem:[%s532 + $0x228] sm:$0xff] %v671
                  %v673 = vld [vmem:[%s531 + $0x460] sm:$0xff]
                  %674 = vst [vmem:[%s532 + $0x230] sm:$0xff] %v673
                  %v675 = vld [vmem:[%s531 + $0x470] sm:$0xff]
                  %676 = vst [vmem:[%s532 + $0x238] sm:$0xff] %v675
                  %v677 = vld [vmem:[%s531 + $0x480] sm:$0xff]
                  %678 = vst [vmem:[%s532 + $0x240] sm:$0xff] %v677
                  %v679 = vld [vmem:[%s531 + $0x490] sm:$0xff]
                  %680 = vst [vmem:[%s532 + $0x248] sm:$0xff] %v679
                  %v681 = vld [vmem:[%s531 + $0x4a0] sm:$0xff]
                  %682 = vst [vmem:[%s532 + $0x250] sm:$0xff] %v681
                  %v683 = vld [vmem:[%s531 + $0x4b0] sm:$0xff]
                  %684 = vst [vmem:[%s532 + $0x258] sm:$0xff] %v683
                  %v685 = vld [vmem:[%s531 + $0x4c0] sm:$0xff]
                  %686 = vst [vmem:[%s532 + $0x260] sm:$0xff] %v685
                  %v687 = vld [vmem:[%s531 + $0x4d0] sm:$0xff]
                  %688 = vst [vmem:[%s532 + $0x268] sm:$0xff] %v687
                  %v689 = vld [vmem:[%s531 + $0x4e0] sm:$0xff]
                  %690 = vst [vmem:[%s532 + $0x270] sm:$0xff] %v689
                  %v691 = vld [vmem:[%s531 + $0x4f0] sm:$0xff]
                  %692 = vst [vmem:[%s532 + $0x278] sm:$0xff] %v691
                  %v693 = vld [vmem:[%s531 + $0x500] sm:$0xff]
                  %694 = vst [vmem:[%s532 + $0x280] sm:$0xff] %v693
                  %v695 = vld [vmem:[%s531 + $0x510] sm:$0xff]
                  %696 = vst [vmem:[%s532 + $0x288] sm:$0xff] %v695
                  %v697 = vld [vmem:[%s531 + $0x520] sm:$0xff]
                  %698 = vst [vmem:[%s532 + $0x290] sm:$0xff] %v697
                  %v699 = vld [vmem:[%s531 + $0x530] sm:$0xff]
                  %700 = vst [vmem:[%s532 + $0x298] sm:$0xff] %v699
                  %v701 = vld [vmem:[%s531 + $0x540] sm:$0xff]
                  %702 = vst [vmem:[%s532 + $0x2a0] sm:$0xff] %v701
                  %v703 = vld [vmem:[%s531 + $0x550] sm:$0xff]
                  %704 = vst [vmem:[%s532 + $0x2a8] sm:$0xff] %v703
                  %v705 = vld [vmem:[%s531 + $0x560] sm:$0xff]
                  %706 = vst [vmem:[%s532 + $0x2b0] sm:$0xff] %v705
                  %v707 = vld [vmem:[%s531 + $0x570] sm:$0xff]
                  %708 = vst [vmem:[%s532 + $0x2b8] sm:$0xff] %v707
                  %v709 = vld [vmem:[%s531 + $0x580] sm:$0xff]
                  %710 = vst [vmem:[%s532 + $0x2c0] sm:$0xff] %v709
                  %v711 = vld [vmem:[%s531 + $0x590] sm:$0xff]
                  %712 = vst [vmem:[%s532 + $0x2c8] sm:$0xff] %v711
                  %v713 = vld [vmem:[%s531 + $0x5a0] sm:$0xff]
                  %714 = vst [vmem:[%s532 + $0x2d0] sm:$0xff] %v713
                  %v715 = vld [vmem:[%s531 + $0x5b0] sm:$0xff]
                  %716 = vst [vmem:[%s532 + $0x2d8] sm:$0xff] %v715
                  %v717 = vld [vmem:[%s531 + $0x5c0] sm:$0xff]
                  %718 = vst [vmem:[%s532 + $0x2e0] sm:$0xff] %v717
                  %v719 = vld [vmem:[%s531 + $0x5d0] sm:$0xff]
                  %720 = vst [vmem:[%s532 + $0x2e8] sm:$0xff] %v719
                  %v721 = vld [vmem:[%s531 + $0x5e0] sm:$0xff]
                  %722 = vst [vmem:[%s532 + $0x2f0] sm:$0xff] %v721
                  %v723 = vld [vmem:[%s531 + $0x5f0] sm:$0xff]
                  %724 = vst [vmem:[%s532 + $0x2f8] sm:$0xff] %v723
                  %v725 = vld [vmem:[%s531 + $0x600] sm:$0xff]
                  %726 = vst [vmem:[%s532 + $0x300] sm:$0xff] %v725
                  %v727 = vld [vmem:[%s531 + $0x610] sm:$0xff]
                  %728 = vst [vmem:[%s532 + $0x308] sm:$0xff] %v727
                  %v729 = vld [vmem:[%s531 + $0x620] sm:$0xff]
                  %730 = vst [vmem:[%s532 + $0x310] sm:$0xff] %v729
                  %v731 = vld [vmem:[%s531 + $0x630] sm:$0xff]
                  %732 = vst [vmem:[%s532 + $0x318] sm:$0xff] %v731
                  %v733 = vld [vmem:[%s531 + $0x640] sm:$0xff]
                  %734 = vst [vmem:[%s532 + $0x320] sm:$0xff] %v733
                  %v735 = vld [vmem:[%s531 + $0x650] sm:$0xff]
                  %736 = vst [vmem:[%s532 + $0x328] sm:$0xff] %v735
                  %v737 = vld [vmem:[%s531 + $0x660] sm:$0xff]
                  %738 = vst [vmem:[%s532 + $0x330] sm:$0xff] %v737
                  %v739 = vld [vmem:[%s531 + $0x670] sm:$0xff]
                  %740 = vst [vmem:[%s532 + $0x338] sm:$0xff] %v739
                  %v741 = vld [vmem:[%s531 + $0x680] sm:$0xff]
                  %742 = vst [vmem:[%s532 + $0x340] sm:$0xff] %v741
                  %v743 = vld [vmem:[%s531 + $0x690] sm:$0xff]
                  %744 = vst [vmem:[%s532 + $0x348] sm:$0xff] %v743
                  %v745 = vld [vmem:[%s531 + $0x6a0] sm:$0xff]
                  %746 = vst [vmem:[%s532 + $0x350] sm:$0xff] %v745
                  %v747 = vld [vmem:[%s531 + $0x6b0] sm:$0xff]
                  %748 = vst [vmem:[%s532 + $0x358] sm:$0xff] %v747
                  %v749 = vld [vmem:[%s531 + $0x6c0] sm:$0xff]
                  %750 = vst [vmem:[%s532 + $0x360] sm:$0xff] %v749
                  %v751 = vld [vmem:[%s531 + $0x6d0] sm:$0xff]
                  %752 = vst [vmem:[%s532 + $0x368] sm:$0xff] %v751
                  %v753 = vld [vmem:[%s531 + $0x6e0] sm:$0xff]
                  %754 = vst [vmem:[%s532 + $0x370] sm:$0xff] %v753
                  %v755 = vld [vmem:[%s531 + $0x6f0] sm:$0xff]
                  %756 = vst [vmem:[%s532 + $0x378] sm:$0xff] %v755
                  %v757 = vld [vmem:[%s531 + $0x700] sm:$0xff]
                  %758 = vst [vmem:[%s532 + $0x380] sm:$0xff] %v757
                  %v759 = vld [vmem:[%s531 + $0x710] sm:$0xff]
                  %760 = vst [vmem:[%s532 + $0x388] sm:$0xff] %v759
                  %v761 = vld [vmem:[%s531 + $0x720] sm:$0xff]
                  %762 = vst [vmem:[%s532 + $0x390] sm:$0xff] %v761
                  %v763 = vld [vmem:[%s531 + $0x730] sm:$0xff]
                  %764 = vst [vmem:[%s532 + $0x398] sm:$0xff] %v763
                  %v765 = vld [vmem:[%s531 + $0x740] sm:$0xff]
                  %766 = vst [vmem:[%s532 + $0x3a0] sm:$0xff] %v765
                  %v767 = vld [vmem:[%s531 + $0x750] sm:$0xff]
                  %768 = vst [vmem:[%s532 + $0x3a8] sm:$0xff] %v767
                  %v769 = vld [vmem:[%s531 + $0x760] sm:$0xff]
                  %770 = vst [vmem:[%s532 + $0x3b0] sm:$0xff] %v769
                  %v771 = vld [vmem:[%s531 + $0x770] sm:$0xff]
                  %772 = vst [vmem:[%s532 + $0x3b8] sm:$0xff] %v771
                  %v773 = vld [vmem:[%s531 + $0x780] sm:$0xff]
                  %774 = vst [vmem:[%s532 + $0x3c0] sm:$0xff] %v773
                  %v775 = vld [vmem:[%s531 + $0x790] sm:$0xff]
                  %776 = vst [vmem:[%s532 + $0x3c8] sm:$0xff] %v775
                  %v777 = vld [vmem:[%s531 + $0x7a0] sm:$0xff]
                  %778 = vst [vmem:[%s532 + $0x3d0] sm:$0xff] %v777
                  %v779 = vld [vmem:[%s531 + $0x7b0] sm:$0xff]
                  %780 = vst [vmem:[%s532 + $0x3d8] sm:$0xff] %v779
                  %v781 = vld [vmem:[%s531 + $0x7c0] sm:$0xff]
                  %782 = vst [vmem:[%s532 + $0x3e0] sm:$0xff] %v781
                  %v783 = vld [vmem:[%s531 + $0x7d0] sm:$0xff]
                  %784 = vst [vmem:[%s532 + $0x3e8] sm:$0xff] %v783
                  %v785 = vld [vmem:[%s531 + $0x7e0] sm:$0xff]
                  %786 = vst [vmem:[%s532 + $0x3f0] sm:$0xff] %v785
                  %v787 = vld [vmem:[%s531 + $0x7f0] sm:$0xff]
                  %788 = vst [vmem:[%s532 + $0x3f8] sm:$0xff] %v787
                  %v789 = vld [vmem:[%s531 + $0x800] sm:$0xff]
                  %790 = vst [vmem:[%s532 + $0x400] sm:$0xff] %v789
                  %v791 = vld [vmem:[%s531 + $0x810] sm:$0xff]
                  %792 = vst [vmem:[%s532 + $0x408] sm:$0xff] %v791
                  %v793 = vld [vmem:[%s531 + $0x820] sm:$0xff]
                  %794 = vst [vmem:[%s532 + $0x410] sm:$0xff] %v793
                  %v795 = vld [vmem:[%s531 + $0x830] sm:$0xff]
                  %796 = vst [vmem:[%s532 + $0x418] sm:$0xff] %v795
                  %v797 = vld [vmem:[%s531 + $0x840] sm:$0xff]
                  %798 = vst [vmem:[%s532 + $0x420] sm:$0xff] %v797
                  %v799 = vld [vmem:[%s531 + $0x850] sm:$0xff]
                  %800 = vst [vmem:[%s532 + $0x428] sm:$0xff] %v799
                  %v801 = vld [vmem:[%s531 + $0x860] sm:$0xff]
                  %802 = vst [vmem:[%s532 + $0x430] sm:$0xff] %v801
                  %v803 = vld [vmem:[%s531 + $0x870] sm:$0xff]
                  %804 = vst [vmem:[%s532 + $0x438] sm:$0xff] %v803
                  %v805 = vld [vmem:[%s531 + $0x880] sm:$0xff]
                  %806 = vst [vmem:[%s532 + $0x440] sm:$0xff] %v805
                  %v807 = vld [vmem:[%s531 + $0x890] sm:$0xff]
                  %808 = vst [vmem:[%s532 + $0x448] sm:$0xff] %v807
                  %v809 = vld [vmem:[%s531 + $0x8a0] sm:$0xff]
                  %810 = vst [vmem:[%s532 + $0x450] sm:$0xff] %v809
                  %v811 = vld [vmem:[%s531 + $0x8b0] sm:$0xff]
                  %812 = vst [vmem:[%s532 + $0x458] sm:$0xff] %v811
                  %v813 = vld [vmem:[%s531 + $0x8c0] sm:$0xff]
                  %814 = vst [vmem:[%s532 + $0x460] sm:$0xff] %v813
                  %v815 = vld [vmem:[%s531 + $0x8d0] sm:$0xff]
                  %816 = vst [vmem:[%s532 + $0x468] sm:$0xff] %v815
                  %v817 = vld [vmem:[%s531 + $0x8e0] sm:$0xff]
                  %818 = vst [vmem:[%s532 + $0x470] sm:$0xff] %v817
                  %v819 = vld [vmem:[%s531 + $0x8f0] sm:$0xff]
                  %820 = vst [vmem:[%s532 + $0x478] sm:$0xff] %v819
                $region52: #{battlefield_feature.17} parent=46 // loop_footer
                  %s530 = sadd.s32 1, %s526
                $region53: #{battlefield_feature.17} parent=46 // loop_footer_branch
                  %525 = sbr.rel target = $region49
                $region54: #{battlefield_feature.17} parent=46 // loop_exit
                  _
              $region47: #{battlefield_feature.17} parent=31 // pred_fallthru
                _
              // Predicated region
              $region55: #{battlefield_feature.17} parent=31 // pred_check
                _
              $region56: #{battlefield_feature.17} parent=31 // pred_check_branch
                %822 = sbr.rel target = $region58
              $region57: #{battlefield_feature.17} parent=31 // pred_region
                _
              $region58: #{battlefield_feature.17} parent=31 // pred_fallthru
                _
            $region32: #{battlefield_feature.17} parent=27 // pred_fallthru
              _
            // Predicated region
            $region33: #{battlefield_feature.17} parent=27 // pred_check
              _
            $region34: #{battlefield_feature.17} parent=27 // pred_check_branch
              %225 = sbr.rel target = $region36
            $region35: #{battlefield_feature.17} parent=27 // pred_region
              loop: start=0, step=1, limit=1
              $region37: #{battlefield_feature.17} parent=35 // loop_pre_header
                _
              $region38: #{battlefield_feature.17} parent=35 // loop_header
                %s228 = sphi 0, %s232
                %p229 = scmp.ge.s32.totalorder %s228, 1
                %s233 = sphi %s219, %s219
                %s234 = sphi %s216, %s216
              $region39: #{battlefield_feature.17} parent=35 // loop_header_branch
                %231 = sbr.rel (%p229) target = $region43
              $region40: #{battlefield_feature.17} parent=35 // loop_body
                %v235 = vld [vmem:[%s233] sm:$0xff]
                %236 = vst [vmem:[%s234] sm:$0xff] %v235
                %v237 = vld [vmem:[%s233 + $0x10] sm:$0xff]
                %238 = vst [vmem:[%s234 + $0x8] sm:$0xff] %v237
                %v239 = vld [vmem:[%s233 + $0x20] sm:$0xff]
                %240 = vst [vmem:[%s234 + $0x10] sm:$0xff] %v239
                %v241 = vld [vmem:[%s233 + $0x30] sm:$0xff]
                %242 = vst [vmem:[%s234 + $0x18] sm:$0xff] %v241
                %v243 = vld [vmem:[%s233 + $0x40] sm:$0xff]
                %244 = vst [vmem:[%s234 + $0x20] sm:$0xff] %v243
                %v245 = vld [vmem:[%s233 + $0x50] sm:$0xff]
                %246 = vst [vmem:[%s234 + $0x28] sm:$0xff] %v245
                %v247 = vld [vmem:[%s233 + $0x60] sm:$0xff]
                %248 = vst [vmem:[%s234 + $0x30] sm:$0xff] %v247
                %v249 = vld [vmem:[%s233 + $0x70] sm:$0xff]
                %250 = vst [vmem:[%s234 + $0x38] sm:$0xff] %v249
                %v251 = vld [vmem:[%s233 + $0x80] sm:$0xff]
                %252 = vst [vmem:[%s234 + $0x40] sm:$0xff] %v251
                %v253 = vld [vmem:[%s233 + $0x90] sm:$0xff]
                %254 = vst [vmem:[%s234 + $0x48] sm:$0xff] %v253
                %v255 = vld [vmem:[%s233 + $0xa0] sm:$0xff]
                %256 = vst [vmem:[%s234 + $0x50] sm:$0xff] %v255
                %v257 = vld [vmem:[%s233 + $0xb0] sm:$0xff]
                %258 = vst [vmem:[%s234 + $0x58] sm:$0xff] %v257
                %v259 = vld [vmem:[%s233 + $0xc0] sm:$0xff]
                %260 = vst [vmem:[%s234 + $0x60] sm:$0xff] %v259
                %v261 = vld [vmem:[%s233 + $0xd0] sm:$0xff]
                %262 = vst [vmem:[%s234 + $0x68] sm:$0xff] %v261
                %v263 = vld [vmem:[%s233 + $0xe0] sm:$0xff]
                %264 = vst [vmem:[%s234 + $0x70] sm:$0xff] %v263
                %v265 = vld [vmem:[%s233 + $0xf0] sm:$0xff]
                %266 = vst [vmem:[%s234 + $0x78] sm:$0xff] %v265
                %v267 = vld [vmem:[%s233 + $0x100] sm:$0xff]
                %268 = vst [vmem:[%s234 + $0x80] sm:$0xff] %v267
                %v269 = vld [vmem:[%s233 + $0x110] sm:$0xff]
                %270 = vst [vmem:[%s234 + $0x88] sm:$0xff] %v269
                %v271 = vld [vmem:[%s233 + $0x120] sm:$0xff]
                %272 = vst [vmem:[%s234 + $0x90] sm:$0xff] %v271
                %v273 = vld [vmem:[%s233 + $0x130] sm:$0xff]
                %274 = vst [vmem:[%s234 + $0x98] sm:$0xff] %v273
                %v275 = vld [vmem:[%s233 + $0x140] sm:$0xff]
                %276 = vst [vmem:[%s234 + $0xa0] sm:$0xff] %v275
                %v277 = vld [vmem:[%s233 + $0x150] sm:$0xff]
                %278 = vst [vmem:[%s234 + $0xa8] sm:$0xff] %v277
                %v279 = vld [vmem:[%s233 + $0x160] sm:$0xff]
                %280 = vst [vmem:[%s234 + $0xb0] sm:$0xff] %v279
                %v281 = vld [vmem:[%s233 + $0x170] sm:$0xff]
                %282 = vst [vmem:[%s234 + $0xb8] sm:$0xff] %v281
                %v283 = vld [vmem:[%s233 + $0x180] sm:$0xff]
                %284 = vst [vmem:[%s234 + $0xc0] sm:$0xff] %v283
                %v285 = vld [vmem:[%s233 + $0x190] sm:$0xff]
                %286 = vst [vmem:[%s234 + $0xc8] sm:$0xff] %v285
                %v287 = vld [vmem:[%s233 + $0x1a0] sm:$0xff]
                %288 = vst [vmem:[%s234 + $0xd0] sm:$0xff] %v287
                %v289 = vld [vmem:[%s233 + $0x1b0] sm:$0xff]
                %290 = vst [vmem:[%s234 + $0xd8] sm:$0xff] %v289
                %v291 = vld [vmem:[%s233 + $0x1c0] sm:$0xff]
                %292 = vst [vmem:[%s234 + $0xe0] sm:$0xff] %v291
                %v293 = vld [vmem:[%s233 + $0x1d0] sm:$0xff]
                %294 = vst [vmem:[%s234 + $0xe8] sm:$0xff] %v293
                %v295 = vld [vmem:[%s233 + $0x1e0] sm:$0xff]
                %296 = vst [vmem:[%s234 + $0xf0] sm:$0xff] %v295
                %v297 = vld [vmem:[%s233 + $0x1f0] sm:$0xff]
                %298 = vst [vmem:[%s234 + $0xf8] sm:$0xff] %v297
                %v299 = vld [vmem:[%s233 + $0x200] sm:$0xff]
                %300 = vst [vmem:[%s234 + $0x100] sm:$0xff] %v299
                %v301 = vld [vmem:[%s233 + $0x210] sm:$0xff]
                %302 = vst [vmem:[%s234 + $0x108] sm:$0xff] %v301
                %v303 = vld [vmem:[%s233 + $0x220] sm:$0xff]
                %304 = vst [vmem:[%s234 + $0x110] sm:$0xff] %v303
                %v305 = vld [vmem:[%s233 + $0x230] sm:$0xff]
                %306 = vst [vmem:[%s234 + $0x118] sm:$0xff] %v305
                %v307 = vld [vmem:[%s233 + $0x240] sm:$0xff]
                %308 = vst [vmem:[%s234 + $0x120] sm:$0xff] %v307
                %v309 = vld [vmem:[%s233 + $0x250] sm:$0xff]
                %310 = vst [vmem:[%s234 + $0x128] sm:$0xff] %v309
                %v311 = vld [vmem:[%s233 + $0x260] sm:$0xff]
                %312 = vst [vmem:[%s234 + $0x130] sm:$0xff] %v311
                %v313 = vld [vmem:[%s233 + $0x270] sm:$0xff]
                %314 = vst [vmem:[%s234 + $0x138] sm:$0xff] %v313
                %v315 = vld [vmem:[%s233 + $0x280] sm:$0xff]
                %316 = vst [vmem:[%s234 + $0x140] sm:$0xff] %v315
                %v317 = vld [vmem:[%s233 + $0x290] sm:$0xff]
                %318 = vst [vmem:[%s234 + $0x148] sm:$0xff] %v317
                %v319 = vld [vmem:[%s233 + $0x2a0] sm:$0xff]
                %320 = vst [vmem:[%s234 + $0x150] sm:$0xff] %v319
                %v321 = vld [vmem:[%s233 + $0x2b0] sm:$0xff]
                %322 = vst [vmem:[%s234 + $0x158] sm:$0xff] %v321
                %v323 = vld [vmem:[%s233 + $0x2c0] sm:$0xff]
                %324 = vst [vmem:[%s234 + $0x160] sm:$0xff] %v323
                %v325 = vld [vmem:[%s233 + $0x2d0] sm:$0xff]
                %326 = vst [vmem:[%s234 + $0x168] sm:$0xff] %v325
                %v327 = vld [vmem:[%s233 + $0x2e0] sm:$0xff]
                %328 = vst [vmem:[%s234 + $0x170] sm:$0xff] %v327
                %v329 = vld [vmem:[%s233 + $0x2f0] sm:$0xff]
                %330 = vst [vmem:[%s234 + $0x178] sm:$0xff] %v329
                %v331 = vld [vmem:[%s233 + $0x300] sm:$0xff]
                %332 = vst [vmem:[%s234 + $0x180] sm:$0xff] %v331
                %v333 = vld [vmem:[%s233 + $0x310] sm:$0xff]
                %334 = vst [vmem:[%s234 + $0x188] sm:$0xff] %v333
                %v335 = vld [vmem:[%s233 + $0x320] sm:$0xff]
                %336 = vst [vmem:[%s234 + $0x190] sm:$0xff] %v335
                %v337 = vld [vmem:[%s233 + $0x330] sm:$0xff]
                %338 = vst [vmem:[%s234 + $0x198] sm:$0xff] %v337
                %v339 = vld [vmem:[%s233 + $0x340] sm:$0xff]
                %340 = vst [vmem:[%s234 + $0x1a0] sm:$0xff] %v339
                %v341 = vld [vmem:[%s233 + $0x350] sm:$0xff]
                %342 = vst [vmem:[%s234 + $0x1a8] sm:$0xff] %v341
                %v343 = vld [vmem:[%s233 + $0x360] sm:$0xff]
                %344 = vst [vmem:[%s234 + $0x1b0] sm:$0xff] %v343
                %v345 = vld [vmem:[%s233 + $0x370] sm:$0xff]
                %346 = vst [vmem:[%s234 + $0x1b8] sm:$0xff] %v345
                %v347 = vld [vmem:[%s233 + $0x380] sm:$0xff]
                %348 = vst [vmem:[%s234 + $0x1c0] sm:$0xff] %v347
                %v349 = vld [vmem:[%s233 + $0x390] sm:$0xff]
                %350 = vst [vmem:[%s234 + $0x1c8] sm:$0xff] %v349
                %v351 = vld [vmem:[%s233 + $0x3a0] sm:$0xff]
                %352 = vst [vmem:[%s234 + $0x1d0] sm:$0xff] %v351
                %v353 = vld [vmem:[%s233 + $0x3b0] sm:$0xff]
                %354 = vst [vmem:[%s234 + $0x1d8] sm:$0xff] %v353
                %v355 = vld [vmem:[%s233 + $0x3c0] sm:$0xff]
                %356 = vst [vmem:[%s234 + $0x1e0] sm:$0xff] %v355
                %v357 = vld [vmem:[%s233 + $0x3d0] sm:$0xff]
                %358 = vst [vmem:[%s234 + $0x1e8] sm:$0xff] %v357
                %v359 = vld [vmem:[%s233 + $0x3e0] sm:$0xff]
                %360 = vst [vmem:[%s234 + $0x1f0] sm:$0xff] %v359
                %v361 = vld [vmem:[%s233 + $0x3f0] sm:$0xff]
                %362 = vst [vmem:[%s234 + $0x1f8] sm:$0xff] %v361
                %v363 = vld [vmem:[%s233 + $0x400] sm:$0xff]
                %364 = vst [vmem:[%s234 + $0x200] sm:$0xff] %v363
                %v365 = vld [vmem:[%s233 + $0x410] sm:$0xff]
                %366 = vst [vmem:[%s234 + $0x208] sm:$0xff] %v365
                %v367 = vld [vmem:[%s233 + $0x420] sm:$0xff]
                %368 = vst [vmem:[%s234 + $0x210] sm:$0xff] %v367
                %v369 = vld [vmem:[%s233 + $0x430] sm:$0xff]
                %370 = vst [vmem:[%s234 + $0x218] sm:$0xff] %v369
                %v371 = vld [vmem:[%s233 + $0x440] sm:$0xff]
                %372 = vst [vmem:[%s234 + $0x220] sm:$0xff] %v371
                %v373 = vld [vmem:[%s233 + $0x450] sm:$0xff]
                %374 = vst [vmem:[%s234 + $0x228] sm:$0xff] %v373
                %v375 = vld [vmem:[%s233 + $0x460] sm:$0xff]
                %376 = vst [vmem:[%s234 + $0x230] sm:$0xff] %v375
                %v377 = vld [vmem:[%s233 + $0x470] sm:$0xff]
                %378 = vst [vmem:[%s234 + $0x238] sm:$0xff] %v377
                %v379 = vld [vmem:[%s233 + $0x480] sm:$0xff]
                %380 = vst [vmem:[%s234 + $0x240] sm:$0xff] %v379
                %v381 = vld [vmem:[%s233 + $0x490] sm:$0xff]
                %382 = vst [vmem:[%s234 + $0x248] sm:$0xff] %v381
                %v383 = vld [vmem:[%s233 + $0x4a0] sm:$0xff]
                %384 = vst [vmem:[%s234 + $0x250] sm:$0xff] %v383
                %v385 = vld [vmem:[%s233 + $0x4b0] sm:$0xff]
                %386 = vst [vmem:[%s234 + $0x258] sm:$0xff] %v385
                %v387 = vld [vmem:[%s233 + $0x4c0] sm:$0xff]
                %388 = vst [vmem:[%s234 + $0x260] sm:$0xff] %v387
                %v389 = vld [vmem:[%s233 + $0x4d0] sm:$0xff]
                %390 = vst [vmem:[%s234 + $0x268] sm:$0xff] %v389
                %v391 = vld [vmem:[%s233 + $0x4e0] sm:$0xff]
                %392 = vst [vmem:[%s234 + $0x270] sm:$0xff] %v391
                %v393 = vld [vmem:[%s233 + $0x4f0] sm:$0xff]
                %394 = vst [vmem:[%s234 + $0x278] sm:$0xff] %v393
                %v395 = vld [vmem:[%s233 + $0x500] sm:$0xff]
                %396 = vst [vmem:[%s234 + $0x280] sm:$0xff] %v395
                %v397 = vld [vmem:[%s233 + $0x510] sm:$0xff]
                %398 = vst [vmem:[%s234 + $0x288] sm:$0xff] %v397
                %v399 = vld [vmem:[%s233 + $0x520] sm:$0xff]
                %400 = vst [vmem:[%s234 + $0x290] sm:$0xff] %v399
                %v401 = vld [vmem:[%s233 + $0x530] sm:$0xff]
                %402 = vst [vmem:[%s234 + $0x298] sm:$0xff] %v401
                %v403 = vld [vmem:[%s233 + $0x540] sm:$0xff]
                %404 = vst [vmem:[%s234 + $0x2a0] sm:$0xff] %v403
                %v405 = vld [vmem:[%s233 + $0x550] sm:$0xff]
                %406 = vst [vmem:[%s234 + $0x2a8] sm:$0xff] %v405
                %v407 = vld [vmem:[%s233 + $0x560] sm:$0xff]
                %408 = vst [vmem:[%s234 + $0x2b0] sm:$0xff] %v407
                %v409 = vld [vmem:[%s233 + $0x570] sm:$0xff]
                %410 = vst [vmem:[%s234 + $0x2b8] sm:$0xff] %v409
                %v411 = vld [vmem:[%s233 + $0x580] sm:$0xff]
                %412 = vst [vmem:[%s234 + $0x2c0] sm:$0xff] %v411
                %v413 = vld [vmem:[%s233 + $0x590] sm:$0xff]
                %414 = vst [vmem:[%s234 + $0x2c8] sm:$0xff] %v413
                %v415 = vld [vmem:[%s233 + $0x5a0] sm:$0xff]
                %416 = vst [vmem:[%s234 + $0x2d0] sm:$0xff] %v415
                %v417 = vld [vmem:[%s233 + $0x5b0] sm:$0xff]
                %418 = vst [vmem:[%s234 + $0x2d8] sm:$0xff] %v417
                %v419 = vld [vmem:[%s233 + $0x5c0] sm:$0xff]
                %420 = vst [vmem:[%s234 + $0x2e0] sm:$0xff] %v419
                %v421 = vld [vmem:[%s233 + $0x5d0] sm:$0xff]
                %422 = vst [vmem:[%s234 + $0x2e8] sm:$0xff] %v421
                %v423 = vld [vmem:[%s233 + $0x5e0] sm:$0xff]
                %424 = vst [vmem:[%s234 + $0x2f0] sm:$0xff] %v423
                %v425 = vld [vmem:[%s233 + $0x5f0] sm:$0xff]
                %426 = vst [vmem:[%s234 + $0x2f8] sm:$0xff] %v425
                %v427 = vld [vmem:[%s233 + $0x600] sm:$0xff]
                %428 = vst [vmem:[%s234 + $0x300] sm:$0xff] %v427
                %v429 = vld [vmem:[%s233 + $0x610] sm:$0xff]
                %430 = vst [vmem:[%s234 + $0x308] sm:$0xff] %v429
                %v431 = vld [vmem:[%s233 + $0x620] sm:$0xff]
                %432 = vst [vmem:[%s234 + $0x310] sm:$0xff] %v431
                %v433 = vld [vmem:[%s233 + $0x630] sm:$0xff]
                %434 = vst [vmem:[%s234 + $0x318] sm:$0xff] %v433
                %v435 = vld [vmem:[%s233 + $0x640] sm:$0xff]
                %436 = vst [vmem:[%s234 + $0x320] sm:$0xff] %v435
                %v437 = vld [vmem:[%s233 + $0x650] sm:$0xff]
                %438 = vst [vmem:[%s234 + $0x328] sm:$0xff] %v437
                %v439 = vld [vmem:[%s233 + $0x660] sm:$0xff]
                %440 = vst [vmem:[%s234 + $0x330] sm:$0xff] %v439
                %v441 = vld [vmem:[%s233 + $0x670] sm:$0xff]
                %442 = vst [vmem:[%s234 + $0x338] sm:$0xff] %v441
                %v443 = vld [vmem:[%s233 + $0x680] sm:$0xff]
                %444 = vst [vmem:[%s234 + $0x340] sm:$0xff] %v443
                %v445 = vld [vmem:[%s233 + $0x690] sm:$0xff]
                %446 = vst [vmem:[%s234 + $0x348] sm:$0xff] %v445
                %v447 = vld [vmem:[%s233 + $0x6a0] sm:$0xff]
                %448 = vst [vmem:[%s234 + $0x350] sm:$0xff] %v447
                %v449 = vld [vmem:[%s233 + $0x6b0] sm:$0xff]
                %450 = vst [vmem:[%s234 + $0x358] sm:$0xff] %v449
                %v451 = vld [vmem:[%s233 + $0x6c0] sm:$0xff]
                %452 = vst [vmem:[%s234 + $0x360] sm:$0xff] %v451
                %v453 = vld [vmem:[%s233 + $0x6d0] sm:$0xff]
                %454 = vst [vmem:[%s234 + $0x368] sm:$0xff] %v453
                %v455 = vld [vmem:[%s233 + $0x6e0] sm:$0xff]
                %456 = vst [vmem:[%s234 + $0x370] sm:$0xff] %v455
                %v457 = vld [vmem:[%s233 + $0x6f0] sm:$0xff]
                %458 = vst [vmem:[%s234 + $0x378] sm:$0xff] %v457
                %v459 = vld [vmem:[%s233 + $0x700] sm:$0xff]
                %460 = vst [vmem:[%s234 + $0x380] sm:$0xff] %v459
                %v461 = vld [vmem:[%s233 + $0x710] sm:$0xff]
                %462 = vst [vmem:[%s234 + $0x388] sm:$0xff] %v461
                %v463 = vld [vmem:[%s233 + $0x720] sm:$0xff]
                %464 = vst [vmem:[%s234 + $0x390] sm:$0xff] %v463
                %v465 = vld [vmem:[%s233 + $0x730] sm:$0xff]
                %466 = vst [vmem:[%s234 + $0x398] sm:$0xff] %v465
                %v467 = vld [vmem:[%s233 + $0x740] sm:$0xff]
                %468 = vst [vmem:[%s234 + $0x3a0] sm:$0xff] %v467
                %v469 = vld [vmem:[%s233 + $0x750] sm:$0xff]
                %470 = vst [vmem:[%s234 + $0x3a8] sm:$0xff] %v469
                %v471 = vld [vmem:[%s233 + $0x760] sm:$0xff]
                %472 = vst [vmem:[%s234 + $0x3b0] sm:$0xff] %v471
                %v473 = vld [vmem:[%s233 + $0x770] sm:$0xff]
                %474 = vst [vmem:[%s234 + $0x3b8] sm:$0xff] %v473
                %v475 = vld [vmem:[%s233 + $0x780] sm:$0xff]
                %476 = vst [vmem:[%s234 + $0x3c0] sm:$0xff] %v475
                %v477 = vld [vmem:[%s233 + $0x790] sm:$0xff]
                %478 = vst [vmem:[%s234 + $0x3c8] sm:$0xff] %v477
                %v479 = vld [vmem:[%s233 + $0x7a0] sm:$0xff]
                %480 = vst [vmem:[%s234 + $0x3d0] sm:$0xff] %v479
                %v481 = vld [vmem:[%s233 + $0x7b0] sm:$0xff]
                %482 = vst [vmem:[%s234 + $0x3d8] sm:$0xff] %v481
                %v483 = vld [vmem:[%s233 + $0x7c0] sm:$0xff]
                %484 = vst [vmem:[%s234 + $0x3e0] sm:$0xff] %v483
                %v485 = vld [vmem:[%s233 + $0x7d0] sm:$0xff]
                %486 = vst [vmem:[%s234 + $0x3e8] sm:$0xff] %v485
                %v487 = vld [vmem:[%s233 + $0x7e0] sm:$0xff]
                %488 = vst [vmem:[%s234 + $0x3f0] sm:$0xff] %v487
                %v489 = vld [vmem:[%s233 + $0x7f0] sm:$0xff]
                %490 = vst [vmem:[%s234 + $0x3f8] sm:$0xff] %v489
                %v491 = vld [vmem:[%s233 + $0x800] sm:$0xff]
                %492 = vst [vmem:[%s234 + $0x400] sm:$0xff] %v491
                %v493 = vld [vmem:[%s233 + $0x810] sm:$0xff]
                %494 = vst [vmem:[%s234 + $0x408] sm:$0xff] %v493
                %v495 = vld [vmem:[%s233 + $0x820] sm:$0xff]
                %496 = vst [vmem:[%s234 + $0x410] sm:$0xff] %v495
                %v497 = vld [vmem:[%s233 + $0x830] sm:$0xff]
                %498 = vst [vmem:[%s234 + $0x418] sm:$0xff] %v497
                %v499 = vld [vmem:[%s233 + $0x840] sm:$0xff]
                %500 = vst [vmem:[%s234 + $0x420] sm:$0xff] %v499
                %v501 = vld [vmem:[%s233 + $0x850] sm:$0xff]
                %502 = vst [vmem:[%s234 + $0x428] sm:$0xff] %v501
                %v503 = vld [vmem:[%s233 + $0x860] sm:$0xff]
                %504 = vst [vmem:[%s234 + $0x430] sm:$0xff] %v503
                %v505 = vld [vmem:[%s233 + $0x870] sm:$0xff]
                %506 = vst [vmem:[%s234 + $0x438] sm:$0xff] %v505
                %v507 = vld [vmem:[%s233 + $0x880] sm:$0xff]
                %508 = vst [vmem:[%s234 + $0x440] sm:$0xff] %v507
                %v509 = vld [vmem:[%s233 + $0x890] sm:$0xff]
                %510 = vst [vmem:[%s234 + $0x448] sm:$0xff] %v509
                %v511 = vld [vmem:[%s233 + $0x8a0] sm:$0xff]
                %512 = vst [vmem:[%s234 + $0x450] sm:$0xff] %v511
                %v513 = vld [vmem:[%s233 + $0x8b0] sm:$0xff]
                %514 = vst [vmem:[%s234 + $0x458] sm:$0xff] %v513
                %v515 = vld [vmem:[%s233 + $0x8c0] sm:$0xff]
                %516 = vst [vmem:[%s234 + $0x460] sm:$0xff] %v515
                %v517 = vld [vmem:[%s233 + $0x8d0] sm:$0xff]
                %518 = vst [vmem:[%s234 + $0x468] sm:$0xff] %v517
                %v519 = vld [vmem:[%s233 + $0x8e0] sm:$0xff]
                %520 = vst [vmem:[%s234 + $0x470] sm:$0xff] %v519
                %v521 = vld [vmem:[%s233 + $0x8f0] sm:$0xff]
                %522 = vst [vmem:[%s234 + $0x478] sm:$0xff] %v521
              $region41: #{battlefield_feature.17} parent=35 // loop_footer
                %s232 = sadd.s32 1, %s228
              $region42: #{battlefield_feature.17} parent=35 // loop_footer_branch
                %227 = sbr.rel target = $region38
              $region43: #{battlefield_feature.17} parent=35 // loop_exit
                _
            $region36: #{battlefield_feature.17} parent=27 // pred_fallthru
              _
          $region28: #{battlefield_feature.17} parent=23 // pred_fallthru
            _
          %823 = vnop
        $region24: #{battlefield_feature.17} parent=19 // pred_fallthru
          _
        // Predicated region
        $region59: #{battlefield_feature.17} parent=19 // pred_check
          %p824 = pneg %p95
        $region60: #{battlefield_feature.17} parent=19 // pred_check_branch
          %826 = sbr.rel (%p824) target = $region62
        $region61: #{battlefield_feature.17} parent=19 // pred_region
          %s827 = smul.u32 2, %s19
          %p828 = scmp.lt.s32.totalorder %s827, 3
          %s829 = scalar_select %p828, %s827, 3
          %s830 = scalar_lea.vmem %s2, %s829
          %s831 = smul.u32 2, %s19
        $region62: #{battlefield_feature.17} parent=19 // pred_fallthru
          _
        // Predicated region
        $region63: #{battlefield_feature.17} parent=19 // pred_check
          %p832 = pneg %p121
        $region64: #{battlefield_feature.17} parent=19 // pred_check_branch
          %834 = sbr.rel (%p832) target = $region66
        $region65: #{battlefield_feature.17} parent=19 // pred_region
          %s835 = smul.u32 2, %s19
          %p836 = scmp.lt.s32.totalorder %s835, 3
          %s837 = scalar_select %p836, %s835, 3
          %s838 = scalar_lea.vmem %s3, %s837
          %s839 = smul.u32 2, %s19
        $region66: #{battlefield_feature.17} parent=19 // pred_fallthru
          _
        // Predicated region
        $region67: #{battlefield_feature.17} parent=19 // pred_check
          %p840 = pneg %p147
        $region68: #{battlefield_feature.17} parent=19 // pred_check_branch
          %842 = sbr.rel (%p840) target = $region70
        $region69: #{battlefield_feature.17} parent=19 // pred_region
          %s843 = smul.u32 2, %s19
          %p844 = scmp.lt.s32.totalorder %s843, 3
          %s845 = scalar_select %p844, %s843, 3
          %s846 = scalar_lea.vmem %s4, %s845
          %s847 = smul.u32 2, %s19
        $region70: #{battlefield_feature.17} parent=19 // pred_fallthru
          _
      $region20: #{battlefield_feature.17} parent=5 // pred_fallthru
        _
      %p848 = scmp.le.s32.totalorder 1, %s11
      %p849 = scmp.lt.s32.totalorder %s11, 3
      %p850 = pnand %p848, %p849
      %p851 = pneg %p850
      // Predicated region
      $region71: #{battlefield_feature.17} parent=5 // pred_check
        _
      $region72: #{battlefield_feature.17} parent=5 // pred_check_branch
        %853 = sbr.rel (%p850) target = $region74
      $region73: #{battlefield_feature.17} parent=5 // pred_region
        %s854 = ssub.s32 %s11, 1
        %s855 = sand.u32 %s62, 1
        %s856 = sand.u32 %s62, 1
        %s857 = smul.addr %s856, 1152
        %s858 = scalar_lea.vmem [#allocation2], %s857
        // Predicated region
        $region75: #{battlefield_feature.17} parent=73 // pred_check
          %p859 = pneg %p75
        $region76: #{battlefield_feature.17} parent=73 // pred_check_branch
          %861 = sbr.rel (%p859) target = $region78
        $region77: #{battlefield_feature.17} parent=73 // pred_region
          _
        $region78: #{battlefield_feature.17} parent=73 // pred_fallthru
          _
        %s862 = smul.u32 2, %s20
        %p863 = scmp.lt.s32.totalorder %s862, 1
        %s864 = scalar_select %p863, %s862, 1
        %s865 = smul.addr %s864, 9
        %s866 = smul.addr %s865, 4
        %s867 = scalar_lea.vmem %s0, %s866
        %p868 = pneg %p49
        %p869 = pneg %p46
        %s870 = sand.u32 %s62, 1
        %s871 = sand.u32 %s62, 1
        %s872 = smul.addr %s871, 1152
        %s873 = scalar_lea.vmem [#allocation2], %s872
        %p874 = pneg %p75
        %p875 = pneg %p72
        %s876 = smul.u32 2, %s21
        %p877 = scmp.lt.s32.totalorder %s876, 3
        %s878 = scalar_select %p877, %s876, 3
        %s879 = scalar_lea.vmem %s2, %s878
        %p880 = pneg %p101
        %p881 = pneg %p98
        %s882 = smul.u32 2, %s21
        %p883 = scmp.lt.s32.totalorder %s882, 3
        %s884 = scalar_select %p883, %s882, 3
        %s885 = scalar_lea.vmem %s3, %s884
        %p886 = pneg %p127
        %p887 = pneg %p124
        %s888 = smul.u32 2, %s21
        %p889 = scmp.lt.s32.totalorder %s888, 3
        %s890 = scalar_select %p889, %s888, 3
        %s891 = scalar_lea.vmem %s4, %s890
        %p892 = pneg %p153
        %p893 = pneg %p150
        %p894 = pneg %p181
        %p895 = pneg %p178
        %s896 = sand.u32 %s168, 1
        %s897 = sand.u32 %s168, 1
        %s898 = smul.addr %s897, 32
        %s899 = scalar_lea.vmem [#allocation3], %s898
        %s900 = smul.u32 2, %s20
        %p901 = scmp.lt.s32.totalorder %s900, 1
        %s902 = scalar_select %p901, %s900, 1
        %s903 = smul.addr %s902, 9
        %s904 = smul.addr %s903, 4
        %s905 = scalar_lea.vmem %s0, %s904
        %s906 = smul.u32 2, %s20
        %s907 = smul.u32 2, %s21
        %s908 = smul.u32 2, %s21
        %p909 = scmp.lt.s32.totalorder %s908, 3
        %s910 = scalar_select %p909, %s908, 3
        %s911 = scalar_lea.vmem %s2, %s910
        %s912 = smul.u32 2, %s21
        %s913 = smul.u32 2, %s21
        %p914 = scmp.lt.s32.totalorder %s913, 3
        %s915 = scalar_select %p914, %s913, 3
        %s916 = scalar_lea.vmem %s3, %s915
        %s917 = smul.u32 2, %s21
        %s918 = smul.u32 2, %s21
        %p919 = scmp.lt.s32.totalorder %s918, 3
        %s920 = scalar_select %p919, %s918, 3
        %s921 = scalar_lea.vmem %s4, %s920
        %s922 = smul.u32 2, %s21
        %s923 = smul.u32 2, %s20
        %s924 = smul.u32 2, %s21
        %v926 = vld [vmem:[%s905] sm:$0xff]
        %v927 = vld [vmem:[%s905 + $0x8] sm:$0xff]
        %v928 = vld [vmem:[%s905 + $0x10] sm:$0xff]
        %v929 = vld [vmem:[%s905 + $0x18] sm:$0xff]
        %v930 = vld [vmem:[%s905 + $0x20] sm:$0xf]
        %v931 = vld [vmem:[%s905 + $0x24] sm:$0xff]
        %v932 = vld [vmem:[%s905 + $0x2c] sm:$0xff]
        %v933 = vld [vmem:[%s905 + $0x34] sm:$0xff]
        %v934 = vld [vmem:[%s905 + $0x3c] sm:$0xff]
        %v935 = vld [vmem:[%s905 + $0x44] sm:$0xf]
        %v936 = vld [vmem:[%s858] sm:$0xff]
        %v937 = vld [vmem:[%s858 + $0x8] sm:$0xff]
        %v938 = vld [vmem:[%s858 + $0x10] sm:$0xff]
        %v939 = vld [vmem:[%s858 + $0x18] sm:$0xff]
        %v940 = vld [vmem:[%s858 + $0x20] sm:$0xff]
        %v941 = vld [vmem:[%s858 + $0x28] sm:$0xff]
        %v942 = vld [vmem:[%s858 + $0x30] sm:$0xff]
        %v943 = vld [vmem:[%s858 + $0x38] sm:$0xff]
        %v944 = vld [vmem:[%s858 + $0x40] sm:$0xff]
        %v945 = vld [vmem:[%s858 + $0x48] sm:$0xff]
        %v946 = vld [vmem:[%s858 + $0x50] sm:$0xff]
        %v947 = vld [vmem:[%s858 + $0x58] sm:$0xff]
        %v948 = vld [vmem:[%s858 + $0x60] sm:$0xff]
        %v949 = vld [vmem:[%s858 + $0x68] sm:$0xff]
        %v950 = vld [vmem:[%s858 + $0x70] sm:$0xff]
        %v951 = vld [vmem:[%s858 + $0x78] sm:$0xff]
        %v952 = vld [vmem:[%s858 + $0x80] sm:$0xff]
        %v953 = vld [vmem:[%s858 + $0x88] sm:$0xff]
        %v954 = vld [vmem:[%s858 + $0x90] sm:$0xff]
        %v955 = vld [vmem:[%s858 + $0x98] sm:$0xff]
        %v956 = vld [vmem:[%s858 + $0xa0] sm:$0xff]
        %v957 = vld [vmem:[%s858 + $0xa8] sm:$0xff]
        %v958 = vld [vmem:[%s858 + $0xb0] sm:$0xff]
        %v959 = vld [vmem:[%s858 + $0xb8] sm:$0xff]
        %v960 = vld [vmem:[%s858 + $0xc0] sm:$0xff]
        %v961 = vld [vmem:[%s858 + $0xc8] sm:$0xff]
        %v962 = vld [vmem:[%s858 + $0xd0] sm:$0xff]
        %v963 = vld [vmem:[%s858 + $0xd8] sm:$0xff]
        %v964 = vld [vmem:[%s858 + $0xe0] sm:$0xff]
        %v965 = vld [vmem:[%s858 + $0xe8] sm:$0xff]
        %v966 = vld [vmem:[%s858 + $0xf0] sm:$0xff]
        %v967 = vld [vmem:[%s858 + $0xf8] sm:$0xff]
        %v968 = vld [vmem:[%s858 + $0x100] sm:$0xff]
        %v969 = vld [vmem:[%s858 + $0x108] sm:$0xff]
        %v970 = vld [vmem:[%s858 + $0x110] sm:$0xff]
        %v971 = vld [vmem:[%s858 + $0x118] sm:$0xff]
        %v972 = vld [vmem:[%s858 + $0x120] sm:$0xff]
        %v973 = vld [vmem:[%s858 + $0x128] sm:$0xff]
        %v974 = vld [vmem:[%s858 + $0x130] sm:$0xff]
        %v975 = vld [vmem:[%s858 + $0x138] sm:$0xff]
        %v976 = vld [vmem:[%s858 + $0x140] sm:$0xff]
        %v977 = vld [vmem:[%s858 + $0x148] sm:$0xff]
        %v978 = vld [vmem:[%s858 + $0x150] sm:$0xff]
        %v979 = vld [vmem:[%s858 + $0x158] sm:$0xff]
        %v980 = vld [vmem:[%s858 + $0x160] sm:$0xff]
        %v981 = vld [vmem:[%s858 + $0x168] sm:$0xff]
        %v982 = vld [vmem:[%s858 + $0x170] sm:$0xff]
        %v983 = vld [vmem:[%s858 + $0x178] sm:$0xff]
        %v984 = vld [vmem:[%s858 + $0x180] sm:$0xff]
        %v985 = vld [vmem:[%s858 + $0x188] sm:$0xff]
        %v986 = vld [vmem:[%s858 + $0x190] sm:$0xff]
        %v987 = vld [vmem:[%s858 + $0x198] sm:$0xff]
        %v988 = vld [vmem:[%s858 + $0x1a0] sm:$0xff]
        %v989 = vld [vmem:[%s858 + $0x1a8] sm:$0xff]
        %v990 = vld [vmem:[%s858 + $0x1b0] sm:$0xff]
        %v991 = vld [vmem:[%s858 + $0x1b8] sm:$0xff]
        %v992 = vld [vmem:[%s858 + $0x1c0] sm:$0xff]
        %v993 = vld [vmem:[%s858 + $0x1c8] sm:$0xff]
        %v994 = vld [vmem:[%s858 + $0x1d0] sm:$0xff]
        %v995 = vld [vmem:[%s858 + $0x1d8] sm:$0xff]
        %v996 = vld [vmem:[%s858 + $0x1e0] sm:$0xff]
        %v997 = vld [vmem:[%s858 + $0x1e8] sm:$0xff]
        %v998 = vld [vmem:[%s858 + $0x1f0] sm:$0xff]
        %v999 = vld [vmem:[%s858 + $0x1f8] sm:$0xff]
        %v1000 = vld [vmem:[%s858 + $0x200] sm:$0xff]
        %v1001 = vld [vmem:[%s858 + $0x208] sm:$0xff]
        %v1002 = vld [vmem:[%s858 + $0x210] sm:$0xff]
        %v1003 = vld [vmem:[%s858 + $0x218] sm:$0xff]
        %v1004 = vld [vmem:[%s858 + $0x220] sm:$0xff]
        %v1005 = vld [vmem:[%s858 + $0x228] sm:$0xff]
        %v1006 = vld [vmem:[%s858 + $0x230] sm:$0xff]
        %v1007 = vld [vmem:[%s858 + $0x238] sm:$0xff]
        %v1008 = vld [vmem:[%s858 + $0x240] sm:$0xff]
        %v1009 = vld [vmem:[%s858 + $0x248] sm:$0xff]
        %v1010 = vld [vmem:[%s858 + $0x250] sm:$0xff]
        %v1011 = vld [vmem:[%s858 + $0x258] sm:$0xff]
        %v1012 = vld [vmem:[%s858 + $0x260] sm:$0xff]
        %v1013 = vld [vmem:[%s858 + $0x268] sm:$0xff]
        %v1014 = vld [vmem:[%s858 + $0x270] sm:$0xff]
        %v1015 = vld [vmem:[%s858 + $0x278] sm:$0xff]
        %v1016 = vld [vmem:[%s858 + $0x280] sm:$0xff]
        %v1017 = vld [vmem:[%s858 + $0x288] sm:$0xff]
        %v1018 = vld [vmem:[%s858 + $0x290] sm:$0xff]
        %v1019 = vld [vmem:[%s858 + $0x298] sm:$0xff]
        %v1020 = vld [vmem:[%s858 + $0x2a0] sm:$0xff]
        %v1021 = vld [vmem:[%s858 + $0x2a8] sm:$0xff]
        %v1022 = vld [vmem:[%s858 + $0x2b0] sm:$0xff]
        %v1023 = vld [vmem:[%s858 + $0x2b8] sm:$0xff]
        %v1024 = vld [vmem:[%s858 + $0x2c0] sm:$0xff]
        %v1025 = vld [vmem:[%s858 + $0x2c8] sm:$0xff]
        %v1026 = vld [vmem:[%s858 + $0x2d0] sm:$0xff]
        %v1027 = vld [vmem:[%s858 + $0x2d8] sm:$0xff]
        %v1028 = vld [vmem:[%s858 + $0x2e0] sm:$0xff]
        %v1029 = vld [vmem:[%s858 + $0x2e8] sm:$0xff]
        %v1030 = vld [vmem:[%s858 + $0x2f0] sm:$0xff]
        %v1031 = vld [vmem:[%s858 + $0x2f8] sm:$0xff]
        %v1032 = vld [vmem:[%s858 + $0x300] sm:$0xff]
        %v1033 = vld [vmem:[%s858 + $0x308] sm:$0xff]
        %v1034 = vld [vmem:[%s858 + $0x310] sm:$0xff]
        %v1035 = vld [vmem:[%s858 + $0x318] sm:$0xff]
        %v1036 = vld [vmem:[%s858 + $0x320] sm:$0xff]
        %v1037 = vld [vmem:[%s858 + $0x328] sm:$0xff]
        %v1038 = vld [vmem:[%s858 + $0x330] sm:$0xff]
        %v1039 = vld [vmem:[%s858 + $0x338] sm:$0xff]
        %v1040 = vld [vmem:[%s858 + $0x340] sm:$0xff]
        %v1041 = vld [vmem:[%s858 + $0x348] sm:$0xff]
        %v1042 = vld [vmem:[%s858 + $0x350] sm:$0xff]
        %v1043 = vld [vmem:[%s858 + $0x358] sm:$0xff]
        %v1044 = vld [vmem:[%s858 + $0x360] sm:$0xff]
        %v1045 = vld [vmem:[%s858 + $0x368] sm:$0xff]
        %v1046 = vld [vmem:[%s858 + $0x370] sm:$0xff]
        %v1047 = vld [vmem:[%s858 + $0x378] sm:$0xff]
        %v1048 = vld [vmem:[%s858 + $0x380] sm:$0xff]
        %v1049 = vld [vmem:[%s858 + $0x388] sm:$0xff]
        %v1050 = vld [vmem:[%s858 + $0x390] sm:$0xff]
        %v1051 = vld [vmem:[%s858 + $0x398] sm:$0xff]
        %v1052 = vld [vmem:[%s858 + $0x3a0] sm:$0xff]
        %v1053 = vld [vmem:[%s858 + $0x3a8] sm:$0xff]
        %v1054 = vld [vmem:[%s858 + $0x3b0] sm:$0xff]
        %v1055 = vld [vmem:[%s858 + $0x3b8] sm:$0xff]
        %v1056 = vld [vmem:[%s858 + $0x3c0] sm:$0xff]
        %v1057 = vld [vmem:[%s858 + $0x3c8] sm:$0xff]
        %v1058 = vld [vmem:[%s858 + $0x3d0] sm:$0xff]
        %v1059 = vld [vmem:[%s858 + $0x3d8] sm:$0xff]
        %v1060 = vld [vmem:[%s858 + $0x3e0] sm:$0xff]
        %v1061 = vld [vmem:[%s858 + $0x3e8] sm:$0xff]
        %v1062 = vld [vmem:[%s858 + $0x3f0] sm:$0xff]
        %v1063 = vld [vmem:[%s858 + $0x3f8] sm:$0xff]
        %v1064 = vld [vmem:[%s858 + $0x400] sm:$0xff]
        %v1065 = vld [vmem:[%s858 + $0x408] sm:$0xff]
        %v1066 = vld [vmem:[%s858 + $0x410] sm:$0xff]
        %v1067 = vld [vmem:[%s858 + $0x418] sm:$0xff]
        %v1068 = vld [vmem:[%s858 + $0x420] sm:$0xff]
        %v1069 = vld [vmem:[%s858 + $0x428] sm:$0xff]
        %v1070 = vld [vmem:[%s858 + $0x430] sm:$0xff]
        %v1071 = vld [vmem:[%s858 + $0x438] sm:$0xff]
        %v1072 = vld [vmem:[%s858 + $0x440] sm:$0xff]
        %v1073 = vld [vmem:[%s858 + $0x448] sm:$0xff]
        %v1074 = vld [vmem:[%s858 + $0x450] sm:$0xff]
        %v1075 = vld [vmem:[%s858 + $0x458] sm:$0xff]
        %v1076 = vld [vmem:[%s858 + $0x460] sm:$0xff]
        %v1077 = vld [vmem:[%s858 + $0x468] sm:$0xff]
        %v1078 = vld [vmem:[%s858 + $0x470] sm:$0xff]
        %v1079 = vld [vmem:[%s858 + $0x478] sm:$0xff]
        %v1090 = vunpack.c.l.b16 %v926
        %v1091 = vunpack.c.h.b16 %v926
        %v1092 = vunpack.c.l.b16 %v927
        %v1093 = vunpack.c.h.b16 %v927
        %v1094 = vunpack.c.l.b16 %v928
        %v1095 = vunpack.c.h.b16 %v928
        %v1096 = vunpack.c.l.b16 %v929
        %v1097 = vunpack.c.h.b16 %v929
        %v1098 = vunpack.c.l.b16 %v930
        %v1099 = vunpack.c.l.b16 %v931
        %v1100 = vunpack.c.h.b16 %v931
        %v1101 = vunpack.c.l.b16 %v932
        %v1102 = vunpack.c.h.b16 %v932
        %v1103 = vunpack.c.l.b16 %v933
        %v1104 = vunpack.c.h.b16 %v933
        %v1105 = vunpack.c.l.b16 %v934
        %v1106 = vunpack.c.h.b16 %v934
        %v1107 = vunpack.c.l.b16 %v935
        %v1108 = vpack.c.b16 %v1099, %v1090
        %v1109 = vpack.c.b16 %v1100, %v1091
        %v1110 = vpack.c.b16 %v1101, %v1092
        %v1111 = vpack.c.b16 %v1102, %v1093
        %v1112 = vpack.c.b16 %v1103, %v1094
        %v1113 = vpack.c.b16 %v1104, %v1095
        %v1114 = vpack.c.b16 %v1105, %v1096
        %v1115 = vpack.c.b16 %v1106, %v1097
        %v1116 = vpack.c.b16 %v1107, %v1098
        %v1270 = vunpack.c.l.b16 %v936
        %v1271 = vunpack.c.h.b16 %v936
        %v1272 = vunpack.c.l.b16 %v937
        %v1273 = vunpack.c.h.b16 %v937
        %v1274 = vunpack.c.l.b16 %v938
        %v1275 = vunpack.c.h.b16 %v938
        %v1276 = vunpack.c.l.b16 %v939
        %v1277 = vunpack.c.h.b16 %v939
        %v1278 = vunpack.c.l.b16 %v940
        %v1279 = vunpack.c.h.b16 %v940
        %v1280 = vunpack.c.l.b16 %v941
        %v1281 = vunpack.c.h.b16 %v941
        %v1282 = vunpack.c.l.b16 %v942
        %v1283 = vunpack.c.h.b16 %v942
        %v1284 = vunpack.c.l.b16 %v943
        %v1285 = vunpack.c.h.b16 %v943
        %v1286 = vunpack.c.l.b16 %v944
        %v1287 = vunpack.c.h.b16 %v944
        %v1288 = vunpack.c.l.b16 %v945
        %v1289 = vunpack.c.h.b16 %v945
        %v1290 = vunpack.c.l.b16 %v946
        %v1291 = vunpack.c.h.b16 %v946
        %v1292 = vunpack.c.l.b16 %v947
        %v1293 = vunpack.c.h.b16 %v947
        %v1294 = vunpack.c.l.b16 %v948
        %v1295 = vunpack.c.h.b16 %v948
        %v1296 = vunpack.c.l.b16 %v949
        %v1297 = vunpack.c.h.b16 %v949
        %v1298 = vunpack.c.l.b16 %v950
        %v1299 = vunpack.c.h.b16 %v950
        %v1300 = vunpack.c.l.b16 %v951
        %v1301 = vunpack.c.h.b16 %v951
        %v1302 = vunpack.c.l.b16 %v952
        %v1303 = vunpack.c.h.b16 %v952
        %v1304 = vunpack.c.l.b16 %v953
        %v1305 = vunpack.c.h.b16 %v953
        %v1306 = vunpack.c.l.b16 %v954
        %v1307 = vunpack.c.h.b16 %v954
        %v1308 = vunpack.c.l.b16 %v955
        %v1309 = vunpack.c.h.b16 %v955
        %v1310 = vunpack.c.l.b16 %v956
        %v1311 = vunpack.c.h.b16 %v956
        %v1312 = vunpack.c.l.b16 %v957
        %v1313 = vunpack.c.h.b16 %v957
        %v1314 = vunpack.c.l.b16 %v958
        %v1315 = vunpack.c.h.b16 %v958
        %v1316 = vunpack.c.l.b16 %v959
        %v1317 = vunpack.c.h.b16 %v959
        %v1318 = vunpack.c.l.b16 %v960
        %v1319 = vunpack.c.h.b16 %v960
        %v1320 = vunpack.c.l.b16 %v961
        %v1321 = vunpack.c.h.b16 %v961
        %v1322 = vunpack.c.l.b16 %v962
        %v1323 = vunpack.c.h.b16 %v962
        %v1324 = vunpack.c.l.b16 %v963
        %v1325 = vunpack.c.h.b16 %v963
        %v1326 = vunpack.c.l.b16 %v964
        %v1327 = vunpack.c.h.b16 %v964
        %v1328 = vunpack.c.l.b16 %v965
        %v1329 = vunpack.c.h.b16 %v965
        %v1330 = vunpack.c.l.b16 %v966
        %v1331 = vunpack.c.h.b16 %v966
        %v1332 = vunpack.c.l.b16 %v967
        %v1333 = vunpack.c.h.b16 %v967
        %v1334 = vunpack.c.l.b16 %v968
        %v1335 = vunpack.c.h.b16 %v968
        %v1336 = vunpack.c.l.b16 %v969
        %v1337 = vunpack.c.h.b16 %v969
        %v1338 = vunpack.c.l.b16 %v970
        %v1339 = vunpack.c.h.b16 %v970
        %v1340 = vunpack.c.l.b16 %v971
        %v1341 = vunpack.c.h.b16 %v971
        %v1342 = vunpack.c.l.b16 %v972
        %v1343 = vunpack.c.h.b16 %v972
        %v1344 = vunpack.c.l.b16 %v973
        %v1345 = vunpack.c.h.b16 %v973
        %v1346 = vunpack.c.l.b16 %v974
        %v1347 = vunpack.c.h.b16 %v974
        %v1348 = vunpack.c.l.b16 %v975
        %v1349 = vunpack.c.h.b16 %v975
        %v1350 = vunpack.c.l.b16 %v976
        %v1351 = vunpack.c.h.b16 %v976
        %v1352 = vunpack.c.l.b16 %v977
        %v1353 = vunpack.c.h.b16 %v977
        %v1354 = vunpack.c.l.b16 %v978
        %v1355 = vunpack.c.h.b16 %v978
        %v1356 = vunpack.c.l.b16 %v979
        %v1357 = vunpack.c.h.b16 %v979
        %v1358 = vunpack.c.l.b16 %v980
        %v1359 = vunpack.c.h.b16 %v980
        %v1360 = vunpack.c.l.b16 %v981
        %v1361 = vunpack.c.h.b16 %v981
        %v1362 = vunpack.c.l.b16 %v982
        %v1363 = vunpack.c.h.b16 %v982
        %v1364 = vunpack.c.l.b16 %v983
        %v1365 = vunpack.c.h.b16 %v983
        %v1366 = vunpack.c.l.b16 %v984
        %v1367 = vunpack.c.h.b16 %v984
        %v1368 = vunpack.c.l.b16 %v985
        %v1369 = vunpack.c.h.b16 %v985
        %v1370 = vunpack.c.l.b16 %v986
        %v1371 = vunpack.c.h.b16 %v986
        %v1372 = vunpack.c.l.b16 %v987
        %v1373 = vunpack.c.h.b16 %v987
        %v1374 = vunpack.c.l.b16 %v988
        %v1375 = vunpack.c.h.b16 %v988
        %v1376 = vunpack.c.l.b16 %v989
        %v1377 = vunpack.c.h.b16 %v989
        %v1378 = vunpack.c.l.b16 %v990
        %v1379 = vunpack.c.h.b16 %v990
        %v1380 = vunpack.c.l.b16 %v991
        %v1381 = vunpack.c.h.b16 %v991
        %v1382 = vunpack.c.l.b16 %v992
        %v1383 = vunpack.c.h.b16 %v992
        %v1384 = vunpack.c.l.b16 %v993
        %v1385 = vunpack.c.h.b16 %v993
        %v1386 = vunpack.c.l.b16 %v994
        %v1387 = vunpack.c.h.b16 %v994
        %v1388 = vunpack.c.l.b16 %v995
        %v1389 = vunpack.c.h.b16 %v995
        %v1390 = vunpack.c.l.b16 %v996
        %v1391 = vunpack.c.h.b16 %v996
        %v1392 = vunpack.c.l.b16 %v997
        %v1393 = vunpack.c.h.b16 %v997
        %v1394 = vunpack.c.l.b16 %v998
        %v1395 = vunpack.c.h.b16 %v998
        %v1396 = vunpack.c.l.b16 %v999
        %v1397 = vunpack.c.h.b16 %v999
        %v1398 = vunpack.c.l.b16 %v1000
        %v1399 = vunpack.c.h.b16 %v1000
        %v1400 = vunpack.c.l.b16 %v1001
        %v1401 = vunpack.c.h.b16 %v1001
        %v1402 = vunpack.c.l.b16 %v1002
        %v1403 = vunpack.c.h.b16 %v1002
        %v1404 = vunpack.c.l.b16 %v1003
        %v1405 = vunpack.c.h.b16 %v1003
        %v1406 = vunpack.c.l.b16 %v1004
        %v1407 = vunpack.c.h.b16 %v1004
        %v1408 = vunpack.c.l.b16 %v1005
        %v1409 = vunpack.c.h.b16 %v1005
        %v1410 = vunpack.c.l.b16 %v1006
        %v1411 = vunpack.c.h.b16 %v1006
        %v1412 = vunpack.c.l.b16 %v1007
        %v1413 = vunpack.c.h.b16 %v1007
        %v1414 = vunpack.c.l.b16 %v1008
        %v1415 = vunpack.c.h.b16 %v1008
        %v1416 = vunpack.c.l.b16 %v1009
        %v1417 = vunpack.c.h.b16 %v1009
        %v1418 = vunpack.c.l.b16 %v1010
        %v1419 = vunpack.c.h.b16 %v1010
        %v1420 = vunpack.c.l.b16 %v1011
        %v1421 = vunpack.c.h.b16 %v1011
        %v1422 = vunpack.c.l.b16 %v1012
        %v1423 = vunpack.c.h.b16 %v1012
        %v1424 = vunpack.c.l.b16 %v1013
        %v1425 = vunpack.c.h.b16 %v1013
        %v1426 = vunpack.c.l.b16 %v1014
        %v1427 = vunpack.c.h.b16 %v1014
        %v1428 = vunpack.c.l.b16 %v1015
        %v1429 = vunpack.c.h.b16 %v1015
        %v1430 = vunpack.c.l.b16 %v1016
        %v1431 = vunpack.c.h.b16 %v1016
        %v1432 = vunpack.c.l.b16 %v1017
        %v1433 = vunpack.c.h.b16 %v1017
        %v1434 = vunpack.c.l.b16 %v1018
        %v1435 = vunpack.c.h.b16 %v1018
        %v1436 = vunpack.c.l.b16 %v1019
        %v1437 = vunpack.c.h.b16 %v1019
        %v1438 = vunpack.c.l.b16 %v1020
        %v1439 = vunpack.c.h.b16 %v1020
        %v1440 = vunpack.c.l.b16 %v1021
        %v1441 = vunpack.c.h.b16 %v1021
        %v1442 = vunpack.c.l.b16 %v1022
        %v1443 = vunpack.c.h.b16 %v1022
        %v1444 = vunpack.c.l.b16 %v1023
        %v1445 = vunpack.c.h.b16 %v1023
        %v1446 = vunpack.c.l.b16 %v1024
        %v1447 = vunpack.c.h.b16 %v1024
        %v1448 = vunpack.c.l.b16 %v1025
        %v1449 = vunpack.c.h.b16 %v1025
        %v1450 = vunpack.c.l.b16 %v1026
        %v1451 = vunpack.c.h.b16 %v1026
        %v1452 = vunpack.c.l.b16 %v1027
        %v1453 = vunpack.c.h.b16 %v1027
        %v1454 = vunpack.c.l.b16 %v1028
        %v1455 = vunpack.c.h.b16 %v1028
        %v1456 = vunpack.c.l.b16 %v1029
        %v1457 = vunpack.c.h.b16 %v1029
        %v1458 = vunpack.c.l.b16 %v1030
        %v1459 = vunpack.c.h.b16 %v1030
        %v1460 = vunpack.c.l.b16 %v1031
        %v1461 = vunpack.c.h.b16 %v1031
        %v1462 = vunpack.c.l.b16 %v1032
        %v1463 = vunpack.c.h.b16 %v1032
        %v1464 = vunpack.c.l.b16 %v1033
        %v1465 = vunpack.c.h.b16 %v1033
        %v1466 = vunpack.c.l.b16 %v1034
        %v1467 = vunpack.c.h.b16 %v1034
        %v1468 = vunpack.c.l.b16 %v1035
        %v1469 = vunpack.c.h.b16 %v1035
        %v1470 = vunpack.c.l.b16 %v1036
        %v1471 = vunpack.c.h.b16 %v1036
        %v1472 = vunpack.c.l.b16 %v1037
        %v1473 = vunpack.c.h.b16 %v1037
        %v1474 = vunpack.c.l.b16 %v1038
        %v1475 = vunpack.c.h.b16 %v1038
        %v1476 = vunpack.c.l.b16 %v1039
        %v1477 = vunpack.c.h.b16 %v1039
        %v1478 = vunpack.c.l.b16 %v1040
        %v1479 = vunpack.c.h.b16 %v1040
        %v1480 = vunpack.c.l.b16 %v1041
        %v1481 = vunpack.c.h.b16 %v1041
        %v1482 = vunpack.c.l.b16 %v1042
        %v1483 = vunpack.c.h.b16 %v1042
        %v1484 = vunpack.c.l.b16 %v1043
        %v1485 = vunpack.c.h.b16 %v1043
        %v1486 = vunpack.c.l.b16 %v1044
        %v1487 = vunpack.c.h.b16 %v1044
        %v1488 = vunpack.c.l.b16 %v1045
        %v1489 = vunpack.c.h.b16 %v1045
        %v1490 = vunpack.c.l.b16 %v1046
        %v1491 = vunpack.c.h.b16 %v1046
        %v1492 = vunpack.c.l.b16 %v1047
        %v1493 = vunpack.c.h.b16 %v1047
        %v1494 = vunpack.c.l.b16 %v1048
        %v1495 = vunpack.c.h.b16 %v1048
        %v1496 = vunpack.c.l.b16 %v1049
        %v1497 = vunpack.c.h.b16 %v1049
        %v1498 = vunpack.c.l.b16 %v1050
        %v1499 = vunpack.c.h.b16 %v1050
        %v1500 = vunpack.c.l.b16 %v1051
        %v1501 = vunpack.c.h.b16 %v1051
        %v1502 = vunpack.c.l.b16 %v1052
        %v1503 = vunpack.c.h.b16 %v1052
        %v1504 = vunpack.c.l.b16 %v1053
        %v1505 = vunpack.c.h.b16 %v1053
        %v1506 = vunpack.c.l.b16 %v1054
        %v1507 = vunpack.c.h.b16 %v1054
        %v1508 = vunpack.c.l.b16 %v1055
        %v1509 = vunpack.c.h.b16 %v1055
        %v1510 = vunpack.c.l.b16 %v1056
        %v1511 = vunpack.c.h.b16 %v1056
        %v1512 = vunpack.c.l.b16 %v1057
        %v1513 = vunpack.c.h.b16 %v1057
        %v1514 = vunpack.c.l.b16 %v1058
        %v1515 = vunpack.c.h.b16 %v1058
        %v1516 = vunpack.c.l.b16 %v1059
        %v1517 = vunpack.c.h.b16 %v1059
        %v1518 = vunpack.c.l.b16 %v1060
        %v1519 = vunpack.c.h.b16 %v1060
        %v1520 = vunpack.c.l.b16 %v1061
        %v1521 = vunpack.c.h.b16 %v1061
        %v1522 = vunpack.c.l.b16 %v1062
        %v1523 = vunpack.c.h.b16 %v1062
        %v1524 = vunpack.c.l.b16 %v1063
        %v1525 = vunpack.c.h.b16 %v1063
        %v1526 = vunpack.c.l.b16 %v1064
        %v1527 = vunpack.c.h.b16 %v1064
        %v1528 = vunpack.c.l.b16 %v1065
        %v1529 = vunpack.c.h.b16 %v1065
        %v1530 = vunpack.c.l.b16 %v1066
        %v1531 = vunpack.c.h.b16 %v1066
        %v1532 = vunpack.c.l.b16 %v1067
        %v1533 = vunpack.c.h.b16 %v1067
        %v1534 = vunpack.c.l.b16 %v1068
        %v1535 = vunpack.c.h.b16 %v1068
        %v1536 = vunpack.c.l.b16 %v1069
        %v1537 = vunpack.c.h.b16 %v1069
        %v1538 = vunpack.c.l.b16 %v1070
        %v1539 = vunpack.c.h.b16 %v1070
        %v1540 = vunpack.c.l.b16 %v1071
        %v1541 = vunpack.c.h.b16 %v1071
        %v1542 = vunpack.c.l.b16 %v1072
        %v1543 = vunpack.c.h.b16 %v1072
        %v1544 = vunpack.c.l.b16 %v1073
        %v1545 = vunpack.c.h.b16 %v1073
        %v1546 = vunpack.c.l.b16 %v1074
        %v1547 = vunpack.c.h.b16 %v1074
        %v1548 = vunpack.c.l.b16 %v1075
        %v1549 = vunpack.c.h.b16 %v1075
        %v1550 = vunpack.c.l.b16 %v1076
        %v1551 = vunpack.c.h.b16 %v1076
        %v1552 = vunpack.c.l.b16 %v1077
        %v1553 = vunpack.c.h.b16 %v1077
        %v1554 = vunpack.c.l.b16 %v1078
        %v1555 = vunpack.c.h.b16 %v1078
        %v1556 = vunpack.c.l.b16 %v1079
        %v1557 = vunpack.c.h.b16 %v1079
        %v1558 = vpack.c.b16 %v1272, %v1270
        %v1559 = vpack.c.b16 %v1273, %v1271
        %v1560 = vpack.c.b16 %v1276, %v1274
        %v1561 = vpack.c.b16 %v1277, %v1275
        %v1562 = vpack.c.b16 %v1280, %v1278
        %v1563 = vpack.c.b16 %v1281, %v1279
        %v1564 = vpack.c.b16 %v1284, %v1282
        %v1565 = vpack.c.b16 %v1285, %v1283
        %v1566 = vpack.c.b16 %v1288, %v1286
        %v1567 = vpack.c.b16 %v1289, %v1287
        %v1568 = vpack.c.b16 %v1292, %v1290
        %v1569 = vpack.c.b16 %v1293, %v1291
        %v1570 = vpack.c.b16 %v1296, %v1294
        %v1571 = vpack.c.b16 %v1297, %v1295
        %v1572 = vpack.c.b16 %v1300, %v1298
        %v1573 = vpack.c.b16 %v1301, %v1299
        %v1574 = vpack.c.b16 %v1304, %v1302
        %v1575 = vpack.c.b16 %v1305, %v1303
        %v1576 = vpack.c.b16 %v1308, %v1306
        %v1577 = vpack.c.b16 %v1309, %v1307
        %v1578 = vpack.c.b16 %v1312, %v1310
        %v1579 = vpack.c.b16 %v1313, %v1311
        %v1580 = vpack.c.b16 %v1316, %v1314
        %v1581 = vpack.c.b16 %v1317, %v1315
        %v1582 = vpack.c.b16 %v1320, %v1318
        %v1583 = vpack.c.b16 %v1321, %v1319
        %v1584 = vpack.c.b16 %v1324, %v1322
        %v1585 = vpack.c.b16 %v1325, %v1323
        %v1586 = vpack.c.b16 %v1328, %v1326
        %v1587 = vpack.c.b16 %v1329, %v1327
        %v1588 = vpack.c.b16 %v1332, %v1330
        %v1589 = vpack.c.b16 %v1333, %v1331
        %v1590 = vpack.c.b16 %v1336, %v1334
        %v1591 = vpack.c.b16 %v1337, %v1335
        %v1592 = vpack.c.b16 %v1340, %v1338
        %v1593 = vpack.c.b16 %v1341, %v1339
        %v1594 = vpack.c.b16 %v1344, %v1342
        %v1595 = vpack.c.b16 %v1345, %v1343
        %v1596 = vpack.c.b16 %v1348, %v1346
        %v1597 = vpack.c.b16 %v1349, %v1347
        %v1598 = vpack.c.b16 %v1352, %v1350
        %v1599 = vpack.c.b16 %v1353, %v1351
        %v1600 = vpack.c.b16 %v1356, %v1354
        %v1601 = vpack.c.b16 %v1357, %v1355
        %v1602 = vpack.c.b16 %v1360, %v1358
        %v1603 = vpack.c.b16 %v1361, %v1359
        %v1604 = vpack.c.b16 %v1364, %v1362
        %v1605 = vpack.c.b16 %v1365, %v1363
        %v1606 = vpack.c.b16 %v1368, %v1366
        %v1607 = vpack.c.b16 %v1369, %v1367
        %v1608 = vpack.c.b16 %v1372, %v1370
        %v1609 = vpack.c.b16 %v1373, %v1371
        %v1610 = vpack.c.b16 %v1376, %v1374
        %v1611 = vpack.c.b16 %v1377, %v1375
        %v1612 = vpack.c.b16 %v1380, %v1378
        %v1613 = vpack.c.b16 %v1381, %v1379
        %v1614 = vpack.c.b16 %v1384, %v1382
        %v1615 = vpack.c.b16 %v1385, %v1383
        %v1616 = vpack.c.b16 %v1388, %v1386
        %v1617 = vpack.c.b16 %v1389, %v1387
        %v1618 = vpack.c.b16 %v1392, %v1390
        %v1619 = vpack.c.b16 %v1393, %v1391
        %v1620 = vpack.c.b16 %v1396, %v1394
        %v1621 = vpack.c.b16 %v1397, %v1395
        %v1622 = vpack.c.b16 %v1400, %v1398
        %v1623 = vpack.c.b16 %v1401, %v1399
        %v1624 = vpack.c.b16 %v1404, %v1402
        %v1625 = vpack.c.b16 %v1405, %v1403
        %v1626 = vpack.c.b16 %v1408, %v1406
        %v1627 = vpack.c.b16 %v1409, %v1407
        %v1628 = vpack.c.b16 %v1412, %v1410
        %v1629 = vpack.c.b16 %v1413, %v1411
        %v1630 = vpack.c.b16 %v1416, %v1414
        %v1631 = vpack.c.b16 %v1417, %v1415
        %v1632 = vpack.c.b16 %v1420, %v1418
        %v1633 = vpack.c.b16 %v1421, %v1419
        %v1634 = vpack.c.b16 %v1424, %v1422
        %v1635 = vpack.c.b16 %v1425, %v1423
        %v1636 = vpack.c.b16 %v1428, %v1426
        %v1637 = vpack.c.b16 %v1429, %v1427
        %v1638 = vpack.c.b16 %v1432, %v1430
        %v1639 = vpack.c.b16 %v1433, %v1431
        %v1640 = vpack.c.b16 %v1436, %v1434
        %v1641 = vpack.c.b16 %v1437, %v1435
        %v1642 = vpack.c.b16 %v1440, %v1438
        %v1643 = vpack.c.b16 %v1441, %v1439
        %v1644 = vpack.c.b16 %v1444, %v1442
        %v1645 = vpack.c.b16 %v1445, %v1443
        %v1646 = vpack.c.b16 %v1448, %v1446
        %v1647 = vpack.c.b16 %v1449, %v1447
        %v1648 = vpack.c.b16 %v1452, %v1450
        %v1649 = vpack.c.b16 %v1453, %v1451
        %v1650 = vpack.c.b16 %v1456, %v1454
        %v1651 = vpack.c.b16 %v1457, %v1455
        %v1652 = vpack.c.b16 %v1460, %v1458
        %v1653 = vpack.c.b16 %v1461, %v1459
        %v1654 = vpack.c.b16 %v1464, %v1462
        %v1655 = vpack.c.b16 %v1465, %v1463
        %v1656 = vpack.c.b16 %v1468, %v1466
        %v1657 = vpack.c.b16 %v1469, %v1467
        %v1658 = vpack.c.b16 %v1472, %v1470
        %v1659 = vpack.c.b16 %v1473, %v1471
        %v1660 = vpack.c.b16 %v1476, %v1474
        %v1661 = vpack.c.b16 %v1477, %v1475
        %v1662 = vpack.c.b16 %v1480, %v1478
        %v1663 = vpack.c.b16 %v1481, %v1479
        %v1664 = vpack.c.b16 %v1484, %v1482
        %v1665 = vpack.c.b16 %v1485, %v1483
        %v1666 = vpack.c.b16 %v1488, %v1486
        %v1667 = vpack.c.b16 %v1489, %v1487
        %v1668 = vpack.c.b16 %v1492, %v1490
        %v1669 = vpack.c.b16 %v1493, %v1491
        %v1670 = vpack.c.b16 %v1496, %v1494
        %v1671 = vpack.c.b16 %v1497, %v1495
        %v1672 = vpack.c.b16 %v1500, %v1498
        %v1673 = vpack.c.b16 %v1501, %v1499
        %v1674 = vpack.c.b16 %v1504, %v1502
        %v1675 = vpack.c.b16 %v1505, %v1503
        %v1676 = vpack.c.b16 %v1508, %v1506
        %v1677 = vpack.c.b16 %v1509, %v1507
        %v1678 = vpack.c.b16 %v1512, %v1510
        %v1679 = vpack.c.b16 %v1513, %v1511
        %v1680 = vpack.c.b16 %v1516, %v1514
        %v1681 = vpack.c.b16 %v1517, %v1515
        %v1682 = vpack.c.b16 %v1520, %v1518
        %v1683 = vpack.c.b16 %v1521, %v1519
        %v1684 = vpack.c.b16 %v1524, %v1522
        %v1685 = vpack.c.b16 %v1525, %v1523
        %v1686 = vpack.c.b16 %v1528, %v1526
        %v1687 = vpack.c.b16 %v1529, %v1527
        %v1688 = vpack.c.b16 %v1532, %v1530
        %v1689 = vpack.c.b16 %v1533, %v1531
        %v1690 = vpack.c.b16 %v1536, %v1534
        %v1691 = vpack.c.b16 %v1537, %v1535
        %v1692 = vpack.c.b16 %v1540, %v1538
        %v1693 = vpack.c.b16 %v1541, %v1539
        %v1694 = vpack.c.b16 %v1544, %v1542
        %v1695 = vpack.c.b16 %v1545, %v1543
        %v1696 = vpack.c.b16 %v1548, %v1546
        %v1697 = vpack.c.b16 %v1549, %v1547
        %v1698 = vpack.c.b16 %v1552, %v1550
        %v1699 = vpack.c.b16 %v1553, %v1551
        %v1700 = vpack.c.b16 %v1556, %v1554
        %v1701 = vpack.c.b16 %v1557, %v1555
        %1846 = vmatprep.subr.bf16.mxu0 %v1559
        %1847 = vmatpush1.bf16.msra.mxu0 %v1558
        %1848 = vmatprep.subr.bf16.mxu0 %v1561
        %1849 = vmatpush1.bf16.msra.mxu0 %v1560
        %1850 = vmatprep.subr.bf16.mxu0 %v1563
        %1851 = vmatpush1.bf16.msra.mxu0 %v1562
        %1852 = vmatprep.subr.bf16.mxu0 %v1565
        %1853 = vmatpush1.bf16.msra.mxu0 %v1564
        %1854 = vmatprep.subr.bf16.mxu0 %v1567
        %1855 = vmatpush1.bf16.msra.mxu0 %v1566
        %1856 = vmatprep.subr.bf16.mxu0 %v1569
        %1857 = vmatpush1.bf16.msra.mxu0 %v1568
        %1858 = vmatprep.subr.bf16.mxu0 %v1571
        %1859 = vmatpush1.bf16.msra.mxu0 %v1570
        %1860 = vmatprep.subr.bf16.mxu0 %v1573
        %1861 = vmatpush1.bf16.msra.mxu0 %v1572
        %1862 = vmatprep.subr.bf16.mxu0 %v1575
        %1863 = vmatpush1.bf16.msra.mxu0 %v1574
        %1864 = vmatprep.subr.bf16.mxu0 %v1577
        %1865 = vmatpush1.bf16.msra.mxu0 %v1576
        %1866 = vmatprep.subr.bf16.mxu0 %v1579
        %1867 = vmatpush1.bf16.msra.mxu0 %v1578
        %1868 = vmatprep.subr.bf16.mxu0 %v1581
        %1869 = vmatpush1.bf16.msra.mxu0 %v1580
        %1870 = vmatprep.subr.bf16.mxu0 %v1583
        %1871 = vmatpush1.bf16.msra.mxu0 %v1582
        %1872 = vmatprep.subr.bf16.mxu0 %v1585
        %1873 = vmatpush1.bf16.msra.mxu0 %v1584
        %1874 = vmatprep.subr.bf16.mxu0 %v1587
        %1875 = vmatpush1.bf16.msra.mxu0 %v1586
        %1876 = vmatprep.subr.bf16.mxu0 %v1589
        %1877 = vmatpush1.bf16.msra.mxu0 %v1588
        %1878 = vmatprep.mubr.bf16.mxu0 %v1109
        %1879 = vmatmul.mubr.bf16.gmra.mrb[0].mxu0 %v1108
        %v1880 = vpop.f32.mrb[0].mxu0
        %v1881 = vadd.f32 0.0, %v1880
        %v1882 = vpop.f32.mrb[0].mxu0
        %v1883 = vadd.f32 0.0, %v1882
        %v1884 = vpop.f32.mrb[0].mxu0
        %v1885 = vadd.f32 0.0, %v1884
        %v1886 = vpop.f32.mrb[0].mxu0
        %v1887 = vadd.f32 0.0, %v1886
        %1888 = vdwg.mxu0
        %1889 = vmatprep.subr.bf16.mxu0 %v1591
        %1890 = vmatpush1.bf16.msra.mxu0 %v1590
        %1891 = vmatprep.subr.bf16.mxu0 %v1593
        %1892 = vmatpush1.bf16.msra.mxu0 %v1592
        %1893 = vmatprep.subr.bf16.mxu0 %v1595
        %1894 = vmatpush1.bf16.msra.mxu0 %v1594
        %1895 = vmatprep.subr.bf16.mxu0 %v1597
        %1896 = vmatpush1.bf16.msra.mxu0 %v1596
        %1897 = vmatprep.subr.bf16.mxu0 %v1599
        %1898 = vmatpush1.bf16.msra.mxu0 %v1598
        %1899 = vmatprep.subr.bf16.mxu0 %v1601
        %1900 = vmatpush1.bf16.msra.mxu0 %v1600
        %1901 = vmatprep.subr.bf16.mxu0 %v1603
        %1902 = vmatpush1.bf16.msra.mxu0 %v1602
        %1903 = vmatprep.subr.bf16.mxu0 %v1605
        %1904 = vmatpush1.bf16.msra.mxu0 %v1604
        %1905 = vmatprep.subr.bf16.mxu0 %v1607
        %1906 = vmatpush1.bf16.msra.mxu0 %v1606
        %1907 = vmatprep.subr.bf16.mxu0 %v1609
        %1908 = vmatpush1.bf16.msra.mxu0 %v1608
        %1909 = vmatprep.subr.bf16.mxu0 %v1611
        %1910 = vmatpush1.bf16.msra.mxu0 %v1610
        %1911 = vmatprep.subr.bf16.mxu0 %v1613
        %1912 = vmatpush1.bf16.msra.mxu0 %v1612
        %1913 = vmatprep.subr.bf16.mxu0 %v1615
        %1914 = vmatpush1.bf16.msra.mxu0 %v1614
        %1915 = vmatprep.subr.bf16.mxu0 %v1617
        %1916 = vmatpush1.bf16.msra.mxu0 %v1616
        %1917 = vmatprep.subr.bf16.mxu0 %v1619
        %1918 = vmatpush1.bf16.msra.mxu0 %v1618
        %1919 = vmatprep.subr.bf16.mxu0 %v1621
        %1920 = vmatpush1.bf16.msra.mxu0 %v1620
        %1921 = vmatprep.mubr.bf16.mxu0 %v1111
        %1922 = vmatmul.mubr.bf16.gmra.mrb[0].mxu0 %v1110
        %v1923 = vpop.f32.mrb[0].mxu0
        %v1924 = vadd.f32 %v1881, %v1923
        %v1925 = vpop.f32.mrb[0].mxu0
        %v1926 = vadd.f32 %v1883, %v1925
        %v1927 = vpop.f32.mrb[0].mxu0
        %v1928 = vadd.f32 %v1885, %v1927
        %v1929 = vpop.f32.mrb[0].mxu0
        %v1930 = vadd.f32 %v1887, %v1929
        %1931 = vdwg.mxu0
        %1932 = vmatprep.subr.bf16.mxu0 %v1623
        %1933 = vmatpush1.bf16.msra.mxu0 %v1622
        %1934 = vmatprep.subr.bf16.mxu0 %v1625
        %1935 = vmatpush1.bf16.msra.mxu0 %v1624
        %1936 = vmatprep.subr.bf16.mxu0 %v1627
        %1937 = vmatpush1.bf16.msra.mxu0 %v1626
        %1938 = vmatprep.subr.bf16.mxu0 %v1629
        %1939 = vmatpush1.bf16.msra.mxu0 %v1628
        %1940 = vmatprep.subr.bf16.mxu0 %v1631
        %1941 = vmatpush1.bf16.msra.mxu0 %v1630
        %1942 = vmatprep.subr.bf16.mxu0 %v1633
        %1943 = vmatpush1.bf16.msra.mxu0 %v1632
        %1944 = vmatprep.subr.bf16.mxu0 %v1635
        %1945 = vmatpush1.bf16.msra.mxu0 %v1634
        %1946 = vmatprep.subr.bf16.mxu0 %v1637
        %1947 = vmatpush1.bf16.msra.mxu0 %v1636
        %1948 = vmatprep.subr.bf16.mxu0 %v1639
        %1949 = vmatpush1.bf16.msra.mxu0 %v1638
        %1950 = vmatprep.subr.bf16.mxu0 %v1641
        %1951 = vmatpush1.bf16.msra.mxu0 %v1640
        %1952 = vmatprep.subr.bf16.mxu0 %v1643
        %1953 = vmatpush1.bf16.msra.mxu0 %v1642
        %1954 = vmatprep.subr.bf16.mxu0 %v1645
        %1955 = vmatpush1.bf16.msra.mxu0 %v1644
        %1956 = vmatprep.subr.bf16.mxu0 %v1647
        %1957 = vmatpush1.bf16.msra.mxu0 %v1646
        %1958 = vmatprep.subr.bf16.mxu0 %v1649
        %1959 = vmatpush1.bf16.msra.mxu0 %v1648
        %1960 = vmatprep.subr.bf16.mxu0 %v1651
        %1961 = vmatpush1.bf16.msra.mxu0 %v1650
        %1962 = vmatprep.subr.bf16.mxu0 %v1653
        %1963 = vmatpush1.bf16.msra.mxu0 %v1652
        %1964 = vmatprep.mubr.bf16.mxu0 %v1113
        %1965 = vmatmul.mubr.bf16.gmra.mrb[0].mxu0 %v1112
        %v1966 = vpop.f32.mrb[0].mxu0
        %v1967 = vadd.f32 %v1924, %v1966
        %v1968 = vpop.f32.mrb[0].mxu0
        %v1969 = vadd.f32 %v1926, %v1968
        %v1970 = vpop.f32.mrb[0].mxu0
        %v1971 = vadd.f32 %v1928, %v1970
        %v1972 = vpop.f32.mrb[0].mxu0
        %v1973 = vadd.f32 %v1930, %v1972
        %1974 = vdwg.mxu0
        %1975 = vmatprep.subr.bf16.mxu0 %v1655
        %1976 = vmatpush1.bf16.msra.mxu0 %v1654
        %1977 = vmatprep.subr.bf16.mxu0 %v1657
        %1978 = vmatpush1.bf16.msra.mxu0 %v1656
        %1979 = vmatprep.subr.bf16.mxu0 %v1659
        %1980 = vmatpush1.bf16.msra.mxu0 %v1658
        %1981 = vmatprep.subr.bf16.mxu0 %v1661
        %1982 = vmatpush1.bf16.msra.mxu0 %v1660
        %1983 = vmatprep.subr.bf16.mxu0 %v1663
        %1984 = vmatpush1.bf16.msra.mxu0 %v1662
        %1985 = vmatprep.subr.bf16.mxu0 %v1665
        %1986 = vmatpush1.bf16.msra.mxu0 %v1664
        %1987 = vmatprep.subr.bf16.mxu0 %v1667
        %1988 = vmatpush1.bf16.msra.mxu0 %v1666
        %1989 = vmatprep.subr.bf16.mxu0 %v1669
        %1990 = vmatpush1.bf16.msra.mxu0 %v1668
        %1991 = vmatprep.subr.bf16.mxu0 %v1671
        %1992 = vmatpush1.bf16.msra.mxu0 %v1670
        %1993 = vmatprep.subr.bf16.mxu0 %v1673
        %1994 = vmatpush1.bf16.msra.mxu0 %v1672
        %1995 = vmatprep.subr.bf16.mxu0 %v1675
        %1996 = vmatpush1.bf16.msra.mxu0 %v1674
        %1997 = vmatprep.subr.bf16.mxu0 %v1677
        %1998 = vmatpush1.bf16.msra.mxu0 %v1676
        %1999 = vmatprep.subr.bf16.mxu0 %v1679
        %2000 = vmatpush1.bf16.msra.mxu0 %v1678
        %2001 = vmatprep.subr.bf16.mxu0 %v1681
        %2002 = vmatpush1.bf16.msra.mxu0 %v1680
        %2003 = vmatprep.subr.bf16.mxu0 %v1683
        %2004 = vmatpush1.bf16.msra.mxu0 %v1682
        %2005 = vmatprep.subr.bf16.mxu0 %v1685
        %2006 = vmatpush1.bf16.msra.mxu0 %v1684
        %2007 = vmatprep.mubr.bf16.mxu0 %v1115
        %2008 = vmatmul.mubr.bf16.gmra.mrb[0].mxu0 %v1114
        %v2009 = vpop.f32.mrb[0].mxu0
        %v2010 = vadd.f32 %v1967, %v2009
        %v2011 = vpop.f32.mrb[0].mxu0
        %v2012 = vadd.f32 %v1969, %v2011
        %v2013 = vpop.f32.mrb[0].mxu0
        %v2014 = vadd.f32 %v1971, %v2013
        %v2015 = vpop.f32.mrb[0].mxu0
        %v2016 = vadd.f32 %v1973, %v2015
        %2017 = vdwg.mxu0
        %2018 = vmatprep.subr.bf16.mxu0 %v1687
        %2019 = vmatpush1.bf16.msra.mxu0 %v1686
        %2020 = vmatprep.subr.bf16.mxu0 %v1689
        %2021 = vmatpush1.bf16.msra.mxu0 %v1688
        %2022 = vmatprep.subr.bf16.mxu0 %v1691
        %2023 = vmatpush1.bf16.msra.mxu0 %v1690
        %2024 = vmatprep.subr.bf16.mxu0 %v1693
        %2025 = vmatpush1.bf16.msra.mxu0 %v1692
        %2026 = vmatprep.subr.bf16.mxu0 %v1695
        %2027 = vmatpush1.bf16.msra.mxu0 %v1694
        %2028 = vmatprep.subr.bf16.mxu0 %v1697
        %2029 = vmatpush1.bf16.msra.mxu0 %v1696
        %2030 = vmatprep.subr.bf16.mxu0 %v1699
        %2031 = vmatpush1.bf16.msra.mxu0 %v1698
        %2032 = vmatprep.subr.bf16.mxu0 %v1701
        %2033 = vmatpush1.bf16.msra.mxu0 %v1700
        %2034 = vmatprep.subr.bf16.mxu0 0
        %2035 = vmatpush1.bf16.msra.mxu0 0
        %2036 = vmatprep.subr.bf16.mxu0 0
        %2037 = vmatpush1.bf16.msra.mxu0 0
        %2038 = vmatprep.subr.bf16.mxu0 0
        %2039 = vmatpush1.bf16.msra.mxu0 0
        %2040 = vmatprep.subr.bf16.mxu0 0
        %2041 = vmatpush1.bf16.msra.mxu0 0
        %2042 = vmatprep.subr.bf16.mxu0 0
        %2043 = vmatpush1.bf16.msra.mxu0 0
        %2044 = vmatprep.subr.bf16.mxu0 0
        %2045 = vmatpush1.bf16.msra.mxu0 0
        %2046 = vmatprep.subr.bf16.mxu0 0
        %2047 = vmatpush1.bf16.msra.mxu0 0
        %2048 = vmatprep.subr.bf16.mxu0 0
        %2049 = vmatpush1.bf16.msra.mxu0 0
        %2050 = vmatprep.mubr.bf16.mxu0 0
        %2051 = vmatmul.mubr.bf16.gmra.mrb[0].mxu0 %v1116
        %v2052 = vpop.f32.mrb[0].mxu0
        %v2053 = vadd.f32 %v2010, %v2052
        %v2054 = vpop.f32.mrb[0].mxu0
        %v2055 = vadd.f32 %v2012, %v2054
        %v2056 = vpop.f32.mrb[0].mxu0
        %v2057 = vadd.f32 %v2014, %v2056
        %v2058 = vpop.f32.mrb[0].mxu0
        %v2059 = vadd.f32 %v2016, %v2058
        %2060 = vdwg.mxu0
        %v2061 = vld [vmem:[%s911] sm:$0x3]
        %v2062 = vld [vmem:[%s916] sm:$0x3]
        %v2063 = vld [vmem:[%s921] sm:$0x3]
        %v2065 = vlaneseq
        %v2066 = vshrl.u32 %v2065, 7
        %v2067 = vsub.s32 0, %v2066
        %v2068 = vrot.slane %v2061, %v2067
        %v2069 = vlaneseq
        %v2070 = vshrl.u32 %v2069, 7
        %v2071 = vsub.s32 1, %v2070
        %v2072 = vrot.slane %v2061, %v2071
        %v2075 = vmul.f32 %v2053, %v2068
        %v2076 = vmul.f32 %v2055, %v2072
        %v2077 = vmul.f32 %v2057, %v2068
        %v2078 = vmul.f32 %v2059, %v2072
        %v2080 = vlaneseq
        %v2081 = vshrl.u32 %v2080, 7
        %v2082 = vsub.s32 0, %v2081
        %v2083 = vrot.slane %v2062, %v2082
        %v2084 = vlaneseq
        %v2085 = vshrl.u32 %v2084, 7
        %v2086 = vsub.s32 1, %v2085
        %v2087 = vrot.slane %v2062, %v2086
        %v2090 = vadd.f32 %v2075, %v2083
        %v2091 = vadd.f32 %v2076, %v2087
        %v2092 = vadd.f32 %v2077, %v2083
        %v2093 = vadd.f32 %v2078, %v2087
        %vm2094 = vcmp.ne.f32.partialorder %v2063, 0.0
        %v2095 = vmax.f32 %v2090, 0.0
        %v2096 = vmax.f32 %v2091, 0.0
        %v2097 = vmax.f32 %v2092, 0.0
        %v2098 = vmax.f32 %v2093, 0.0
        %v2099 = vsel %vm2094, 1, 0
        %v2100 = vlaneseq
        %v2101 = vshrl.u32 %v2100, 7
        %v2102 = vsub.s32 0, %v2101
        %v2103 = vrot.slane %v2099, %v2102
        %v2104 = vlaneseq
        %v2105 = vshrl.u32 %v2104, 7
        %v2106 = vsub.s32 1, %v2105
        %v2107 = vrot.slane %v2099, %v2106
        %vm2108 = vcmp.eq.s32.totalorder %v2103, 1
        %vm2109 = vcmp.eq.s32.totalorder %v2107, 1
        %v2110 = vsel %vm2108, %v2095, %v2090
        %v2111 = vsel %vm2109, %v2096, %v2091
        %v2112 = vsel %vm2108, %v2097, %v2092
        %v2113 = vsel %vm2109, %v2098, %v2093
        %2114 = vst [vmem:[%s899] sm:$0xff] %v2110
        %2115 = vst [vmem:[%s899 + $0x8] sm:$0xff] %v2111
        %2116 = vst [vmem:[%s899 + $0x10] sm:$0xff] %v2112
        %2117 = vst [vmem:[%s899 + $0x18] sm:$0xff] %v2113
        %s2118 = sand.u32 %s168, 1
        %s2119 = sand.u32 %s168, 1
        %s2120 = smul.addr %s2119, 32
        %s2121 = scalar_lea.vmem [#allocation3], %s2120
        // Predicated region
        $region79: #{battlefield_feature.17} parent=73 // pred_check
          %p2122 = pneg %p178
        $region80: #{battlefield_feature.17} parent=73 // pred_check_branch
          %2124 = sbr.rel (%p2122) target = $region82
        $region81: #{battlefield_feature.17} parent=73 // pred_region
          %s2125 = smul.u32 2, %s20
          %s2126 = smul.u32 2, %s21
          %s2127 = smul.addr %s2125, 4
          %s2128 = sadd.s32 %s2126, %s2127
          %s2129 = smul.addr %s2128, 8
          %s2130 = scalar_lea.vmem %s5, %s2129
          // Predicated region
          $region83: #{battlefield_feature.17} parent=81 // pred_check
            _
          $region84: #{battlefield_feature.17} parent=81 // pred_check_branch
            %2132 = sbr.rel (0) target = $region86
          $region85: #{battlefield_feature.17} parent=81 // pred_region
            // Predicated region
            $region87: #{battlefield_feature.17} parent=85 // pred_check
              _
            $region88: #{battlefield_feature.17} parent=85 // pred_check_branch
              %2134 = sbr.rel (0) target = $region90
            $region89: #{battlefield_feature.17} parent=85 // pred_region
              loop: start=0, step=1, limit=1
              $region91: #{battlefield_feature.17} parent=89 // loop_pre_header
                _
              $region92: #{battlefield_feature.17} parent=89 // loop_header
                %s2136 = sphi 0, %s2140
                %p2137 = scmp.ge.s32.totalorder %s2136, 1
                %s2141 = sphi %s2121, %s2121
                %s2142 = sphi %s2130, %s2130
              $region93: #{battlefield_feature.17} parent=89 // loop_header_branch
                %2139 = sbr.rel (%p2137) target = $region97
              $region94: #{battlefield_feature.17} parent=89 // loop_body
                %v2143 = vld [vmem:[%s2141] sm:$0xff]
                %2144 = vst [vmem:[%s2142] sm:$0xff] %v2143
                %v2145 = vld [vmem:[%s2141 + $0x8] sm:$0xff]
                %2146 = vst [vmem:[%s2142 + $0x8] sm:$0xff] %v2145
                %v2147 = vld [vmem:[%s2141 + $0x10] sm:$0xff]
                %2148 = vst [vmem:[%s2142 + $0x20] sm:$0xff] %v2147
                %v2149 = vld [vmem:[%s2141 + $0x18] sm:$0xff]
                %2150 = vst [vmem:[%s2142 + $0x28] sm:$0xff] %v2149
              $region95: #{battlefield_feature.17} parent=89 // loop_footer
                %s2140 = sadd.s32 1, %s2136
              $region96: #{battlefield_feature.17} parent=89 // loop_footer_branch
                %2135 = sbr.rel target = $region92
              $region97: #{battlefield_feature.17} parent=89 // loop_exit
                _
            $region90: #{battlefield_feature.17} parent=85 // pred_fallthru
              _
            // Predicated region
            $region98: #{battlefield_feature.17} parent=85 // pred_check
              _
            $region99: #{battlefield_feature.17} parent=85 // pred_check_branch
              %2152 = sbr.rel target = $region101
            $region100: #{battlefield_feature.17} parent=85 // pred_region
              _
            $region101: #{battlefield_feature.17} parent=85 // pred_fallthru
              _
          $region86: #{battlefield_feature.17} parent=81 // pred_fallthru
            _
          %2153 = vnop
        $region82: #{battlefield_feature.17} parent=73 // pred_fallthru
          _
      $region74: #{battlefield_feature.17} parent=5 // pred_fallthru
        _
      %p2154 = scmp.le.s32.totalorder 2, %s11
      // Predicated region
      $region102: #{battlefield_feature.17} parent=5 // pred_check
        %p2155 = pneg %p2154
      $region103: #{battlefield_feature.17} parent=5 // pred_check_branch
        %2157 = sbr.rel (%p2155) target = $region105
      $region104: #{battlefield_feature.17} parent=5 // pred_region
        %s2158 = ssub.s32 %s11, 2
        // Predicated region
        $region106: #{battlefield_feature.17} parent=104 // pred_check
          %p2159 = pneg %p184
        $region107: #{battlefield_feature.17} parent=104 // pred_check_branch
          %2161 = sbr.rel (%p2159) target = $region109
        $region108: #{battlefield_feature.17} parent=104 // pred_region
          %s2162 = sand.u32 %s169, 1
          %s2163 = sand.u32 %s169, 1
          %s2164 = smul.addr %s2163, 32
          %s2165 = scalar_lea.vmem [#allocation3], %s2164
        $region109: #{battlefield_feature.17} parent=104 // pred_fallthru
          _
      $region105: #{battlefield_feature.17} parent=5 // pred_fallthru
        _
    $region6: #{battlefield_feature.17} parent=1 // loop_footer
      %s15 = sadd.s32 1, %s11
    $region7: #{battlefield_feature.17} parent=1 // loop_footer_branch
      %10 = sbr.rel target = $region3
    $region8: #{battlefield_feature.17} parent=1 // loop_exit
      _

// kernel: battlefield_feature.18
$region0: #{battlefield_feature.18}
  #allocation0 [shape = 'u32[]', space=smem, size = 0x4, offset = 0x4, fixed_abs, tag = 'smem constant byte address 0x4 - core index']
  #allocation1 [shape = 'u32[144,128]{1,0:T(1,128)}', space=vmem, size = 0x12000, scoped, tag = 'internal scratch']
  %s0 = inlined_call_operand.vmem [shape: bf16[16,2304], index: 0, kind: input, shape index: {}]
  %s1 = inlined_call_operand.vmem [shape: bf16[2304,256], index: 1, kind: input, shape index: {}]
  %s2 = inlined_call_operand.vmem [shape: f32[1,256], index: 2, kind: input, shape index: {}]
  %s3 = inlined_call_operand.vmem [shape: f32[1,256], index: 3, kind: input, shape index: {}]
  %s4 = inlined_call_operand.vmem [shape: f32[16,256], index: 4, kind: input, shape index: {}]
  %s5 = inlined_call_operand.vmem [shape: f32[16,256], index: 5, kind: output, shape index: {}]
  %s6 = sld [smem:[#allocation0]]
  $region30: #{battlefield_feature.18} parent=0
    _
  %s8 = ssub.s32 1, %s6
  %s9 = scalar_select 0, %s8, %s6
  // Predicated region
  $region2: #{battlefield_feature.18} parent=0 // pred_check
    _
  $region3: #{battlefield_feature.18} parent=0 // pred_check_branch
    %11 = sbr.rel (0) target = $region5
  $region4: #{battlefield_feature.18} parent=0 // pred_region
    _
  $region5: #{battlefield_feature.18} parent=0 // pred_fallthru
    _
  // Predicated region
  $region6: #{battlefield_feature.18} parent=0 // pred_check
    _
  $region7: #{battlefield_feature.18} parent=0 // pred_check_branch
    %13 = sbr.rel (0) target = $region9
  $region8: #{battlefield_feature.18} parent=0 // pred_region
    _
  $region9: #{battlefield_feature.18} parent=0 // pred_fallthru
    _
  // Predicated region
  $region10: #{battlefield_feature.18} parent=0 // pred_check
    _
  $region11: #{battlefield_feature.18} parent=0 // pred_check_branch
    %15 = sbr.rel (0) target = $region13
  $region12: #{battlefield_feature.18} parent=0 // pred_region
    _
  $region13: #{battlefield_feature.18} parent=0 // pred_fallthru
    _
  // Predicated region
  $region14: #{battlefield_feature.18} parent=0 // pred_check
    _
  $region15: #{battlefield_feature.18} parent=0 // pred_check_branch
    %17 = sbr.rel (0) target = $region17
  $region16: #{battlefield_feature.18} parent=0 // pred_region
    _
  $region17: #{battlefield_feature.18} parent=0 // pred_fallthru
    _
  // Predicated region
  $region18: #{battlefield_feature.18} parent=0 // pred_check
    _
  $region19: #{battlefield_feature.18} parent=0 // pred_check_branch
    %19 = sbr.rel (0) target = $region21
  $region20: #{battlefield_feature.18} parent=0 // pred_region
    _
  $region21: #{battlefield_feature.18} parent=0 // pred_fallthru
    _
  %v20 = vld [vmem:[%s0] sm:$0xff]
  %v21 = vld [vmem:[%s0 + $0x8] sm:$0xff]
  %v22 = vld [vmem:[%s0 + $0x10] sm:$0xff]
  %v23 = vld [vmem:[%s0 + $0x18] sm:$0xff]
  %v24 = vld [vmem:[%s0 + $0x20] sm:$0xff]
  %v25 = vld [vmem:[%s0 + $0x28] sm:$0xff]
  %v26 = vld [vmem:[%s0 + $0x30] sm:$0xff]
  %v27 = vld [vmem:[%s0 + $0x38] sm:$0xff]
  %v28 = vld [vmem:[%s0 + $0x40] sm:$0xff]
  %v29 = vld [vmem:[%s0 + $0x48] sm:$0xff]
  %v30 = vld [vmem:[%s0 + $0x50] sm:$0xff]
  %v31 = vld [vmem:[%s0 + $0x58] sm:$0xff]
  %v32 = vld [vmem:[%s0 + $0x60] sm:$0xff]
  %v33 = vld [vmem:[%s0 + $0x68] sm:$0xff]
  %v34 = vld [vmem:[%s0 + $0x70] sm:$0xff]
  %v35 = vld [vmem:[%s0 + $0x78] sm:$0xff]
  %v36 = vld [vmem:[%s0 + $0x80] sm:$0xff]
  %v37 = vld [vmem:[%s0 + $0x88] sm:$0xff]
  %v38 = vld [vmem:[%s1] sm:$0xff]
  %v39 = vld [vmem:[%s1 + $0x8] sm:$0xff]
  %v40 = vld [vmem:[%s1 + $0x10] sm:$0xff]
  %v41 = vld [vmem:[%s1 + $0x18] sm:$0xff]
  %v42 = vld [vmem:[%s1 + $0x20] sm:$0xff]
  %v43 = vld [vmem:[%s1 + $0x28] sm:$0xff]
  %v44 = vld [vmem:[%s1 + $0x30] sm:$0xff]
  %v45 = vld [vmem:[%s1 + $0x38] sm:$0xff]
  %v46 = vld [vmem:[%s1 + $0x40] sm:$0xff]
  %v47 = vld [vmem:[%s1 + $0x48] sm:$0xff]
  %v48 = vld [vmem:[%s1 + $0x50] sm:$0xff]
  %v49 = vld [vmem:[%s1 + $0x58] sm:$0xff]
  %v50 = vld [vmem:[%s1 + $0x60] sm:$0xff]
  %v51 = vld [vmem:[%s1 + $0x68] sm:$0xff]
  %v52 = vld [vmem:[%s1 + $0x70] sm:$0xff]
  %v53 = vld [vmem:[%s1 + $0x78] sm:$0xff]
  %v54 = vld [vmem:[%s1 + $0x80] sm:$0xff]
  %v55 = vld [vmem:[%s1 + $0x88] sm:$0xff]
  %v56 = vld [vmem:[%s1 + $0x90] sm:$0xff]
  %v57 = vld [vmem:[%s1 + $0x98] sm:$0xff]
  %v58 = vld [vmem:[%s1 + $0xa0] sm:$0xff]
  %v59 = vld [vmem:[%s1 + $0xa8] sm:$0xff]
  %v60 = vld [vmem:[%s1 + $0xb0] sm:$0xff]
  %v61 = vld [vmem:[%s1 + $0xb8] sm:$0xff]
  %v62 = vld [vmem:[%s1 + $0xc0] sm:$0xff]
  %v63 = vld [vmem:[%s1 + $0xc8] sm:$0xff]
  %v64 = vld [vmem:[%s1 + $0xd0] sm:$0xff]
  %v65 = vld [vmem:[%s1 + $0xd8] sm:$0xff]
  %v66 = vld [vmem:[%s1 + $0xe0] sm:$0xff]
  %v67 = vld [vmem:[%s1 + $0xe8] sm:$0xff]
  %v68 = vld [vmem:[%s1 + $0xf0] sm:$0xff]
  %v69 = vld [vmem:[%s1 + $0xf8] sm:$0xff]
  %v70 = vld [vmem:[%s1 + $0x100] sm:$0xff]
  %v71 = vld [vmem:[%s1 + $0x108] sm:$0xff]
  %v72 = vld [vmem:[%s1 + $0x110] sm:$0xff]
  %v73 = vld [vmem:[%s1 + $0x118] sm:$0xff]
  %v74 = vld [vmem:[%s1 + $0x120] sm:$0xff]
  %v75 = vld [vmem:[%s1 + $0x128] sm:$0xff]
  %v76 = vld [vmem:[%s1 + $0x130] sm:$0xff]
  %v77 = vld [vmem:[%s1 + $0x138] sm:$0xff]
  %v78 = vld [vmem:[%s1 + $0x140] sm:$0xff]
  %v79 = vld [vmem:[%s1 + $0x148] sm:$0xff]
  %v80 = vld [vmem:[%s1 + $0x150] sm:$0xff]
  %v81 = vld [vmem:[%s1 + $0x158] sm:$0xff]
  %v82 = vld [vmem:[%s1 + $0x160] sm:$0xff]
  %v83 = vld [vmem:[%s1 + $0x168] sm:$0xff]
  %v84 = vld [vmem:[%s1 + $0x170] sm:$0xff]
  %v85 = vld [vmem:[%s1 + $0x178] sm:$0xff]
  %v86 = vld [vmem:[%s1 + $0x180] sm:$0xff]
  %v87 = vld [vmem:[%s1 + $0x188] sm:$0xff]
  %v88 = vld [vmem:[%s1 + $0x190] sm:$0xff]
  %v89 = vld [vmem:[%s1 + $0x198] sm:$0xff]
  %v90 = vld [vmem:[%s1 + $0x1a0] sm:$0xff]
  %v91 = vld [vmem:[%s1 + $0x1a8] sm:$0xff]
  %v92 = vld [vmem:[%s1 + $0x1b0] sm:$0xff]
  %v93 = vld [vmem:[%s1 + $0x1b8] sm:$0xff]
  %v94 = vld [vmem:[%s1 + $0x1c0] sm:$0xff]
  %v95 = vld [vmem:[%s1 + $0x1c8] sm:$0xff]
  %v96 = vld [vmem:[%s1 + $0x1d0] sm:$0xff]
  %v97 = vld [vmem:[%s1 + $0x1d8] sm:$0xff]
  %v98 = vld [vmem:[%s1 + $0x1e0] sm:$0xff]
  %v99 = vld [vmem:[%s1 + $0x1e8] sm:$0xff]
  %v100 = vld [vmem:[%s1 + $0x1f0] sm:$0xff]
  %v101 = vld [vmem:[%s1 + $0x1f8] sm:$0xff]
  %v102 = vld [vmem:[%s1 + $0x200] sm:$0xff]
  %v103 = vld [vmem:[%s1 + $0x208] sm:$0xff]
  %v104 = vld [vmem:[%s1 + $0x210] sm:$0xff]
  %v105 = vld [vmem:[%s1 + $0x218] sm:$0xff]
  %v106 = vld [vmem:[%s1 + $0x220] sm:$0xff]
  %v107 = vld [vmem:[%s1 + $0x228] sm:$0xff]
  %v108 = vld [vmem:[%s1 + $0x230] sm:$0xff]
  %v109 = vld [vmem:[%s1 + $0x238] sm:$0xff]
  %v110 = vld [vmem:[%s1 + $0x240] sm:$0xff]
  %v111 = vld [vmem:[%s1 + $0x248] sm:$0xff]
  %v112 = vld [vmem:[%s1 + $0x250] sm:$0xff]
  %v113 = vld [vmem:[%s1 + $0x258] sm:$0xff]
  %v114 = vld [vmem:[%s1 + $0x260] sm:$0xff]
  %v115 = vld [vmem:[%s1 + $0x268] sm:$0xff]
  %v116 = vld [vmem:[%s1 + $0x270] sm:$0xff]
  %v117 = vld [vmem:[%s1 + $0x278] sm:$0xff]
  %v118 = vld [vmem:[%s1 + $0x280] sm:$0xff]
  %v119 = vld [vmem:[%s1 + $0x288] sm:$0xff]
  %v120 = vld [vmem:[%s1 + $0x290] sm:$0xff]
  %v121 = vld [vmem:[%s1 + $0x298] sm:$0xff]
  %v122 = vld [vmem:[%s1 + $0x2a0] sm:$0xff]
  %v123 = vld [vmem:[%s1 + $0x2a8] sm:$0xff]
  %v124 = vld [vmem:[%s1 + $0x2b0] sm:$0xff]
  %v125 = vld [vmem:[%s1 + $0x2b8] sm:$0xff]
  %v126 = vld [vmem:[%s1 + $0x2c0] sm:$0xff]
  %v127 = vld [vmem:[%s1 + $0x2c8] sm:$0xff]
  %v128 = vld [vmem:[%s1 + $0x2d0] sm:$0xff]
  %v129 = vld [vmem:[%s1 + $0x2d8] sm:$0xff]
  %v130 = vld [vmem:[%s1 + $0x2e0] sm:$0xff]
  %v131 = vld [vmem:[%s1 + $0x2e8] sm:$0xff]
  %v132 = vld [vmem:[%s1 + $0x2f0] sm:$0xff]
  %v133 = vld [vmem:[%s1 + $0x2f8] sm:$0xff]
  %v134 = vld [vmem:[%s1 + $0x300] sm:$0xff]
  %v135 = vld [vmem:[%s1 + $0x308] sm:$0xff]
  %v136 = vld [vmem:[%s1 + $0x310] sm:$0xff]
  %v137 = vld [vmem:[%s1 + $0x318] sm:$0xff]
  %v138 = vld [vmem:[%s1 + $0x320] sm:$0xff]
  %v139 = vld [vmem:[%s1 + $0x328] sm:$0xff]
  %v140 = vld [vmem:[%s1 + $0x330] sm:$0xff]
  %v141 = vld [vmem:[%s1 + $0x338] sm:$0xff]
  %v142 = vld [vmem:[%s1 + $0x340] sm:$0xff]
  %v143 = vld [vmem:[%s1 + $0x348] sm:$0xff]
  %v144 = vld [vmem:[%s1 + $0x350] sm:$0xff]
  %v145 = vld [vmem:[%s1 + $0x358] sm:$0xff]
  %v146 = vld [vmem:[%s1 + $0x360] sm:$0xff]
  %v147 = vld [vmem:[%s1 + $0x368] sm:$0xff]
  %v148 = vld [vmem:[%s1 + $0x370] sm:$0xff]
  %v149 = vld [vmem:[%s1 + $0x378] sm:$0xff]
  %v150 = vld [vmem:[%s1 + $0x380] sm:$0xff]
  %v151 = vld [vmem:[%s1 + $0x388] sm:$0xff]
  %v152 = vld [vmem:[%s1 + $0x390] sm:$0xff]
  %v153 = vld [vmem:[%s1 + $0x398] sm:$0xff]
  %v154 = vld [vmem:[%s1 + $0x3a0] sm:$0xff]
  %v155 = vld [vmem:[%s1 + $0x3a8] sm:$0xff]
  %v156 = vld [vmem:[%s1 + $0x3b0] sm:$0xff]
  %v157 = vld [vmem:[%s1 + $0x3b8] sm:$0xff]
  %v158 = vld [vmem:[%s1 + $0x3c0] sm:$0xff]
  %v159 = vld [vmem:[%s1 + $0x3c8] sm:$0xff]
  %v160 = vld [vmem:[%s1 + $0x3d0] sm:$0xff]
  %v161 = vld [vmem:[%s1 + $0x3d8] sm:$0xff]
  %v162 = vld [vmem:[%s1 + $0x3e0] sm:$0xff]
  %v163 = vld [vmem:[%s1 + $0x3e8] sm:$0xff]
  %v164 = vld [vmem:[%s1 + $0x3f0] sm:$0xff]
  %v165 = vld [vmem:[%s1 + $0x3f8] sm:$0xff]
  %v166 = vld [vmem:[%s1 + $0x400] sm:$0xff]
  %v167 = vld [vmem:[%s1 + $0x408] sm:$0xff]
  %v168 = vld [vmem:[%s1 + $0x410] sm:$0xff]
  %v169 = vld [vmem:[%s1 + $0x418] sm:$0xff]
  %v170 = vld [vmem:[%s1 + $0x420] sm:$0xff]
  %v171 = vld [vmem:[%s1 + $0x428] sm:$0xff]
  %v172 = vld [vmem:[%s1 + $0x430] sm:$0xff]
  %v173 = vld [vmem:[%s1 + $0x438] sm:$0xff]
  %v174 = vld [vmem:[%s1 + $0x440] sm:$0xff]
  %v175 = vld [vmem:[%s1 + $0x448] sm:$0xff]
  %v176 = vld [vmem:[%s1 + $0x450] sm:$0xff]
  %v177 = vld [vmem:[%s1 + $0x458] sm:$0xff]
  %v178 = vld [vmem:[%s1 + $0x460] sm:$0xff]
  %v179 = vld [vmem:[%s1 + $0x468] sm:$0xff]
  %v180 = vld [vmem:[%s1 + $0x470] sm:$0xff]
  %v181 = vld [vmem:[%s1 + $0x478] sm:$0xff]
  %v182 = vld [vmem:[%s1 + $0x480] sm:$0xff]
  %v183 = vld [vmem:[%s1 + $0x488] sm:$0xff]
  %v184 = vld [vmem:[%s1 + $0x490] sm:$0xff]
  %v185 = vld [vmem:[%s1 + $0x498] sm:$0xff]
  %v186 = vld [vmem:[%s1 + $0x4a0] sm:$0xff]
  %v187 = vld [vmem:[%s1 + $0x4a8] sm:$0xff]
  %v188 = vld [vmem:[%s1 + $0x4b0] sm:$0xff]
  %v189 = vld [vmem:[%s1 + $0x4b8] sm:$0xff]
  %v190 = vld [vmem:[%s1 + $0x4c0] sm:$0xff]
  %v191 = vld [vmem:[%s1 + $0x4c8] sm:$0xff]
  %v192 = vld [vmem:[%s1 + $0x4d0] sm:$0xff]
  %v193 = vld [vmem:[%s1 + $0x4d8] sm:$0xff]
  %v194 = vld [vmem:[%s1 + $0x4e0] sm:$0xff]
  %v195 = vld [vmem:[%s1 + $0x4e8] sm:$0xff]
  %v196 = vld [vmem:[%s1 + $0x4f0] sm:$0xff]
  %v197 = vld [vmem:[%s1 + $0x4f8] sm:$0xff]
  %v198 = vld [vmem:[%s1 + $0x500] sm:$0xff]
  %v199 = vld [vmem:[%s1 + $0x508] sm:$0xff]
  %v200 = vld [vmem:[%s1 + $0x510] sm:$0xff]
  %v201 = vld [vmem:[%s1 + $0x518] sm:$0xff]
  %v202 = vld [vmem:[%s1 + $0x520] sm:$0xff]
  %v203 = vld [vmem:[%s1 + $0x528] sm:$0xff]
  %v204 = vld [vmem:[%s1 + $0x530] sm:$0xff]
  %v205 = vld [vmem:[%s1 + $0x538] sm:$0xff]
  %v206 = vld [vmem:[%s1 + $0x540] sm:$0xff]
  %v207 = vld [vmem:[%s1 + $0x548] sm:$0xff]
  %v208 = vld [vmem:[%s1 + $0x550] sm:$0xff]
  %v209 = vld [vmem:[%s1 + $0x558] sm:$0xff]
  %v210 = vld [vmem:[%s1 + $0x560] sm:$0xff]
  %v211 = vld [vmem:[%s1 + $0x568] sm:$0xff]
  %v212 = vld [vmem:[%s1 + $0x570] sm:$0xff]
  %v213 = vld [vmem:[%s1 + $0x578] sm:$0xff]
  %v214 = vld [vmem:[%s1 + $0x580] sm:$0xff]
  %v215 = vld [vmem:[%s1 + $0x588] sm:$0xff]
  %v216 = vld [vmem:[%s1 + $0x590] sm:$0xff]
  %v217 = vld [vmem:[%s1 + $0x598] sm:$0xff]
  %v218 = vld [vmem:[%s1 + $0x5a0] sm:$0xff]
  %v219 = vld [vmem:[%s1 + $0x5a8] sm:$0xff]
  %v220 = vld [vmem:[%s1 + $0x5b0] sm:$0xff]
  %v221 = vld [vmem:[%s1 + $0x5b8] sm:$0xff]
  %v222 = vld [vmem:[%s1 + $0x5c0] sm:$0xff]
  %v223 = vld [vmem:[%s1 + $0x5c8] sm:$0xff]
  %v224 = vld [vmem:[%s1 + $0x5d0] sm:$0xff]
  %v225 = vld [vmem:[%s1 + $0x5d8] sm:$0xff]
  %v226 = vld [vmem:[%s1 + $0x5e0] sm:$0xff]
  %v227 = vld [vmem:[%s1 + $0x5e8] sm:$0xff]
  %v228 = vld [vmem:[%s1 + $0x5f0] sm:$0xff]
  %v229 = vld [vmem:[%s1 + $0x5f8] sm:$0xff]
  %v230 = vld [vmem:[%s1 + $0x600] sm:$0xff]
  %v231 = vld [vmem:[%s1 + $0x608] sm:$0xff]
  %v232 = vld [vmem:[%s1 + $0x610] sm:$0xff]
  %v233 = vld [vmem:[%s1 + $0x618] sm:$0xff]
  %v234 = vld [vmem:[%s1 + $0x620] sm:$0xff]
  %v235 = vld [vmem:[%s1 + $0x628] sm:$0xff]
  %v236 = vld [vmem:[%s1 + $0x630] sm:$0xff]
  %v237 = vld [vmem:[%s1 + $0x638] sm:$0xff]
  %v238 = vld [vmem:[%s1 + $0x640] sm:$0xff]
  %v239 = vld [vmem:[%s1 + $0x648] sm:$0xff]
  %v240 = vld [vmem:[%s1 + $0x650] sm:$0xff]
  %v241 = vld [vmem:[%s1 + $0x658] sm:$0xff]
  %v242 = vld [vmem:[%s1 + $0x660] sm:$0xff]
  %v243 = vld [vmem:[%s1 + $0x668] sm:$0xff]
  %v244 = vld [vmem:[%s1 + $0x670] sm:$0xff]
  %v245 = vld [vmem:[%s1 + $0x678] sm:$0xff]
  %v246 = vld [vmem:[%s1 + $0x680] sm:$0xff]
  %v247 = vld [vmem:[%s1 + $0x688] sm:$0xff]
  %v248 = vld [vmem:[%s1 + $0x690] sm:$0xff]
  %v249 = vld [vmem:[%s1 + $0x698] sm:$0xff]
  %v250 = vld [vmem:[%s1 + $0x6a0] sm:$0xff]
  %v251 = vld [vmem:[%s1 + $0x6a8] sm:$0xff]
  %v252 = vld [vmem:[%s1 + $0x6b0] sm:$0xff]
  %v253 = vld [vmem:[%s1 + $0x6b8] sm:$0xff]
  %v254 = vld [vmem:[%s1 + $0x6c0] sm:$0xff]
  %v255 = vld [vmem:[%s1 + $0x6c8] sm:$0xff]
  %v256 = vld [vmem:[%s1 + $0x6d0] sm:$0xff]
  %v257 = vld [vmem:[%s1 + $0x6d8] sm:$0xff]
  %v258 = vld [vmem:[%s1 + $0x6e0] sm:$0xff]
  %v259 = vld [vmem:[%s1 + $0x6e8] sm:$0xff]
  %v260 = vld [vmem:[%s1 + $0x6f0] sm:$0xff]
  %v261 = vld [vmem:[%s1 + $0x6f8] sm:$0xff]
  %v262 = vld [vmem:[%s1 + $0x700] sm:$0xff]
  %v263 = vld [vmem:[%s1 + $0x708] sm:$0xff]
  %v264 = vld [vmem:[%s1 + $0x710] sm:$0xff]
  %v265 = vld [vmem:[%s1 + $0x718] sm:$0xff]
  %v266 = vld [vmem:[%s1 + $0x720] sm:$0xff]
  %v267 = vld [vmem:[%s1 + $0x728] sm:$0xff]
  %v268 = vld [vmem:[%s1 + $0x730] sm:$0xff]
  %v269 = vld [vmem:[%s1 + $0x738] sm:$0xff]
  %v270 = vld [vmem:[%s1 + $0x740] sm:$0xff]
  %v271 = vld [vmem:[%s1 + $0x748] sm:$0xff]
  %v272 = vld [vmem:[%s1 + $0x750] sm:$0xff]
  %v273 = vld [vmem:[%s1 + $0x758] sm:$0xff]
  %v274 = vld [vmem:[%s1 + $0x760] sm:$0xff]
  %v275 = vld [vmem:[%s1 + $0x768] sm:$0xff]
  %v276 = vld [vmem:[%s1 + $0x770] sm:$0xff]
  %v277 = vld [vmem:[%s1 + $0x778] sm:$0xff]
  %v278 = vld [vmem:[%s1 + $0x780] sm:$0xff]
  %v279 = vld [vmem:[%s1 + $0x788] sm:$0xff]
  %v280 = vld [vmem:[%s1 + $0x790] sm:$0xff]
  %v281 = vld [vmem:[%s1 + $0x798] sm:$0xff]
  %v282 = vld [vmem:[%s1 + $0x7a0] sm:$0xff]
  %v283 = vld [vmem:[%s1 + $0x7a8] sm:$0xff]
  %v284 = vld [vmem:[%s1 + $0x7b0] sm:$0xff]
  %v285 = vld [vmem:[%s1 + $0x7b8] sm:$0xff]
  %v286 = vld [vmem:[%s1 + $0x7c0] sm:$0xff]
  %v287 = vld [vmem:[%s1 + $0x7c8] sm:$0xff]
  %v288 = vld [vmem:[%s1 + $0x7d0] sm:$0xff]
  %v289 = vld [vmem:[%s1 + $0x7d8] sm:$0xff]
  %v290 = vld [vmem:[%s1 + $0x7e0] sm:$0xff]
  %v291 = vld [vmem:[%s1 + $0x7e8] sm:$0xff]
  %v292 = vld [vmem:[%s1 + $0x7f0] sm:$0xff]
  %v293 = vld [vmem:[%s1 + $0x7f8] sm:$0xff]
  %v294 = vld [vmem:[%s1 + $0x800] sm:$0xff]
  %v295 = vld [vmem:[%s1 + $0x808] sm:$0xff]
  %v296 = vld [vmem:[%s1 + $0x810] sm:$0xff]
  %v297 = vld [vmem:[%s1 + $0x818] sm:$0xff]
  %v298 = vld [vmem:[%s1 + $0x820] sm:$0xff]
  %v299 = vld [vmem:[%s1 + $0x828] sm:$0xff]
  %v300 = vld [vmem:[%s1 + $0x830] sm:$0xff]
  %v301 = vld [vmem:[%s1 + $0x838] sm:$0xff]
  %v302 = vld [vmem:[%s1 + $0x840] sm:$0xff]
  %v303 = vld [vmem:[%s1 + $0x848] sm:$0xff]
  %v304 = vld [vmem:[%s1 + $0x850] sm:$0xff]
  %v305 = vld [vmem:[%s1 + $0x858] sm:$0xff]
  %v306 = vld [vmem:[%s1 + $0x860] sm:$0xff]
  %v307 = vld [vmem:[%s1 + $0x868] sm:$0xff]
  %v308 = vld [vmem:[%s1 + $0x870] sm:$0xff]
  %v309 = vld [vmem:[%s1 + $0x878] sm:$0xff]
  %v310 = vld [vmem:[%s1 + $0x880] sm:$0xff]
  %v311 = vld [vmem:[%s1 + $0x888] sm:$0xff]
  %v312 = vld [vmem:[%s1 + $0x890] sm:$0xff]
  %v313 = vld [vmem:[%s1 + $0x898] sm:$0xff]
  %v314 = vld [vmem:[%s1 + $0x8a0] sm:$0xff]
  %v315 = vld [vmem:[%s1 + $0x8a8] sm:$0xff]
  %v316 = vld [vmem:[%s1 + $0x8b0] sm:$0xff]
  %v317 = vld [vmem:[%s1 + $0x8b8] sm:$0xff]
  %v318 = vld [vmem:[%s1 + $0x8c0] sm:$0xff]
  %v319 = vld [vmem:[%s1 + $0x8c8] sm:$0xff]
  %v320 = vld [vmem:[%s1 + $0x8d0] sm:$0xff]
  %v321 = vld [vmem:[%s1 + $0x8d8] sm:$0xff]
  %v322 = vld [vmem:[%s1 + $0x8e0] sm:$0xff]
  %v323 = vld [vmem:[%s1 + $0x8e8] sm:$0xff]
  %v324 = vld [vmem:[%s1 + $0x8f0] sm:$0xff]
  %v325 = vld [vmem:[%s1 + $0x8f8] sm:$0xff]
  %v344 = vunpack.c.l.b16 %v20
  %v345 = vunpack.c.h.b16 %v20
  %v346 = vunpack.c.l.b16 %v21
  %v347 = vunpack.c.h.b16 %v21
  %v348 = vunpack.c.l.b16 %v22
  %v349 = vunpack.c.h.b16 %v22
  %v350 = vunpack.c.l.b16 %v23
  %v351 = vunpack.c.h.b16 %v23
  %v352 = vunpack.c.l.b16 %v24
  %v353 = vunpack.c.h.b16 %v24
  %v354 = vunpack.c.l.b16 %v25
  %v355 = vunpack.c.h.b16 %v25
  %v356 = vunpack.c.l.b16 %v26
  %v357 = vunpack.c.h.b16 %v26
  %v358 = vunpack.c.l.b16 %v27
  %v359 = vunpack.c.h.b16 %v27
  %v360 = vunpack.c.l.b16 %v28
  %v361 = vunpack.c.h.b16 %v28
  %v362 = vunpack.c.l.b16 %v29
  %v363 = vunpack.c.h.b16 %v29
  %v364 = vunpack.c.l.b16 %v30
  %v365 = vunpack.c.h.b16 %v30
  %v366 = vunpack.c.l.b16 %v31
  %v367 = vunpack.c.h.b16 %v31
  %v368 = vunpack.c.l.b16 %v32
  %v369 = vunpack.c.h.b16 %v32
  %v370 = vunpack.c.l.b16 %v33
  %v371 = vunpack.c.h.b16 %v33
  %v372 = vunpack.c.l.b16 %v34
  %v373 = vunpack.c.h.b16 %v34
  %v374 = vunpack.c.l.b16 %v35
  %v375 = vunpack.c.h.b16 %v35
  %v376 = vunpack.c.l.b16 %v36
  %v377 = vunpack.c.h.b16 %v36
  %v378 = vunpack.c.l.b16 %v37
  %v379 = vunpack.c.h.b16 %v37
  %v380 = vpack.c.b16 %v362, %v344
  %v381 = vpack.c.b16 %v363, %v345
  %v382 = vpack.c.b16 %v364, %v346
  %v383 = vpack.c.b16 %v365, %v347
  %v384 = vpack.c.b16 %v366, %v348
  %v385 = vpack.c.b16 %v367, %v349
  %v386 = vpack.c.b16 %v368, %v350
  %v387 = vpack.c.b16 %v369, %v351
  %v388 = vpack.c.b16 %v370, %v352
  %v389 = vpack.c.b16 %v371, %v353
  %v390 = vpack.c.b16 %v372, %v354
  %v391 = vpack.c.b16 %v373, %v355
  %v392 = vpack.c.b16 %v374, %v356
  %v393 = vpack.c.b16 %v375, %v357
  %v394 = vpack.c.b16 %v376, %v358
  %v395 = vpack.c.b16 %v377, %v359
  %v396 = vpack.c.b16 %v378, %v360
  %v397 = vpack.c.b16 %v379, %v361
  %v704 = vunpack.c.l.b16 %v38
  %v705 = vunpack.c.h.b16 %v38
  %v706 = vunpack.c.l.b16 %v39
  %v707 = vunpack.c.h.b16 %v39
  %v708 = vunpack.c.l.b16 %v40
  %v709 = vunpack.c.h.b16 %v40
  %v710 = vunpack.c.l.b16 %v41
  %v711 = vunpack.c.h.b16 %v41
  %v712 = vunpack.c.l.b16 %v42
  %v713 = vunpack.c.h.b16 %v42
  %v714 = vunpack.c.l.b16 %v43
  %v715 = vunpack.c.h.b16 %v43
  %v716 = vunpack.c.l.b16 %v44
  %v717 = vunpack.c.h.b16 %v44
  %v718 = vunpack.c.l.b16 %v45
  %v719 = vunpack.c.h.b16 %v45
  %v720 = vunpack.c.l.b16 %v46
  %v721 = vunpack.c.h.b16 %v46
  %v722 = vunpack.c.l.b16 %v47
  %v723 = vunpack.c.h.b16 %v47
  %v724 = vunpack.c.l.b16 %v48
  %v725 = vunpack.c.h.b16 %v48
  %v726 = vunpack.c.l.b16 %v49
  %v727 = vunpack.c.h.b16 %v49
  %v728 = vunpack.c.l.b16 %v50
  %v729 = vunpack.c.h.b16 %v50
  %v730 = vunpack.c.l.b16 %v51
  %v731 = vunpack.c.h.b16 %v51
  %v732 = vunpack.c.l.b16 %v52
  %v733 = vunpack.c.h.b16 %v52
  %v734 = vunpack.c.l.b16 %v53
  %v735 = vunpack.c.h.b16 %v53
  %v736 = vunpack.c.l.b16 %v54
  %v737 = vunpack.c.h.b16 %v54
  %v738 = vunpack.c.l.b16 %v55
  %v739 = vunpack.c.h.b16 %v55
  %v740 = vunpack.c.l.b16 %v56
  %v741 = vunpack.c.h.b16 %v56
  %v742 = vunpack.c.l.b16 %v57
  %v743 = vunpack.c.h.b16 %v57
  %v744 = vunpack.c.l.b16 %v58
  %v745 = vunpack.c.h.b16 %v58
  %v746 = vunpack.c.l.b16 %v59
  %v747 = vunpack.c.h.b16 %v59
  %v748 = vunpack.c.l.b16 %v60
  %v749 = vunpack.c.h.b16 %v60
  %v750 = vunpack.c.l.b16 %v61
  %v751 = vunpack.c.h.b16 %v61
  %v752 = vunpack.c.l.b16 %v62
  %v753 = vunpack.c.h.b16 %v62
  %v754 = vunpack.c.l.b16 %v63
  %v755 = vunpack.c.h.b16 %v63
  %v756 = vunpack.c.l.b16 %v64
  %v757 = vunpack.c.h.b16 %v64
  %v758 = vunpack.c.l.b16 %v65
  %v759 = vunpack.c.h.b16 %v65
  %v760 = vunpack.c.l.b16 %v66
  %v761 = vunpack.c.h.b16 %v66
  %v762 = vunpack.c.l.b16 %v67
  %v763 = vunpack.c.h.b16 %v67
  %v764 = vunpack.c.l.b16 %v68
  %v765 = vunpack.c.h.b16 %v68
  %v766 = vunpack.c.l.b16 %v69
  %v767 = vunpack.c.h.b16 %v69
  %v768 = vunpack.c.l.b16 %v70
  %v769 = vunpack.c.h.b16 %v70
  %v770 = vunpack.c.l.b16 %v71
  %v771 = vunpack.c.h.b16 %v71
  %v772 = vunpack.c.l.b16 %v72
  %v773 = vunpack.c.h.b16 %v72
  %v774 = vunpack.c.l.b16 %v73
  %v775 = vunpack.c.h.b16 %v73
  %v776 = vunpack.c.l.b16 %v74
  %v777 = vunpack.c.h.b16 %v74
  %v778 = vunpack.c.l.b16 %v75
  %v779 = vunpack.c.h.b16 %v75
  %v780 = vunpack.c.l.b16 %v76
  %v781 = vunpack.c.h.b16 %v76
  %v782 = vunpack.c.l.b16 %v77
  %v783 = vunpack.c.h.b16 %v77
  %v784 = vunpack.c.l.b16 %v78
  %v785 = vunpack.c.h.b16 %v78
  %v786 = vunpack.c.l.b16 %v79
  %v787 = vunpack.c.h.b16 %v79
  %v788 = vunpack.c.l.b16 %v80
  %v789 = vunpack.c.h.b16 %v80
  %v790 = vunpack.c.l.b16 %v81
  %v791 = vunpack.c.h.b16 %v81
  %v792 = vunpack.c.l.b16 %v82
  %v793 = vunpack.c.h.b16 %v82
  %v794 = vunpack.c.l.b16 %v83
  %v795 = vunpack.c.h.b16 %v83
  %v796 = vunpack.c.l.b16 %v84
  %v797 = vunpack.c.h.b16 %v84
  %v798 = vunpack.c.l.b16 %v85
  %v799 = vunpack.c.h.b16 %v85
  %v800 = vunpack.c.l.b16 %v86
  %v801 = vunpack.c.h.b16 %v86
  %v802 = vunpack.c.l.b16 %v87
  %v803 = vunpack.c.h.b16 %v87
  %v804 = vunpack.c.l.b16 %v88
  %v805 = vunpack.c.h.b16 %v88
  %v806 = vunpack.c.l.b16 %v89
  %v807 = vunpack.c.h.b16 %v89
  %v808 = vunpack.c.l.b16 %v90
  %v809 = vunpack.c.h.b16 %v90
  %v810 = vunpack.c.l.b16 %v91
  %v811 = vunpack.c.h.b16 %v91
  %v812 = vunpack.c.l.b16 %v92
  %v813 = vunpack.c.h.b16 %v92
  %v814 = vunpack.c.l.b16 %v93
  %v815 = vunpack.c.h.b16 %v93
  %v816 = vunpack.c.l.b16 %v94
  %v817 = vunpack.c.h.b16 %v94
  %v818 = vunpack.c.l.b16 %v95
  %v819 = vunpack.c.h.b16 %v95
  %v820 = vunpack.c.l.b16 %v96
  %v821 = vunpack.c.h.b16 %v96
  %v822 = vunpack.c.l.b16 %v97
  %v823 = vunpack.c.h.b16 %v97
  %v824 = vunpack.c.l.b16 %v98
  %v825 = vunpack.c.h.b16 %v98
  %v826 = vunpack.c.l.b16 %v99
  %v827 = vunpack.c.h.b16 %v99
  %v828 = vunpack.c.l.b16 %v100
  %v829 = vunpack.c.h.b16 %v100
  %v830 = vunpack.c.l.b16 %v101
  %v831 = vunpack.c.h.b16 %v101
  %v832 = vunpack.c.l.b16 %v102
  %v833 = vunpack.c.h.b16 %v102
  %v834 = vunpack.c.l.b16 %v103
  %v835 = vunpack.c.h.b16 %v103
  %v836 = vunpack.c.l.b16 %v104
  %v837 = vunpack.c.h.b16 %v104
  %v838 = vunpack.c.l.b16 %v105
  %v839 = vunpack.c.h.b16 %v105
  %v840 = vunpack.c.l.b16 %v106
  %v841 = vunpack.c.h.b16 %v106
  %v842 = vunpack.c.l.b16 %v107
  %v843 = vunpack.c.h.b16 %v107
  %v844 = vunpack.c.l.b16 %v108
  %v845 = vunpack.c.h.b16 %v108
  %v846 = vunpack.c.l.b16 %v109
  %v847 = vunpack.c.h.b16 %v109
  %v848 = vunpack.c.l.b16 %v110
  %v849 = vunpack.c.h.b16 %v110
  %v850 = vunpack.c.l.b16 %v111
  %v851 = vunpack.c.h.b16 %v111
  %v852 = vunpack.c.l.b16 %v112
  %v853 = vunpack.c.h.b16 %v112
  %v854 = vunpack.c.l.b16 %v113
  %v855 = vunpack.c.h.b16 %v113
  %v856 = vunpack.c.l.b16 %v114
  %v857 = vunpack.c.h.b16 %v114
  %v858 = vunpack.c.l.b16 %v115
  %v859 = vunpack.c.h.b16 %v115
  %v860 = vunpack.c.l.b16 %v116
  %v861 = vunpack.c.h.b16 %v116
  %v862 = vunpack.c.l.b16 %v117
  %v863 = vunpack.c.h.b16 %v117
  %v864 = vunpack.c.l.b16 %v118
  %v865 = vunpack.c.h.b16 %v118
  %v866 = vunpack.c.l.b16 %v119
  %v867 = vunpack.c.h.b16 %v119
  %v868 = vunpack.c.l.b16 %v120
  %v869 = vunpack.c.h.b16 %v120
  %v870 = vunpack.c.l.b16 %v121
  %v871 = vunpack.c.h.b16 %v121
  %v872 = vunpack.c.l.b16 %v122
  %v873 = vunpack.c.h.b16 %v122
  %v874 = vunpack.c.l.b16 %v123
  %v875 = vunpack.c.h.b16 %v123
  %v876 = vunpack.c.l.b16 %v124
  %v877 = vunpack.c.h.b16 %v124
  %v878 = vunpack.c.l.b16 %v125
  %v879 = vunpack.c.h.b16 %v125
  %v880 = vunpack.c.l.b16 %v126
  %v881 = vunpack.c.h.b16 %v126
  %v882 = vunpack.c.l.b16 %v127
  %v883 = vunpack.c.h.b16 %v127
  %v884 = vunpack.c.l.b16 %v128
  %v885 = vunpack.c.h.b16 %v128
  %v886 = vunpack.c.l.b16 %v129
  %v887 = vunpack.c.h.b16 %v129
  %v888 = vunpack.c.l.b16 %v130
  %v889 = vunpack.c.h.b16 %v130
  %v890 = vunpack.c.l.b16 %v131
  %v891 = vunpack.c.h.b16 %v131
  %v892 = vunpack.c.l.b16 %v132
  %v893 = vunpack.c.h.b16 %v132
  %v894 = vunpack.c.l.b16 %v133
  %v895 = vunpack.c.h.b16 %v133
  %v896 = vunpack.c.l.b16 %v134
  %v897 = vunpack.c.h.b16 %v134
  %v898 = vunpack.c.l.b16 %v135
  %v899 = vunpack.c.h.b16 %v135
  %v900 = vunpack.c.l.b16 %v136
  %v901 = vunpack.c.h.b16 %v136
  %v902 = vunpack.c.l.b16 %v137
  %v903 = vunpack.c.h.b16 %v137
  %v904 = vunpack.c.l.b16 %v138
  %v905 = vunpack.c.h.b16 %v138
  %v906 = vunpack.c.l.b16 %v139
  %v907 = vunpack.c.h.b16 %v139
  %v908 = vunpack.c.l.b16 %v140
  %v909 = vunpack.c.h.b16 %v140
  %v910 = vunpack.c.l.b16 %v141
  %v911 = vunpack.c.h.b16 %v141
  %v912 = vunpack.c.l.b16 %v142
  %v913 = vunpack.c.h.b16 %v142
  %v914 = vunpack.c.l.b16 %v143
  %v915 = vunpack.c.h.b16 %v143
  %v916 = vunpack.c.l.b16 %v144
  %v917 = vunpack.c.h.b16 %v144
  %v918 = vunpack.c.l.b16 %v145
  %v919 = vunpack.c.h.b16 %v145
  %v920 = vunpack.c.l.b16 %v146
  %v921 = vunpack.c.h.b16 %v146
  %v922 = vunpack.c.l.b16 %v147
  %v923 = vunpack.c.h.b16 %v147
  %v924 = vunpack.c.l.b16 %v148
  %v925 = vunpack.c.h.b16 %v148
  %v926 = vunpack.c.l.b16 %v149
  %v927 = vunpack.c.h.b16 %v149
  %v928 = vunpack.c.l.b16 %v150
  %v929 = vunpack.c.h.b16 %v150
  %v930 = vunpack.c.l.b16 %v151
  %v931 = vunpack.c.h.b16 %v151
  %v932 = vunpack.c.l.b16 %v152
  %v933 = vunpack.c.h.b16 %v152
  %v934 = vunpack.c.l.b16 %v153
  %v935 = vunpack.c.h.b16 %v153
  %v936 = vunpack.c.l.b16 %v154
  %v937 = vunpack.c.h.b16 %v154
  %v938 = vunpack.c.l.b16 %v155
  %v939 = vunpack.c.h.b16 %v155
  %v940 = vunpack.c.l.b16 %v156
  %v941 = vunpack.c.h.b16 %v156
  %v942 = vunpack.c.l.b16 %v157
  %v943 = vunpack.c.h.b16 %v157
  %v944 = vunpack.c.l.b16 %v158
  %v945 = vunpack.c.h.b16 %v158
  %v946 = vunpack.c.l.b16 %v159
  %v947 = vunpack.c.h.b16 %v159
  %v948 = vunpack.c.l.b16 %v160
  %v949 = vunpack.c.h.b16 %v160
  %v950 = vunpack.c.l.b16 %v161
  %v951 = vunpack.c.h.b16 %v161
  %v952 = vunpack.c.l.b16 %v162
  %v953 = vunpack.c.h.b16 %v162
  %v954 = vunpack.c.l.b16 %v163
  %v955 = vunpack.c.h.b16 %v163
  %v956 = vunpack.c.l.b16 %v164
  %v957 = vunpack.c.h.b16 %v164
  %v958 = vunpack.c.l.b16 %v165
  %v959 = vunpack.c.h.b16 %v165
  %v960 = vunpack.c.l.b16 %v166
  %v961 = vunpack.c.h.b16 %v166
  %v962 = vunpack.c.l.b16 %v167
  %v963 = vunpack.c.h.b16 %v167
  %v964 = vunpack.c.l.b16 %v168
  %v965 = vunpack.c.h.b16 %v168
  %v966 = vunpack.c.l.b16 %v169
  %v967 = vunpack.c.h.b16 %v169
  %v968 = vunpack.c.l.b16 %v170
  %v969 = vunpack.c.h.b16 %v170
  %v970 = vunpack.c.l.b16 %v171
  %v971 = vunpack.c.h.b16 %v171
  %v972 = vunpack.c.l.b16 %v172
  %v973 = vunpack.c.h.b16 %v172
  %v974 = vunpack.c.l.b16 %v173
  %v975 = vunpack.c.h.b16 %v173
  %v976 = vunpack.c.l.b16 %v174
  %v977 = vunpack.c.h.b16 %v174
  %v978 = vunpack.c.l.b16 %v175
  %v979 = vunpack.c.h.b16 %v175
  %v980 = vunpack.c.l.b16 %v176
  %v981 = vunpack.c.h.b16 %v176
  %v982 = vunpack.c.l.b16 %v177
  %v983 = vunpack.c.h.b16 %v177
  %v984 = vunpack.c.l.b16 %v178
  %v985 = vunpack.c.h.b16 %v178
  %v986 = vunpack.c.l.b16 %v179
  %v987 = vunpack.c.h.b16 %v179
  %v988 = vunpack.c.l.b16 %v180
  %v989 = vunpack.c.h.b16 %v180
  %v990 = vunpack.c.l.b16 %v181
  %v991 = vunpack.c.h.b16 %v181
  %v992 = vunpack.c.l.b16 %v182
  %v993 = vunpack.c.h.b16 %v182
  %v994 = vunpack.c.l.b16 %v183
  %v995 = vunpack.c.h.b16 %v183
  %v996 = vunpack.c.l.b16 %v184
  %v997 = vunpack.c.h.b16 %v184
  %v998 = vunpack.c.l.b16 %v185
  %v999 = vunpack.c.h.b16 %v185
  %v1000 = vunpack.c.l.b16 %v186
  %v1001 = vunpack.c.h.b16 %v186
  %v1002 = vunpack.c.l.b16 %v187
  %v1003 = vunpack.c.h.b16 %v187
  %v1004 = vunpack.c.l.b16 %v188
  %v1005 = vunpack.c.h.b16 %v188
  %v1006 = vunpack.c.l.b16 %v189
  %v1007 = vunpack.c.h.b16 %v189
  %v1008 = vunpack.c.l.b16 %v190
  %v1009 = vunpack.c.h.b16 %v190
  %v1010 = vunpack.c.l.b16 %v191
  %v1011 = vunpack.c.h.b16 %v191
  %v1012 = vunpack.c.l.b16 %v192
  %v1013 = vunpack.c.h.b16 %v192
  %v1014 = vunpack.c.l.b16 %v193
  %v1015 = vunpack.c.h.b16 %v193
  %v1016 = vunpack.c.l.b16 %v194
  %v1017 = vunpack.c.h.b16 %v194
  %v1018 = vunpack.c.l.b16 %v195
  %v1019 = vunpack.c.h.b16 %v195
  %v1020 = vunpack.c.l.b16 %v196
  %v1021 = vunpack.c.h.b16 %v196
  %v1022 = vunpack.c.l.b16 %v197
  %v1023 = vunpack.c.h.b16 %v197
  %v1024 = vunpack.c.l.b16 %v198
  %v1025 = vunpack.c.h.b16 %v198
  %v1026 = vunpack.c.l.b16 %v199
  %v1027 = vunpack.c.h.b16 %v199
  %v1028 = vunpack.c.l.b16 %v200
  %v1029 = vunpack.c.h.b16 %v200
  %v1030 = vunpack.c.l.b16 %v201
  %v1031 = vunpack.c.h.b16 %v201
  %v1032 = vunpack.c.l.b16 %v202
  %v1033 = vunpack.c.h.b16 %v202
  %v1034 = vunpack.c.l.b16 %v203
  %v1035 = vunpack.c.h.b16 %v203
  %v1036 = vunpack.c.l.b16 %v204
  %v1037 = vunpack.c.h.b16 %v204
  %v1038 = vunpack.c.l.b16 %v205
  %v1039 = vunpack.c.h.b16 %v205
  %v1040 = vunpack.c.l.b16 %v206
  %v1041 = vunpack.c.h.b16 %v206
  %v1042 = vunpack.c.l.b16 %v207
  %v1043 = vunpack.c.h.b16 %v207
  %v1044 = vunpack.c.l.b16 %v208
  %v1045 = vunpack.c.h.b16 %v208
  %v1046 = vunpack.c.l.b16 %v209
  %v1047 = vunpack.c.h.b16 %v209
  %v1048 = vunpack.c.l.b16 %v210
  %v1049 = vunpack.c.h.b16 %v210
  %v1050 = vunpack.c.l.b16 %v211
  %v1051 = vunpack.c.h.b16 %v211
  %v1052 = vunpack.c.l.b16 %v212
  %v1053 = vunpack.c.h.b16 %v212
  %v1054 = vunpack.c.l.b16 %v213
  %v1055 = vunpack.c.h.b16 %v213
  %v1056 = vunpack.c.l.b16 %v214
  %v1057 = vunpack.c.h.b16 %v214
  %v1058 = vunpack.c.l.b16 %v215
  %v1059 = vunpack.c.h.b16 %v215
  %v1060 = vunpack.c.l.b16 %v216
  %v1061 = vunpack.c.h.b16 %v216
  %v1062 = vunpack.c.l.b16 %v217
  %v1063 = vunpack.c.h.b16 %v217
  %v1064 = vunpack.c.l.b16 %v218
  %v1065 = vunpack.c.h.b16 %v218
  %v1066 = vunpack.c.l.b16 %v219
  %v1067 = vunpack.c.h.b16 %v219
  %v1068 = vunpack.c.l.b16 %v220
  %v1069 = vunpack.c.h.b16 %v220
  %v1070 = vunpack.c.l.b16 %v221
  %v1071 = vunpack.c.h.b16 %v221
  %v1072 = vunpack.c.l.b16 %v222
  %v1073 = vunpack.c.h.b16 %v222
  %v1074 = vunpack.c.l.b16 %v223
  %v1075 = vunpack.c.h.b16 %v223
  %v1076 = vunpack.c.l.b16 %v224
  %v1077 = vunpack.c.h.b16 %v224
  %v1078 = vunpack.c.l.b16 %v225
  %v1079 = vunpack.c.h.b16 %v225
  %v1080 = vunpack.c.l.b16 %v226
  %v1081 = vunpack.c.h.b16 %v226
  %v1082 = vunpack.c.l.b16 %v227
  %v1083 = vunpack.c.h.b16 %v227
  %v1084 = vunpack.c.l.b16 %v228
  %v1085 = vunpack.c.h.b16 %v228
  %v1086 = vunpack.c.l.b16 %v229
  %v1087 = vunpack.c.h.b16 %v229
  %v1088 = vunpack.c.l.b16 %v230
  %v1089 = vunpack.c.h.b16 %v230
  %v1090 = vunpack.c.l.b16 %v231
  %v1091 = vunpack.c.h.b16 %v231
  %v1092 = vunpack.c.l.b16 %v232
  %v1093 = vunpack.c.h.b16 %v232
  %v1094 = vunpack.c.l.b16 %v233
  %v1095 = vunpack.c.h.b16 %v233
  %v1096 = vunpack.c.l.b16 %v234
  %v1097 = vunpack.c.h.b16 %v234
  %v1098 = vunpack.c.l.b16 %v235
  %v1099 = vunpack.c.h.b16 %v235
  %v1100 = vunpack.c.l.b16 %v236
  %v1101 = vunpack.c.h.b16 %v236
  %v1102 = vunpack.c.l.b16 %v237
  %v1103 = vunpack.c.h.b16 %v237
  %v1104 = vunpack.c.l.b16 %v238
  %v1105 = vunpack.c.h.b16 %v238
  %v1106 = vunpack.c.l.b16 %v239
  %v1107 = vunpack.c.h.b16 %v239
  %v1108 = vunpack.c.l.b16 %v240
  %v1109 = vunpack.c.h.b16 %v240
  %v1110 = vunpack.c.l.b16 %v241
  %v1111 = vunpack.c.h.b16 %v241
  %v1112 = vunpack.c.l.b16 %v242
  %v1113 = vunpack.c.h.b16 %v242
  %v1114 = vunpack.c.l.b16 %v243
  %v1115 = vunpack.c.h.b16 %v243
  %v1116 = vunpack.c.l.b16 %v244
  %v1117 = vunpack.c.h.b16 %v244
  %v1118 = vunpack.c.l.b16 %v245
  %v1119 = vunpack.c.h.b16 %v245
  %v1120 = vunpack.c.l.b16 %v246
  %v1121 = vunpack.c.h.b16 %v246
  %v1122 = vunpack.c.l.b16 %v247
  %v1123 = vunpack.c.h.b16 %v247
  %v1124 = vunpack.c.l.b16 %v248
  %v1125 = vunpack.c.h.b16 %v248
  %v1126 = vunpack.c.l.b16 %v249
  %v1127 = vunpack.c.h.b16 %v249
  %v1128 = vunpack.c.l.b16 %v250
  %v1129 = vunpack.c.h.b16 %v250
  %v1130 = vunpack.c.l.b16 %v251
  %v1131 = vunpack.c.h.b16 %v251
  %v1132 = vunpack.c.l.b16 %v252
  %v1133 = vunpack.c.h.b16 %v252
  %v1134 = vunpack.c.l.b16 %v253
  %v1135 = vunpack.c.h.b16 %v253
  %v1136 = vunpack.c.l.b16 %v254
  %v1137 = vunpack.c.h.b16 %v254
  %v1138 = vunpack.c.l.b16 %v255
  %v1139 = vunpack.c.h.b16 %v255
  %v1140 = vunpack.c.l.b16 %v256
  %v1141 = vunpack.c.h.b16 %v256
  %v1142 = vunpack.c.l.b16 %v257
  %v1143 = vunpack.c.h.b16 %v257
  %v1144 = vunpack.c.l.b16 %v258
  %v1145 = vunpack.c.h.b16 %v258
  %v1146 = vunpack.c.l.b16 %v259
  %v1147 = vunpack.c.h.b16 %v259
  %v1148 = vunpack.c.l.b16 %v260
  %v1149 = vunpack.c.h.b16 %v260
  %v1150 = vunpack.c.l.b16 %v261
  %v1151 = vunpack.c.h.b16 %v261
  %v1152 = vunpack.c.l.b16 %v262
  %v1153 = vunpack.c.h.b16 %v262
  %v1154 = vunpack.c.l.b16 %v263
  %v1155 = vunpack.c.h.b16 %v263
  %v1156 = vunpack.c.l.b16 %v264
  %v1157 = vunpack.c.h.b16 %v264
  %v1158 = vunpack.c.l.b16 %v265
  %v1159 = vunpack.c.h.b16 %v265
  %v1160 = vunpack.c.l.b16 %v266
  %v1161 = vunpack.c.h.b16 %v266
  %v1162 = vunpack.c.l.b16 %v267
  %v1163 = vunpack.c.h.b16 %v267
  %v1164 = vunpack.c.l.b16 %v268
  %v1165 = vunpack.c.h.b16 %v268
  %v1166 = vunpack.c.l.b16 %v269
  %v1167 = vunpack.c.h.b16 %v269
  %v1168 = vunpack.c.l.b16 %v270
  %v1169 = vunpack.c.h.b16 %v270
  %v1170 = vunpack.c.l.b16 %v271
  %v1171 = vunpack.c.h.b16 %v271
  %v1172 = vunpack.c.l.b16 %v272
  %v1173 = vunpack.c.h.b16 %v272
  %v1174 = vunpack.c.l.b16 %v273
  %v1175 = vunpack.c.h.b16 %v273
  %v1176 = vunpack.c.l.b16 %v274
  %v1177 = vunpack.c.h.b16 %v274
  %v1178 = vunpack.c.l.b16 %v275
  %v1179 = vunpack.c.h.b16 %v275
  %v1180 = vunpack.c.l.b16 %v276
  %v1181 = vunpack.c.h.b16 %v276
  %v1182 = vunpack.c.l.b16 %v277
  %v1183 = vunpack.c.h.b16 %v277
  %v1184 = vunpack.c.l.b16 %v278
  %v1185 = vunpack.c.h.b16 %v278
  %v1186 = vunpack.c.l.b16 %v279
  %v1187 = vunpack.c.h.b16 %v279
  %v1188 = vunpack.c.l.b16 %v280
  %v1189 = vunpack.c.h.b16 %v280
  %v1190 = vunpack.c.l.b16 %v281
  %v1191 = vunpack.c.h.b16 %v281
  %v1192 = vunpack.c.l.b16 %v282
  %v1193 = vunpack.c.h.b16 %v282
  %v1194 = vunpack.c.l.b16 %v283
  %v1195 = vunpack.c.h.b16 %v283
  %v1196 = vunpack.c.l.b16 %v284
  %v1197 = vunpack.c.h.b16 %v284
  %v1198 = vunpack.c.l.b16 %v285
  %v1199 = vunpack.c.h.b16 %v285
  %v1200 = vunpack.c.l.b16 %v286
  %v1201 = vunpack.c.h.b16 %v286
  %v1202 = vunpack.c.l.b16 %v287
  %v1203 = vunpack.c.h.b16 %v287
  %v1204 = vunpack.c.l.b16 %v288
  %v1205 = vunpack.c.h.b16 %v288
  %v1206 = vunpack.c.l.b16 %v289
  %v1207 = vunpack.c.h.b16 %v289
  %v1208 = vunpack.c.l.b16 %v290
  %v1209 = vunpack.c.h.b16 %v290
  %v1210 = vunpack.c.l.b16 %v291
  %v1211 = vunpack.c.h.b16 %v291
  %v1212 = vunpack.c.l.b16 %v292
  %v1213 = vunpack.c.h.b16 %v292
  %v1214 = vunpack.c.l.b16 %v293
  %v1215 = vunpack.c.h.b16 %v293
  %v1216 = vunpack.c.l.b16 %v294
  %v1217 = vunpack.c.h.b16 %v294
  %v1218 = vunpack.c.l.b16 %v295
  %v1219 = vunpack.c.h.b16 %v295
  %v1220 = vunpack.c.l.b16 %v296
  %v1221 = vunpack.c.h.b16 %v296
  %v1222 = vunpack.c.l.b16 %v297
  %v1223 = vunpack.c.h.b16 %v297
  %v1224 = vunpack.c.l.b16 %v298
  %v1225 = vunpack.c.h.b16 %v298
  %v1226 = vunpack.c.l.b16 %v299
  %v1227 = vunpack.c.h.b16 %v299
  %v1228 = vunpack.c.l.b16 %v300
  %v1229 = vunpack.c.h.b16 %v300
  %v1230 = vunpack.c.l.b16 %v301
  %v1231 = vunpack.c.h.b16 %v301
  %v1232 = vunpack.c.l.b16 %v302
  %v1233 = vunpack.c.h.b16 %v302
  %v1234 = vunpack.c.l.b16 %v303
  %v1235 = vunpack.c.h.b16 %v303
  %v1236 = vunpack.c.l.b16 %v304
  %v1237 = vunpack.c.h.b16 %v304
  %v1238 = vunpack.c.l.b16 %v305
  %v1239 = vunpack.c.h.b16 %v305
  %v1240 = vunpack.c.l.b16 %v306
  %v1241 = vunpack.c.h.b16 %v306
  %v1242 = vunpack.c.l.b16 %v307
  %v1243 = vunpack.c.h.b16 %v307
  %v1244 = vunpack.c.l.b16 %v308
  %v1245 = vunpack.c.h.b16 %v308
  %v1246 = vunpack.c.l.b16 %v309
  %v1247 = vunpack.c.h.b16 %v309
  %v1248 = vunpack.c.l.b16 %v310
  %v1249 = vunpack.c.h.b16 %v310
  %v1250 = vunpack.c.l.b16 %v311
  %v1251 = vunpack.c.h.b16 %v311
  %v1252 = vunpack.c.l.b16 %v312
  %v1253 = vunpack.c.h.b16 %v312
  %v1254 = vunpack.c.l.b16 %v313
  %v1255 = vunpack.c.h.b16 %v313
  %v1256 = vunpack.c.l.b16 %v314
  %v1257 = vunpack.c.h.b16 %v314
  %v1258 = vunpack.c.l.b16 %v315
  %v1259 = vunpack.c.h.b16 %v315
  %v1260 = vunpack.c.l.b16 %v316
  %v1261 = vunpack.c.h.b16 %v316
  %v1262 = vunpack.c.l.b16 %v317
  %v1263 = vunpack.c.h.b16 %v317
  %v1264 = vunpack.c.l.b16 %v318
  %v1265 = vunpack.c.h.b16 %v318
  %v1266 = vunpack.c.l.b16 %v319
  %v1267 = vunpack.c.h.b16 %v319
  %v1268 = vunpack.c.l.b16 %v320
  %v1269 = vunpack.c.h.b16 %v320
  %v1270 = vunpack.c.l.b16 %v321
  %v1271 = vunpack.c.h.b16 %v321
  %v1272 = vunpack.c.l.b16 %v322
  %v1273 = vunpack.c.h.b16 %v322
  %v1274 = vunpack.c.l.b16 %v323
  %v1275 = vunpack.c.h.b16 %v323
  %v1276 = vunpack.c.l.b16 %v324
  %v1277 = vunpack.c.h.b16 %v324
  %v1278 = vunpack.c.l.b16 %v325
  %v1279 = vunpack.c.h.b16 %v325
  %v1280 = vpack.c.b16 %v706, %v704
  %v1281 = vpack.c.b16 %v707, %v705
  %v1282 = vpack.c.b16 %v710, %v708
  %v1283 = vpack.c.b16 %v711, %v709
  %v1284 = vpack.c.b16 %v714, %v712
  %v1285 = vpack.c.b16 %v715, %v713
  %v1286 = vpack.c.b16 %v718, %v716
  %v1287 = vpack.c.b16 %v719, %v717
  %v1288 = vpack.c.b16 %v722, %v720
  %v1289 = vpack.c.b16 %v723, %v721
  %v1290 = vpack.c.b16 %v726, %v724
  %v1291 = vpack.c.b16 %v727, %v725
  %v1292 = vpack.c.b16 %v730, %v728
  %v1293 = vpack.c.b16 %v731, %v729
  %v1294 = vpack.c.b16 %v734, %v732
  %v1295 = vpack.c.b16 %v735, %v733
  %v1296 = vpack.c.b16 %v738, %v736
  %v1297 = vpack.c.b16 %v739, %v737
  %v1298 = vpack.c.b16 %v742, %v740
  %v1299 = vpack.c.b16 %v743, %v741
  %v1300 = vpack.c.b16 %v746, %v744
  %v1301 = vpack.c.b16 %v747, %v745
  %v1302 = vpack.c.b16 %v750, %v748
  %v1303 = vpack.c.b16 %v751, %v749
  %v1304 = vpack.c.b16 %v754, %v752
  %v1305 = vpack.c.b16 %v755, %v753
  %v1306 = vpack.c.b16 %v758, %v756
  %v1307 = vpack.c.b16 %v759, %v757
  %v1308 = vpack.c.b16 %v762, %v760
  %v1309 = vpack.c.b16 %v763, %v761
  %v1310 = vpack.c.b16 %v766, %v764
  %v1311 = vpack.c.b16 %v767, %v765
  %v1312 = vpack.c.b16 %v770, %v768
  %v1313 = vpack.c.b16 %v771, %v769
  %v1314 = vpack.c.b16 %v774, %v772
  %v1315 = vpack.c.b16 %v775, %v773
  %v1316 = vpack.c.b16 %v778, %v776
  %v1317 = vpack.c.b16 %v779, %v777
  %v1318 = vpack.c.b16 %v782, %v780
  %v1319 = vpack.c.b16 %v783, %v781
  %v1320 = vpack.c.b16 %v786, %v784
  %v1321 = vpack.c.b16 %v787, %v785
  %v1322 = vpack.c.b16 %v790, %v788
  %v1323 = vpack.c.b16 %v791, %v789
  %v1324 = vpack.c.b16 %v794, %v792
  %v1325 = vpack.c.b16 %v795, %v793
  %v1326 = vpack.c.b16 %v798, %v796
  %v1327 = vpack.c.b16 %v799, %v797
  %v1328 = vpack.c.b16 %v802, %v800
  %v1329 = vpack.c.b16 %v803, %v801
  %v1330 = vpack.c.b16 %v806, %v804
  %v1331 = vpack.c.b16 %v807, %v805
  %v1332 = vpack.c.b16 %v810, %v808
  %v1333 = vpack.c.b16 %v811, %v809
  %v1334 = vpack.c.b16 %v814, %v812
  %v1335 = vpack.c.b16 %v815, %v813
  %v1336 = vpack.c.b16 %v818, %v816
  %v1337 = vpack.c.b16 %v819, %v817
  %v1338 = vpack.c.b16 %v822, %v820
  %v1339 = vpack.c.b16 %v823, %v821
  %v1340 = vpack.c.b16 %v826, %v824
  %v1341 = vpack.c.b16 %v827, %v825
  %v1342 = vpack.c.b16 %v830, %v828
  %v1343 = vpack.c.b16 %v831, %v829
  %v1344 = vpack.c.b16 %v834, %v832
  %v1345 = vpack.c.b16 %v835, %v833
  %v1346 = vpack.c.b16 %v838, %v836
  %v1347 = vpack.c.b16 %v839, %v837
  %v1348 = vpack.c.b16 %v842, %v840
  %v1349 = vpack.c.b16 %v843, %v841
  %v1350 = vpack.c.b16 %v846, %v844
  %v1351 = vpack.c.b16 %v847, %v845
  %v1352 = vpack.c.b16 %v850, %v848
  %v1353 = vpack.c.b16 %v851, %v849
  %v1354 = vpack.c.b16 %v854, %v852
  %v1355 = vpack.c.b16 %v855, %v853
  %v1356 = vpack.c.b16 %v858, %v856
  %v1357 = vpack.c.b16 %v859, %v857
  %v1358 = vpack.c.b16 %v862, %v860
  %v1359 = vpack.c.b16 %v863, %v861
  %v1360 = vpack.c.b16 %v866, %v864
  %v1361 = vpack.c.b16 %v867, %v865
  %v1362 = vpack.c.b16 %v870, %v868
  %v1363 = vpack.c.b16 %v871, %v869
  %v1364 = vpack.c.b16 %v874, %v872
  %v1365 = vpack.c.b16 %v875, %v873
  %v1366 = vpack.c.b16 %v878, %v876
  %v1367 = vpack.c.b16 %v879, %v877
  %v1368 = vpack.c.b16 %v882, %v880
  %v1369 = vpack.c.b16 %v883, %v881
  %v1370 = vpack.c.b16 %v886, %v884
  %v1371 = vpack.c.b16 %v887, %v885
  %v1372 = vpack.c.b16 %v890, %v888
  %v1373 = vpack.c.b16 %v891, %v889
  %v1374 = vpack.c.b16 %v894, %v892
  %v1375 = vpack.c.b16 %v895, %v893
  %v1376 = vpack.c.b16 %v898, %v896
  %v1377 = vpack.c.b16 %v899, %v897
  %v1378 = vpack.c.b16 %v902, %v900
  %v1379 = vpack.c.b16 %v903, %v901
  %v1380 = vpack.c.b16 %v906, %v904
  %v1381 = vpack.c.b16 %v907, %v905
  %v1382 = vpack.c.b16 %v910, %v908
  %v1383 = vpack.c.b16 %v911, %v909
  %v1384 = vpack.c.b16 %v914, %v912
  %v1385 = vpack.c.b16 %v915, %v913
  %v1386 = vpack.c.b16 %v918, %v916
  %v1387 = vpack.c.b16 %v919, %v917
  %v1388 = vpack.c.b16 %v922, %v920
  %v1389 = vpack.c.b16 %v923, %v921
  %v1390 = vpack.c.b16 %v926, %v924
  %v1391 = vpack.c.b16 %v927, %v925
  %v1392 = vpack.c.b16 %v930, %v928
  %v1393 = vpack.c.b16 %v931, %v929
  %v1394 = vpack.c.b16 %v934, %v932
  %v1395 = vpack.c.b16 %v935, %v933
  %v1396 = vpack.c.b16 %v938, %v936
  %v1397 = vpack.c.b16 %v939, %v937
  %v1398 = vpack.c.b16 %v942, %v940
  %v1399 = vpack.c.b16 %v943, %v941
  %v1400 = vpack.c.b16 %v946, %v944
  %v1401 = vpack.c.b16 %v947, %v945
  %v1402 = vpack.c.b16 %v950, %v948
  %v1403 = vpack.c.b16 %v951, %v949
  %v1404 = vpack.c.b16 %v954, %v952
  %v1405 = vpack.c.b16 %v955, %v953
  %v1406 = vpack.c.b16 %v958, %v956
  %v1407 = vpack.c.b16 %v959, %v957
  %v1408 = vpack.c.b16 %v962, %v960
  %v1409 = vpack.c.b16 %v963, %v961
  %v1410 = vpack.c.b16 %v966, %v964
  %v1411 = vpack.c.b16 %v967, %v965
  %v1412 = vpack.c.b16 %v970, %v968
  %v1413 = vpack.c.b16 %v971, %v969
  %v1414 = vpack.c.b16 %v974, %v972
  %v1415 = vpack.c.b16 %v975, %v973
  %v1416 = vpack.c.b16 %v978, %v976
  %v1417 = vpack.c.b16 %v979, %v977
  %v1418 = vpack.c.b16 %v982, %v980
  %v1419 = vpack.c.b16 %v983, %v981
  %v1420 = vpack.c.b16 %v986, %v984
  %v1421 = vpack.c.b16 %v987, %v985
  %v1422 = vpack.c.b16 %v990, %v988
  %v1423 = vpack.c.b16 %v991, %v989
  %v1424 = vpack.c.b16 %v994, %v992
  %v1425 = vpack.c.b16 %v995, %v993
  %v1426 = vpack.c.b16 %v998, %v996
  %v1427 = vpack.c.b16 %v999, %v997
  %v1428 = vpack.c.b16 %v1002, %v1000
  %v1429 = vpack.c.b16 %v1003, %v1001
  %v1430 = vpack.c.b16 %v1006, %v1004
  %v1431 = vpack.c.b16 %v1007, %v1005
  %v1432 = vpack.c.b16 %v1010, %v1008
  %v1433 = vpack.c.b16 %v1011, %v1009
  %v1434 = vpack.c.b16 %v1014, %v1012
  %v1435 = vpack.c.b16 %v1015, %v1013
  %v1436 = vpack.c.b16 %v1018, %v1016
  %v1437 = vpack.c.b16 %v1019, %v1017
  %v1438 = vpack.c.b16 %v1022, %v1020
  %v1439 = vpack.c.b16 %v1023, %v1021
  %v1440 = vpack.c.b16 %v1026, %v1024
  %v1441 = vpack.c.b16 %v1027, %v1025
  %v1442 = vpack.c.b16 %v1030, %v1028
  %v1443 = vpack.c.b16 %v1031, %v1029
  %v1444 = vpack.c.b16 %v1034, %v1032
  %v1445 = vpack.c.b16 %v1035, %v1033
  %v1446 = vpack.c.b16 %v1038, %v1036
  %v1447 = vpack.c.b16 %v1039, %v1037
  %v1448 = vpack.c.b16 %v1042, %v1040
  %v1449 = vpack.c.b16 %v1043, %v1041
  %v1450 = vpack.c.b16 %v1046, %v1044
  %v1451 = vpack.c.b16 %v1047, %v1045
  %v1452 = vpack.c.b16 %v1050, %v1048
  %v1453 = vpack.c.b16 %v1051, %v1049
  %v1454 = vpack.c.b16 %v1054, %v1052
  %v1455 = vpack.c.b16 %v1055, %v1053
  %v1456 = vpack.c.b16 %v1058, %v1056
  %v1457 = vpack.c.b16 %v1059, %v1057
  %v1458 = vpack.c.b16 %v1062, %v1060
  %v1459 = vpack.c.b16 %v1063, %v1061
  %v1460 = vpack.c.b16 %v1066, %v1064
  %v1461 = vpack.c.b16 %v1067, %v1065
  %v1462 = vpack.c.b16 %v1070, %v1068
  %v1463 = vpack.c.b16 %v1071, %v1069
  %v1464 = vpack.c.b16 %v1074, %v1072
  %v1465 = vpack.c.b16 %v1075, %v1073
  %v1466 = vpack.c.b16 %v1078, %v1076
  %v1467 = vpack.c.b16 %v1079, %v1077
  %v1468 = vpack.c.b16 %v1082, %v1080
  %v1469 = vpack.c.b16 %v1083, %v1081
  %v1470 = vpack.c.b16 %v1086, %v1084
  %v1471 = vpack.c.b16 %v1087, %v1085
  %v1472 = vpack.c.b16 %v1090, %v1088
  %v1473 = vpack.c.b16 %v1091, %v1089
  %v1474 = vpack.c.b16 %v1094, %v1092
  %v1475 = vpack.c.b16 %v1095, %v1093
  %v1476 = vpack.c.b16 %v1098, %v1096
  %v1477 = vpack.c.b16 %v1099, %v1097
  %v1478 = vpack.c.b16 %v1102, %v1100
  %v1479 = vpack.c.b16 %v1103, %v1101
  %v1480 = vpack.c.b16 %v1106, %v1104
  %v1481 = vpack.c.b16 %v1107, %v1105
  %v1482 = vpack.c.b16 %v1110, %v1108
  %v1483 = vpack.c.b16 %v1111, %v1109
  %v1484 = vpack.c.b16 %v1114, %v1112
  %v1485 = vpack.c.b16 %v1115, %v1113
  %v1486 = vpack.c.b16 %v1118, %v1116
  %v1487 = vpack.c.b16 %v1119, %v1117
  %v1488 = vpack.c.b16 %v1122, %v1120
  %v1489 = vpack.c.b16 %v1123, %v1121
  %v1490 = vpack.c.b16 %v1126, %v1124
  %v1491 = vpack.c.b16 %v1127, %v1125
  %v1492 = vpack.c.b16 %v1130, %v1128
  %v1493 = vpack.c.b16 %v1131, %v1129
  %v1494 = vpack.c.b16 %v1134, %v1132
  %v1495 = vpack.c.b16 %v1135, %v1133
  %v1496 = vpack.c.b16 %v1138, %v1136
  %v1497 = vpack.c.b16 %v1139, %v1137
  %v1498 = vpack.c.b16 %v1142, %v1140
  %v1499 = vpack.c.b16 %v1143, %v1141
  %v1500 = vpack.c.b16 %v1146, %v1144
  %v1501 = vpack.c.b16 %v1147, %v1145
  %v1502 = vpack.c.b16 %v1150, %v1148
  %v1503 = vpack.c.b16 %v1151, %v1149
  %v1504 = vpack.c.b16 %v1154, %v1152
  %v1505 = vpack.c.b16 %v1155, %v1153
  %v1506 = vpack.c.b16 %v1158, %v1156
  %v1507 = vpack.c.b16 %v1159, %v1157
  %v1508 = vpack.c.b16 %v1162, %v1160
  %v1509 = vpack.c.b16 %v1163, %v1161
  %v1510 = vpack.c.b16 %v1166, %v1164
  %v1511 = vpack.c.b16 %v1167, %v1165
  %v1512 = vpack.c.b16 %v1170, %v1168
  %v1513 = vpack.c.b16 %v1171, %v1169
  %v1514 = vpack.c.b16 %v1174, %v1172
  %v1515 = vpack.c.b16 %v1175, %v1173
  %v1516 = vpack.c.b16 %v1178, %v1176
  %v1517 = vpack.c.b16 %v1179, %v1177
  %v1518 = vpack.c.b16 %v1182, %v1180
  %v1519 = vpack.c.b16 %v1183, %v1181
  %v1520 = vpack.c.b16 %v1186, %v1184
  %v1521 = vpack.c.b16 %v1187, %v1185
  %v1522 = vpack.c.b16 %v1190, %v1188
  %v1523 = vpack.c.b16 %v1191, %v1189
  %v1524 = vpack.c.b16 %v1194, %v1192
  %v1525 = vpack.c.b16 %v1195, %v1193
  %v1526 = vpack.c.b16 %v1198, %v1196
  %v1527 = vpack.c.b16 %v1199, %v1197
  %v1528 = vpack.c.b16 %v1202, %v1200
  %v1529 = vpack.c.b16 %v1203, %v1201
  %v1530 = vpack.c.b16 %v1206, %v1204
  %v1531 = vpack.c.b16 %v1207, %v1205
  %v1532 = vpack.c.b16 %v1210, %v1208
  %v1533 = vpack.c.b16 %v1211, %v1209
  %v1534 = vpack.c.b16 %v1214, %v1212
  %v1535 = vpack.c.b16 %v1215, %v1213
  %v1536 = vpack.c.b16 %v1218, %v1216
  %v1537 = vpack.c.b16 %v1219, %v1217
  %v1538 = vpack.c.b16 %v1222, %v1220
  %v1539 = vpack.c.b16 %v1223, %v1221
  %v1540 = vpack.c.b16 %v1226, %v1224
  %v1541 = vpack.c.b16 %v1227, %v1225
  %v1542 = vpack.c.b16 %v1230, %v1228
  %v1543 = vpack.c.b16 %v1231, %v1229
  %v1544 = vpack.c.b16 %v1234, %v1232
  %v1545 = vpack.c.b16 %v1235, %v1233
  %v1546 = vpack.c.b16 %v1238, %v1236
  %v1547 = vpack.c.b16 %v1239, %v1237
  %v1548 = vpack.c.b16 %v1242, %v1240
  %v1549 = vpack.c.b16 %v1243, %v1241
  %v1550 = vpack.c.b16 %v1246, %v1244
  %v1551 = vpack.c.b16 %v1247, %v1245
  %v1552 = vpack.c.b16 %v1250, %v1248
  %v1553 = vpack.c.b16 %v1251, %v1249
  %v1554 = vpack.c.b16 %v1254, %v1252
  %v1555 = vpack.c.b16 %v1255, %v1253
  %v1556 = vpack.c.b16 %v1258, %v1256
  %v1557 = vpack.c.b16 %v1259, %v1257
  %v1558 = vpack.c.b16 %v1262, %v1260
  %v1559 = vpack.c.b16 %v1263, %v1261
  %v1560 = vpack.c.b16 %v1266, %v1264
  %v1561 = vpack.c.b16 %v1267, %v1265
  %v1562 = vpack.c.b16 %v1270, %v1268
  %v1563 = vpack.c.b16 %v1271, %v1269
  %v1564 = vpack.c.b16 %v1274, %v1272
  %v1565 = vpack.c.b16 %v1275, %v1273
  %v1566 = vpack.c.b16 %v1278, %v1276
  %v1567 = vpack.c.b16 %v1279, %v1277
  %1856 = vmatprep.subr.bf16.mxu0 %v1281
  %1857 = vmatpush1.bf16.msra.mxu0 %v1280
  %1858 = vmatprep.subr.bf16.mxu0 %v1283
  %1859 = vmatpush1.bf16.msra.mxu0 %v1282
  %1860 = vmatprep.subr.bf16.mxu0 %v1285
  %1861 = vmatpush1.bf16.msra.mxu0 %v1284
  %1862 = vmatprep.subr.bf16.mxu0 %v1287
  %1863 = vmatpush1.bf16.msra.mxu0 %v1286
  %1864 = vmatprep.subr.bf16.mxu0 %v1289
  %1865 = vmatpush1.bf16.msra.mxu0 %v1288
  %1866 = vmatprep.subr.bf16.mxu0 %v1291
  %1867 = vmatpush1.bf16.msra.mxu0 %v1290
  %1868 = vmatprep.subr.bf16.mxu0 %v1293
  %1869 = vmatpush1.bf16.msra.mxu0 %v1292
  %1870 = vmatprep.subr.bf16.mxu0 %v1295
  %1871 = vmatpush1.bf16.msra.mxu0 %v1294
  %1872 = vmatprep.subr.bf16.mxu0 %v1297
  %1873 = vmatpush1.bf16.msra.mxu0 %v1296
  %1874 = vmatprep.subr.bf16.mxu0 %v1299
  %1875 = vmatpush1.bf16.msra.mxu0 %v1298
  %1876 = vmatprep.subr.bf16.mxu0 %v1301
  %1877 = vmatpush1.bf16.msra.mxu0 %v1300
  %1878 = vmatprep.subr.bf16.mxu0 %v1303
  %1879 = vmatpush1.bf16.msra.mxu0 %v1302
  %1880 = vmatprep.subr.bf16.mxu0 %v1305
  %1881 = vmatpush1.bf16.msra.mxu0 %v1304
  %1882 = vmatprep.subr.bf16.mxu0 %v1307
  %1883 = vmatpush1.bf16.msra.mxu0 %v1306
  %1884 = vmatprep.subr.bf16.mxu0 %v1309
  %1885 = vmatpush1.bf16.msra.mxu0 %v1308
  %1886 = vmatprep.subr.bf16.mxu0 %v1311
  %1887 = vmatpush1.bf16.msra.mxu0 %v1310
  %1888 = vmatprep.mubr.bf16.mxu0 %v381
  %1889 = vmatmul.mubr.bf16.gmra.mrb[0].mxu0 %v380
  %v1890 = vpop.f32.mrb[0].mxu0
  %v1891 = vadd.f32 0.0, %v1890
  %v1892 = vpop.f32.mrb[0].mxu0
  %v1893 = vadd.f32 0.0, %v1892
  %v1894 = vpop.f32.mrb[0].mxu0
  %v1895 = vadd.f32 0.0, %v1894
  %v1896 = vpop.f32.mrb[0].mxu0
  %v1897 = vadd.f32 0.0, %v1896
  %1898 = vdwg.mxu0
  %1899 = vmatprep.subr.bf16.mxu0 %v1313
  %1900 = vmatpush1.bf16.msra.mxu0 %v1312
  %1901 = vmatprep.subr.bf16.mxu0 %v1315
  %1902 = vmatpush1.bf16.msra.mxu0 %v1314
  %1903 = vmatprep.subr.bf16.mxu0 %v1317
  %1904 = vmatpush1.bf16.msra.mxu0 %v1316
  %1905 = vmatprep.subr.bf16.mxu0 %v1319
  %1906 = vmatpush1.bf16.msra.mxu0 %v1318
  %1907 = vmatprep.subr.bf16.mxu0 %v1321
  %1908 = vmatpush1.bf16.msra.mxu0 %v1320
  %1909 = vmatprep.subr.bf16.mxu0 %v1323
  %1910 = vmatpush1.bf16.msra.mxu0 %v1322
  %1911 = vmatprep.subr.bf16.mxu0 %v1325
  %1912 = vmatpush1.bf16.msra.mxu0 %v1324
  %1913 = vmatprep.subr.bf16.mxu0 %v1327
  %1914 = vmatpush1.bf16.msra.mxu0 %v1326
  %1915 = vmatprep.subr.bf16.mxu0 %v1329
  %1916 = vmatpush1.bf16.msra.mxu0 %v1328
  %1917 = vmatprep.subr.bf16.mxu0 %v1331
  %1918 = vmatpush1.bf16.msra.mxu0 %v1330
  %1919 = vmatprep.subr.bf16.mxu0 %v1333
  %1920 = vmatpush1.bf16.msra.mxu0 %v1332
  %1921 = vmatprep.subr.bf16.mxu0 %v1335
  %1922 = vmatpush1.bf16.msra.mxu0 %v1334
  %1923 = vmatprep.subr.bf16.mxu0 %v1337
  %1924 = vmatpush1.bf16.msra.mxu0 %v1336
  %1925 = vmatprep.subr.bf16.mxu0 %v1339
  %1926 = vmatpush1.bf16.msra.mxu0 %v1338
  %1927 = vmatprep.subr.bf16.mxu0 %v1341
  %1928 = vmatpush1.bf16.msra.mxu0 %v1340
  %1929 = vmatprep.subr.bf16.mxu0 %v1343
  %1930 = vmatpush1.bf16.msra.mxu0 %v1342
  %1931 = vmatprep.mubr.bf16.mxu0 %v383
  %1932 = vmatmul.mubr.bf16.gmra.mrb[0].mxu0 %v382
  %v1933 = vpop.f32.mrb[0].mxu0
  %v1934 = vadd.f32 %v1891, %v1933
  %v1935 = vpop.f32.mrb[0].mxu0
  %v1936 = vadd.f32 %v1893, %v1935
  %v1937 = vpop.f32.mrb[0].mxu0
  %v1938 = vadd.f32 %v1895, %v1937
  %v1939 = vpop.f32.mrb[0].mxu0
  %v1940 = vadd.f32 %v1897, %v1939
  %1941 = vdwg.mxu0
  %1942 = vmatprep.subr.bf16.mxu0 %v1345
  %1943 = vmatpush1.bf16.msra.mxu0 %v1344
  %1944 = vmatprep.subr.bf16.mxu0 %v1347
  %1945 = vmatpush1.bf16.msra.mxu0 %v1346
  %1946 = vmatprep.subr.bf16.mxu0 %v1349
  %1947 = vmatpush1.bf16.msra.mxu0 %v1348
  %1948 = vmatprep.subr.bf16.mxu0 %v1351
  %1949 = vmatpush1.bf16.msra.mxu0 %v1350
  %1950 = vmatprep.subr.bf16.mxu0 %v1353
  %1951 = vmatpush1.bf16.msra.mxu0 %v1352
  %1952 = vmatprep.subr.bf16.mxu0 %v1355
  %1953 = vmatpush1.bf16.msra.mxu0 %v1354
  %1954 = vmatprep.subr.bf16.mxu0 %v1357
  %1955 = vmatpush1.bf16.msra.mxu0 %v1356
  %1956 = vmatprep.subr.bf16.mxu0 %v1359
  %1957 = vmatpush1.bf16.msra.mxu0 %v1358
  %1958 = vmatprep.subr.bf16.mxu0 %v1361
  %1959 = vmatpush1.bf16.msra.mxu0 %v1360
  %1960 = vmatprep.subr.bf16.mxu0 %v1363
  %1961 = vmatpush1.bf16.msra.mxu0 %v1362
  %1962 = vmatprep.subr.bf16.mxu0 %v1365
  %1963 = vmatpush1.bf16.msra.mxu0 %v1364
  %1964 = vmatprep.subr.bf16.mxu0 %v1367
  %1965 = vmatpush1.bf16.msra.mxu0 %v1366
  %1966 = vmatprep.subr.bf16.mxu0 %v1369
  %1967 = vmatpush1.bf16.msra.mxu0 %v1368
  %1968 = vmatprep.subr.bf16.mxu0 %v1371
  %1969 = vmatpush1.bf16.msra.mxu0 %v1370
  %1970 = vmatprep.subr.bf16.mxu0 %v1373
  %1971 = vmatpush1.bf16.msra.mxu0 %v1372
  %1972 = vmatprep.subr.bf16.mxu0 %v1375
  %1973 = vmatpush1.bf16.msra.mxu0 %v1374
  %1974 = vmatprep.mubr.bf16.mxu0 %v385
  %1975 = vmatmul.mubr.bf16.gmra.mrb[0].mxu0 %v384
  %v1976 = vpop.f32.mrb[0].mxu0
  %v1977 = vadd.f32 %v1934, %v1976
  %v1978 = vpop.f32.mrb[0].mxu0
  %v1979 = vadd.f32 %v1936, %v1978
  %v1980 = vpop.f32.mrb[0].mxu0
  %v1981 = vadd.f32 %v1938, %v1980
  %v1982 = vpop.f32.mrb[0].mxu0
  %v1983 = vadd.f32 %v1940, %v1982
  %1984 = vdwg.mxu0
  %1985 = vmatprep.subr.bf16.mxu0 %v1377
  %1986 = vmatpush1.bf16.msra.mxu0 %v1376
  %1987 = vmatprep.subr.bf16.mxu0 %v1379
  %1988 = vmatpush1.bf16.msra.mxu0 %v1378
  %1989 = vmatprep.subr.bf16.mxu0 %v1381
  %1990 = vmatpush1.bf16.msra.mxu0 %v1380
  %1991 = vmatprep.subr.bf16.mxu0 %v1383
  %1992 = vmatpush1.bf16.msra.mxu0 %v1382
  %1993 = vmatprep.subr.bf16.mxu0 %v1385
  %1994 = vmatpush1.bf16.msra.mxu0 %v1384
  %1995 = vmatprep.subr.bf16.mxu0 %v1387
  %1996 = vmatpush1.bf16.msra.mxu0 %v1386
  %1997 = vmatprep.subr.bf16.mxu0 %v1389
  %1998 = vmatpush1.bf16.msra.mxu0 %v1388
  %1999 = vmatprep.subr.bf16.mxu0 %v1391
  %2000 = vmatpush1.bf16.msra.mxu0 %v1390
  %2001 = vmatprep.subr.bf16.mxu0 %v1393
  %2002 = vmatpush1.bf16.msra.mxu0 %v1392
  %2003 = vmatprep.subr.bf16.mxu0 %v1395
  %2004 = vmatpush1.bf16.msra.mxu0 %v1394
  %2005 = vmatprep.subr.bf16.mxu0 %v1397
  %2006 = vmatpush1.bf16.msra.mxu0 %v1396
  %2007 = vmatprep.subr.bf16.mxu0 %v1399
  %2008 = vmatpush1.bf16.msra.mxu0 %v1398
  %2009 = vmatprep.subr.bf16.mxu0 %v1401
  %2010 = vmatpush1.bf16.msra.mxu0 %v1400
  %2011 = vmatprep.subr.bf16.mxu0 %v1403
  %2012 = vmatpush1.bf16.msra.mxu0 %v1402
  %2013 = vmatprep.subr.bf16.mxu0 %v1405
  %2014 = vmatpush1.bf16.msra.mxu0 %v1404
  %2015 = vmatprep.subr.bf16.mxu0 %v1407
  %2016 = vmatpush1.bf16.msra.mxu0 %v1406
  %2017 = vmatprep.mubr.bf16.mxu0 %v387
  %2018 = vmatmul.mubr.bf16.gmra.mrb[0].mxu0 %v386
  %v2019 = vpop.f32.mrb[0].mxu0
  %v2020 = vadd.f32 %v1977, %v2019
  %v2021 = vpop.f32.mrb[0].mxu0
  %v2022 = vadd.f32 %v1979, %v2021
  %v2023 = vpop.f32.mrb[0].mxu0
  %v2024 = vadd.f32 %v1981, %v2023
  %v2025 = vpop.f32.mrb[0].mxu0
  %v2026 = vadd.f32 %v1983, %v2025
  %2027 = vdwg.mxu0
  %2028 = vmatprep.subr.bf16.mxu0 %v1409
  %2029 = vmatpush1.bf16.msra.mxu0 %v1408
  %2030 = vmatprep.subr.bf16.mxu0 %v1411
  %2031 = vmatpush1.bf16.msra.mxu0 %v1410
  %2032 = vmatprep.subr.bf16.mxu0 %v1413
  %2033 = vmatpush1.bf16.msra.mxu0 %v1412
  %2034 = vmatprep.subr.bf16.mxu0 %v1415
  %2035 = vmatpush1.bf16.msra.mxu0 %v1414
  %2036 = vmatprep.subr.bf16.mxu0 %v1417
  %2037 = vmatpush1.bf16.msra.mxu0 %v1416
  %2038 = vmatprep.subr.bf16.mxu0 %v1419
  %2039 = vmatpush1.bf16.msra.mxu0 %v1418
  %2040 = vmatprep.subr.bf16.mxu0 %v1421
  %2041 = vmatpush1.bf16.msra.mxu0 %v1420
  %2042 = vmatprep.subr.bf16.mxu0 %v1423
  %2043 = vmatpush1.bf16.msra.mxu0 %v1422
  %2044 = vmatprep.subr.bf16.mxu0 %v1425
  %2045 = vmatpush1.bf16.msra.mxu0 %v1424
  %2046 = vmatprep.subr.bf16.mxu0 %v1427
  %2047 = vmatpush1.bf16.msra.mxu0 %v1426
  %2048 = vmatprep.subr.bf16.mxu0 %v1429
  %2049 = vmatpush1.bf16.msra.mxu0 %v1428
  %2050 = vmatprep.subr.bf16.mxu0 %v1431
  %2051 = vmatpush1.bf16.msra.mxu0 %v1430
  %2052 = vmatprep.subr.bf16.mxu0 %v1433
  %2053 = vmatpush1.bf16.msra.mxu0 %v1432
  %2054 = vmatprep.subr.bf16.mxu0 %v1435
  %2055 = vmatpush1.bf16.msra.mxu0 %v1434
  %2056 = vmatprep.subr.bf16.mxu0 %v1437
  %2057 = vmatpush1.bf16.msra.mxu0 %v1436
  %2058 = vmatprep.subr.bf16.mxu0 %v1439
  %2059 = vmatpush1.bf16.msra.mxu0 %v1438
  %2060 = vmatprep.mubr.bf16.mxu0 %v389
  %2061 = vmatmul.mubr.bf16.gmra.mrb[0].mxu0 %v388
  %v2062 = vpop.f32.mrb[0].mxu0
  %v2063 = vadd.f32 %v2020, %v2062
  %v2064 = vpop.f32.mrb[0].mxu0
  %v2065 = vadd.f32 %v2022, %v2064
  %v2066 = vpop.f32.mrb[0].mxu0
  %v2067 = vadd.f32 %v2024, %v2066
  %v2068 = vpop.f32.mrb[0].mxu0
  %v2069 = vadd.f32 %v2026, %v2068
  %2070 = vdwg.mxu0
  %2071 = vmatprep.subr.bf16.mxu0 %v1441
  %2072 = vmatpush1.bf16.msra.mxu0 %v1440
  %2073 = vmatprep.subr.bf16.mxu0 %v1443
  %2074 = vmatpush1.bf16.msra.mxu0 %v1442
  %2075 = vmatprep.subr.bf16.mxu0 %v1445
  %2076 = vmatpush1.bf16.msra.mxu0 %v1444
  %2077 = vmatprep.subr.bf16.mxu0 %v1447
  %2078 = vmatpush1.bf16.msra.mxu0 %v1446
  %2079 = vmatprep.subr.bf16.mxu0 %v1449
  %2080 = vmatpush1.bf16.msra.mxu0 %v1448
  %2081 = vmatprep.subr.bf16.mxu0 %v1451
  %2082 = vmatpush1.bf16.msra.mxu0 %v1450
  %2083 = vmatprep.subr.bf16.mxu0 %v1453
  %2084 = vmatpush1.bf16.msra.mxu0 %v1452
  %2085 = vmatprep.subr.bf16.mxu0 %v1455
  %2086 = vmatpush1.bf16.msra.mxu0 %v1454
  %2087 = vmatprep.subr.bf16.mxu0 %v1457
  %2088 = vmatpush1.bf16.msra.mxu0 %v1456
  %2089 = vmatprep.subr.bf16.mxu0 %v1459
  %2090 = vmatpush1.bf16.msra.mxu0 %v1458
  %2091 = vmatprep.subr.bf16.mxu0 %v1461
  %2092 = vmatpush1.bf16.msra.mxu0 %v1460
  %2093 = vmatprep.subr.bf16.mxu0 %v1463
  %2094 = vmatpush1.bf16.msra.mxu0 %v1462
  %2095 = vmatprep.subr.bf16.mxu0 %v1465
  %2096 = vmatpush1.bf16.msra.mxu0 %v1464
  %2097 = vmatprep.subr.bf16.mxu0 %v1467
  %2098 = vmatpush1.bf16.msra.mxu0 %v1466
  %2099 = vmatprep.subr.bf16.mxu0 %v1469
  %2100 = vmatpush1.bf16.msra.mxu0 %v1468
  %2101 = vmatprep.subr.bf16.mxu0 %v1471
  %2102 = vmatpush1.bf16.msra.mxu0 %v1470
  %2103 = vmatprep.mubr.bf16.mxu0 %v391
  %2104 = vmatmul.mubr.bf16.gmra.mrb[0].mxu0 %v390
  %v2105 = vpop.f32.mrb[0].mxu0
  %v2106 = vadd.f32 %v2063, %v2105
  %v2107 = vpop.f32.mrb[0].mxu0
  %v2108 = vadd.f32 %v2065, %v2107
  %v2109 = vpop.f32.mrb[0].mxu0
  %v2110 = vadd.f32 %v2067, %v2109
  %v2111 = vpop.f32.mrb[0].mxu0
  %v2112 = vadd.f32 %v2069, %v2111
  %2113 = vdwg.mxu0
  %2114 = vmatprep.subr.bf16.mxu0 %v1473
  %2115 = vmatpush1.bf16.msra.mxu0 %v1472
  %2116 = vmatprep.subr.bf16.mxu0 %v1475
  %2117 = vmatpush1.bf16.msra.mxu0 %v1474
  %2118 = vmatprep.subr.bf16.mxu0 %v1477
  %2119 = vmatpush1.bf16.msra.mxu0 %v1476
  %2120 = vmatprep.subr.bf16.mxu0 %v1479
  %2121 = vmatpush1.bf16.msra.mxu0 %v1478
  %2122 = vmatprep.subr.bf16.mxu0 %v1481
  %2123 = vmatpush1.bf16.msra.mxu0 %v1480
  %2124 = vmatprep.subr.bf16.mxu0 %v1483
  %2125 = vmatpush1.bf16.msra.mxu0 %v1482
  %2126 = vmatprep.subr.bf16.mxu0 %v1485
  %2127 = vmatpush1.bf16.msra.mxu0 %v1484
  %2128 = vmatprep.subr.bf16.mxu0 %v1487
  %2129 = vmatpush1.bf16.msra.mxu0 %v1486
  %2130 = vmatprep.subr.bf16.mxu0 %v1489
  %2131 = vmatpush1.bf16.msra.mxu0 %v1488
  %2132 = vmatprep.subr.bf16.mxu0 %v1491
  %2133 = vmatpush1.bf16.msra.mxu0 %v1490
  %2134 = vmatprep.subr.bf16.mxu0 %v1493
  %2135 = vmatpush1.bf16.msra.mxu0 %v1492
  %2136 = vmatprep.subr.bf16.mxu0 %v1495
  %2137 = vmatpush1.bf16.msra.mxu0 %v1494
  %2138 = vmatprep.subr.bf16.mxu0 %v1497
  %2139 = vmatpush1.bf16.msra.mxu0 %v1496
  %2140 = vmatprep.subr.bf16.mxu0 %v1499
  %2141 = vmatpush1.bf16.msra.mxu0 %v1498
  %2142 = vmatprep.subr.bf16.mxu0 %v1501
  %2143 = vmatpush1.bf16.msra.mxu0 %v1500
  %2144 = vmatprep.subr.bf16.mxu0 %v1503
  %2145 = vmatpush1.bf16.msra.mxu0 %v1502
  %2146 = vmatprep.mubr.bf16.mxu0 %v393
  %2147 = vmatmul.mubr.bf16.gmra.mrb[0].mxu0 %v392
  %v2148 = vpop.f32.mrb[0].mxu0
  %v2149 = vadd.f32 %v2106, %v2148
  %v2150 = vpop.f32.mrb[0].mxu0
  %v2151 = vadd.f32 %v2108, %v2150
  %v2152 = vpop.f32.mrb[0].mxu0
  %v2153 = vadd.f32 %v2110, %v2152
  %v2154 = vpop.f32.mrb[0].mxu0
  %v2155 = vadd.f32 %v2112, %v2154
  %2156 = vdwg.mxu0
  %2157 = vmatprep.subr.bf16.mxu0 %v1505
  %2158 = vmatpush1.bf16.msra.mxu0 %v1504
  %2159 = vmatprep.subr.bf16.mxu0 %v1507
  %2160 = vmatpush1.bf16.msra.mxu0 %v1506
  %2161 = vmatprep.subr.bf16.mxu0 %v1509
  %2162 = vmatpush1.bf16.msra.mxu0 %v1508
  %2163 = vmatprep.subr.bf16.mxu0 %v1511
  %2164 = vmatpush1.bf16.msra.mxu0 %v1510
  %2165 = vmatprep.subr.bf16.mxu0 %v1513
  %2166 = vmatpush1.bf16.msra.mxu0 %v1512
  %2167 = vmatprep.subr.bf16.mxu0 %v1515
  %2168 = vmatpush1.bf16.msra.mxu0 %v1514
  %2169 = vmatprep.subr.bf16.mxu0 %v1517
  %2170 = vmatpush1.bf16.msra.mxu0 %v1516
  %2171 = vmatprep.subr.bf16.mxu0 %v1519
  %2172 = vmatpush1.bf16.msra.mxu0 %v1518
  %2173 = vmatprep.subr.bf16.mxu0 %v1521
  %2174 = vmatpush1.bf16.msra.mxu0 %v1520
  %2175 = vmatprep.subr.bf16.mxu0 %v1523
  %2176 = vmatpush1.bf16.msra.mxu0 %v1522
  %2177 = vmatprep.subr.bf16.mxu0 %v1525
  %2178 = vmatpush1.bf16.msra.mxu0 %v1524
  %2179 = vmatprep.subr.bf16.mxu0 %v1527
  %2180 = vmatpush1.bf16.msra.mxu0 %v1526
  %2181 = vmatprep.subr.bf16.mxu0 %v1529
  %2182 = vmatpush1.bf16.msra.mxu0 %v1528
  %2183 = vmatprep.subr.bf16.mxu0 %v1531
  %2184 = vmatpush1.bf16.msra.mxu0 %v1530
  %2185 = vmatprep.subr.bf16.mxu0 %v1533
  %2186 = vmatpush1.bf16.msra.mxu0 %v1532
  %2187 = vmatprep.subr.bf16.mxu0 %v1535
  %2188 = vmatpush1.bf16.msra.mxu0 %v1534
  %2189 = vmatprep.mubr.bf16.mxu0 %v395
  %2190 = vmatmul.mubr.bf16.gmra.mrb[0].mxu0 %v394
  %v2191 = vpop.f32.mrb[0].mxu0
  %v2192 = vadd.f32 %v2149, %v2191
  %v2193 = vpop.f32.mrb[0].mxu0
  %v2194 = vadd.f32 %v2151, %v2193
  %v2195 = vpop.f32.mrb[0].mxu0
  %v2196 = vadd.f32 %v2153, %v2195
  %v2197 = vpop.f32.mrb[0].mxu0
  %v2198 = vadd.f32 %v2155, %v2197
  %2199 = vdwg.mxu0
  %2200 = vmatprep.subr.bf16.mxu0 %v1537
  %2201 = vmatpush1.bf16.msra.mxu0 %v1536
  %2202 = vmatprep.subr.bf16.mxu0 %v1539
  %2203 = vmatpush1.bf16.msra.mxu0 %v1538
  %2204 = vmatprep.subr.bf16.mxu0 %v1541
  %2205 = vmatpush1.bf16.msra.mxu0 %v1540
  %2206 = vmatprep.subr.bf16.mxu0 %v1543
  %2207 = vmatpush1.bf16.msra.mxu0 %v1542
  %2208 = vmatprep.subr.bf16.mxu0 %v1545
  %2209 = vmatpush1.bf16.msra.mxu0 %v1544
  %2210 = vmatprep.subr.bf16.mxu0 %v1547
  %2211 = vmatpush1.bf16.msra.mxu0 %v1546
  %2212 = vmatprep.subr.bf16.mxu0 %v1549
  %2213 = vmatpush1.bf16.msra.mxu0 %v1548
  %2214 = vmatprep.subr.bf16.mxu0 %v1551
  %2215 = vmatpush1.bf16.msra.mxu0 %v1550
  %2216 = vmatprep.subr.bf16.mxu0 %v1553
  %2217 = vmatpush1.bf16.msra.mxu0 %v1552
  %2218 = vmatprep.subr.bf16.mxu0 %v1555
  %2219 = vmatpush1.bf16.msra.mxu0 %v1554
  %2220 = vmatprep.subr.bf16.mxu0 %v1557
  %2221 = vmatpush1.bf16.msra.mxu0 %v1556
  %2222 = vmatprep.subr.bf16.mxu0 %v1559
  %2223 = vmatpush1.bf16.msra.mxu0 %v1558
  %2224 = vmatprep.subr.bf16.mxu0 %v1561
  %2225 = vmatpush1.bf16.msra.mxu0 %v1560
  %2226 = vmatprep.subr.bf16.mxu0 %v1563
  %2227 = vmatpush1.bf16.msra.mxu0 %v1562
  %2228 = vmatprep.subr.bf16.mxu0 %v1565
  %2229 = vmatpush1.bf16.msra.mxu0 %v1564
  %2230 = vmatprep.subr.bf16.mxu0 %v1567
  %2231 = vmatpush1.bf16.msra.mxu0 %v1566
  %2232 = vmatprep.mubr.bf16.mxu0 %v397
  %2233 = vmatmul.mubr.bf16.gmra.mrb[0].mxu0 %v396
  %v2234 = vpop.f32.mrb[0].mxu0
  %v2235 = vadd.f32 %v2192, %v2234
  %v2236 = vpop.f32.mrb[0].mxu0
  %v2237 = vadd.f32 %v2194, %v2236
  %v2238 = vpop.f32.mrb[0].mxu0
  %v2239 = vadd.f32 %v2196, %v2238
  %v2240 = vpop.f32.mrb[0].mxu0
  %v2241 = vadd.f32 %v2198, %v2240
  %2242 = vdwg.mxu0
  %v2243 = vld [vmem:[%s2] sm:$0x3]
  %v2244 = vld [vmem:[%s3] sm:$0x3]
  %v2245 = vld [vmem:[%s4] sm:$0xff]
  %v2246 = vld [vmem:[%s4 + $0x8] sm:$0xff]
  %v2247 = vld [vmem:[%s4 + $0x10] sm:$0xff]
  %v2248 = vld [vmem:[%s4 + $0x18] sm:$0xff]
  %v2250 = vlaneseq
  %v2251 = vshrl.u32 %v2250, 7
  %v2252 = vsub.s32 0, %v2251
  %v2253 = vrot.slane %v2243, %v2252
  %v2254 = vlaneseq
  %v2255 = vshrl.u32 %v2254, 7
  %v2256 = vsub.s32 1, %v2255
  %v2257 = vrot.slane %v2243, %v2256
  %v2260 = vmul.f32 %v2235, %v2253
  %v2261 = vmul.f32 %v2237, %v2257
  %v2262 = vmul.f32 %v2239, %v2253
  %v2263 = vmul.f32 %v2241, %v2257
  %v2265 = vlaneseq
  %v2266 = vshrl.u32 %v2265, 7
  %v2267 = vsub.s32 0, %v2266
  %v2268 = vrot.slane %v2244, %v2267
  %v2269 = vlaneseq
  %v2270 = vshrl.u32 %v2269, 7
  %v2271 = vsub.s32 1, %v2270
  %v2272 = vrot.slane %v2244, %v2271
  %v2275 = vadd.f32 %v2260, %v2268
  %v2276 = vadd.f32 %v2261, %v2272
  %v2277 = vadd.f32 %v2262, %v2268
  %v2278 = vadd.f32 %v2263, %v2272
  %v2279 = vadd.f32 %v2275, %v2245
  %v2280 = vadd.f32 %v2276, %v2246
  %v2281 = vadd.f32 %v2277, %v2247
  %v2282 = vadd.f32 %v2278, %v2248
  %v2283 = vmax.f32 %v2279, 0.0
  %v2284 = vmax.f32 %v2280, 0.0
  %v2285 = vmax.f32 %v2281, 0.0
  %v2286 = vmax.f32 %v2282, 0.0
  %2287 = vst [vmem:[%s5] sm:$0xff] %v2283
  %2288 = vst [vmem:[%s5 + $0x8] sm:$0xff] %v2284
  %2289 = vst [vmem:[%s5 + $0x10] sm:$0xff] %v2285
  %2290 = vst [vmem:[%s5 + $0x18] sm:$0xff] %v2286
  // Predicated region
  $region22: #{battlefield_feature.18} parent=0 // pred_check
    _
  $region23: #{battlefield_feature.18} parent=0 // pred_check_branch
    %2292 = sbr.rel (0) target = $region25
  $region24: #{battlefield_feature.18} parent=0 // pred_region
    _
  $region25: #{battlefield_feature.18} parent=0 // pred_fallthru
    _
  // Predicated region
  $region26: #{battlefield_feature.18} parent=0 // pred_check
    _
  $region27: #{battlefield_feature.18} parent=0 // pred_check_branch
    %2294 = sbr.rel (0) target = $region29
  $region28: #{battlefield_feature.18} parent=0 // pred_region
    _
  $region29: #{battlefield_feature.18} parent=0 // pred_fallthru
    _

// kernel: battlefield_feature.19
$region0: #{battlefield_feature.19}
  #allocation0 [shape = 'u32[]', space=smem, size = 0x4, offset = 0x4, fixed_abs, tag = 'smem constant byte address 0x4 - core index']
  #allocation1 [shape = 'u32[144,128]{1,0:T(1,128)}', space=vmem, size = 0x12000, scoped, tag = 'internal scratch']
  %s0 = inlined_call_operand.vmem [shape: bf16[16,2304], index: 0, kind: input, shape index: {}]
  %s1 = inlined_call_operand.vmem [shape: bf16[2304,128], index: 1, kind: input, shape index: {}]
  %s2 = inlined_call_operand.vmem [shape: f32[1,128], index: 2, kind: input, shape index: {}, may-alias: {2,4}]
  %s3 = inlined_call_operand.vmem [shape: f32[1,128], index: 3, kind: input, shape index: {}]
  %s4 = inlined_call_operand.vmem [shape: f32[1,128], index: 4, kind: input, shape index: {}, may-alias: {2,4}]
  %s5 = inlined_call_operand.vmem [shape: f32[16,128], index: 5, kind: output, shape index: {}]
  %s6 = sld [smem:[#allocation0]]
  $region30: #{battlefield_feature.19} parent=0
    _
  %s8 = ssub.s32 1, %s6
  %s9 = scalar_select 0, %s8, %s6
  // Predicated region
  $region2: #{battlefield_feature.19} parent=0 // pred_check
    _
  $region3: #{battlefield_feature.19} parent=0 // pred_check_branch
    %11 = sbr.rel (0) target = $region5
  $region4: #{battlefield_feature.19} parent=0 // pred_region
    _
  $region5: #{battlefield_feature.19} parent=0 // pred_fallthru
    _
  // Predicated region
  $region6: #{battlefield_feature.19} parent=0 // pred_check
    _
  $region7: #{battlefield_feature.19} parent=0 // pred_check_branch
    %13 = sbr.rel (0) target = $region9
  $region8: #{battlefield_feature.19} parent=0 // pred_region
    _
  $region9: #{battlefield_feature.19} parent=0 // pred_fallthru
    _
  // Predicated region
  $region10: #{battlefield_feature.19} parent=0 // pred_check
    _
  $region11: #{battlefield_feature.19} parent=0 // pred_check_branch
    %15 = sbr.rel (0) target = $region13
  $region12: #{battlefield_feature.19} parent=0 // pred_region
    _
  $region13: #{battlefield_feature.19} parent=0 // pred_fallthru
    _
  // Predicated region
  $region14: #{battlefield_feature.19} parent=0 // pred_check
    _
  $region15: #{battlefield_feature.19} parent=0 // pred_check_branch
    %17 = sbr.rel (0) target = $region17
  $region16: #{battlefield_feature.19} parent=0 // pred_region
    _
  $region17: #{battlefield_feature.19} parent=0 // pred_fallthru
    _
  // Predicated region
  $region18: #{battlefield_feature.19} parent=0 // pred_check
    _
  $region19: #{battlefield_feature.19} parent=0 // pred_check_branch
    %19 = sbr.rel (0) target = $region21
  $region20: #{battlefield_feature.19} parent=0 // pred_region
    _
  $region21: #{battlefield_feature.19} parent=0 // pred_fallthru
    _
  %v21 = vld [vmem:[%s0] sm:$0xff]
  %v22 = vld [vmem:[%s0 + $0x8] sm:$0xff]
  %v23 = vld [vmem:[%s0 + $0x10] sm:$0xff]
  %v24 = vld [vmem:[%s0 + $0x18] sm:$0xff]
  %v25 = vld [vmem:[%s0 + $0x20] sm:$0xff]
  %v26 = vld [vmem:[%s0 + $0x28] sm:$0xff]
  %v27 = vld [vmem:[%s0 + $0x30] sm:$0xff]
  %v28 = vld [vmem:[%s0 + $0x38] sm:$0xff]
  %v29 = vld [vmem:[%s0 + $0x40] sm:$0xff]
  %v30 = vld [vmem:[%s0 + $0x48] sm:$0xff]
  %v31 = vld [vmem:[%s0 + $0x50] sm:$0xff]
  %v32 = vld [vmem:[%s0 + $0x58] sm:$0xff]
  %v33 = vld [vmem:[%s0 + $0x60] sm:$0xff]
  %v34 = vld [vmem:[%s0 + $0x68] sm:$0xff]
  %v35 = vld [vmem:[%s0 + $0x70] sm:$0xff]
  %v36 = vld [vmem:[%s0 + $0x78] sm:$0xff]
  %v37 = vld [vmem:[%s0 + $0x80] sm:$0xff]
  %v38 = vld [vmem:[%s0 + $0x88] sm:$0xff]
  %v39 = vld [vmem:[%s1] sm:$0xf]
  %v40 = vld [vmem:[%s1 + $0x4] sm:$0xf]
  %v41 = vld [vmem:[%s1 + $0x8] sm:$0xf]
  %v42 = vld [vmem:[%s1 + $0xc] sm:$0xf]
  %v43 = vld [vmem:[%s1 + $0x10] sm:$0xf]
  %v44 = vld [vmem:[%s1 + $0x14] sm:$0xf]
  %v45 = vld [vmem:[%s1 + $0x18] sm:$0xf]
  %v46 = vld [vmem:[%s1 + $0x1c] sm:$0xf]
  %v47 = vld [vmem:[%s1 + $0x20] sm:$0xf]
  %v48 = vld [vmem:[%s1 + $0x24] sm:$0xf]
  %v49 = vld [vmem:[%s1 + $0x28] sm:$0xf]
  %v50 = vld [vmem:[%s1 + $0x2c] sm:$0xf]
  %v51 = vld [vmem:[%s1 + $0x30] sm:$0xf]
  %v52 = vld [vmem:[%s1 + $0x34] sm:$0xf]
  %v53 = vld [vmem:[%s1 + $0x38] sm:$0xf]
  %v54 = vld [vmem:[%s1 + $0x3c] sm:$0xf]
  %v55 = vld [vmem:[%s1 + $0x40] sm:$0xf]
  %v56 = vld [vmem:[%s1 + $0x44] sm:$0xf]
  %v57 = vld [vmem:[%s1 + $0x48] sm:$0xf]
  %v58 = vld [vmem:[%s1 + $0x4c] sm:$0xf]
  %v59 = vld [vmem:[%s1 + $0x50] sm:$0xf]
  %v60 = vld [vmem:[%s1 + $0x54] sm:$0xf]
  %v61 = vld [vmem:[%s1 + $0x58] sm:$0xf]
  %v62 = vld [vmem:[%s1 + $0x5c] sm:$0xf]
  %v63 = vld [vmem:[%s1 + $0x60] sm:$0xf]
  %v64 = vld [vmem:[%s1 + $0x64] sm:$0xf]
  %v65 = vld [vmem:[%s1 + $0x68] sm:$0xf]
  %v66 = vld [vmem:[%s1 + $0x6c] sm:$0xf]
  %v67 = vld [vmem:[%s1 + $0x70] sm:$0xf]
  %v68 = vld [vmem:[%s1 + $0x74] sm:$0xf]
  %v69 = vld [vmem:[%s1 + $0x78] sm:$0xf]
  %v70 = vld [vmem:[%s1 + $0x7c] sm:$0xf]
  %v71 = vld [vmem:[%s1 + $0x80] sm:$0xf]
  %v72 = vld [vmem:[%s1 + $0x84] sm:$0xf]
  %v73 = vld [vmem:[%s1 + $0x88] sm:$0xf]
  %v74 = vld [vmem:[%s1 + $0x8c] sm:$0xf]
  %v75 = vld [vmem:[%s1 + $0x90] sm:$0xf]
  %v76 = vld [vmem:[%s1 + $0x94] sm:$0xf]
  %v77 = vld [vmem:[%s1 + $0x98] sm:$0xf]
  %v78 = vld [vmem:[%s1 + $0x9c] sm:$0xf]
  %v79 = vld [vmem:[%s1 + $0xa0] sm:$0xf]
  %v80 = vld [vmem:[%s1 + $0xa4] sm:$0xf]
  %v81 = vld [vmem:[%s1 + $0xa8] sm:$0xf]
  %v82 = vld [vmem:[%s1 + $0xac] sm:$0xf]
  %v83 = vld [vmem:[%s1 + $0xb0] sm:$0xf]
  %v84 = vld [vmem:[%s1 + $0xb4] sm:$0xf]
  %v85 = vld [vmem:[%s1 + $0xb8] sm:$0xf]
  %v86 = vld [vmem:[%s1 + $0xbc] sm:$0xf]
  %v87 = vld [vmem:[%s1 + $0xc0] sm:$0xf]
  %v88 = vld [vmem:[%s1 + $0xc4] sm:$0xf]
  %v89 = vld [vmem:[%s1 + $0xc8] sm:$0xf]
  %v90 = vld [vmem:[%s1 + $0xcc] sm:$0xf]
  %v91 = vld [vmem:[%s1 + $0xd0] sm:$0xf]
  %v92 = vld [vmem:[%s1 + $0xd4] sm:$0xf]
  %v93 = vld [vmem:[%s1 + $0xd8] sm:$0xf]
  %v94 = vld [vmem:[%s1 + $0xdc] sm:$0xf]
  %v95 = vld [vmem:[%s1 + $0xe0] sm:$0xf]
  %v96 = vld [vmem:[%s1 + $0xe4] sm:$0xf]
  %v97 = vld [vmem:[%s1 + $0xe8] sm:$0xf]
  %v98 = vld [vmem:[%s1 + $0xec] sm:$0xf]
  %v99 = vld [vmem:[%s1 + $0xf0] sm:$0xf]
  %v100 = vld [vmem:[%s1 + $0xf4] sm:$0xf]
  %v101 = vld [vmem:[%s1 + $0xf8] sm:$0xf]
  %v102 = vld [vmem:[%s1 + $0xfc] sm:$0xf]
  %v103 = vld [vmem:[%s1 + $0x100] sm:$0xf]
  %v104 = vld [vmem:[%s1 + $0x104] sm:$0xf]
  %v105 = vld [vmem:[%s1 + $0x108] sm:$0xf]
  %v106 = vld [vmem:[%s1 + $0x10c] sm:$0xf]
  %v107 = vld [vmem:[%s1 + $0x110] sm:$0xf]
  %v108 = vld [vmem:[%s1 + $0x114] sm:$0xf]
  %v109 = vld [vmem:[%s1 + $0x118] sm:$0xf]
  %v110 = vld [vmem:[%s1 + $0x11c] sm:$0xf]
  %v111 = vld [vmem:[%s1 + $0x120] sm:$0xf]
  %v112 = vld [vmem:[%s1 + $0x124] sm:$0xf]
  %v113 = vld [vmem:[%s1 + $0x128] sm:$0xf]
  %v114 = vld [vmem:[%s1 + $0x12c] sm:$0xf]
  %v115 = vld [vmem:[%s1 + $0x130] sm:$0xf]
  %v116 = vld [vmem:[%s1 + $0x134] sm:$0xf]
  %v117 = vld [vmem:[%s1 + $0x138] sm:$0xf]
  %v118 = vld [vmem:[%s1 + $0x13c] sm:$0xf]
  %v119 = vld [vmem:[%s1 + $0x140] sm:$0xf]
  %v120 = vld [vmem:[%s1 + $0x144] sm:$0xf]
  %v121 = vld [vmem:[%s1 + $0x148] sm:$0xf]
  %v122 = vld [vmem:[%s1 + $0x14c] sm:$0xf]
  %v123 = vld [vmem:[%s1 + $0x150] sm:$0xf]
  %v124 = vld [vmem:[%s1 + $0x154] sm:$0xf]
  %v125 = vld [vmem:[%s1 + $0x158] sm:$0xf]
  %v126 = vld [vmem:[%s1 + $0x15c] sm:$0xf]
  %v127 = vld [vmem:[%s1 + $0x160] sm:$0xf]
  %v128 = vld [vmem:[%s1 + $0x164] sm:$0xf]
  %v129 = vld [vmem:[%s1 + $0x168] sm:$0xf]
  %v130 = vld [vmem:[%s1 + $0x16c] sm:$0xf]
  %v131 = vld [vmem:[%s1 + $0x170] sm:$0xf]
  %v132 = vld [vmem:[%s1 + $0x174] sm:$0xf]
  %v133 = vld [vmem:[%s1 + $0x178] sm:$0xf]
  %v134 = vld [vmem:[%s1 + $0x17c] sm:$0xf]
  %v135 = vld [vmem:[%s1 + $0x180] sm:$0xf]
  %v136 = vld [vmem:[%s1 + $0x184] sm:$0xf]
  %v137 = vld [vmem:[%s1 + $0x188] sm:$0xf]
  %v138 = vld [vmem:[%s1 + $0x18c] sm:$0xf]
  %v139 = vld [vmem:[%s1 + $0x190] sm:$0xf]
  %v140 = vld [vmem:[%s1 + $0x194] sm:$0xf]
  %v141 = vld [vmem:[%s1 + $0x198] sm:$0xf]
  %v142 = vld [vmem:[%s1 + $0x19c] sm:$0xf]
  %v143 = vld [vmem:[%s1 + $0x1a0] sm:$0xf]
  %v144 = vld [vmem:[%s1 + $0x1a4] sm:$0xf]
  %v145 = vld [vmem:[%s1 + $0x1a8] sm:$0xf]
  %v146 = vld [vmem:[%s1 + $0x1ac] sm:$0xf]
  %v147 = vld [vmem:[%s1 + $0x1b0] sm:$0xf]
  %v148 = vld [vmem:[%s1 + $0x1b4] sm:$0xf]
  %v149 = vld [vmem:[%s1 + $0x1b8] sm:$0xf]
  %v150 = vld [vmem:[%s1 + $0x1bc] sm:$0xf]
  %v151 = vld [vmem:[%s1 + $0x1c0] sm:$0xf]
  %v152 = vld [vmem:[%s1 + $0x1c4] sm:$0xf]
  %v153 = vld [vmem:[%s1 + $0x1c8] sm:$0xf]
  %v154 = vld [vmem:[%s1 + $0x1cc] sm:$0xf]
  %v155 = vld [vmem:[%s1 + $0x1d0] sm:$0xf]
  %v156 = vld [vmem:[%s1 + $0x1d4] sm:$0xf]
  %v157 = vld [vmem:[%s1 + $0x1d8] sm:$0xf]
  %v158 = vld [vmem:[%s1 + $0x1dc] sm:$0xf]
  %v159 = vld [vmem:[%s1 + $0x1e0] sm:$0xf]
  %v160 = vld [vmem:[%s1 + $0x1e4] sm:$0xf]
  %v161 = vld [vmem:[%s1 + $0x1e8] sm:$0xf]
  %v162 = vld [vmem:[%s1 + $0x1ec] sm:$0xf]
  %v163 = vld [vmem:[%s1 + $0x1f0] sm:$0xf]
  %v164 = vld [vmem:[%s1 + $0x1f4] sm:$0xf]
  %v165 = vld [vmem:[%s1 + $0x1f8] sm:$0xf]
  %v166 = vld [vmem:[%s1 + $0x1fc] sm:$0xf]
  %v167 = vld [vmem:[%s1 + $0x200] sm:$0xf]
  %v168 = vld [vmem:[%s1 + $0x204] sm:$0xf]
  %v169 = vld [vmem:[%s1 + $0x208] sm:$0xf]
  %v170 = vld [vmem:[%s1 + $0x20c] sm:$0xf]
  %v171 = vld [vmem:[%s1 + $0x210] sm:$0xf]
  %v172 = vld [vmem:[%s1 + $0x214] sm:$0xf]
  %v173 = vld [vmem:[%s1 + $0x218] sm:$0xf]
  %v174 = vld [vmem:[%s1 + $0x21c] sm:$0xf]
  %v175 = vld [vmem:[%s1 + $0x220] sm:$0xf]
  %v176 = vld [vmem:[%s1 + $0x224] sm:$0xf]
  %v177 = vld [vmem:[%s1 + $0x228] sm:$0xf]
  %v178 = vld [vmem:[%s1 + $0x22c] sm:$0xf]
  %v179 = vld [vmem:[%s1 + $0x230] sm:$0xf]
  %v180 = vld [vmem:[%s1 + $0x234] sm:$0xf]
  %v181 = vld [vmem:[%s1 + $0x238] sm:$0xf]
  %v182 = vld [vmem:[%s1 + $0x23c] sm:$0xf]
  %v183 = vld [vmem:[%s1 + $0x240] sm:$0xf]
  %v184 = vld [vmem:[%s1 + $0x244] sm:$0xf]
  %v185 = vld [vmem:[%s1 + $0x248] sm:$0xf]
  %v186 = vld [vmem:[%s1 + $0x24c] sm:$0xf]
  %v187 = vld [vmem:[%s1 + $0x250] sm:$0xf]
  %v188 = vld [vmem:[%s1 + $0x254] sm:$0xf]
  %v189 = vld [vmem:[%s1 + $0x258] sm:$0xf]
  %v190 = vld [vmem:[%s1 + $0x25c] sm:$0xf]
  %v191 = vld [vmem:[%s1 + $0x260] sm:$0xf]
  %v192 = vld [vmem:[%s1 + $0x264] sm:$0xf]
  %v193 = vld [vmem:[%s1 + $0x268] sm:$0xf]
  %v194 = vld [vmem:[%s1 + $0x26c] sm:$0xf]
  %v195 = vld [vmem:[%s1 + $0x270] sm:$0xf]
  %v196 = vld [vmem:[%s1 + $0x274] sm:$0xf]
  %v197 = vld [vmem:[%s1 + $0x278] sm:$0xf]
  %v198 = vld [vmem:[%s1 + $0x27c] sm:$0xf]
  %v199 = vld [vmem:[%s1 + $0x280] sm:$0xf]
  %v200 = vld [vmem:[%s1 + $0x284] sm:$0xf]
  %v201 = vld [vmem:[%s1 + $0x288] sm:$0xf]
  %v202 = vld [vmem:[%s1 + $0x28c] sm:$0xf]
  %v203 = vld [vmem:[%s1 + $0x290] sm:$0xf]
  %v204 = vld [vmem:[%s1 + $0x294] sm:$0xf]
  %v205 = vld [vmem:[%s1 + $0x298] sm:$0xf]
  %v206 = vld [vmem:[%s1 + $0x29c] sm:$0xf]
  %v207 = vld [vmem:[%s1 + $0x2a0] sm:$0xf]
  %v208 = vld [vmem:[%s1 + $0x2a4] sm:$0xf]
  %v209 = vld [vmem:[%s1 + $0x2a8] sm:$0xf]
  %v210 = vld [vmem:[%s1 + $0x2ac] sm:$0xf]
  %v211 = vld [vmem:[%s1 + $0x2b0] sm:$0xf]
  %v212 = vld [vmem:[%s1 + $0x2b4] sm:$0xf]
  %v213 = vld [vmem:[%s1 + $0x2b8] sm:$0xf]
  %v214 = vld [vmem:[%s1 + $0x2bc] sm:$0xf]
  %v215 = vld [vmem:[%s1 + $0x2c0] sm:$0xf]
  %v216 = vld [vmem:[%s1 + $0x2c4] sm:$0xf]
  %v217 = vld [vmem:[%s1 + $0x2c8] sm:$0xf]
  %v218 = vld [vmem:[%s1 + $0x2cc] sm:$0xf]
  %v219 = vld [vmem:[%s1 + $0x2d0] sm:$0xf]
  %v220 = vld [vmem:[%s1 + $0x2d4] sm:$0xf]
  %v221 = vld [vmem:[%s1 + $0x2d8] sm:$0xf]
  %v222 = vld [vmem:[%s1 + $0x2dc] sm:$0xf]
  %v223 = vld [vmem:[%s1 + $0x2e0] sm:$0xf]
  %v224 = vld [vmem:[%s1 + $0x2e4] sm:$0xf]
  %v225 = vld [vmem:[%s1 + $0x2e8] sm:$0xf]
  %v226 = vld [vmem:[%s1 + $0x2ec] sm:$0xf]
  %v227 = vld [vmem:[%s1 + $0x2f0] sm:$0xf]
  %v228 = vld [vmem:[%s1 + $0x2f4] sm:$0xf]
  %v229 = vld [vmem:[%s1 + $0x2f8] sm:$0xf]
  %v230 = vld [vmem:[%s1 + $0x2fc] sm:$0xf]
  %v231 = vld [vmem:[%s1 + $0x300] sm:$0xf]
  %v232 = vld [vmem:[%s1 + $0x304] sm:$0xf]
  %v233 = vld [vmem:[%s1 + $0x308] sm:$0xf]
  %v234 = vld [vmem:[%s1 + $0x30c] sm:$0xf]
  %v235 = vld [vmem:[%s1 + $0x310] sm:$0xf]
  %v236 = vld [vmem:[%s1 + $0x314] sm:$0xf]
  %v237 = vld [vmem:[%s1 + $0x318] sm:$0xf]
  %v238 = vld [vmem:[%s1 + $0x31c] sm:$0xf]
  %v239 = vld [vmem:[%s1 + $0x320] sm:$0xf]
  %v240 = vld [vmem:[%s1 + $0x324] sm:$0xf]
  %v241 = vld [vmem:[%s1 + $0x328] sm:$0xf]
  %v242 = vld [vmem:[%s1 + $0x32c] sm:$0xf]
  %v243 = vld [vmem:[%s1 + $0x330] sm:$0xf]
  %v244 = vld [vmem:[%s1 + $0x334] sm:$0xf]
  %v245 = vld [vmem:[%s1 + $0x338] sm:$0xf]
  %v246 = vld [vmem:[%s1 + $0x33c] sm:$0xf]
  %v247 = vld [vmem:[%s1 + $0x340] sm:$0xf]
  %v248 = vld [vmem:[%s1 + $0x344] sm:$0xf]
  %v249 = vld [vmem:[%s1 + $0x348] sm:$0xf]
  %v250 = vld [vmem:[%s1 + $0x34c] sm:$0xf]
  %v251 = vld [vmem:[%s1 + $0x350] sm:$0xf]
  %v252 = vld [vmem:[%s1 + $0x354] sm:$0xf]
  %v253 = vld [vmem:[%s1 + $0x358] sm:$0xf]
  %v254 = vld [vmem:[%s1 + $0x35c] sm:$0xf]
  %v255 = vld [vmem:[%s1 + $0x360] sm:$0xf]
  %v256 = vld [vmem:[%s1 + $0x364] sm:$0xf]
  %v257 = vld [vmem:[%s1 + $0x368] sm:$0xf]
  %v258 = vld [vmem:[%s1 + $0x36c] sm:$0xf]
  %v259 = vld [vmem:[%s1 + $0x370] sm:$0xf]
  %v260 = vld [vmem:[%s1 + $0x374] sm:$0xf]
  %v261 = vld [vmem:[%s1 + $0x378] sm:$0xf]
  %v262 = vld [vmem:[%s1 + $0x37c] sm:$0xf]
  %v263 = vld [vmem:[%s1 + $0x380] sm:$0xf]
  %v264 = vld [vmem:[%s1 + $0x384] sm:$0xf]
  %v265 = vld [vmem:[%s1 + $0x388] sm:$0xf]
  %v266 = vld [vmem:[%s1 + $0x38c] sm:$0xf]
  %v267 = vld [vmem:[%s1 + $0x390] sm:$0xf]
  %v268 = vld [vmem:[%s1 + $0x394] sm:$0xf]
  %v269 = vld [vmem:[%s1 + $0x398] sm:$0xf]
  %v270 = vld [vmem:[%s1 + $0x39c] sm:$0xf]
  %v271 = vld [vmem:[%s1 + $0x3a0] sm:$0xf]
  %v272 = vld [vmem:[%s1 + $0x3a4] sm:$0xf]
  %v273 = vld [vmem:[%s1 + $0x3a8] sm:$0xf]
  %v274 = vld [vmem:[%s1 + $0x3ac] sm:$0xf]
  %v275 = vld [vmem:[%s1 + $0x3b0] sm:$0xf]
  %v276 = vld [vmem:[%s1 + $0x3b4] sm:$0xf]
  %v277 = vld [vmem:[%s1 + $0x3b8] sm:$0xf]
  %v278 = vld [vmem:[%s1 + $0x3bc] sm:$0xf]
  %v279 = vld [vmem:[%s1 + $0x3c0] sm:$0xf]
  %v280 = vld [vmem:[%s1 + $0x3c4] sm:$0xf]
  %v281 = vld [vmem:[%s1 + $0x3c8] sm:$0xf]
  %v282 = vld [vmem:[%s1 + $0x3cc] sm:$0xf]
  %v283 = vld [vmem:[%s1 + $0x3d0] sm:$0xf]
  %v284 = vld [vmem:[%s1 + $0x3d4] sm:$0xf]
  %v285 = vld [vmem:[%s1 + $0x3d8] sm:$0xf]
  %v286 = vld [vmem:[%s1 + $0x3dc] sm:$0xf]
  %v287 = vld [vmem:[%s1 + $0x3e0] sm:$0xf]
  %v288 = vld [vmem:[%s1 + $0x3e4] sm:$0xf]
  %v289 = vld [vmem:[%s1 + $0x3e8] sm:$0xf]
  %v290 = vld [vmem:[%s1 + $0x3ec] sm:$0xf]
  %v291 = vld [vmem:[%s1 + $0x3f0] sm:$0xf]
  %v292 = vld [vmem:[%s1 + $0x3f4] sm:$0xf]
  %v293 = vld [vmem:[%s1 + $0x3f8] sm:$0xf]
  %v294 = vld [vmem:[%s1 + $0x3fc] sm:$0xf]
  %v295 = vld [vmem:[%s1 + $0x400] sm:$0xf]
  %v296 = vld [vmem:[%s1 + $0x404] sm:$0xf]
  %v297 = vld [vmem:[%s1 + $0x408] sm:$0xf]
  %v298 = vld [vmem:[%s1 + $0x40c] sm:$0xf]
  %v299 = vld [vmem:[%s1 + $0x410] sm:$0xf]
  %v300 = vld [vmem:[%s1 + $0x414] sm:$0xf]
  %v301 = vld [vmem:[%s1 + $0x418] sm:$0xf]
  %v302 = vld [vmem:[%s1 + $0x41c] sm:$0xf]
  %v303 = vld [vmem:[%s1 + $0x420] sm:$0xf]
  %v304 = vld [vmem:[%s1 + $0x424] sm:$0xf]
  %v305 = vld [vmem:[%s1 + $0x428] sm:$0xf]
  %v306 = vld [vmem:[%s1 + $0x42c] sm:$0xf]
  %v307 = vld [vmem:[%s1 + $0x430] sm:$0xf]
  %v308 = vld [vmem:[%s1 + $0x434] sm:$0xf]
  %v309 = vld [vmem:[%s1 + $0x438] sm:$0xf]
  %v310 = vld [vmem:[%s1 + $0x43c] sm:$0xf]
  %v311 = vld [vmem:[%s1 + $0x440] sm:$0xf]
  %v312 = vld [vmem:[%s1 + $0x444] sm:$0xf]
  %v313 = vld [vmem:[%s1 + $0x448] sm:$0xf]
  %v314 = vld [vmem:[%s1 + $0x44c] sm:$0xf]
  %v315 = vld [vmem:[%s1 + $0x450] sm:$0xf]
  %v316 = vld [vmem:[%s1 + $0x454] sm:$0xf]
  %v317 = vld [vmem:[%s1 + $0x458] sm:$0xf]
  %v318 = vld [vmem:[%s1 + $0x45c] sm:$0xf]
  %v319 = vld [vmem:[%s1 + $0x460] sm:$0xf]
  %v320 = vld [vmem:[%s1 + $0x464] sm:$0xf]
  %v321 = vld [vmem:[%s1 + $0x468] sm:$0xf]
  %v322 = vld [vmem:[%s1 + $0x46c] sm:$0xf]
  %v323 = vld [vmem:[%s1 + $0x470] sm:$0xf]
  %v324 = vld [vmem:[%s1 + $0x474] sm:$0xf]
  %v325 = vld [vmem:[%s1 + $0x478] sm:$0xf]
  %v326 = vld [vmem:[%s1 + $0x47c] sm:$0xf]
  %v345 = vunpack.c.l.b16 %v21
  %v346 = vunpack.c.h.b16 %v21
  %v347 = vunpack.c.l.b16 %v22
  %v348 = vunpack.c.h.b16 %v22
  %v349 = vunpack.c.l.b16 %v23
  %v350 = vunpack.c.h.b16 %v23
  %v351 = vunpack.c.l.b16 %v24
  %v352 = vunpack.c.h.b16 %v24
  %v353 = vunpack.c.l.b16 %v25
  %v354 = vunpack.c.h.b16 %v25
  %v355 = vunpack.c.l.b16 %v26
  %v356 = vunpack.c.h.b16 %v26
  %v357 = vunpack.c.l.b16 %v27
  %v358 = vunpack.c.h.b16 %v27
  %v359 = vunpack.c.l.b16 %v28
  %v360 = vunpack.c.h.b16 %v28
  %v361 = vunpack.c.l.b16 %v29
  %v362 = vunpack.c.h.b16 %v29
  %v363 = vunpack.c.l.b16 %v30
  %v364 = vunpack.c.h.b16 %v30
  %v365 = vunpack.c.l.b16 %v31
  %v366 = vunpack.c.h.b16 %v31
  %v367 = vunpack.c.l.b16 %v32
  %v368 = vunpack.c.h.b16 %v32
  %v369 = vunpack.c.l.b16 %v33
  %v370 = vunpack.c.h.b16 %v33
  %v371 = vunpack.c.l.b16 %v34
  %v372 = vunpack.c.h.b16 %v34
  %v373 = vunpack.c.l.b16 %v35
  %v374 = vunpack.c.h.b16 %v35
  %v375 = vunpack.c.l.b16 %v36
  %v376 = vunpack.c.h.b16 %v36
  %v377 = vunpack.c.l.b16 %v37
  %v378 = vunpack.c.h.b16 %v37
  %v379 = vunpack.c.l.b16 %v38
  %v380 = vunpack.c.h.b16 %v38
  %v381 = vpack.c.b16 %v363, %v345
  %v382 = vpack.c.b16 %v364, %v346
  %v383 = vpack.c.b16 %v365, %v347
  %v384 = vpack.c.b16 %v366, %v348
  %v385 = vpack.c.b16 %v367, %v349
  %v386 = vpack.c.b16 %v368, %v350
  %v387 = vpack.c.b16 %v369, %v351
  %v388 = vpack.c.b16 %v370, %v352
  %v389 = vpack.c.b16 %v371, %v353
  %v390 = vpack.c.b16 %v372, %v354
  %v391 = vpack.c.b16 %v373, %v355
  %v392 = vpack.c.b16 %v374, %v356
  %v393 = vpack.c.b16 %v375, %v357
  %v394 = vpack.c.b16 %v376, %v358
  %v395 = vpack.c.b16 %v377, %v359
  %v396 = vpack.c.b16 %v378, %v360
  %v397 = vpack.c.b16 %v379, %v361
  %v398 = vpack.c.b16 %v380, %v362
  %v705 = vunpack.c.l.b16 %v39
  %v706 = vunpack.c.l.b16 %v40
  %v707 = vunpack.c.l.b16 %v41
  %v708 = vunpack.c.l.b16 %v42
  %v709 = vunpack.c.l.b16 %v43
  %v710 = vunpack.c.l.b16 %v44
  %v711 = vunpack.c.l.b16 %v45
  %v712 = vunpack.c.l.b16 %v46
  %v713 = vunpack.c.l.b16 %v47
  %v714 = vunpack.c.l.b16 %v48
  %v715 = vunpack.c.l.b16 %v49
  %v716 = vunpack.c.l.b16 %v50
  %v717 = vunpack.c.l.b16 %v51
  %v718 = vunpack.c.l.b16 %v52
  %v719 = vunpack.c.l.b16 %v53
  %v720 = vunpack.c.l.b16 %v54
  %v721 = vunpack.c.l.b16 %v55
  %v722 = vunpack.c.l.b16 %v56
  %v723 = vunpack.c.l.b16 %v57
  %v724 = vunpack.c.l.b16 %v58
  %v725 = vunpack.c.l.b16 %v59
  %v726 = vunpack.c.l.b16 %v60
  %v727 = vunpack.c.l.b16 %v61
  %v728 = vunpack.c.l.b16 %v62
  %v729 = vunpack.c.l.b16 %v63
  %v730 = vunpack.c.l.b16 %v64
  %v731 = vunpack.c.l.b16 %v65
  %v732 = vunpack.c.l.b16 %v66
  %v733 = vunpack.c.l.b16 %v67
  %v734 = vunpack.c.l.b16 %v68
  %v735 = vunpack.c.l.b16 %v69
  %v736 = vunpack.c.l.b16 %v70
  %v737 = vunpack.c.l.b16 %v71
  %v738 = vunpack.c.l.b16 %v72
  %v739 = vunpack.c.l.b16 %v73
  %v740 = vunpack.c.l.b16 %v74
  %v741 = vunpack.c.l.b16 %v75
  %v742 = vunpack.c.l.b16 %v76
  %v743 = vunpack.c.l.b16 %v77
  %v744 = vunpack.c.l.b16 %v78
  %v745 = vunpack.c.l.b16 %v79
  %v746 = vunpack.c.l.b16 %v80
  %v747 = vunpack.c.l.b16 %v81
  %v748 = vunpack.c.l.b16 %v82
  %v749 = vunpack.c.l.b16 %v83
  %v750 = vunpack.c.l.b16 %v84
  %v751 = vunpack.c.l.b16 %v85
  %v752 = vunpack.c.l.b16 %v86
  %v753 = vunpack.c.l.b16 %v87
  %v754 = vunpack.c.l.b16 %v88
  %v755 = vunpack.c.l.b16 %v89
  %v756 = vunpack.c.l.b16 %v90
  %v757 = vunpack.c.l.b16 %v91
  %v758 = vunpack.c.l.b16 %v92
  %v759 = vunpack.c.l.b16 %v93
  %v760 = vunpack.c.l.b16 %v94
  %v761 = vunpack.c.l.b16 %v95
  %v762 = vunpack.c.l.b16 %v96
  %v763 = vunpack.c.l.b16 %v97
  %v764 = vunpack.c.l.b16 %v98
  %v765 = vunpack.c.l.b16 %v99
  %v766 = vunpack.c.l.b16 %v100
  %v767 = vunpack.c.l.b16 %v101
  %v768 = vunpack.c.l.b16 %v102
  %v769 = vunpack.c.l.b16 %v103
  %v770 = vunpack.c.l.b16 %v104
  %v771 = vunpack.c.l.b16 %v105
  %v772 = vunpack.c.l.b16 %v106
  %v773 = vunpack.c.l.b16 %v107
  %v774 = vunpack.c.l.b16 %v108
  %v775 = vunpack.c.l.b16 %v109
  %v776 = vunpack.c.l.b16 %v110
  %v777 = vunpack.c.l.b16 %v111
  %v778 = vunpack.c.l.b16 %v112
  %v779 = vunpack.c.l.b16 %v113
  %v780 = vunpack.c.l.b16 %v114
  %v781 = vunpack.c.l.b16 %v115
  %v782 = vunpack.c.l.b16 %v116
  %v783 = vunpack.c.l.b16 %v117
  %v784 = vunpack.c.l.b16 %v118
  %v785 = vunpack.c.l.b16 %v119
  %v786 = vunpack.c.l.b16 %v120
  %v787 = vunpack.c.l.b16 %v121
  %v788 = vunpack.c.l.b16 %v122
  %v789 = vunpack.c.l.b16 %v123
  %v790 = vunpack.c.l.b16 %v124
  %v791 = vunpack.c.l.b16 %v125
  %v792 = vunpack.c.l.b16 %v126
  %v793 = vunpack.c.l.b16 %v127
  %v794 = vunpack.c.l.b16 %v128
  %v795 = vunpack.c.l.b16 %v129
  %v796 = vunpack.c.l.b16 %v130
  %v797 = vunpack.c.l.b16 %v131
  %v798 = vunpack.c.l.b16 %v132
  %v799 = vunpack.c.l.b16 %v133
  %v800 = vunpack.c.l.b16 %v134
  %v801 = vunpack.c.l.b16 %v135
  %v802 = vunpack.c.l.b16 %v136
  %v803 = vunpack.c.l.b16 %v137
  %v804 = vunpack.c.l.b16 %v138
  %v805 = vunpack.c.l.b16 %v139
  %v806 = vunpack.c.l.b16 %v140
  %v807 = vunpack.c.l.b16 %v141
  %v808 = vunpack.c.l.b16 %v142
  %v809 = vunpack.c.l.b16 %v143
  %v810 = vunpack.c.l.b16 %v144
  %v811 = vunpack.c.l.b16 %v145
  %v812 = vunpack.c.l.b16 %v146
  %v813 = vunpack.c.l.b16 %v147
  %v814 = vunpack.c.l.b16 %v148
  %v815 = vunpack.c.l.b16 %v149
  %v816 = vunpack.c.l.b16 %v150
  %v817 = vunpack.c.l.b16 %v151
  %v818 = vunpack.c.l.b16 %v152
  %v819 = vunpack.c.l.b16 %v153
  %v820 = vunpack.c.l.b16 %v154
  %v821 = vunpack.c.l.b16 %v155
  %v822 = vunpack.c.l.b16 %v156
  %v823 = vunpack.c.l.b16 %v157
  %v824 = vunpack.c.l.b16 %v158
  %v825 = vunpack.c.l.b16 %v159
  %v826 = vunpack.c.l.b16 %v160
  %v827 = vunpack.c.l.b16 %v161
  %v828 = vunpack.c.l.b16 %v162
  %v829 = vunpack.c.l.b16 %v163
  %v830 = vunpack.c.l.b16 %v164
  %v831 = vunpack.c.l.b16 %v165
  %v832 = vunpack.c.l.b16 %v166
  %v833 = vunpack.c.l.b16 %v167
  %v834 = vunpack.c.l.b16 %v168
  %v835 = vunpack.c.l.b16 %v169
  %v836 = vunpack.c.l.b16 %v170
  %v837 = vunpack.c.l.b16 %v171
  %v838 = vunpack.c.l.b16 %v172
  %v839 = vunpack.c.l.b16 %v173
  %v840 = vunpack.c.l.b16 %v174
  %v841 = vunpack.c.l.b16 %v175
  %v842 = vunpack.c.l.b16 %v176
  %v843 = vunpack.c.l.b16 %v177
  %v844 = vunpack.c.l.b16 %v178
  %v845 = vunpack.c.l.b16 %v179
  %v846 = vunpack.c.l.b16 %v180
  %v847 = vunpack.c.l.b16 %v181
  %v848 = vunpack.c.l.b16 %v182
  %v849 = vunpack.c.l.b16 %v183
  %v850 = vunpack.c.l.b16 %v184
  %v851 = vunpack.c.l.b16 %v185
  %v852 = vunpack.c.l.b16 %v186
  %v853 = vunpack.c.l.b16 %v187
  %v854 = vunpack.c.l.b16 %v188
  %v855 = vunpack.c.l.b16 %v189
  %v856 = vunpack.c.l.b16 %v190
  %v857 = vunpack.c.l.b16 %v191
  %v858 = vunpack.c.l.b16 %v192
  %v859 = vunpack.c.l.b16 %v193
  %v860 = vunpack.c.l.b16 %v194
  %v861 = vunpack.c.l.b16 %v195
  %v862 = vunpack.c.l.b16 %v196
  %v863 = vunpack.c.l.b16 %v197
  %v864 = vunpack.c.l.b16 %v198
  %v865 = vunpack.c.l.b16 %v199
  %v866 = vunpack.c.l.b16 %v200
  %v867 = vunpack.c.l.b16 %v201
  %v868 = vunpack.c.l.b16 %v202
  %v869 = vunpack.c.l.b16 %v203
  %v870 = vunpack.c.l.b16 %v204
  %v871 = vunpack.c.l.b16 %v205
  %v872 = vunpack.c.l.b16 %v206
  %v873 = vunpack.c.l.b16 %v207
  %v874 = vunpack.c.l.b16 %v208
  %v875 = vunpack.c.l.b16 %v209
  %v876 = vunpack.c.l.b16 %v210
  %v877 = vunpack.c.l.b16 %v211
  %v878 = vunpack.c.l.b16 %v212
  %v879 = vunpack.c.l.b16 %v213
  %v880 = vunpack.c.l.b16 %v214
  %v881 = vunpack.c.l.b16 %v215
  %v882 = vunpack.c.l.b16 %v216
  %v883 = vunpack.c.l.b16 %v217
  %v884 = vunpack.c.l.b16 %v218
  %v885 = vunpack.c.l.b16 %v219
  %v886 = vunpack.c.l.b16 %v220
  %v887 = vunpack.c.l.b16 %v221
  %v888 = vunpack.c.l.b16 %v222
  %v889 = vunpack.c.l.b16 %v223
  %v890 = vunpack.c.l.b16 %v224
  %v891 = vunpack.c.l.b16 %v225
  %v892 = vunpack.c.l.b16 %v226
  %v893 = vunpack.c.l.b16 %v227
  %v894 = vunpack.c.l.b16 %v228
  %v895 = vunpack.c.l.b16 %v229
  %v896 = vunpack.c.l.b16 %v230
  %v897 = vunpack.c.l.b16 %v231
  %v898 = vunpack.c.l.b16 %v232
  %v899 = vunpack.c.l.b16 %v233
  %v900 = vunpack.c.l.b16 %v234
  %v901 = vunpack.c.l.b16 %v235
  %v902 = vunpack.c.l.b16 %v236
  %v903 = vunpack.c.l.b16 %v237
  %v904 = vunpack.c.l.b16 %v238
  %v905 = vunpack.c.l.b16 %v239
  %v906 = vunpack.c.l.b16 %v240
  %v907 = vunpack.c.l.b16 %v241
  %v908 = vunpack.c.l.b16 %v242
  %v909 = vunpack.c.l.b16 %v243
  %v910 = vunpack.c.l.b16 %v244
  %v911 = vunpack.c.l.b16 %v245
  %v912 = vunpack.c.l.b16 %v246
  %v913 = vunpack.c.l.b16 %v247
  %v914 = vunpack.c.l.b16 %v248
  %v915 = vunpack.c.l.b16 %v249
  %v916 = vunpack.c.l.b16 %v250
  %v917 = vunpack.c.l.b16 %v251
  %v918 = vunpack.c.l.b16 %v252
  %v919 = vunpack.c.l.b16 %v253
  %v920 = vunpack.c.l.b16 %v254
  %v921 = vunpack.c.l.b16 %v255
  %v922 = vunpack.c.l.b16 %v256
  %v923 = vunpack.c.l.b16 %v257
  %v924 = vunpack.c.l.b16 %v258
  %v925 = vunpack.c.l.b16 %v259
  %v926 = vunpack.c.l.b16 %v260
  %v927 = vunpack.c.l.b16 %v261
  %v928 = vunpack.c.l.b16 %v262
  %v929 = vunpack.c.l.b16 %v263
  %v930 = vunpack.c.l.b16 %v264
  %v931 = vunpack.c.l.b16 %v265
  %v932 = vunpack.c.l.b16 %v266
  %v933 = vunpack.c.l.b16 %v267
  %v934 = vunpack.c.l.b16 %v268
  %v935 = vunpack.c.l.b16 %v269
  %v936 = vunpack.c.l.b16 %v270
  %v937 = vunpack.c.l.b16 %v271
  %v938 = vunpack.c.l.b16 %v272
  %v939 = vunpack.c.l.b16 %v273
  %v940 = vunpack.c.l.b16 %v274
  %v941 = vunpack.c.l.b16 %v275
  %v942 = vunpack.c.l.b16 %v276
  %v943 = vunpack.c.l.b16 %v277
  %v944 = vunpack.c.l.b16 %v278
  %v945 = vunpack.c.l.b16 %v279
  %v946 = vunpack.c.l.b16 %v280
  %v947 = vunpack.c.l.b16 %v281
  %v948 = vunpack.c.l.b16 %v282
  %v949 = vunpack.c.l.b16 %v283
  %v950 = vunpack.c.l.b16 %v284
  %v951 = vunpack.c.l.b16 %v285
  %v952 = vunpack.c.l.b16 %v286
  %v953 = vunpack.c.l.b16 %v287
  %v954 = vunpack.c.l.b16 %v288
  %v955 = vunpack.c.l.b16 %v289
  %v956 = vunpack.c.l.b16 %v290
  %v957 = vunpack.c.l.b16 %v291
  %v958 = vunpack.c.l.b16 %v292
  %v959 = vunpack.c.l.b16 %v293
  %v960 = vunpack.c.l.b16 %v294
  %v961 = vunpack.c.l.b16 %v295
  %v962 = vunpack.c.l.b16 %v296
  %v963 = vunpack.c.l.b16 %v297
  %v964 = vunpack.c.l.b16 %v298
  %v965 = vunpack.c.l.b16 %v299
  %v966 = vunpack.c.l.b16 %v300
  %v967 = vunpack.c.l.b16 %v301
  %v968 = vunpack.c.l.b16 %v302
  %v969 = vunpack.c.l.b16 %v303
  %v970 = vunpack.c.l.b16 %v304
  %v971 = vunpack.c.l.b16 %v305
  %v972 = vunpack.c.l.b16 %v306
  %v973 = vunpack.c.l.b16 %v307
  %v974 = vunpack.c.l.b16 %v308
  %v975 = vunpack.c.l.b16 %v309
  %v976 = vunpack.c.l.b16 %v310
  %v977 = vunpack.c.l.b16 %v311
  %v978 = vunpack.c.l.b16 %v312
  %v979 = vunpack.c.l.b16 %v313
  %v980 = vunpack.c.l.b16 %v314
  %v981 = vunpack.c.l.b16 %v315
  %v982 = vunpack.c.l.b16 %v316
  %v983 = vunpack.c.l.b16 %v317
  %v984 = vunpack.c.l.b16 %v318
  %v985 = vunpack.c.l.b16 %v319
  %v986 = vunpack.c.l.b16 %v320
  %v987 = vunpack.c.l.b16 %v321
  %v988 = vunpack.c.l.b16 %v322
  %v989 = vunpack.c.l.b16 %v323
  %v990 = vunpack.c.l.b16 %v324
  %v991 = vunpack.c.l.b16 %v325
  %v992 = vunpack.c.l.b16 %v326
  %v993 = vpack.c.b16 %v706, %v705
  %v994 = vpack.c.b16 %v708, %v707
  %v995 = vpack.c.b16 %v710, %v709
  %v996 = vpack.c.b16 %v712, %v711
  %v997 = vpack.c.b16 %v714, %v713
  %v998 = vpack.c.b16 %v716, %v715
  %v999 = vpack.c.b16 %v718, %v717
  %v1000 = vpack.c.b16 %v720, %v719
  %v1001 = vpack.c.b16 %v722, %v721
  %v1002 = vpack.c.b16 %v724, %v723
  %v1003 = vpack.c.b16 %v726, %v725
  %v1004 = vpack.c.b16 %v728, %v727
  %v1005 = vpack.c.b16 %v730, %v729
  %v1006 = vpack.c.b16 %v732, %v731
  %v1007 = vpack.c.b16 %v734, %v733
  %v1008 = vpack.c.b16 %v736, %v735
  %v1009 = vpack.c.b16 %v738, %v737
  %v1010 = vpack.c.b16 %v740, %v739
  %v1011 = vpack.c.b16 %v742, %v741
  %v1012 = vpack.c.b16 %v744, %v743
  %v1013 = vpack.c.b16 %v746, %v745
  %v1014 = vpack.c.b16 %v748, %v747
  %v1015 = vpack.c.b16 %v750, %v749
  %v1016 = vpack.c.b16 %v752, %v751
  %v1017 = vpack.c.b16 %v754, %v753
  %v1018 = vpack.c.b16 %v756, %v755
  %v1019 = vpack.c.b16 %v758, %v757
  %v1020 = vpack.c.b16 %v760, %v759
  %v1021 = vpack.c.b16 %v762, %v761
  %v1022 = vpack.c.b16 %v764, %v763
  %v1023 = vpack.c.b16 %v766, %v765
  %v1024 = vpack.c.b16 %v768, %v767
  %v1025 = vpack.c.b16 %v770, %v769
  %v1026 = vpack.c.b16 %v772, %v771
  %v1027 = vpack.c.b16 %v774, %v773
  %v1028 = vpack.c.b16 %v776, %v775
  %v1029 = vpack.c.b16 %v778, %v777
  %v1030 = vpack.c.b16 %v780, %v779
  %v1031 = vpack.c.b16 %v782, %v781
  %v1032 = vpack.c.b16 %v784, %v783
  %v1033 = vpack.c.b16 %v786, %v785
  %v1034 = vpack.c.b16 %v788, %v787
  %v1035 = vpack.c.b16 %v790, %v789
  %v1036 = vpack.c.b16 %v792, %v791
  %v1037 = vpack.c.b16 %v794, %v793
  %v1038 = vpack.c.b16 %v796, %v795
  %v1039 = vpack.c.b16 %v798, %v797
  %v1040 = vpack.c.b16 %v800, %v799
  %v1041 = vpack.c.b16 %v802, %v801
  %v1042 = vpack.c.b16 %v804, %v803
  %v1043 = vpack.c.b16 %v806, %v805
  %v1044 = vpack.c.b16 %v808, %v807
  %v1045 = vpack.c.b16 %v810, %v809
  %v1046 = vpack.c.b16 %v812, %v811
  %v1047 = vpack.c.b16 %v814, %v813
  %v1048 = vpack.c.b16 %v816, %v815
  %v1049 = vpack.c.b16 %v818, %v817
  %v1050 = vpack.c.b16 %v820, %v819
  %v1051 = vpack.c.b16 %v822, %v821
  %v1052 = vpack.c.b16 %v824, %v823
  %v1053 = vpack.c.b16 %v826, %v825
  %v1054 = vpack.c.b16 %v828, %v827
  %v1055 = vpack.c.b16 %v830, %v829
  %v1056 = vpack.c.b16 %v832, %v831
  %v1057 = vpack.c.b16 %v834, %v833
  %v1058 = vpack.c.b16 %v836, %v835
  %v1059 = vpack.c.b16 %v838, %v837
  %v1060 = vpack.c.b16 %v840, %v839
  %v1061 = vpack.c.b16 %v842, %v841
  %v1062 = vpack.c.b16 %v844, %v843
  %v1063 = vpack.c.b16 %v846, %v845
  %v1064 = vpack.c.b16 %v848, %v847
  %v1065 = vpack.c.b16 %v850, %v849
  %v1066 = vpack.c.b16 %v852, %v851
  %v1067 = vpack.c.b16 %v854, %v853
  %v1068 = vpack.c.b16 %v856, %v855
  %v1069 = vpack.c.b16 %v858, %v857
  %v1070 = vpack.c.b16 %v860, %v859
  %v1071 = vpack.c.b16 %v862, %v861
  %v1072 = vpack.c.b16 %v864, %v863
  %v1073 = vpack.c.b16 %v866, %v865
  %v1074 = vpack.c.b16 %v868, %v867
  %v1075 = vpack.c.b16 %v870, %v869
  %v1076 = vpack.c.b16 %v872, %v871
  %v1077 = vpack.c.b16 %v874, %v873
  %v1078 = vpack.c.b16 %v876, %v875
  %v1079 = vpack.c.b16 %v878, %v877
  %v1080 = vpack.c.b16 %v880, %v879
  %v1081 = vpack.c.b16 %v882, %v881
  %v1082 = vpack.c.b16 %v884, %v883
  %v1083 = vpack.c.b16 %v886, %v885
  %v1084 = vpack.c.b16 %v888, %v887
  %v1085 = vpack.c.b16 %v890, %v889
  %v1086 = vpack.c.b16 %v892, %v891
  %v1087 = vpack.c.b16 %v894, %v893
  %v1088 = vpack.c.b16 %v896, %v895
  %v1089 = vpack.c.b16 %v898, %v897
  %v1090 = vpack.c.b16 %v900, %v899
  %v1091 = vpack.c.b16 %v902, %v901
  %v1092 = vpack.c.b16 %v904, %v903
  %v1093 = vpack.c.b16 %v906, %v905
  %v1094 = vpack.c.b16 %v908, %v907
  %v1095 = vpack.c.b16 %v910, %v909
  %v1096 = vpack.c.b16 %v912, %v911
  %v1097 = vpack.c.b16 %v914, %v913
  %v1098 = vpack.c.b16 %v916, %v915
  %v1099 = vpack.c.b16 %v918, %v917
  %v1100 = vpack.c.b16 %v920, %v919
  %v1101 = vpack.c.b16 %v922, %v921
  %v1102 = vpack.c.b16 %v924, %v923
  %v1103 = vpack.c.b16 %v926, %v925
  %v1104 = vpack.c.b16 %v928, %v927
  %v1105 = vpack.c.b16 %v930, %v929
  %v1106 = vpack.c.b16 %v932, %v931
  %v1107 = vpack.c.b16 %v934, %v933
  %v1108 = vpack.c.b16 %v936, %v935
  %v1109 = vpack.c.b16 %v938, %v937
  %v1110 = vpack.c.b16 %v940, %v939
  %v1111 = vpack.c.b16 %v942, %v941
  %v1112 = vpack.c.b16 %v944, %v943
  %v1113 = vpack.c.b16 %v946, %v945
  %v1114 = vpack.c.b16 %v948, %v947
  %v1115 = vpack.c.b16 %v950, %v949
  %v1116 = vpack.c.b16 %v952, %v951
  %v1117 = vpack.c.b16 %v954, %v953
  %v1118 = vpack.c.b16 %v956, %v955
  %v1119 = vpack.c.b16 %v958, %v957
  %v1120 = vpack.c.b16 %v960, %v959
  %v1121 = vpack.c.b16 %v962, %v961
  %v1122 = vpack.c.b16 %v964, %v963
  %v1123 = vpack.c.b16 %v966, %v965
  %v1124 = vpack.c.b16 %v968, %v967
  %v1125 = vpack.c.b16 %v970, %v969
  %v1126 = vpack.c.b16 %v972, %v971
  %v1127 = vpack.c.b16 %v974, %v973
  %v1128 = vpack.c.b16 %v976, %v975
  %v1129 = vpack.c.b16 %v978, %v977
  %v1130 = vpack.c.b16 %v980, %v979
  %v1131 = vpack.c.b16 %v982, %v981
  %v1132 = vpack.c.b16 %v984, %v983
  %v1133 = vpack.c.b16 %v986, %v985
  %v1134 = vpack.c.b16 %v988, %v987
  %v1135 = vpack.c.b16 %v990, %v989
  %v1136 = vpack.c.b16 %v992, %v991
  %1281 = vmatprep.subr.bf16.mxu0 0
  %1282 = vmatpush1.bf16.msra.mxu0 %v993
  %1283 = vmatprep.subr.bf16.mxu0 0
  %1284 = vmatpush1.bf16.msra.mxu0 %v994
  %1285 = vmatprep.subr.bf16.mxu0 0
  %1286 = vmatpush1.bf16.msra.mxu0 %v995
  %1287 = vmatprep.subr.bf16.mxu0 0
  %1288 = vmatpush1.bf16.msra.mxu0 %v996
  %1289 = vmatprep.subr.bf16.mxu0 0
  %1290 = vmatpush1.bf16.msra.mxu0 %v997
  %1291 = vmatprep.subr.bf16.mxu0 0
  %1292 = vmatpush1.bf16.msra.mxu0 %v998
  %1293 = vmatprep.subr.bf16.mxu0 0
  %1294 = vmatpush1.bf16.msra.mxu0 %v999
  %1295 = vmatprep.subr.bf16.mxu0 0
  %1296 = vmatpush1.bf16.msra.mxu0 %v1000
  %1297 = vmatprep.subr.bf16.mxu0 0
  %1298 = vmatpush1.bf16.msra.mxu0 %v1001
  %1299 = vmatprep.subr.bf16.mxu0 0
  %1300 = vmatpush1.bf16.msra.mxu0 %v1002
  %1301 = vmatprep.subr.bf16.mxu0 0
  %1302 = vmatpush1.bf16.msra.mxu0 %v1003
  %1303 = vmatprep.subr.bf16.mxu0 0
  %1304 = vmatpush1.bf16.msra.mxu0 %v1004
  %1305 = vmatprep.subr.bf16.mxu0 0
  %1306 = vmatpush1.bf16.msra.mxu0 %v1005
  %1307 = vmatprep.subr.bf16.mxu0 0
  %1308 = vmatpush1.bf16.msra.mxu0 %v1006
  %1309 = vmatprep.subr.bf16.mxu0 0
  %1310 = vmatpush1.bf16.msra.mxu0 %v1007
  %1311 = vmatprep.subr.bf16.mxu0 0
  %1312 = vmatpush1.bf16.msra.mxu0 %v1008
  %1313 = vmatprep.mubr.bf16.mxu0 %v382
  %1314 = vmatmul.mubr.bf16.gmra.mrb[0].mxu0 %v381
  %v1315 = vpop.f32.mrb[0].mxu0
  %v1316 = vadd.f32 0.0, %v1315
  %v1317 = vpop.f32.mrb[0].mxu0
  %v1318 = vpop.f32.mrb[0].mxu0
  %v1319 = vadd.f32 0.0, %v1318
  %v1320 = vpop.f32.mrb[0].mxu0
  %1321 = vdwg.mxu0
  %1322 = vmatprep.subr.bf16.mxu0 0
  %1323 = vmatpush1.bf16.msra.mxu0 %v1009
  %1324 = vmatprep.subr.bf16.mxu0 0
  %1325 = vmatpush1.bf16.msra.mxu0 %v1010
  %1326 = vmatprep.subr.bf16.mxu0 0
  %1327 = vmatpush1.bf16.msra.mxu0 %v1011
  %1328 = vmatprep.subr.bf16.mxu0 0
  %1329 = vmatpush1.bf16.msra.mxu0 %v1012
  %1330 = vmatprep.subr.bf16.mxu0 0
  %1331 = vmatpush1.bf16.msra.mxu0 %v1013
  %1332 = vmatprep.subr.bf16.mxu0 0
  %1333 = vmatpush1.bf16.msra.mxu0 %v1014
  %1334 = vmatprep.subr.bf16.mxu0 0
  %1335 = vmatpush1.bf16.msra.mxu0 %v1015
  %1336 = vmatprep.subr.bf16.mxu0 0
  %1337 = vmatpush1.bf16.msra.mxu0 %v1016
  %1338 = vmatprep.subr.bf16.mxu0 0
  %1339 = vmatpush1.bf16.msra.mxu0 %v1017
  %1340 = vmatprep.subr.bf16.mxu0 0
  %1341 = vmatpush1.bf16.msra.mxu0 %v1018
  %1342 = vmatprep.subr.bf16.mxu0 0
  %1343 = vmatpush1.bf16.msra.mxu0 %v1019
  %1344 = vmatprep.subr.bf16.mxu0 0
  %1345 = vmatpush1.bf16.msra.mxu0 %v1020
  %1346 = vmatprep.subr.bf16.mxu0 0
  %1347 = vmatpush1.bf16.msra.mxu0 %v1021
  %1348 = vmatprep.subr.bf16.mxu0 0
  %1349 = vmatpush1.bf16.msra.mxu0 %v1022
  %1350 = vmatprep.subr.bf16.mxu0 0
  %1351 = vmatpush1.bf16.msra.mxu0 %v1023
  %1352 = vmatprep.subr.bf16.mxu0 0
  %1353 = vmatpush1.bf16.msra.mxu0 %v1024
  %1354 = vmatprep.mubr.bf16.mxu0 %v384
  %1355 = vmatmul.mubr.bf16.gmra.mrb[0].mxu0 %v383
  %v1356 = vpop.f32.mrb[0].mxu0
  %v1357 = vadd.f32 %v1316, %v1356
  %v1358 = vpop.f32.mrb[0].mxu0
  %v1359 = vpop.f32.mrb[0].mxu0
  %v1360 = vadd.f32 %v1319, %v1359
  %v1361 = vpop.f32.mrb[0].mxu0
  %1362 = vdwg.mxu0
  %1363 = vmatprep.subr.bf16.mxu0 0
  %1364 = vmatpush1.bf16.msra.mxu0 %v1025
  %1365 = vmatprep.subr.bf16.mxu0 0
  %1366 = vmatpush1.bf16.msra.mxu0 %v1026
  %1367 = vmatprep.subr.bf16.mxu0 0
  %1368 = vmatpush1.bf16.msra.mxu0 %v1027
  %1369 = vmatprep.subr.bf16.mxu0 0
  %1370 = vmatpush1.bf16.msra.mxu0 %v1028
  %1371 = vmatprep.subr.bf16.mxu0 0
  %1372 = vmatpush1.bf16.msra.mxu0 %v1029
  %1373 = vmatprep.subr.bf16.mxu0 0
  %1374 = vmatpush1.bf16.msra.mxu0 %v1030
  %1375 = vmatprep.subr.bf16.mxu0 0
  %1376 = vmatpush1.bf16.msra.mxu0 %v1031
  %1377 = vmatprep.subr.bf16.mxu0 0
  %1378 = vmatpush1.bf16.msra.mxu0 %v1032
  %1379 = vmatprep.subr.bf16.mxu0 0
  %1380 = vmatpush1.bf16.msra.mxu0 %v1033
  %1381 = vmatprep.subr.bf16.mxu0 0
  %1382 = vmatpush1.bf16.msra.mxu0 %v1034
  %1383 = vmatprep.subr.bf16.mxu0 0
  %1384 = vmatpush1.bf16.msra.mxu0 %v1035
  %1385 = vmatprep.subr.bf16.mxu0 0
  %1386 = vmatpush1.bf16.msra.mxu0 %v1036
  %1387 = vmatprep.subr.bf16.mxu0 0
  %1388 = vmatpush1.bf16.msra.mxu0 %v1037
  %1389 = vmatprep.subr.bf16.mxu0 0
  %1390 = vmatpush1.bf16.msra.mxu0 %v1038
  %1391 = vmatprep.subr.bf16.mxu0 0
  %1392 = vmatpush1.bf16.msra.mxu0 %v1039
  %1393 = vmatprep.subr.bf16.mxu0 0
  %1394 = vmatpush1.bf16.msra.mxu0 %v1040
  %1395 = vmatprep.mubr.bf16.mxu0 %v386
  %1396 = vmatmul.mubr.bf16.gmra.mrb[0].mxu0 %v385
  %v1397 = vpop.f32.mrb[0].mxu0
  %v1398 = vadd.f32 %v1357, %v1397
  %v1399 = vpop.f32.mrb[0].mxu0
  %v1400 = vpop.f32.mrb[0].mxu0
  %v1401 = vadd.f32 %v1360, %v1400
  %v1402 = vpop.f32.mrb[0].mxu0
  %1403 = vdwg.mxu0
  %1404 = vmatprep.subr.bf16.mxu0 0
  %1405 = vmatpush1.bf16.msra.mxu0 %v1041
  %1406 = vmatprep.subr.bf16.mxu0 0
  %1407 = vmatpush1.bf16.msra.mxu0 %v1042
  %1408 = vmatprep.subr.bf16.mxu0 0
  %1409 = vmatpush1.bf16.msra.mxu0 %v1043
  %1410 = vmatprep.subr.bf16.mxu0 0
  %1411 = vmatpush1.bf16.msra.mxu0 %v1044
  %1412 = vmatprep.subr.bf16.mxu0 0
  %1413 = vmatpush1.bf16.msra.mxu0 %v1045
  %1414 = vmatprep.subr.bf16.mxu0 0
  %1415 = vmatpush1.bf16.msra.mxu0 %v1046
  %1416 = vmatprep.subr.bf16.mxu0 0
  %1417 = vmatpush1.bf16.msra.mxu0 %v1047
  %1418 = vmatprep.subr.bf16.mxu0 0
  %1419 = vmatpush1.bf16.msra.mxu0 %v1048
  %1420 = vmatprep.subr.bf16.mxu0 0
  %1421 = vmatpush1.bf16.msra.mxu0 %v1049
  %1422 = vmatprep.subr.bf16.mxu0 0
  %1423 = vmatpush1.bf16.msra.mxu0 %v1050
  %1424 = vmatprep.subr.bf16.mxu0 0
  %1425 = vmatpush1.bf16.msra.mxu0 %v1051
  %1426 = vmatprep.subr.bf16.mxu0 0
  %1427 = vmatpush1.bf16.msra.mxu0 %v1052
  %1428 = vmatprep.subr.bf16.mxu0 0
  %1429 = vmatpush1.bf16.msra.mxu0 %v1053
  %1430 = vmatprep.subr.bf16.mxu0 0
  %1431 = vmatpush1.bf16.msra.mxu0 %v1054
  %1432 = vmatprep.subr.bf16.mxu0 0
  %1433 = vmatpush1.bf16.msra.mxu0 %v1055
  %1434 = vmatprep.subr.bf16.mxu0 0
  %1435 = vmatpush1.bf16.msra.mxu0 %v1056
  %1436 = vmatprep.mubr.bf16.mxu0 %v388
  %1437 = vmatmul.mubr.bf16.gmra.mrb[0].mxu0 %v387
  %v1438 = vpop.f32.mrb[0].mxu0
  %v1439 = vadd.f32 %v1398, %v1438
  %v1440 = vpop.f32.mrb[0].mxu0
  %v1441 = vpop.f32.mrb[0].mxu0
  %v1442 = vadd.f32 %v1401, %v1441
  %v1443 = vpop.f32.mrb[0].mxu0
  %1444 = vdwg.mxu0
  %1445 = vmatprep.subr.bf16.mxu0 0
  %1446 = vmatpush1.bf16.msra.mxu0 %v1057
  %1447 = vmatprep.subr.bf16.mxu0 0
  %1448 = vmatpush1.bf16.msra.mxu0 %v1058
  %1449 = vmatprep.subr.bf16.mxu0 0
  %1450 = vmatpush1.bf16.msra.mxu0 %v1059
  %1451 = vmatprep.subr.bf16.mxu0 0
  %1452 = vmatpush1.bf16.msra.mxu0 %v1060
  %1453 = vmatprep.subr.bf16.mxu0 0
  %1454 = vmatpush1.bf16.msra.mxu0 %v1061
  %1455 = vmatprep.subr.bf16.mxu0 0
  %1456 = vmatpush1.bf16.msra.mxu0 %v1062
  %1457 = vmatprep.subr.bf16.mxu0 0
  %1458 = vmatpush1.bf16.msra.mxu0 %v1063
  %1459 = vmatprep.subr.bf16.mxu0 0
  %1460 = vmatpush1.bf16.msra.mxu0 %v1064
  %1461 = vmatprep.subr.bf16.mxu0 0
  %1462 = vmatpush1.bf16.msra.mxu0 %v1065
  %1463 = vmatprep.subr.bf16.mxu0 0
  %1464 = vmatpush1.bf16.msra.mxu0 %v1066
  %1465 = vmatprep.subr.bf16.mxu0 0
  %1466 = vmatpush1.bf16.msra.mxu0 %v1067
  %1467 = vmatprep.subr.bf16.mxu0 0
  %1468 = vmatpush1.bf16.msra.mxu0 %v1068
  %1469 = vmatprep.subr.bf16.mxu0 0
  %1470 = vmatpush1.bf16.msra.mxu0 %v1069
  %1471 = vmatprep.subr.bf16.mxu0 0
  %1472 = vmatpush1.bf16.msra.mxu0 %v1070
  %1473 = vmatprep.subr.bf16.mxu0 0
  %1474 = vmatpush1.bf16.msra.mxu0 %v1071
  %1475 = vmatprep.subr.bf16.mxu0 0
  %1476 = vmatpush1.bf16.msra.mxu0 %v1072
  %1477 = vmatprep.mubr.bf16.mxu0 %v390
  %1478 = vmatmul.mubr.bf16.gmra.mrb[0].mxu0 %v389
  %v1479 = vpop.f32.mrb[0].mxu0
  %v1480 = vadd.f32 %v1439, %v1479
  %v1481 = vpop.f32.mrb[0].mxu0
  %v1482 = vpop.f32.mrb[0].mxu0
  %v1483 = vadd.f32 %v1442, %v1482
  %v1484 = vpop.f32.mrb[0].mxu0
  %1485 = vdwg.mxu0
  %1486 = vmatprep.subr.bf16.mxu0 0
  %1487 = vmatpush1.bf16.msra.mxu0 %v1073
  %1488 = vmatprep.subr.bf16.mxu0 0
  %1489 = vmatpush1.bf16.msra.mxu0 %v1074
  %1490 = vmatprep.subr.bf16.mxu0 0
  %1491 = vmatpush1.bf16.msra.mxu0 %v1075
  %1492 = vmatprep.subr.bf16.mxu0 0
  %1493 = vmatpush1.bf16.msra.mxu0 %v1076
  %1494 = vmatprep.subr.bf16.mxu0 0
  %1495 = vmatpush1.bf16.msra.mxu0 %v1077
  %1496 = vmatprep.subr.bf16.mxu0 0
  %1497 = vmatpush1.bf16.msra.mxu0 %v1078
  %1498 = vmatprep.subr.bf16.mxu0 0
  %1499 = vmatpush1.bf16.msra.mxu0 %v1079
  %1500 = vmatprep.subr.bf16.mxu0 0
  %1501 = vmatpush1.bf16.msra.mxu0 %v1080
  %1502 = vmatprep.subr.bf16.mxu0 0
  %1503 = vmatpush1.bf16.msra.mxu0 %v1081
  %1504 = vmatprep.subr.bf16.mxu0 0
  %1505 = vmatpush1.bf16.msra.mxu0 %v1082
  %1506 = vmatprep.subr.bf16.mxu0 0
  %1507 = vmatpush1.bf16.msra.mxu0 %v1083
  %1508 = vmatprep.subr.bf16.mxu0 0
  %1509 = vmatpush1.bf16.msra.mxu0 %v1084
  %1510 = vmatprep.subr.bf16.mxu0 0
  %1511 = vmatpush1.bf16.msra.mxu0 %v1085
  %1512 = vmatprep.subr.bf16.mxu0 0
  %1513 = vmatpush1.bf16.msra.mxu0 %v1086
  %1514 = vmatprep.subr.bf16.mxu0 0
  %1515 = vmatpush1.bf16.msra.mxu0 %v1087
  %1516 = vmatprep.subr.bf16.mxu0 0
  %1517 = vmatpush1.bf16.msra.mxu0 %v1088
  %1518 = vmatprep.mubr.bf16.mxu0 %v392
  %1519 = vmatmul.mubr.bf16.gmra.mrb[0].mxu0 %v391
  %v1520 = vpop.f32.mrb[0].mxu0
  %v1521 = vadd.f32 %v1480, %v1520
  %v1522 = vpop.f32.mrb[0].mxu0
  %v1523 = vpop.f32.mrb[0].mxu0
  %v1524 = vadd.f32 %v1483, %v1523
  %v1525 = vpop.f32.mrb[0].mxu0
  %1526 = vdwg.mxu0
  %1527 = vmatprep.subr.bf16.mxu0 0
  %1528 = vmatpush1.bf16.msra.mxu0 %v1089
  %1529 = vmatprep.subr.bf16.mxu0 0
  %1530 = vmatpush1.bf16.msra.mxu0 %v1090
  %1531 = vmatprep.subr.bf16.mxu0 0
  %1532 = vmatpush1.bf16.msra.mxu0 %v1091
  %1533 = vmatprep.subr.bf16.mxu0 0
  %1534 = vmatpush1.bf16.msra.mxu0 %v1092
  %1535 = vmatprep.subr.bf16.mxu0 0
  %1536 = vmatpush1.bf16.msra.mxu0 %v1093
  %1537 = vmatprep.subr.bf16.mxu0 0
  %1538 = vmatpush1.bf16.msra.mxu0 %v1094
  %1539 = vmatprep.subr.bf16.mxu0 0
  %1540 = vmatpush1.bf16.msra.mxu0 %v1095
  %1541 = vmatprep.subr.bf16.mxu0 0
  %1542 = vmatpush1.bf16.msra.mxu0 %v1096
  %1543 = vmatprep.subr.bf16.mxu0 0
  %1544 = vmatpush1.bf16.msra.mxu0 %v1097
  %1545 = vmatprep.subr.bf16.mxu0 0
  %1546 = vmatpush1.bf16.msra.mxu0 %v1098
  %1547 = vmatprep.subr.bf16.mxu0 0
  %1548 = vmatpush1.bf16.msra.mxu0 %v1099
  %1549 = vmatprep.subr.bf16.mxu0 0
  %1550 = vmatpush1.bf16.msra.mxu0 %v1100
  %1551 = vmatprep.subr.bf16.mxu0 0
  %1552 = vmatpush1.bf16.msra.mxu0 %v1101
  %1553 = vmatprep.subr.bf16.mxu0 0
  %1554 = vmatpush1.bf16.msra.mxu0 %v1102
  %1555 = vmatprep.subr.bf16.mxu0 0
  %1556 = vmatpush1.bf16.msra.mxu0 %v1103
  %1557 = vmatprep.subr.bf16.mxu0 0
  %1558 = vmatpush1.bf16.msra.mxu0 %v1104
  %1559 = vmatprep.mubr.bf16.mxu0 %v394
  %1560 = vmatmul.mubr.bf16.gmra.mrb[0].mxu0 %v393
  %v1561 = vpop.f32.mrb[0].mxu0
  %v1562 = vadd.f32 %v1521, %v1561
  %v1563 = vpop.f32.mrb[0].mxu0
  %v1564 = vpop.f32.mrb[0].mxu0
  %v1565 = vadd.f32 %v1524, %v1564
  %v1566 = vpop.f32.mrb[0].mxu0
  %1567 = vdwg.mxu0
  %1568 = vmatprep.subr.bf16.mxu0 0
  %1569 = vmatpush1.bf16.msra.mxu0 %v1105
  %1570 = vmatprep.subr.bf16.mxu0 0
  %1571 = vmatpush1.bf16.msra.mxu0 %v1106
  %1572 = vmatprep.subr.bf16.mxu0 0
  %1573 = vmatpush1.bf16.msra.mxu0 %v1107
  %1574 = vmatprep.subr.bf16.mxu0 0
  %1575 = vmatpush1.bf16.msra.mxu0 %v1108
  %1576 = vmatprep.subr.bf16.mxu0 0
  %1577 = vmatpush1.bf16.msra.mxu0 %v1109
  %1578 = vmatprep.subr.bf16.mxu0 0
  %1579 = vmatpush1.bf16.msra.mxu0 %v1110
  %1580 = vmatprep.subr.bf16.mxu0 0
  %1581 = vmatpush1.bf16.msra.mxu0 %v1111
  %1582 = vmatprep.subr.bf16.mxu0 0
  %1583 = vmatpush1.bf16.msra.mxu0 %v1112
  %1584 = vmatprep.subr.bf16.mxu0 0
  %1585 = vmatpush1.bf16.msra.mxu0 %v1113
  %1586 = vmatprep.subr.bf16.mxu0 0
  %1587 = vmatpush1.bf16.msra.mxu0 %v1114
  %1588 = vmatprep.subr.bf16.mxu0 0
  %1589 = vmatpush1.bf16.msra.mxu0 %v1115
  %1590 = vmatprep.subr.bf16.mxu0 0
  %1591 = vmatpush1.bf16.msra.mxu0 %v1116
  %1592 = vmatprep.subr.bf16.mxu0 0
  %1593 = vmatpush1.bf16.msra.mxu0 %v1117
  %1594 = vmatprep.subr.bf16.mxu0 0
  %1595 = vmatpush1.bf16.msra.mxu0 %v1118
  %1596 = vmatprep.subr.bf16.mxu0 0
  %1597 = vmatpush1.bf16.msra.mxu0 %v1119
  %1598 = vmatprep.subr.bf16.mxu0 0
  %1599 = vmatpush1.bf16.msra.mxu0 %v1120
  %1600 = vmatprep.mubr.bf16.mxu0 %v396
  %1601 = vmatmul.mubr.bf16.gmra.mrb[0].mxu0 %v395
  %v1602 = vpop.f32.mrb[0].mxu0
  %v1603 = vadd.f32 %v1562, %v1602
  %v1604 = vpop.f32.mrb[0].mxu0
  %v1605 = vpop.f32.mrb[0].mxu0
  %v1606 = vadd.f32 %v1565, %v1605
  %v1607 = vpop.f32.mrb[0].mxu0
  %1608 = vdwg.mxu0
  %1609 = vmatprep.subr.bf16.mxu0 0
  %1610 = vmatpush1.bf16.msra.mxu0 %v1121
  %1611 = vmatprep.subr.bf16.mxu0 0
  %1612 = vmatpush1.bf16.msra.mxu0 %v1122
  %1613 = vmatprep.subr.bf16.mxu0 0
  %1614 = vmatpush1.bf16.msra.mxu0 %v1123
  %1615 = vmatprep.subr.bf16.mxu0 0
  %1616 = vmatpush1.bf16.msra.mxu0 %v1124
  %1617 = vmatprep.subr.bf16.mxu0 0
  %1618 = vmatpush1.bf16.msra.mxu0 %v1125
  %1619 = vmatprep.subr.bf16.mxu0 0
  %1620 = vmatpush1.bf16.msra.mxu0 %v1126
  %1621 = vmatprep.subr.bf16.mxu0 0
  %1622 = vmatpush1.bf16.msra.mxu0 %v1127
  %1623 = vmatprep.subr.bf16.mxu0 0
  %1624 = vmatpush1.bf16.msra.mxu0 %v1128
  %1625 = vmatprep.subr.bf16.mxu0 0
  %1626 = vmatpush1.bf16.msra.mxu0 %v1129
  %1627 = vmatprep.subr.bf16.mxu0 0
  %1628 = vmatpush1.bf16.msra.mxu0 %v1130
  %1629 = vmatprep.subr.bf16.mxu0 0
  %1630 = vmatpush1.bf16.msra.mxu0 %v1131
  %1631 = vmatprep.subr.bf16.mxu0 0
  %1632 = vmatpush1.bf16.msra.mxu0 %v1132
  %1633 = vmatprep.subr.bf16.mxu0 0
  %1634 = vmatpush1.bf16.msra.mxu0 %v1133
  %1635 = vmatprep.subr.bf16.mxu0 0
  %1636 = vmatpush1.bf16.msra.mxu0 %v1134
  %1637 = vmatprep.subr.bf16.mxu0 0
  %1638 = vmatpush1.bf16.msra.mxu0 %v1135
  %1639 = vmatprep.subr.bf16.mxu0 0
  %1640 = vmatpush1.bf16.msra.mxu0 %v1136
  %1641 = vmatprep.mubr.bf16.mxu0 %v398
  %1642 = vmatmul.mubr.bf16.gmra.mrb[0].mxu0 %v397
  %v1643 = vpop.f32.mrb[0].mxu0
  %v1644 = vadd.f32 %v1603, %v1643
  %v1645 = vpop.f32.mrb[0].mxu0
  %v1646 = vpop.f32.mrb[0].mxu0
  %v1647 = vadd.f32 %v1606, %v1646
  %v1648 = vpop.f32.mrb[0].mxu0
  %1649 = vdwg.mxu0
  %v1650 = vld [vmem:[%s2] sm:$0x1]
  %v1651 = vld [vmem:[%s3] sm:$0x1]
  %v1652 = vld [vmem:[%s4] sm:$0x1]
  %v1654 = vlaneseq
  %v1655 = vshrl.u32 %v1654, 7
  %v1656 = vsub.s32 0, %v1655
  %v1657 = vrot.slane %v1650, %v1656
  %v1659 = vmul.f32 %v1644, %v1657
  %v1660 = vmul.f32 %v1647, %v1657
  %v1662 = vlaneseq
  %v1663 = vshrl.u32 %v1662, 7
  %v1664 = vsub.s32 0, %v1663
  %v1665 = vrot.slane %v1651, %v1664
  %v1667 = vadd.f32 %v1659, %v1665
  %v1668 = vadd.f32 %v1660, %v1665
  %vm1669 = vcmp.ne.f32.partialorder %v1652, 0.0
  %v1670 = vmax.f32 %v1667, 0.0
  %v1671 = vmax.f32 %v1668, 0.0
  %v1672 = vsel %vm1669, 1, 0
  %v1673 = vlaneseq
  %v1674 = vshrl.u32 %v1673, 7
  %v1675 = vsub.s32 0, %v1674
  %v1676 = vrot.slane %v1672, %v1675
  %vm1677 = vcmp.eq.s32.totalorder %v1676, 1
  %v1678 = vsel %vm1677, %v1670, %v1667
  %v1679 = vsel %vm1677, %v1671, %v1668
  %1680 = vst [vmem:[%s5] sm:$0xff] %v1678
  %1681 = vst [vmem:[%s5 + $0x8] sm:$0xff] %v1679
  // Predicated region
  $region22: #{battlefield_feature.19} parent=0 // pred_check
    _
  $region23: #{battlefield_feature.19} parent=0 // pred_check_branch
    %1683 = sbr.rel (0) target = $region25
  $region24: #{battlefield_feature.19} parent=0 // pred_region
    _
  $region25: #{battlefield_feature.19} parent=0 // pred_fallthru
    _
  // Predicated region
  $region26: #{battlefield_feature.19} parent=0 // pred_check
    _
  $region27: #{battlefield_feature.19} parent=0 // pred_check_branch
    %1685 = sbr.rel (0) target = $region29
  $region28: #{battlefield_feature.19} parent=0 // pred_region
    _
  $region29: #{battlefield_feature.19} parent=0 // pred_fallthru
    _

</llo_original>
